<compile_context>
chip_gen: v7x
topology: tpu7x:2x2x1
jax: 0.10.0
libtpu: 0.0.40
codegen_flags: <defaults>
</compile_context>

<pallas_src>
import functools

import numpy as np
import jax
import jax.numpy as jnp
from jax.experimental import pallas as pl
from jax.experimental.pallas import tpu as pltpu

_BIG = 1e30  # f32 sentinel for masked min/max (do NOT move this path to bf16)


def _vmem_limit_bytes():
    """Generation-specific scoped-VMEM limit (v5e/v6e: 128 MiB phys, v7x: 64 MiB)."""
    try:
        kind = jax.devices()[0].device_kind.lower()
    except Exception:
        kind = ""
    if "v5" in kind or "v6" in kind:
        return 96 * 1024 * 1024
    return 40 * 1024 * 1024  # v7x & unknown: stay well under 64 MiB physical


# --------------------------------------------------------------------------- kernel

def _pna_conv_kernel(start_ref, count_ref,                       # scalar prefetch (SMEM)
                     ef_ref, dst_ref, x_ref,
                     w_m_ref, b_m_ref, w_p_ref, b_p_ref,
                     *rest, n_tile, f, avg_log, f_chunk, with_mlp):
    """One full PNAConv (+ the F.relu from Net.forward), optionally fused MLP head.

    grid = (node_tiles [parallel], edge_tiles-per-node-tile [arbitrary, reduction]).
    Edges are CSR-sorted & padded per node tile; start/count (in e_tile blocks)
    select only this node tile's edge blocks via the data-dependent index_maps.
    """
    if with_mlp:
        (w1_ref, b1_ref, w2_ref, b2_ref, o_ref,
         acc_ss, acc_min, acc_max) = rest
    else:
        (o_ref, acc_ss, acc_min, acc_max) = rest

    ni = pl.program_id(0)
    ei = pl.program_id(1)

    @pl.when(ei == 0)
    def _():
        acc_ss[...] = jnp.zeros_like(acc_ss)
        acc_min[...] = jnp.full_like(acc_min, _BIG)
        acc_max[...] = jnp.full_like(acc_max, -_BIG)

    # Accumulate only over this node tile's own edge blocks (skip padded blocks).
    @pl.when(ei < count_ref[ni])
    def _():
        # fused pre-transform message: single [e_tile, 2F+de] @ [2F+de, F] matmul
        msg = (jnp.dot(ef_ref[...], w_m_ref[...],
                       preferred_element_type=jnp.float32) + b_m_ref[...])
        e_tile = msg.shape[0]
        node_ids = (ni * n_tile
                    + jax.lax.broadcasted_iota(jnp.int32, (n_tile, e_tile), 0))
        eq = node_ids == dst_ref[...]          # [n_tile, e_tile]; pad edges (dst=N) never match
        onehot = eq.astype(jnp.float32)

        # sum | sum-of-squares | degree in a single MXU pass (extra lane is free)
        rhs = jnp.concatenate(
            [msg, msg * msg, jnp.ones((e_tile, 1), jnp.float32)], axis=-1)
        acc_ss[...] += jnp.dot(onehot, rhs, preferred_element_type=jnp.float32)

        # masked min / max, F-chunked to bound the [n_tile, f_chunk, e_tile] temporaries
        mask = eq[:, None, :]                  # [n_tile, 1, e_tile]
        mins, maxs = [], []
        for c in range(0, f, f_chunk):
            blk = msg[:, c:c + f_chunk].T[None, :, :]      # [1, chunk, e_tile]
            mins.append(jnp.min(jnp.where(mask, blk, _BIG), axis=-1))
            maxs.append(jnp.max(jnp.where(mask, blk, -_BIG), axis=-1))
        acc_min[...] = jnp.minimum(acc_min[...], jnp.concatenate(mins, axis=-1))
        acc_max[...] = jnp.maximum(acc_max[...], jnp.concatenate(maxs, axis=-1))

    # finalize: scalers + (post_nn . lin) + ReLU (+ fused MLP head on last layer)
    @pl.when(ei == pl.num_programs(1) - 1)
    def _():
        ss = acc_ss[...]
        s, s2, deg = ss[:, :f], ss[:, f:2 * f], ss[:, 2 * f:2 * f + 1]
        deg_c = jnp.maximum(deg, 1.0)                          # clamp(min=1)
        inv_deg = pl.reciprocal(deg_c, approx=True)            # EUP, not VALU
        mean = s * inv_deg
        std = jnp.sqrt(jnp.maximum(s2 * inv_deg - mean * mean, 0.0) + 1e-5)
        has_edge = deg > 0.5
        mn = jnp.where(has_edge, acc_min[...], 0.0)
        mx = jnp.where(has_edge, acc_max[...], 0.0)

        agg = jnp.concatenate([mean, mn, mx, std], axis=-1)    # [n_tile, 4F]
        log_d = jnp.log(deg_c + 1.0)
        amp = log_d * (1.0 / avg_log)                          # amplification
        att = avg_log * pl.reciprocal(log_d, approx=True)      # attenuation
        agg_all = jnp.concatenate([agg, agg * amp, agg * att], axis=-1)  # [n_tile, 12F]

        # post_nn . lin folded into one affine; single wide K=13F matmul
        feat = jnp.concatenate([x_ref[...], agg_all], axis=-1)            # [n_tile, 13F]
        h = jnp.dot(feat, w_p_ref[...], preferred_element_type=jnp.float32) + b_p_ref[...]
        h = jnp.maximum(h, 0.0)                                # F.relu from Net.forward
        if with_mlp:
            # fused MLP head: Linear -> (Dropout=id) -> ReLU -> Linear -> LogSoftmax
            h = jnp.dot(h, w1_ref[...], preferred_element_type=jnp.float32) + b1_ref[...]
            h = jnp.maximum(h, 0.0)
            y = jnp.dot(h, w2_ref[...], preferred_element_type=jnp.float32) + b2_ref[...]
            z = y - jnp.max(y, axis=-1, keepdims=True)
            h = z - jnp.log(jnp.sum(jnp.exp(z), axis=-1, keepdims=True))
        o_ref[...] = h.astype(o_ref.dtype)


# --------------------------------------------------------------------------- wrapper

def pna_conv(edge_feat, dst2d, x, fp, etile_start, etile_count, *,
             mlp, avg_log, n_tile, e_tile, max_blocks, f_chunk=8):
    n, f_in = x.shape
    ef_dim = edge_feat.shape[1]
    hidden = int(fp["w_p"].shape[1])
    n_tiles = n // n_tile
    assert n % n_tile == 0
    with_mlp = mlp is not None
    out_dim = int(mlp["w2"].shape[1]) if with_mlp else hidden

    # data-dependent edge-block selection from the prefetched CSR tables
    def edge_block(ni, ei, starts, counts):
        return (starts[ni] + jnp.minimum(ei, counts[ni] - 1), 0)

    def dst_block(ni, ei, starts, counts):
        return (0, starts[ni] + jnp.minimum(ei, counts[ni] - 1))

    def node_block(ni, ei, starts, counts):
        return (ni, 0)

    def full_block(ni, ei, starts, counts):
        return (0, 0)

    in_specs = [
        pl.BlockSpec((e_tile, ef_dim), edge_block),            # [x_i | x_j | ea]
        pl.BlockSpec((1, e_tile), dst_block),                  # dst indices (int32)
        pl.BlockSpec((n_tile, f_in), node_block),              # x (self features)
        pl.BlockSpec(tuple(fp["w_m"].shape), full_block),      # folded message weight
        pl.BlockSpec(tuple(fp["b_m"].shape), full_block),
        pl.BlockSpec(tuple(fp["w_p"].shape), full_block),      # folded post_nn . lin
        pl.BlockSpec(tuple(fp["b_p"].shape), full_block),
    ]
    operands = [edge_feat, dst2d, x, fp["w_m"], fp["b_m"], fp["w_p"], fp["b_p"]]
    if with_mlp:
        mid = int(mlp["w1"].shape[1])
        in_specs += [
            pl.BlockSpec((hidden, mid), full_block),
            pl.BlockSpec((1, mid), full_block),
            pl.BlockSpec((mid, out_dim), full_block),
            pl.BlockSpec((1, out_dim), full_block),
        ]
        operands += [mlp["w1"], mlp["b1"].reshape(1, -1),
                     mlp["w2"], mlp["b2"].reshape(1, -1)]

    kernel = functools.partial(_pna_conv_kernel, n_tile=n_tile, f=f_in,
                               avg_log=avg_log, f_chunk=f_chunk, with_mlp=with_mlp)

    return pl.pallas_call(
        kernel,
        out_shape=jax.ShapeDtypeStruct((n, out_dim), jnp.float32),
        grid_spec=pltpu.PrefetchScalarGridSpec(
            num_scalar_prefetch=2,
            grid=(n_tiles, max_blocks),
            in_specs=in_specs,
            out_specs=pl.BlockSpec((n_tile, out_dim), node_block),
            scratch_shapes=[
                pltpu.VMEM((n_tile, 2 * f_in + 1), jnp.float32),  # sum | sum_sq | deg
                pltpu.VMEM((n_tile, f_in), jnp.float32),          # running min
                pltpu.VMEM((n_tile, f_in), jnp.float32),          # running max
            ]),
        compiler_params=pltpu.CompilerParams(
            dimension_semantics=("parallel", "arbitrary"),
            vmem_limit_bytes=_vmem_limit_bytes()),
    )(etile_start, etile_count, *operands)


# --------------------------------------------------------------------------- model

def net_forward(x, edge_attr, graph, params, *, avg_log, n_tile, e_tile,
                max_blocks, f_chunk=8):
    # F.dropout(..., training=False) and nn.Dropout in eval mode are identity.
    ea_pad = edge_attr[graph["edge_perm"]]        # CSR-permuted & padded edge_attr
    n_layers = len(params["convs"])
    for li, fp in enumerate(params["convs"]):
        # row gathers (JAX glue); edge features pre-concatenated for one edge matmul
        edge_feat = jnp.concatenate(
            [x[graph["dst_g"]], x[graph["src_g"]], ea_pad], axis=1)
        mlp = params["mlp"] if li == n_layers - 1 else None   # fuse MLP into last conv
        x = pna_conv(edge_feat, graph["dst2d"], x, fp,
                     graph["etile_start"], graph["etile_count"],
                     mlp=mlp, avg_log=avg_log, n_tile=n_tile, e_tile=e_tile,
                     max_blocks=max_blocks, f_chunk=f_chunk)
    return x


# --------------------------------------------------------------------------- host-side CSR

def build_csr_tiling(edge_index, n, n_tile, e_tile):
    """Sort edges by dst, group per node tile, pad each group to a multiple of
    e_tile with dummy edges (dst = n -> masked by the in-kernel one-hot)."""
    # TODO(synk): pad N to a multiple of n_tile (and slice pad rows off after the
    # MLP) for graphs where N % n_tile != 0 (real Cora).
    src = np.asarray(edge_index[0], np.int32)
    dst = np.asarray(edge_index[1], np.int32)
    order = np.argsort(dst, kind="stable").astype(np.int32)
    src_s, dst_s = src[order], dst[order]
    n_tiles = n // n_tile
    seg_src, seg_dst, seg_perm, starts, counts = [], [], [], [], []
    blk = 0
    for ti in range(n_tiles):
        lo = int(np.searchsorted(dst_s, ti * n_tile, side="left"))
        hi = int(np.searchsorted(dst_s, (ti + 1) * n_tile, side="left"))
        cnt = hi - lo
        nb = max(1, int(np.ceil(cnt / e_tile)))
        pad = nb * e_tile - cnt
        seg_src.append(np.concatenate([src_s[lo:hi], np.zeros(pad, np.int32)]))
        seg_dst.append(np.concatenate([dst_s[lo:hi], np.full(pad, n, np.int32)]))
        seg_perm.append(np.concatenate([order[lo:hi], np.zeros(pad, np.int32)]))
        starts.append(blk)
        counts.append(nb)
        blk += nb
    dst_pad = np.concatenate(seg_dst)
    return dict(
        src_g=jnp.asarray(np.concatenate(seg_src), jnp.int32),
        dst_g=jnp.asarray(np.minimum(dst_pad, n - 1), jnp.int32),   # safe gather index
        dst2d=jnp.asarray(dst_pad, jnp.int32).reshape(1, -1),       # raw (pads = n)
        edge_perm=jnp.asarray(np.concatenate(seg_perm), jnp.int32),
        etile_start=jnp.asarray(starts, jnp.int32),
        etile_count=jnp.asarray(counts, jnp.int32),
        max_blocks=int(max(counts)),
    )


# --------------------------------------------------------------------------- params

def make_conv_params(key, f_in, f_out, edge_dim):
    """Raw parameters in the PyTorch module's shapes (stored as (in, out))."""
    ks = jax.random.split(key, 8)
    s = 0.1
    return dict(
        w_edge=jax.random.normal(ks[0], (edge_dim, f_in), jnp.float32) * s,
        b_edge=jax.random.normal(ks[1], (f_in,), jnp.float32) * s,
        w_pre=jax.random.normal(ks[2], (3 * f_in, f_in), jnp.float32) * s,
        b_pre=jax.random.normal(ks[3], (f_in,), jnp.float32) * s,
        w_post=jax.random.normal(ks[4], (13 * f_in, f_out), jnp.float32) * s,  # (4*3+1)*F
        b_post=jax.random.normal(ks[5], (f_out,), jnp.float32) * s,
        w_lin=jax.random.normal(ks[6], (f_out, f_out), jnp.float32) * s,
        b_lin=jax.random.normal(ks[7], (f_out,), jnp.float32) * s,
    )


def fold_conv_params(p, f_in):
    """Exact host-side foldings:
      msg = [x_i,x_j,edge_encoder(ea)] @ W_pre + b_pre
          = [x_i|x_j|ea] @ [W_pre[:2F] ; W_edge @ W_pre[2F:]] + (b_edge@W_pre[2F:] + b_pre)
      (post_nn . lin)(z) = z @ (W_post @ W_lin) + (b_post @ W_lin + b_lin)
    """
    w_pre_e = p["w_pre"][2 * f_in:]
    w_m = jnp.concatenate([p["w_pre"][:2 * f_in], p["w_edge"] @ w_pre_e], axis=0)
    b_m = (p["b_edge"] @ w_pre_e + p["b_pre"]).reshape(1, -1)
    w_p = p["w_post"] @ p["w_lin"]
    b_p = (p["b_post"] @ p["w_lin"] + p["b_lin"]).reshape(1, -1)
    return dict(w_m=w_m, b_m=b_m, w_p=w_p, b_p=b_p)


if __name__ == "__main__":
    # small synthetic "Cora-like" problem
    N, E = 64, 256
    num_features, hidden, num_classes, edge_dim = 32, 32, 8, 4
    # Toy tiles. At real Cora scale raise e_tile (512-1024 on v5e/v6e, 256-512 on
    # v7x) and keep the node-tile count even for v7x megacore balance.
    N_TILE, E_TILE = 32, 128

    # synthetic graph: ring edges guarantee every node has >= 1 incoming edge;
    # extra edges are skewed toward the first node tile so the per-tile edge-block
    # counts differ (exercises the data-dependent CSR index_maps + pl.when skip).
    rng = np.random.RandomState(0)
    n_extra = E - N
    src = np.concatenate([(np.arange(N) + 1) % N,
                          rng.randint(0, N, size=n_extra)]).astype(np.int32)
    dst = np.concatenate([np.arange(N),
                          rng.randint(0, N // 2, size=n_extra // 2),
                          rng.randint(0, N, size=n_extra - n_extra // 2)]).astype(np.int32)
    edge_index = np.stack([src, dst])                                   # [2, E]

    # degree histogram -> avg log-degree (a constant computed in PNAConv.__init__)
    in_deg = np.bincount(dst, minlength=N)
    hist = np.bincount(in_deg).astype(np.float64)
    bins = np.arange(hist.shape[0], dtype=np.float64)
    avg_log = float((np.log(bins + 1.0) * hist).sum() / hist.sum())

    # host-side CSR tiling (static graph structure, shared by both conv layers)
    graph = build_csr_tiling(edge_index, N, N_TILE, E_TILE)
    max_blocks = graph.pop("max_blocks")

    # deterministic inputs & parameters
    key = jax.random.PRNGKey(0)
    kx, ke, kc0, kc1, km0, km1 = jax.random.split(key, 6)
    x = jax.random.normal(kx, (N, num_features), jnp.float32)
    edge_attr = jax.random.normal(ke, (E, edge_dim), jnp.float32)

    # g = ceil(geomspace(hidden, num_classes, mlp_layers+1)) = [32, 16, 8]
    params = dict(
        convs=[
            fold_conv_params(make_conv_params(kc0, num_features, hidden, edge_dim),
                             num_features),
            fold_conv_params(make_conv_params(kc1, hidden, hidden, edge_dim), hidden),
        ],
        mlp=dict(
            w1=jax.random.normal(km0, (hidden, 16), jnp.float32) * 0.1,
            b1=jnp.zeros((16,), jnp.float32),
            w2=jax.random.normal(km1, (16, num_classes), jnp.float32) * 0.1,
            b2=jnp.zeros((num_classes,), jnp.float32),
        ),
    )

    fwd = jax.jit(functools.partial(net_forward, avg_log=avg_log,
                                    n_tile=N_TILE, e_tile=E_TILE,
                                    max_blocks=max_blocks, f_chunk=8))
    out = fwd(x, edge_attr, graph, params)
    out = jax.block_until_ready(out)

    assert out.shape == (N, num_classes)
    assert bool(jnp.all(jnp.isfinite(out)))
    # rows of log_softmax must (log-)normalize to ~0
    assert bool(jnp.all(jnp.abs(jnp.sum(jnp.exp(out), axis=-1) - 1.0) < 1e-4))
    print("KERNEL_OK")
</pallas_src>

<mosaic_0001>
module attributes {stable_mosaic.version = 11 : i64} {
  func.func @_pna_conv_kernel(%arg0: i32, %arg1: i32, %arg2: memref<2xi32, #tpu.memory_space<smem>>, %arg3: memref<2xi32, #tpu.memory_space<smem>>, %arg4: memref<128x68xf32, #tpu.memory_space<vmem>>, %arg5: memref<1x128xi32, #tpu.memory_space<vmem>>, %arg6: memref<32x32xf32, #tpu.memory_space<vmem>>, %arg7: memref<68x32xf32, #tpu.memory_space<vmem>>, %arg8: memref<1x32xf32, #tpu.memory_space<vmem>>, %arg9: memref<416x32xf32, #tpu.memory_space<vmem>>, %arg10: memref<1x32xf32, #tpu.memory_space<vmem>>, %arg11: memref<32x32xf32, #tpu.memory_space<vmem>>, %arg12: memref<32x65xf32, #tpu.memory_space<vmem>>, %arg13: memref<32x32xf32, #tpu.memory_space<vmem>>, %arg14: memref<32x32xf32, #tpu.memory_space<vmem>>) attributes {dimension_semantics = [#tpu.dimension_semantics<parallel>, #tpu.dimension_semantics<arbitrary>], iteration_bounds = array<i64: 2, 2>, scalar_prefetch = 2 : i64, scratch_operands = 3 : i64, tpu.core_type = #tpu.core_type<tc>, window_params = [{transform_indices = @transform_0, window_bounds = array<i64: 128, 68>}, {transform_indices = @transform_1, window_bounds = array<i64: 1, 128>}, {transform_indices = @transform_2, window_bounds = array<i64: 32, 32>}, {pipeline_mode = #tpu.pipeline_mode<synchronous>, transform_indices = @transform_3, window_bounds = array<i64: 68, 32>}, {pipeline_mode = #tpu.pipeline_mode<synchronous>, transform_indices = @transform_4, window_bounds = array<i64: 1, 32>}, {pipeline_mode = #tpu.pipeline_mode<synchronous>, transform_indices = @transform_5, window_bounds = array<i64: 416, 32>}, {pipeline_mode = #tpu.pipeline_mode<synchronous>, transform_indices = @transform_6, window_bounds = array<i64: 1, 32>}, {transform_indices = @transform_7, window_bounds = array<i64: 32, 32>}]} {
    %c0_i32 = arith.constant 0 : i32
    %0 = arith.cmpi eq, %arg1, %c0_i32 : i32
    %1 = arith.extui %0 : i1 to i32
    %c0_i32_0 = arith.constant 0 : i32
    %2 = arith.cmpi ne, %1, %c0_i32_0 : i32
    scf.if %2 {
      %cst = arith.constant 0.000000e+00 : f32
      %11 = vector.broadcast %cst : f32 to vector<32x65xf32>
      %c0 = arith.constant 0 : index
      %c0_3 = arith.constant 0 : index
      %12 = vector.load %arg12[%c0, %c0_3] : memref<32x65xf32, #tpu.memory_space<vmem>>, vector<32x65xf32>
      tpu.vector_store %arg12[%c0, %c0_3], %11 {strides = array<i32>} : memref<32x65xf32, #tpu.memory_space<vmem>>, vector<32x65xf32>,
      %cst_4 = arith.constant 1.000000e+30 : f32
      %13 = vector.broadcast %cst_4 : f32 to vector<32x32xf32>
      %c0_5 = arith.constant 0 : index
      %c0_6 = arith.constant 0 : index
      %14 = vector.load %arg13[%c0_5, %c0_6] : memref<32x32xf32, #tpu.memory_space<vmem>>, vector<32x32xf32>
      tpu.vector_store %arg13[%c0_5, %c0_6], %13 {strides = array<i32>} : memref<32x32xf32, #tpu.memory_space<vmem>>, vector<32x32xf32>,
      %cst_7 = arith.constant -1.000000e+30 : f32
      %15 = vector.broadcast %cst_7 : f32 to vector<32x32xf32>
      %c0_8 = arith.constant 0 : index
      %c0_9 = arith.constant 0 : index
      %16 = vector.load %arg14[%c0_8, %c0_9] : memref<32x32xf32, #tpu.memory_space<vmem>>, vector<32x32xf32>
      tpu.vector_store %arg14[%c0_8, %c0_9], %15 {strides = array<i32>} : memref<32x32xf32, #tpu.memory_space<vmem>>, vector<32x32xf32>,
    } else {
    }
    %3 = arith.index_cast %arg0 : i32 to index
    %4 = memref.load %arg3[%3] : memref<2xi32, #tpu.memory_space<smem>>
    %5 = arith.cmpi slt, %arg1, %4 : i32
    %6 = arith.extui %5 : i1 to i32
    %c0_i32_1 = arith.constant 0 : i32
    %7 = arith.cmpi ne, %6, %c0_i32_1 : i32
    scf.if %7 {
      %c0 = arith.constant 0 : index
      %c0_3 = arith.constant 0 : index
      %11 = vector.load %arg4[%c0, %c0_3] : memref<128x68xf32, #tpu.memory_space<vmem>>, vector<128x68xf32>
      %c0_4 = arith.constant 0 : index
      %c0_5 = arith.constant 0 : index
      %12 = vector.load %arg7[%c0_4, %c0_5] : memref<68x32xf32, #tpu.memory_space<vmem>>, vector<68x32xf32>
      %cst = arith.constant dense<0.000000e+00> : vector<128x32xf32>
      %13 = tpu.matmul %11, %12, %cst {dimension_numbers = #tpu.dot_dimension_numbers<[1], [0], [0], [1], [0, 0, 1, 1], [], []>} : vector<128x68xf32>, vector<68x32xf32>, vector<128x32xf32> -> vector<128x32xf32>
      %c0_6 = arith.constant 0 : index
      %c0_7 = arith.constant 0 : index
      %14 = vector.load %arg8[%c0_6, %c0_7] : memref<1x32xf32, #tpu.memory_space<vmem>>, vector<1x32xf32>
      %15 = vector.broadcast %14 : vector<1x32xf32> to vector<128x32xf32>
      %16 = arith.addf %13, %15 : vector<128x32xf32>
      %c32_i32 = arith.constant 32 : i32
      %17 = arith.muli %arg0, %c32_i32 : i32
      %18 = tpu.iota {dimensions = array<i32: 0>} : vector<32x128xi32>
      %19 = vector.broadcast %17 : i32 to vector<32x128xi32>
      %20 = arith.addi %19, %18 : vector<32x128xi32>
      %c0_8 = arith.constant 0 : index
      %c0_9 = arith.constant 0 : index
      %21 = vector.load %arg5[%c0_8, %c0_9] : memref<1x128xi32, #tpu.memory_space<vmem>>, vector<1x128xi32>
      %22 = vector.broadcast %21 : vector<1x128xi32> to vector<32x128xi32>
      %23 = arith.cmpi eq, %20, %22 : vector<32x128xi32>
      %24 = arith.extui %23 : vector<32x128xi1> to vector<32x128xi32>
      %25 = arith.sitofp %24 : vector<32x128xi32> to vector<32x128xf32>
      %26 = arith.mulf %16, %16 : vector<128x32xf32>
      %cst_10 = arith.constant 1.000000e+00 : f32
      %27 = vector.broadcast %cst_10 : f32 to vector<128x1xf32>
      %28 = tpu.concatenate %16, %26, %27 in 1 : vector<128x32xf32>, vector<128x32xf32>, vector<128x1xf32> -> vector<128x65xf32>
      %c0_11 = arith.constant 0 : index
      %c0_12 = arith.constant 0 : index
      %29 = vector.load %arg12[%c0_11, %c0_12] : memref<32x65xf32, #tpu.memory_space<vmem>>, vector<32x65xf32>
      %cst_13 = arith.constant dense<0.000000e+00> : vector<32x65xf32>
      %30 = tpu.matmul %25, %28, %cst_13 {dimension_numbers = #tpu.dot_dimension_numbers<[1], [0], [0], [1], [0, 0, 1, 1], [], []>} : vector<32x128xf32>, vector<128x65xf32>, vector<32x65xf32> -> vector<32x65xf32>
      %31 = arith.addf %29, %30 : vector<32x65xf32>
      %c0_14 = arith.constant 0 : index
      %c0_15 = arith.constant 0 : index
      %32 = vector.load %arg12[%c0_14, %c0_15] : memref<32x65xf32, #tpu.memory_space<vmem>>, vector<32x65xf32>
      tpu.vector_store %arg12[%c0_14, %c0_15], %31 {strides = array<i32>} : memref<32x65xf32, #tpu.memory_space<vmem>>, vector<32x65xf32>,
      %33 = vector.shape_cast %23 : vector<32x128xi1> to vector<32x1x128xi1>
      %34 = vector.extract_strided_slice %16 {offsets = [0, 0], sizes = [128, 8], strides = [1, 1]} : vector<128x32xf32> to vector<128x8xf32>
      %35 = tpu.transpose %34, [1, 0] : vector<128x8xf32> -> vector<8x128xf32>
      %36 = vector.shape_cast %35 : vector<8x128xf32> to vector<1x8x128xf32>
      %cst_16 = arith.constant 1.000000e+30 : f32
      %37 = vector.shape_cast %33 : vector<32x1x128xi1> to vector<32x1x128xi1>
      %38 = vector.broadcast %37 : vector<32x1x128xi1> to vector<32x8x128xi1>
      %39 = vector.shape_cast %36 : vector<1x8x128xf32> to vector<1x8x128xf32>
      %40 = vector.broadcast %39 : vector<1x8x128xf32> to vector<32x8x128xf32>
      %41 = vector.broadcast %cst_16 : f32 to vector<32x8x128xf32>
      %42 = arith.select %38, %40, %41 : vector<32x8x128xi1>, vector<32x8x128xf32>
      %cst_17 = arith.constant dense<0x7F800000> : vector<32x8xf32>
      %43 = vector.multi_reduction <minimumf>, %42, %cst_17 [2] : vector<32x8x128xf32> to vector<32x8xf32>
      %cst_18 = arith.constant -1.000000e+30 : f32
      %44 = vector.shape_cast %33 : vector<32x1x128xi1> to vector<32x1x128xi1>
      %45 = vector.broadcast %44 : vector<32x1x128xi1> to vector<32x8x128xi1>
      %46 = vector.shape_cast %36 : vector<1x8x128xf32> to vector<1x8x128xf32>
      %47 = vector.broadcast %46 : vector<1x8x128xf32> to vector<32x8x128xf32>
      %48 = vector.broadcast %cst_18 : f32 to vector<32x8x128xf32>
      %49 = arith.select %45, %47, %48 : vector<32x8x128xi1>, vector<32x8x128xf32>
      %cst_19 = arith.constant dense<0xFF800000> : vector<32x8xf32>
      %50 = vector.multi_reduction <maximumf>, %49, %cst_19 [2] : vector<32x8x128xf32> to vector<32x8xf32>
      %51 = vector.extract_strided_slice %16 {offsets = [0, 8], sizes = [128, 8], strides = [1, 1]} : vector<128x32xf32> to vector<128x8xf32>
      %52 = tpu.transpose %51, [1, 0] : vector<128x8xf32> -> vector<8x128xf32>
      %53 = vector.shape_cast %52 : vector<8x128xf32> to vector<1x8x128xf32>
      %cst_20 = arith.constant 1.000000e+30 : f32
      %54 = vector.shape_cast %33 : vector<32x1x128xi1> to vector<32x1x128xi1>
      %55 = vector.broadcast %54 : vector<32x1x128xi1> to vector<32x8x128xi1>
      %56 = vector.shape_cast %53 : vector<1x8x128xf32> to vector<1x8x128xf32>
      %57 = vector.broadcast %56 : vector<1x8x128xf32> to vector<32x8x128xf32>
      %58 = vector.broadcast %cst_20 : f32 to vector<32x8x128xf32>
      %59 = arith.select %55, %57, %58 : vector<32x8x128xi1>, vector<32x8x128xf32>
      %cst_21 = arith.constant dense<0x7F800000> : vector<32x8xf32>
      %60 = vector.multi_reduction <minimumf>, %59, %cst_21 [2] : vector<32x8x128xf32> to vector<32x8xf32>
      %cst_22 = arith.constant -1.000000e+30 : f32
      %61 = vector.shape_cast %33 : vector<32x1x128xi1> to vector<32x1x128xi1>
      %62 = vector.broadcast %61 : vector<32x1x128xi1> to vector<32x8x128xi1>
      %63 = vector.shape_cast %53 : vector<1x8x128xf32> to vector<1x8x128xf32>
      %64 = vector.broadcast %63 : vector<1x8x128xf32> to vector<32x8x128xf32>
      %65 = vector.broadcast %cst_22 : f32 to vector<32x8x128xf32>
      %66 = arith.select %62, %64, %65 : vector<32x8x128xi1>, vector<32x8x128xf32>
      %cst_23 = arith.constant dense<0xFF800000> : vector<32x8xf32>
      %67 = vector.multi_reduction <maximumf>, %66, %cst_23 [2] : vector<32x8x128xf32> to vector<32x8xf32>
      %68 = vector.extract_strided_slice %16 {offsets = [0, 16], sizes = [128, 8], strides = [1, 1]} : vector<128x32xf32> to vector<128x8xf32>
      %69 = tpu.transpose %68, [1, 0] : vector<128x8xf32> -> vector<8x128xf32>
      %70 = vector.shape_cast %69 : vector<8x128xf32> to vector<1x8x128xf32>
      %cst_24 = arith.constant 1.000000e+30 : f32
      %71 = vector.shape_cast %33 : vector<32x1x128xi1> to vector<32x1x128xi1>
      %72 = vector.broadcast %71 : vector<32x1x128xi1> to vector<32x8x128xi1>
      %73 = vector.shape_cast %70 : vector<1x8x128xf32> to vector<1x8x128xf32>
      %74 = vector.broadcast %73 : vector<1x8x128xf32> to vector<32x8x128xf32>
      %75 = vector.broadcast %cst_24 : f32 to vector<32x8x128xf32>
      %76 = arith.select %72, %74, %75 : vector<32x8x128xi1>, vector<32x8x128xf32>
      %cst_25 = arith.constant dense<0x7F800000> : vector<32x8xf32>
      %77 = vector.multi_reduction <minimumf>, %76, %cst_25 [2] : vector<32x8x128xf32> to vector<32x8xf32>
      %cst_26 = arith.constant -1.000000e+30 : f32
      %78 = vector.shape_cast %33 : vector<32x1x128xi1> to vector<32x1x128xi1>
      %79 = vector.broadcast %78 : vector<32x1x128xi1> to vector<32x8x128xi1>
      %80 = vector.shape_cast %70 : vector<1x8x128xf32> to vector<1x8x128xf32>
      %81 = vector.broadcast %80 : vector<1x8x128xf32> to vector<32x8x128xf32>
      %82 = vector.broadcast %cst_26 : f32 to vector<32x8x128xf32>
      %83 = arith.select %79, %81, %82 : vector<32x8x128xi1>, vector<32x8x128xf32>
      %cst_27 = arith.constant dense<0xFF800000> : vector<32x8xf32>
      %84 = vector.multi_reduction <maximumf>, %83, %cst_27 [2] : vector<32x8x128xf32> to vector<32x8xf32>
      %85 = vector.extract_strided_slice %16 {offsets = [0, 24], sizes = [128, 8], strides = [1, 1]} : vector<128x32xf32> to vector<128x8xf32>
      %86 = tpu.transpose %85, [1, 0] : vector<128x8xf32> -> vector<8x128xf32>
      %87 = vector.shape_cast %86 : vector<8x128xf32> to vector<1x8x128xf32>
      %cst_28 = arith.constant 1.000000e+30 : f32
      %88 = vector.shape_cast %33 : vector<32x1x128xi1> to vector<32x1x128xi1>
      %89 = vector.broadcast %88 : vector<32x1x128xi1> to vector<32x8x128xi1>
      %90 = vector.shape_cast %87 : vector<1x8x128xf32> to vector<1x8x128xf32>
      %91 = vector.broadcast %90 : vector<1x8x128xf32> to vector<32x8x128xf32>
      %92 = vector.broadcast %cst_28 : f32 to vector<32x8x128xf32>
      %93 = arith.select %89, %91, %92 : vector<32x8x128xi1>, vector<32x8x128xf32>
      %cst_29 = arith.constant dense<0x7F800000> : vector<32x8xf32>
      %94 = vector.multi_reduction <minimumf>, %93, %cst_29 [2] : vector<32x8x128xf32> to vector<32x8xf32>
      %cst_30 = arith.constant -1.000000e+30 : f32
      %95 = vector.shape_cast %33 : vector<32x1x128xi1> to vector<32x1x128xi1>
      %96 = vector.broadcast %95 : vector<32x1x128xi1> to vector<32x8x128xi1>
      %97 = vector.shape_cast %87 : vector<1x8x128xf32> to vector<1x8x128xf32>
      %98 = vector.broadcast %97 : vector<1x8x128xf32> to vector<32x8x128xf32>
      %99 = vector.broadcast %cst_30 : f32 to vector<32x8x128xf32>
      %100 = arith.select %96, %98, %99 : vector<32x8x128xi1>, vector<32x8x128xf32>
      %cst_31 = arith.constant dense<0xFF800000> : vector<32x8xf32>
      %101 = vector.multi_reduction <maximumf>, %100, %cst_31 [2] : vector<32x8x128xf32> to vector<32x8xf32>
      %c0_32 = arith.constant 0 : index
      %c0_33 = arith.constant 0 : index
      %102 = vector.load %arg13[%c0_32, %c0_33] : memref<32x32xf32, #tpu.memory_space<vmem>>, vector<32x32xf32>
      %103 = tpu.concatenate %43, %60, %77, %94 in 1 : vector<32x8xf32>, vector<32x8xf32>, vector<32x8xf32>, vector<32x8xf32> -> vector<32x32xf32>
      %104 = arith.minimumf %102, %103 : vector<32x32xf32>
      %c0_34 = arith.constant 0 : index
      %c0_35 = arith.constant 0 : index
      %105 = vector.load %arg13[%c0_34, %c0_35] : memref<32x32xf32, #tpu.memory_space<vmem>>, vector<32x32xf32>
      tpu.vector_store %arg13[%c0_34, %c0_35], %104 {strides = array<i32>} : memref<32x32xf32, #tpu.memory_space<vmem>>, vector<32x32xf32>,
      %c0_36 = arith.constant 0 : index
      %c0_37 = arith.constant 0 : index
      %106 = vector.load %arg14[%c0_36, %c0_37] : memref<32x32xf32, #tpu.memory_space<vmem>>, vector<32x32xf32>
      %107 = tpu.concatenate %50, %67, %84, %101 in 1 : vector<32x8xf32>, vector<32x8xf32>, vector<32x8xf32>, vector<32x8xf32> -> vector<32x32xf32>
      %108 = arith.maximumf %106, %107 : vector<32x32xf32>
      %c0_38 = arith.constant 0 : index
      %c0_39 = arith.constant 0 : index
      %109 = vector.load %arg14[%c0_38, %c0_39] : memref<32x32xf32, #tpu.memory_space<vmem>>, vector<32x32xf32>
      tpu.vector_store %arg14[%c0_38, %c0_39], %108 {strides = array<i32>} : memref<32x32xf32, #tpu.memory_space<vmem>>, vector<32x32xf32>,
    } else {
    }
    %c1_i32 = arith.constant 1 : i32
    %8 = arith.cmpi eq, %arg1, %c1_i32 : i32
    %9 = arith.extui %8 : i1 to i32
    %c0_i32_2 = arith.constant 0 : i32
    %10 = arith.cmpi ne, %9, %c0_i32_2 : i32
    scf.if %10 {
      %c0 = arith.constant 0 : index
      %c0_3 = arith.constant 0 : index
      %11 = vector.load %arg12[%c0, %c0_3] : memref<32x65xf32, #tpu.memory_space<vmem>>, vector<32x65xf32>
      %12 = vector.extract_strided_slice %11 {offsets = [0, 0], sizes = [32, 32], strides = [1, 1]} : vector<32x65xf32> to vector<32x32xf32>
      %13 = vector.extract_strided_slice %11 {offsets = [0, 32], sizes = [32, 32], strides = [1, 1]} : vector<32x65xf32> to vector<32x32xf32>
      %14 = vector.extract_strided_slice %11 {offsets = [0, 64], sizes = [32, 1], strides = [1, 1]} : vector<32x65xf32> to vector<32x1xf32>
      %cst = arith.constant 1.000000e+00 : f32
      %15 = vector.broadcast %cst : f32 to vector<32x1xf32>
      %16 = arith.maximumf %14, %15 : vector<32x1xf32>
      %17 = tpu.reciprocal %16 {approx = true} : vector<32x1xf32> -> vector<32x1xf32>
      %18 = vector.broadcast %17 : vector<32x1xf32> to vector<32x32xf32>
      %19 = arith.mulf %12, %18 : vector<32x32xf32>
      %20 = vector.broadcast %17 : vector<32x1xf32> to vector<32x32xf32>
      %21 = arith.mulf %13, %20 : vector<32x32xf32>
      %22 = arith.mulf %19, %19 : vector<32x32xf32>
      %23 = arith.subf %21, %22 : vector<32x32xf32>
      %cst_4 = arith.constant 0.000000e+00 : f32
      %24 = vector.broadcast %cst_4 : f32 to vector<32x32xf32>
      %25 = arith.maximumf %23, %24 : vector<32x32xf32>
      %cst_5 = arith.constant 9.99999974E-6 : f32
      %26 = vector.broadcast %cst_5 : f32 to vector<32x32xf32>
      %27 = arith.addf %25, %26 : vector<32x32xf32>
      %28 = math.sqrt %27 : vector<32x32xf32>
      %cst_6 = arith.constant 5.000000e-01 : f32
      %29 = vector.broadcast %cst_6 : f32 to vector<32x1xf32>
      %30 = arith.cmpf ogt, %14, %29 : vector<32x1xf32>
      %c0_7 = arith.constant 0 : index
      %c0_8 = arith.constant 0 : index
      %31 = vector.load %arg13[%c0_7, %c0_8] : memref<32x32xf32, #tpu.memory_space<vmem>>, vector<32x32xf32>
      %cst_9 = arith.constant 0.000000e+00 : f32
      %32 = vector.shape_cast %30 : vector<32x1xi1> to vector<32x1xi1>
      %33 = vector.broadcast %32 : vector<32x1xi1> to vector<32x32xi1>
      %34 = vector.broadcast %cst_9 : f32 to vector<32x32xf32>
      %35 = arith.select %33, %31, %34 : vector<32x32xi1>, vector<32x32xf32>
      %c0_10 = arith.constant 0 : index
      %c0_11 = arith.constant 0 : index
      %36 = vector.load %arg14[%c0_10, %c0_11] : memref<32x32xf32, #tpu.memory_space<vmem>>, vector<32x32xf32>
      %cst_12 = arith.constant 0.000000e+00 : f32
      %37 = vector.shape_cast %30 : vector<32x1xi1> to vector<32x1xi1>
      %38 = vector.broadcast %37 : vector<32x1xi1> to vector<32x32xi1>
      %39 = vector.broadcast %cst_12 : f32 to vector<32x32xf32>
      %40 = arith.select %38, %36, %39 : vector<32x32xi1>, vector<32x32xf32>
      %41 = tpu.concatenate %19, %35, %40, %28 in 1 : vector<32x32xf32>, vector<32x32xf32>, vector<32x32xf32>, vector<32x32xf32> -> vector<32x128xf32>
      %cst_13 = arith.constant 1.000000e+00 : f32
      %42 = vector.broadcast %cst_13 : f32 to vector<32x1xf32>
      %43 = arith.addf %16, %42 : vector<32x1xf32>
      %44 = math.log %43 : vector<32x1xf32>
      %cst_14 = arith.constant 0.660282552 : f32
      %45 = vector.broadcast %cst_14 : f32 to vector<32x1xf32>
      %46 = arith.mulf %44, %45 : vector<32x1xf32>
      %47 = tpu.reciprocal %44 {approx = true} : vector<32x1xf32> -> vector<32x1xf32>
      %cst_15 = arith.constant 1.51450312 : f32
      %48 = vector.broadcast %cst_15 : f32 to vector<32x1xf32>
      %49 = arith.mulf %48, %47 : vector<32x1xf32>
      %50 = vector.broadcast %46 : vector<32x1xf32> to vector<32x128xf32>
      %51 = arith.mulf %41, %50 : vector<32x128xf32>
      %52 = vector.broadcast %49 : vector<32x1xf32> to vector<32x128xf32>
      %53 = arith.mulf %41, %52 : vector<32x128xf32>
      %54 = tpu.concatenate %41, %51, %53 in 1 : vector<32x128xf32>, vector<32x128xf32>, vector<32x128xf32> -> vector<32x384xf32>
      %c0_16 = arith.constant 0 : index
      %c0_17 = arith.constant 0 : index
      %55 = vector.load %arg6[%c0_16, %c0_17] : memref<32x32xf32, #tpu.memory_space<vmem>>, vector<32x32xf32>
      %56 = tpu.concatenate %55, %54 in 1 : vector<32x32xf32>, vector<32x384xf32> -> vector<32x416xf32>
      %c0_18 = arith.constant 0 : index
      %c0_19 = arith.constant 0 : index
      %57 = vector.load %arg9[%c0_18, %c0_19] : memref<416x32xf32, #tpu.memory_space<vmem>>, vector<416x32xf32>
      %cst_20 = arith.constant dense<0.000000e+00> : vector<32x32xf32>
      %58 = tpu.matmul %56, %57, %cst_20 {dimension_numbers = #tpu.dot_dimension_numbers<[1], [0], [0], [1], [0, 0, 1, 1], [], []>} : vector<32x416xf32>, vector<416x32xf32>, vector<32x32xf32> -> vector<32x32xf32>
      %c0_21 = arith.constant 0 : index
      %c0_22 = arith.constant 0 : index
      %59 = vector.load %arg10[%c0_21, %c0_22] : memref<1x32xf32, #tpu.memory_space<vmem>>, vector<1x32xf32>
      %60 = vector.broadcast %59 : vector<1x32xf32> to vector<32x32xf32>
      %61 = arith.addf %58, %60 : vector<32x32xf32>
      %cst_23 = arith.constant 0.000000e+00 : f32
      %62 = vector.broadcast %cst_23 : f32 to vector<32x32xf32>
      %63 = arith.maximumf %61, %62 : vector<32x32xf32>
      %c0_24 = arith.constant 0 : index
      %c0_25 = arith.constant 0 : index
      %64 = vector.load %arg11[%c0_24, %c0_25] : memref<32x32xf32, #tpu.memory_space<vmem>>, vector<32x32xf32>
      tpu.vector_store %arg11[%c0_24, %c0_25], %63 {strides = array<i32>} : memref<32x32xf32, #tpu.memory_space<vmem>>, vector<32x32xf32>,
    } else {
    }
    return
  }
  func.func @transform_0(%arg0: i32, %arg1: i32, %arg2: memref<2xi32, #tpu.memory_space<smem>>, %arg3: memref<2xi32, #tpu.memory_space<smem>>) -> (i32, i32) {
    %0 = arith.index_cast %arg0 : i32 to index
    %1 = memref.load %arg2[%0] : memref<2xi32, #tpu.memory_space<smem>>
    %2 = arith.index_cast %arg0 : i32 to index
    %3 = memref.load %arg3[%2] : memref<2xi32, #tpu.memory_space<smem>>
    %c1_i32 = arith.constant 1 : i32
    %4 = arith.subi %3, %c1_i32 : i32
    %5 = arith.minsi %arg1, %4 : i32
    %6 = arith.addi %1, %5 : i32
    %c0_i32 = arith.constant 0 : i32
    %c0_i32_0 = arith.constant 0 : i32
    return %6, %c0_i32 : i32, i32
  }
  func.func @transform_1(%arg0: i32, %arg1: i32, %arg2: memref<2xi32, #tpu.memory_space<smem>>, %arg3: memref<2xi32, #tpu.memory_space<smem>>) -> (i32, i32) {
    %0 = arith.index_cast %arg0 : i32 to index
    %1 = memref.load %arg2[%0] : memref<2xi32, #tpu.memory_space<smem>>
    %2 = arith.index_cast %arg0 : i32 to index
    %3 = memref.load %arg3[%2] : memref<2xi32, #tpu.memory_space<smem>>
    %c1_i32 = arith.constant 1 : i32
    %4 = arith.subi %3, %c1_i32 : i32
    %5 = arith.minsi %arg1, %4 : i32
    %6 = arith.addi %1, %5 : i32
    %c0_i32 = arith.constant 0 : i32
    %c0_i32_0 = arith.constant 0 : i32
    return %c0_i32, %6 : i32, i32
  }
  func.func @transform_2(%arg0: i32, %arg1: i32, %arg2: memref<2xi32, #tpu.memory_space<smem>>, %arg3: memref<2xi32, #tpu.memory_space<smem>>) -> (i32, i32) {
    %c0_i32 = arith.constant 0 : i32
    %c0_i32_0 = arith.constant 0 : i32
    return %arg0, %c0_i32 : i32, i32
  }
  func.func @transform_3(%arg0: i32, %arg1: i32, %arg2: memref<2xi32, #tpu.memory_space<smem>>, %arg3: memref<2xi32, #tpu.memory_space<smem>>) -> (i32, i32) {
    %c0_i32 = arith.constant 0 : i32
    %c0_i32_0 = arith.constant 0 : i32
    %c0_i32_1 = arith.constant 0 : i32
    return %c0_i32, %c0_i32_0 : i32, i32
  }
  func.func @transform_4(%arg0: i32, %arg1: i32, %arg2: memref<2xi32, #tpu.memory_space<smem>>, %arg3: memref<2xi32, #tpu.memory_space<smem>>) -> (i32, i32) {
    %c0_i32 = arith.constant 0 : i32
    %c0_i32_0 = arith.constant 0 : i32
    %c0_i32_1 = arith.constant 0 : i32
    return %c0_i32, %c0_i32_0 : i32, i32
  }
  func.func @transform_5(%arg0: i32, %arg1: i32, %arg2: memref<2xi32, #tpu.memory_space<smem>>, %arg3: memref<2xi32, #tpu.memory_space<smem>>) -> (i32, i32) {
    %c0_i32 = arith.constant 0 : i32
    %c0_i32_0 = arith.constant 0 : i32
    %c0_i32_1 = arith.constant 0 : i32
    return %c0_i32, %c0_i32_0 : i32, i32
  }
  func.func @transform_6(%arg0: i32, %arg1: i32, %arg2: memref<2xi32, #tpu.memory_space<smem>>, %arg3: memref<2xi32, #tpu.memory_space<smem>>) -> (i32, i32) {
    %c0_i32 = arith.constant 0 : i32
    %c0_i32_0 = arith.constant 0 : i32
    %c0_i32_1 = arith.constant 0 : i32
    return %c0_i32, %c0_i32_0 : i32, i32
  }
  func.func @transform_7(%arg0: i32, %arg1: i32, %arg2: memref<2xi32, #tpu.memory_space<smem>>, %arg3: memref<2xi32, #tpu.memory_space<smem>>) -> (i32, i32) {
    %c0_i32 = arith.constant 0 : i32
    %c0_i32_0 = arith.constant 0 : i32
    return %arg0, %c0_i32 : i32, i32
  }
}

module attributes {stable_mosaic.version = 11 : i64} {
  func.func @_pna_conv_kernel(%arg0: i32, %arg1: i32, %arg2: memref<2xi32, #tpu.memory_space<smem>>, %arg3: memref<2xi32, #tpu.memory_space<smem>>, %arg4: memref<128x68xf32, #tpu.memory_space<vmem>>, %arg5: memref<1x128xi32, #tpu.memory_space<vmem>>, %arg6: memref<32x32xf32, #tpu.memory_space<vmem>>, %arg7: memref<68x32xf32, #tpu.memory_space<vmem>>, %arg8: memref<1x32xf32, #tpu.memory_space<vmem>>, %arg9: memref<416x32xf32, #tpu.memory_space<vmem>>, %arg10: memref<1x32xf32, #tpu.memory_space<vmem>>, %arg11: memref<32x16xf32, #tpu.memory_space<vmem>>, %arg12: memref<1x16xf32, #tpu.memory_space<vmem>>, %arg13: memref<16x8xf32, #tpu.memory_space<vmem>>, %arg14: memref<1x8xf32, #tpu.memory_space<vmem>>, %arg15: memref<32x8xf32, #tpu.memory_space<vmem>>, %arg16: memref<32x65xf32, #tpu.memory_space<vmem>>, %arg17: memref<32x32xf32, #tpu.memory_space<vmem>>, %arg18: memref<32x32xf32, #tpu.memory_space<vmem>>) attributes {dimension_semantics = [#tpu.dimension_semantics<parallel>, #tpu.dimension_semantics<arbitrary>], iteration_bounds = array<i64: 2, 2>, scalar_prefetch = 2 : i64, scratch_operands = 3 : i64, tpu.core_type = #tpu.core_type<tc>, window_params = [{transform_indices = @transform_0, window_bounds = array<i64: 128, 68>}, {transform_indices = @transform_1, window_bounds = array<i64: 1, 128>}, {transform_indices = @transform_2, window_bounds = array<i64: 32, 32>}, {pipeline_mode = #tpu.pipeline_mode<synchronous>, transform_indices = @transform_3, window_bounds = array<i64: 68, 32>}, {pipeline_mode = #tpu.pipeline_mode<synchronous>, transform_indices = @transform_4, window_bounds = array<i64: 1, 32>}, {pipeline_mode = #tpu.pipeline_mode<synchronous>, transform_indices = @transform_5, window_bounds = array<i64: 416, 32>}, {pipeline_mode = #tpu.pipeline_mode<synchronous>, transform_indices = @transform_6, window_bounds = array<i64: 1, 32>}, {pipeline_mode = #tpu.pipeline_mode<synchronous>, transform_indices = @transform_7, window_bounds = array<i64: 32, 16>}, {pipeline_mode = #tpu.pipeline_mode<synchronous>, transform_indices = @transform_8, window_bounds = array<i64: 1, 16>}, {pipeline_mode = #tpu.pipeline_mode<synchronous>, transform_indices = @transform_9, window_bounds = array<i64: 16, 8>}, {pipeline_mode = #tpu.pipeline_mode<synchronous>, transform_indices = @transform_10, window_bounds = array<i64: 1, 8>}, {transform_indices = @transform_11, window_bounds = array<i64: 32, 8>}]} {
    %c0_i32 = arith.constant 0 : i32
    %0 = arith.cmpi eq, %arg1, %c0_i32 : i32
    %1 = arith.extui %0 : i1 to i32
    %c0_i32_0 = arith.constant 0 : i32
    %2 = arith.cmpi ne, %1, %c0_i32_0 : i32
    scf.if %2 {
      %cst = arith.constant 0.000000e+00 : f32
      %11 = vector.broadcast %cst : f32 to vector<32x65xf32>
      %c0 = arith.constant 0 : index
      %c0_3 = arith.constant 0 : index
      %12 = vector.load %arg16[%c0, %c0_3] : memref<32x65xf32, #tpu.memory_space<vmem>>, vector<32x65xf32>
      tpu.vector_store %arg16[%c0, %c0_3], %11 {strides = array<i32>} : memref<32x65xf32, #tpu.memory_space<vmem>>, vector<32x65xf32>,
      %cst_4 = arith.constant 1.000000e+30 : f32
      %13 = vector.broadcast %cst_4 : f32 to vector<32x32xf32>
      %c0_5 = arith.constant 0 : index
      %c0_6 = arith.constant 0 : index
      %14 = vector.load %arg17[%c0_5, %c0_6] : memref<32x32xf32, #tpu.memory_space<vmem>>, vector<32x32xf32>
      tpu.vector_store %arg17[%c0_5, %c0_6], %13 {strides = array<i32>} : memref<32x32xf32, #tpu.memory_space<vmem>>, vector<32x32xf32>,
      %cst_7 = arith.constant -1.000000e+30 : f32
      %15 = vector.broadcast %cst_7 : f32 to vector<32x32xf32>
      %c0_8 = arith.constant 0 : index
      %c0_9 = arith.constant 0 : index
      %16 = vector.load %arg18[%c0_8, %c0_9] : memref<32x32xf32, #tpu.memory_space<vmem>>, vector<32x32xf32>
      tpu.vector_store %arg18[%c0_8, %c0_9], %15 {strides = array<i32>} : memref<32x32xf32, #tpu.memory_space<vmem>>, vector<32x32xf32>,
    } else {
    }
    %3 = arith.index_cast %arg0 : i32 to index
    %4 = memref.load %arg3[%3] : memref<2xi32, #tpu.memory_space<smem>>
    %5 = arith.cmpi slt, %arg1, %4 : i32
    %6 = arith.extui %5 : i1 to i32
    %c0_i32_1 = arith.constant 0 : i32
    %7 = arith.cmpi ne, %6, %c0_i32_1 : i32
    scf.if %7 {
      %c0 = arith.constant 0 : index
      %c0_3 = arith.constant 0 : index
      %11 = vector.load %arg4[%c0, %c0_3] : memref<128x68xf32, #tpu.memory_space<vmem>>, vector<128x68xf32>
      %c0_4 = arith.constant 0 : index
      %c0_5 = arith.constant 0 : index
      %12 = vector.load %arg7[%c0_4, %c0_5] : memref<68x32xf32, #tpu.memory_space<vmem>>, vector<68x32xf32>
      %cst = arith.constant dense<0.000000e+00> : vector<128x32xf32>
      %13 = tpu.matmul %11, %12, %cst {dimension_numbers = #tpu.dot_dimension_numbers<[1], [0], [0], [1], [0, 0, 1, 1], [], []>} : vector<128x68xf32>, vector<68x32xf32>, vector<128x32xf32> -> vector<128x32xf32>
      %c0_6 = arith.constant 0 : index
      %c0_7 = arith.constant 0 : index
      %14 = vector.load %arg8[%c0_6, %c0_7] : memref<1x32xf32, #tpu.memory_space<vmem>>, vector<1x32xf32>
      %15 = vector.broadcast %14 : vector<1x32xf32> to vector<128x32xf32>
      %16 = arith.addf %13, %15 : vector<128x32xf32>
      %c32_i32 = arith.constant 32 : i32
      %17 = arith.muli %arg0, %c32_i32 : i32
      %18 = tpu.iota {dimensions = array<i32: 0>} : vector<32x128xi32>
      %19 = vector.broadcast %17 : i32 to vector<32x128xi32>
      %20 = arith.addi %19, %18 : vector<32x128xi32>
      %c0_8 = arith.constant 0 : index
      %c0_9 = arith.constant 0 : index
      %21 = vector.load %arg5[%c0_8, %c0_9] : memref<1x128xi32, #tpu.memory_space<vmem>>, vector<1x128xi32>
      %22 = vector.broadcast %21 : vector<1x128xi32> to vector<32x128xi32>
      %23 = arith.cmpi eq, %20, %22 : vector<32x128xi32>
      %24 = arith.extui %23 : vector<32x128xi1> to vector<32x128xi32>
      %25 = arith.sitofp %24 : vector<32x128xi32> to vector<32x128xf32>
      %26 = arith.mulf %16, %16 : vector<128x32xf32>
      %cst_10 = arith.constant 1.000000e+00 : f32
      %27 = vector.broadcast %cst_10 : f32 to vector<128x1xf32>
      %28 = tpu.concatenate %16, %26, %27 in 1 : vector<128x32xf32>, vector<128x32xf32>, vector<128x1xf32> -> vector<128x65xf32>
      %c0_11 = arith.constant 0 : index
      %c0_12 = arith.constant 0 : index
      %29 = vector.load %arg16[%c0_11, %c0_12] : memref<32x65xf32, #tpu.memory_space<vmem>>, vector<32x65xf32>
      %cst_13 = arith.constant dense<0.000000e+00> : vector<32x65xf32>
      %30 = tpu.matmul %25, %28, %cst_13 {dimension_numbers = #tpu.dot_dimension_numbers<[1], [0], [0], [1], [0, 0, 1, 1], [], []>} : vector<32x128xf32>, vector<128x65xf32>, vector<32x65xf32> -> vector<32x65xf32>
      %31 = arith.addf %29, %30 : vector<32x65xf32>
      %c0_14 = arith.constant 0 : index
      %c0_15 = arith.constant 0 : index
      %32 = vector.load %arg16[%c0_14, %c0_15] : memref<32x65xf32, #tpu.memory_space<vmem>>, vector<32x65xf32>
      tpu.vector_store %arg16[%c0_14, %c0_15], %31 {strides = array<i32>} : memref<32x65xf32, #tpu.memory_space<vmem>>, vector<32x65xf32>,
      %33 = vector.shape_cast %23 : vector<32x128xi1> to vector<32x1x128xi1>
      %34 = vector.extract_strided_slice %16 {offsets = [0, 0], sizes = [128, 8], strides = [1, 1]} : vector<128x32xf32> to vector<128x8xf32>
      %35 = tpu.transpose %34, [1, 0] : vector<128x8xf32> -> vector<8x128xf32>
      %36 = vector.shape_cast %35 : vector<8x128xf32> to vector<1x8x128xf32>
      %cst_16 = arith.constant 1.000000e+30 : f32
      %37 = vector.shape_cast %33 : vector<32x1x128xi1> to vector<32x1x128xi1>
      %38 = vector.broadcast %37 : vector<32x1x128xi1> to vector<32x8x128xi1>
      %39 = vector.shape_cast %36 : vector<1x8x128xf32> to vector<1x8x128xf32>
      %40 = vector.broadcast %39 : vector<1x8x128xf32> to vector<32x8x128xf32>
      %41 = vector.broadcast %cst_16 : f32 to vector<32x8x128xf32>
      %42 = arith.select %38, %40, %41 : vector<32x8x128xi1>, vector<32x8x128xf32>
      %cst_17 = arith.constant dense<0x7F800000> : vector<32x8xf32>
      %43 = vector.multi_reduction <minimumf>, %42, %cst_17 [2] : vector<32x8x128xf32> to vector<32x8xf32>
      %cst_18 = arith.constant -1.000000e+30 : f32
      %44 = vector.shape_cast %33 : vector<32x1x128xi1> to vector<32x1x128xi1>
      %45 = vector.broadcast %44 : vector<32x1x128xi1> to vector<32x8x128xi1>
      %46 = vector.shape_cast %36 : vector<1x8x128xf32> to vector<1x8x128xf32>
      %47 = vector.broadcast %46 : vector<1x8x128xf32> to vector<32x8x128xf32>
      %48 = vector.broadcast %cst_18 : f32 to vector<32x8x128xf32>
      %49 = arith.select %45, %47, %48 : vector<32x8x128xi1>, vector<32x8x128xf32>
      %cst_19 = arith.constant dense<0xFF800000> : vector<32x8xf32>
      %50 = vector.multi_reduction <maximumf>, %49, %cst_19 [2] : vector<32x8x128xf32> to vector<32x8xf32>
      %51 = vector.extract_strided_slice %16 {offsets = [0, 8], sizes = [128, 8], strides = [1, 1]} : vector<128x32xf32> to vector<128x8xf32>
      %52 = tpu.transpose %51, [1, 0] : vector<128x8xf32> -> vector<8x128xf32>
      %53 = vector.shape_cast %52 : vector<8x128xf32> to vector<1x8x128xf32>
      %cst_20 = arith.constant 1.000000e+30 : f32
      %54 = vector.shape_cast %33 : vector<32x1x128xi1> to vector<32x1x128xi1>
      %55 = vector.broadcast %54 : vector<32x1x128xi1> to vector<32x8x128xi1>
      %56 = vector.shape_cast %53 : vector<1x8x128xf32> to vector<1x8x128xf32>
      %57 = vector.broadcast %56 : vector<1x8x128xf32> to vector<32x8x128xf32>
      %58 = vector.broadcast %cst_20 : f32 to vector<32x8x128xf32>
      %59 = arith.select %55, %57, %58 : vector<32x8x128xi1>, vector<32x8x128xf32>
      %cst_21 = arith.constant dense<0x7F800000> : vector<32x8xf32>
      %60 = vector.multi_reduction <minimumf>, %59, %cst_21 [2] : vector<32x8x128xf32> to vector<32x8xf32>
      %cst_22 = arith.constant -1.000000e+30 : f32
      %61 = vector.shape_cast %33 : vector<32x1x128xi1> to vector<32x1x128xi1>
      %62 = vector.broadcast %61 : vector<32x1x128xi1> to vector<32x8x128xi1>
      %63 = vector.shape_cast %53 : vector<1x8x128xf32> to vector<1x8x128xf32>
      %64 = vector.broadcast %63 : vector<1x8x128xf32> to vector<32x8x128xf32>
      %65 = vector.broadcast %cst_22 : f32 to vector<32x8x128xf32>
      %66 = arith.select %62, %64, %65 : vector<32x8x128xi1>, vector<32x8x128xf32>
      %cst_23 = arith.constant dense<0xFF800000> : vector<32x8xf32>
      %67 = vector.multi_reduction <maximumf>, %66, %cst_23 [2] : vector<32x8x128xf32> to vector<32x8xf32>
      %68 = vector.extract_strided_slice %16 {offsets = [0, 16], sizes = [128, 8], strides = [1, 1]} : vector<128x32xf32> to vector<128x8xf32>
      %69 = tpu.transpose %68, [1, 0] : vector<128x8xf32> -> vector<8x128xf32>
      %70 = vector.shape_cast %69 : vector<8x128xf32> to vector<1x8x128xf32>
      %cst_24 = arith.constant 1.000000e+30 : f32
      %71 = vector.shape_cast %33 : vector<32x1x128xi1> to vector<32x1x128xi1>
      %72 = vector.broadcast %71 : vector<32x1x128xi1> to vector<32x8x128xi1>
      %73 = vector.shape_cast %70 : vector<1x8x128xf32> to vector<1x8x128xf32>
      %74 = vector.broadcast %73 : vector<1x8x128xf32> to vector<32x8x128xf32>
      %75 = vector.broadcast %cst_24 : f32 to vector<32x8x128xf32>
      %76 = arith.select %72, %74, %75 : vector<32x8x128xi1>, vector<32x8x128xf32>
      %cst_25 = arith.constant dense<0x7F800000> : vector<32x8xf32>
      %77 = vector.multi_reduction <minimumf>, %76, %cst_25 [2] : vector<32x8x128xf32> to vector<32x8xf32>
      %cst_26 = arith.constant -1.000000e+30 : f32
      %78 = vector.shape_cast %33 : vector<32x1x128xi1> to vector<32x1x128xi1>
      %79 = vector.broadcast %78 : vector<32x1x128xi1> to vector<32x8x128xi1>
      %80 = vector.shape_cast %70 : vector<1x8x128xf32> to vector<1x8x128xf32>
      %81 = vector.broadcast %80 : vector<1x8x128xf32> to vector<32x8x128xf32>
      %82 = vector.broadcast %cst_26 : f32 to vector<32x8x128xf32>
      %83 = arith.select %79, %81, %82 : vector<32x8x128xi1>, vector<32x8x128xf32>
      %cst_27 = arith.constant dense<0xFF800000> : vector<32x8xf32>
      %84 = vector.multi_reduction <maximumf>, %83, %cst_27 [2] : vector<32x8x128xf32> to vector<32x8xf32>
      %85 = vector.extract_strided_slice %16 {offsets = [0, 24], sizes = [128, 8], strides = [1, 1]} : vector<128x32xf32> to vector<128x8xf32>
      %86 = tpu.transpose %85, [1, 0] : vector<128x8xf32> -> vector<8x128xf32>
      %87 = vector.shape_cast %86 : vector<8x128xf32> to vector<1x8x128xf32>
      %cst_28 = arith.constant 1.000000e+30 : f32
      %88 = vector.shape_cast %33 : vector<32x1x128xi1> to vector<32x1x128xi1>
      %89 = vector.broadcast %88 : vector<32x1x128xi1> to vector<32x8x128xi1>
      %90 = vector.shape_cast %87 : vector<1x8x128xf32> to vector<1x8x128xf32>
      %91 = vector.broadcast %90 : vector<1x8x128xf32> to vector<32x8x128xf32>
      %92 = vector.broadcast %cst_28 : f32 to vector<32x8x128xf32>
      %93 = arith.select %89, %91, %92 : vector<32x8x128xi1>, vector<32x8x128xf32>
      %cst_29 = arith.constant dense<0x7F800000> : vector<32x8xf32>
      %94 = vector.multi_reduction <minimumf>, %93, %cst_29 [2] : vector<32x8x128xf32> to vector<32x8xf32>
      %cst_30 = arith.constant -1.000000e+30 : f32
      %95 = vector.shape_cast %33 : vector<32x1x128xi1> to vector<32x1x128xi1>
      %96 = vector.broadcast %95 : vector<32x1x128xi1> to vector<32x8x128xi1>
      %97 = vector.shape_cast %87 : vector<1x8x128xf32> to vector<1x8x128xf32>
      %98 = vector.broadcast %97 : vector<1x8x128xf32> to vector<32x8x128xf32>
      %99 = vector.broadcast %cst_30 : f32 to vector<32x8x128xf32>
      %100 = arith.select %96, %98, %99 : vector<32x8x128xi1>, vector<32x8x128xf32>
      %cst_31 = arith.constant dense<0xFF800000> : vector<32x8xf32>
      %101 = vector.multi_reduction <maximumf>, %100, %cst_31 [2] : vector<32x8x128xf32> to vector<32x8xf32>
      %c0_32 = arith.constant 0 : index
      %c0_33 = arith.constant 0 : index
      %102 = vector.load %arg17[%c0_32, %c0_33] : memref<32x32xf32, #tpu.memory_space<vmem>>, vector<32x32xf32>
      %103 = tpu.concatenate %43, %60, %77, %94 in 1 : vector<32x8xf32>, vector<32x8xf32>, vector<32x8xf32>, vector<32x8xf32> -> vector<32x32xf32>
      %104 = arith.minimumf %102, %103 : vector<32x32xf32>
      %c0_34 = arith.constant 0 : index
      %c0_35 = arith.constant 0 : index
      %105 = vector.load %arg17[%c0_34, %c0_35] : memref<32x32xf32, #tpu.memory_space<vmem>>, vector<32x32xf32>
      tpu.vector_store %arg17[%c0_34, %c0_35], %104 {strides = array<i32>} : memref<32x32xf32, #tpu.memory_space<vmem>>, vector<32x32xf32>,
      %c0_36 = arith.constant 0 : index
      %c0_37 = arith.constant 0 : index
      %106 = vector.load %arg18[%c0_36, %c0_37] : memref<32x32xf32, #tpu.memory_space<vmem>>, vector<32x32xf32>
      %107 = tpu.concatenate %50, %67, %84, %101 in 1 : vector<32x8xf32>, vector<32x8xf32>, vector<32x8xf32>, vector<32x8xf32> -> vector<32x32xf32>
      %108 = arith.maximumf %106, %107 : vector<32x32xf32>
      %c0_38 = arith.constant 0 : index
      %c0_39 = arith.constant 0 : index
      %109 = vector.load %arg18[%c0_38, %c0_39] : memref<32x32xf32, #tpu.memory_space<vmem>>, vector<32x32xf32>
      tpu.vector_store %arg18[%c0_38, %c0_39], %108 {strides = array<i32>} : memref<32x32xf32, #tpu.memory_space<vmem>>, vector<32x32xf32>,
    } else {
    }
    %c1_i32 = arith.constant 1 : i32
    %8 = arith.cmpi eq, %arg1, %c1_i32 : i32
    %9 = arith.extui %8 : i1 to i32
    %c0_i32_2 = arith.constant 0 : i32
    %10 = arith.cmpi ne, %9, %c0_i32_2 : i32
    scf.if %10 {
      %c0 = arith.constant 0 : index
      %c0_3 = arith.constant 0 : index
      %11 = vector.load %arg16[%c0, %c0_3] : memref<32x65xf32, #tpu.memory_space<vmem>>, vector<32x65xf32>
      %12 = vector.extract_strided_slice %11 {offsets = [0, 0], sizes = [32, 32], strides = [1, 1]} : vector<32x65xf32> to vector<32x32xf32>
      %13 = vector.extract_strided_slice %11 {offsets = [0, 32], sizes = [32, 32], strides = [1, 1]} : vector<32x65xf32> to vector<32x32xf32>
      %14 = vector.extract_strided_slice %11 {offsets = [0, 64], sizes = [32, 1], strides = [1, 1]} : vector<32x65xf32> to vector<32x1xf32>
      %cst = arith.constant 1.000000e+00 : f32
      %15 = vector.broadcast %cst : f32 to vector<32x1xf32>
      %16 = arith.maximumf %14, %15 : vector<32x1xf32>
      %17 = tpu.reciprocal %16 {approx = true} : vector<32x1xf32> -> vector<32x1xf32>
      %18 = vector.broadcast %17 : vector<32x1xf32> to vector<32x32xf32>
      %19 = arith.mulf %12, %18 : vector<32x32xf32>
      %20 = vector.broadcast %17 : vector<32x1xf32> to vector<32x32xf32>
      %21 = arith.mulf %13, %20 : vector<32x32xf32>
      %22 = arith.mulf %19, %19 : vector<32x32xf32>
      %23 = arith.subf %21, %22 : vector<32x32xf32>
      %cst_4 = arith.constant 0.000000e+00 : f32
      %24 = vector.broadcast %cst_4 : f32 to vector<32x32xf32>
      %25 = arith.maximumf %23, %24 : vector<32x32xf32>
      %cst_5 = arith.constant 9.99999974E-6 : f32
      %26 = vector.broadcast %cst_5 : f32 to vector<32x32xf32>
      %27 = arith.addf %25, %26 : vector<32x32xf32>
      %28 = math.sqrt %27 : vector<32x32xf32>
      %cst_6 = arith.constant 5.000000e-01 : f32
      %29 = vector.broadcast %cst_6 : f32 to vector<32x1xf32>
      %30 = arith.cmpf ogt, %14, %29 : vector<32x1xf32>
      %c0_7 = arith.constant 0 : index
      %c0_8 = arith.constant 0 : index
      %31 = vector.load %arg17[%c0_7, %c0_8] : memref<32x32xf32, #tpu.memory_space<vmem>>, vector<32x32xf32>
      %cst_9 = arith.constant 0.000000e+00 : f32
      %32 = vector.shape_cast %30 : vector<32x1xi1> to vector<32x1xi1>
      %33 = vector.broadcast %32 : vector<32x1xi1> to vector<32x32xi1>
      %34 = vector.broadcast %cst_9 : f32 to vector<32x32xf32>
      %35 = arith.select %33, %31, %34 : vector<32x32xi1>, vector<32x32xf32>
      %c0_10 = arith.constant 0 : index
      %c0_11 = arith.constant 0 : index
      %36 = vector.load %arg18[%c0_10, %c0_11] : memref<32x32xf32, #tpu.memory_space<vmem>>, vector<32x32xf32>
      %cst_12 = arith.constant 0.000000e+00 : f32
      %37 = vector.shape_cast %30 : vector<32x1xi1> to vector<32x1xi1>
      %38 = vector.broadcast %37 : vector<32x1xi1> to vector<32x32xi1>
      %39 = vector.broadcast %cst_12 : f32 to vector<32x32xf32>
      %40 = arith.select %38, %36, %39 : vector<32x32xi1>, vector<32x32xf32>
      %41 = tpu.concatenate %19, %35, %40, %28 in 1 : vector<32x32xf32>, vector<32x32xf32>, vector<32x32xf32>, vector<32x32xf32> -> vector<32x128xf32>
      %cst_13 = arith.constant 1.000000e+00 : f32
      %42 = vector.broadcast %cst_13 : f32 to vector<32x1xf32>
      %43 = arith.addf %16, %42 : vector<32x1xf32>
      %44 = math.log %43 : vector<32x1xf32>
      %cst_14 = arith.constant 0.660282552 : f32
      %45 = vector.broadcast %cst_14 : f32 to vector<32x1xf32>
      %46 = arith.mulf %44, %45 : vector<32x1xf32>
      %47 = tpu.reciprocal %44 {approx = true} : vector<32x1xf32> -> vector<32x1xf32>
      %cst_15 = arith.constant 1.51450312 : f32
      %48 = vector.broadcast %cst_15 : f32 to vector<32x1xf32>
      %49 = arith.mulf %48, %47 : vector<32x1xf32>
      %50 = vector.broadcast %46 : vector<32x1xf32> to vector<32x128xf32>
      %51 = arith.mulf %41, %50 : vector<32x128xf32>
      %52 = vector.broadcast %49 : vector<32x1xf32> to vector<32x128xf32>
      %53 = arith.mulf %41, %52 : vector<32x128xf32>
      %54 = tpu.concatenate %41, %51, %53 in 1 : vector<32x128xf32>, vector<32x128xf32>, vector<32x128xf32> -> vector<32x384xf32>
      %c0_16 = arith.constant 0 : index
      %c0_17 = arith.constant 0 : index
      %55 = vector.load %arg6[%c0_16, %c0_17] : memref<32x32xf32, #tpu.memory_space<vmem>>, vector<32x32xf32>
      %56 = tpu.concatenate %55, %54 in 1 : vector<32x32xf32>, vector<32x384xf32> -> vector<32x416xf32>
      %c0_18 = arith.constant 0 : index
      %c0_19 = arith.constant 0 : index
      %57 = vector.load %arg9[%c0_18, %c0_19] : memref<416x32xf32, #tpu.memory_space<vmem>>, vector<416x32xf32>
      %cst_20 = arith.constant dense<0.000000e+00> : vector<32x32xf32>
      %58 = tpu.matmul %56, %57, %cst_20 {dimension_numbers = #tpu.dot_dimension_numbers<[1], [0], [0], [1], [0, 0, 1, 1], [], []>} : vector<32x416xf32>, vector<416x32xf32>, vector<32x32xf32> -> vector<32x32xf32>
      %c0_21 = arith.constant 0 : index
      %c0_22 = arith.constant 0 : index
      %59 = vector.load %arg10[%c0_21, %c0_22] : memref<1x32xf32, #tpu.memory_space<vmem>>, vector<1x32xf32>
      %60 = vector.broadcast %59 : vector<1x32xf32> to vector<32x32xf32>
      %61 = arith.addf %58, %60 : vector<32x32xf32>
      %cst_23 = arith.constant 0.000000e+00 : f32
      %62 = vector.broadcast %cst_23 : f32 to vector<32x32xf32>
      %63 = arith.maximumf %61, %62 : vector<32x32xf32>
      %c0_24 = arith.constant 0 : index
      %c0_25 = arith.constant 0 : index
      %64 = vector.load %arg11[%c0_24, %c0_25] : memref<32x16xf32, #tpu.memory_space<vmem>>, vector<32x16xf32>
      %cst_26 = arith.constant dense<0.000000e+00> : vector<32x16xf32>
      %65 = tpu.matmul %63, %64, %cst_26 {dimension_numbers = #tpu.dot_dimension_numbers<[1], [0], [0], [1], [0, 0, 1, 1], [], []>} : vector<32x32xf32>, vector<32x16xf32>, vector<32x16xf32> -> vector<32x16xf32>
      %c0_27 = arith.constant 0 : index
      %c0_28 = arith.constant 0 : index
      %66 = vector.load %arg12[%c0_27, %c0_28] : memref<1x16xf32, #tpu.memory_space<vmem>>, vector<1x16xf32>
      %67 = vector.broadcast %66 : vector<1x16xf32> to vector<32x16xf32>
      %68 = arith.addf %65, %67 : vector<32x16xf32>
      %cst_29 = arith.constant 0.000000e+00 : f32
      %69 = vector.broadcast %cst_29 : f32 to vector<32x16xf32>
      %70 = arith.maximumf %68, %69 : vector<32x16xf32>
      %c0_30 = arith.constant 0 : index
      %c0_31 = arith.constant 0 : index
      %71 = vector.load %arg13[%c0_30, %c0_31] : memref<16x8xf32, #tpu.memory_space<vmem>>, vector<16x8xf32>
      %cst_32 = arith.constant dense<0.000000e+00> : vector<32x8xf32>
      %72 = tpu.matmul %70, %71, %cst_32 {dimension_numbers = #tpu.dot_dimension_numbers<[1], [0], [0], [1], [0, 0, 1, 1], [], []>} : vector<32x16xf32>, vector<16x8xf32>, vector<32x8xf32> -> vector<32x8xf32>
      %c0_33 = arith.constant 0 : index
      %c0_34 = arith.constant 0 : index
      %73 = vector.load %arg14[%c0_33, %c0_34] : memref<1x8xf32, #tpu.memory_space<vmem>>, vector<1x8xf32>
      %74 = vector.broadcast %73 : vector<1x8xf32> to vector<32x8xf32>
      %75 = arith.addf %72, %74 : vector<32x8xf32>
      %cst_35 = arith.constant dense<0xFF800000> : vector<32xf32>
      %76 = vector.multi_reduction <maximumf>, %75, %cst_35 [1] : vector<32x8xf32> to vector<32xf32>
      %77 = vector.shape_cast %76 : vector<32xf32> to vector<32x1xf32>
      %78 = vector.broadcast %77 : vector<32x1xf32> to vector<32x8xf32>
      %79 = arith.subf %75, %78 : vector<32x8xf32>
      %80 = math.exp %79 : vector<32x8xf32>
      %cst_36 = arith.constant dense<0.000000e+00> : vector<32xf32>
      %81 = vector.multi_reduction <add>, %80, %cst_36 [1] : vector<32x8xf32> to vector<32xf32>
      %82 = vector.shape_cast %81 : vector<32xf32> to vector<32x1xf32>
      %83 = math.log %82 : vector<32x1xf32>
      %84 = vector.broadcast %83 : vector<32x1xf32> to vector<32x8xf32>
      %85 = arith.subf %79, %84 : vector<32x8xf32>
      %c0_37 = arith.constant 0 : index
      %c0_38 = arith.constant 0 : index
      %86 = vector.load %arg15[%c0_37, %c0_38] : memref<32x8xf32, #tpu.memory_space<vmem>>, vector<32x8xf32>
      tpu.vector_store %arg15[%c0_37, %c0_38], %85 {strides = array<i32>} : memref<32x8xf32, #tpu.memory_space<vmem>>, vector<32x8xf32>,
    } else {
    }
    return
  }
  func.func @transform_0(%arg0: i32, %arg1: i32, %arg2: memref<2xi32, #tpu.memory_space<smem>>, %arg3: memref<2xi32, #tpu.memory_space<smem>>) -> (i32, i32) {
    %0 = arith.index_cast %arg0 : i32 to index
    %1 = memref.load %arg2[%0] : memref<2xi32, #tpu.memory_space<smem>>
    %2 = arith.index_cast %arg0 : i32 to index
    %3 = memref.load %arg3[%2] : memref<2xi32, #tpu.memory_space<smem>>
    %c1_i32 = arith.constant 1 : i32
    %4 = arith.subi %3, %c1_i32 : i32
    %5 = arith.minsi %arg1, %4 : i32
    %6 = arith.addi %1, %5 : i32
    %c0_i32 = arith.constant 0 : i32
    %c0_i32_0 = arith.constant 0 : i32
    return %6, %c0_i32 : i32, i32
  }
  func.func @transform_1(%arg0: i32, %arg1: i32, %arg2: memref<2xi32, #tpu.memory_space<smem>>, %arg3: memref<2xi32, #tpu.memory_space<smem>>) -> (i32, i32) {
    %0 = arith.index_cast %arg0 : i32 to index
    %1 = memref.load %arg2[%0] : memref<2xi32, #tpu.memory_space<smem>>
    %2 = arith.index_cast %arg0 : i32 to index
    %3 = memref.load %arg3[%2] : memref<2xi32, #tpu.memory_space<smem>>
    %c1_i32 = arith.constant 1 : i32
    %4 = arith.subi %3, %c1_i32 : i32
    %5 = arith.minsi %arg1, %4 : i32
    %6 = arith.addi %1, %5 : i32
    %c0_i32 = arith.constant 0 : i32
    %c0_i32_0 = arith.constant 0 : i32
    return %c0_i32, %6 : i32, i32
  }
  func.func @transform_2(%arg0: i32, %arg1: i32, %arg2: memref<2xi32, #tpu.memory_space<smem>>, %arg3: memref<2xi32, #tpu.memory_space<smem>>) -> (i32, i32) {
    %c0_i32 = arith.constant 0 : i32
    %c0_i32_0 = arith.constant 0 : i32
    return %arg0, %c0_i32 : i32, i32
  }
  func.func @transform_3(%arg0: i32, %arg1: i32, %arg2: memref<2xi32, #tpu.memory_space<smem>>, %arg3: memref<2xi32, #tpu.memory_space<smem>>) -> (i32, i32) {
    %c0_i32 = arith.constant 0 : i32
    %c0_i32_0 = arith.constant 0 : i32
    %c0_i32_1 = arith.constant 0 : i32
    return %c0_i32, %c0_i32_0 : i32, i32
  }
  func.func @transform_4(%arg0: i32, %arg1: i32, %arg2: memref<2xi32, #tpu.memory_space<smem>>, %arg3: memref<2xi32, #tpu.memory_space<smem>>) -> (i32, i32) {
    %c0_i32 = arith.constant 0 : i32
    %c0_i32_0 = arith.constant 0 : i32
    %c0_i32_1 = arith.constant 0 : i32
    return %c0_i32, %c0_i32_0 : i32, i32
  }
  func.func @transform_5(%arg0: i32, %arg1: i32, %arg2: memref<2xi32, #tpu.memory_space<smem>>, %arg3: memref<2xi32, #tpu.memory_space<smem>>) -> (i32, i32) {
    %c0_i32 = arith.constant 0 : i32
    %c0_i32_0 = arith.constant 0 : i32
    %c0_i32_1 = arith.constant 0 : i32
    return %c0_i32, %c0_i32_0 : i32, i32
  }
  func.func @transform_6(%arg0: i32, %arg1: i32, %arg2: memref<2xi32, #tpu.memory_space<smem>>, %arg3: memref<2xi32, #tpu.memory_space<smem>>) -> (i32, i32) {
    %c0_i32 = arith.constant 0 : i32
    %c0_i32_0 = arith.constant 0 : i32
    %c0_i32_1 = arith.constant 0 : i32
    return %c0_i32, %c0_i32_0 : i32, i32
  }
  func.func @transform_7(%arg0: i32, %arg1: i32, %arg2: memref<2xi32, #tpu.memory_space<smem>>, %arg3: memref<2xi32, #tpu.memory_space<smem>>) -> (i32, i32) {
    %c0_i32 = arith.constant 0 : i32
    %c0_i32_0 = arith.constant 0 : i32
    %c0_i32_1 = arith.constant 0 : i32
    return %c0_i32, %c0_i32_0 : i32, i32
  }
  func.func @transform_8(%arg0: i32, %arg1: i32, %arg2: memref<2xi32, #tpu.memory_space<smem>>, %arg3: memref<2xi32, #tpu.memory_space<smem>>) -> (i32, i32) {
    %c0_i32 = arith.constant 0 : i32
    %c0_i32_0 = arith.constant 0 : i32
    %c0_i32_1 = arith.constant 0 : i32
    return %c0_i32, %c0_i32_0 : i32, i32
  }
  func.func @transform_9(%arg0: i32, %arg1: i32, %arg2: memref<2xi32, #tpu.memory_space<smem>>, %arg3: memref<2xi32, #tpu.memory_space<smem>>) -> (i32, i32) {
    %c0_i32 = arith.constant 0 : i32
    %c0_i32_0 = arith.constant 0 : i32
    %c0_i32_1 = arith.constant 0 : i32
    return %c0_i32, %c0_i32_0 : i32, i32
  }
  func.func @transform_10(%arg0: i32, %arg1: i32, %arg2: memref<2xi32, #tpu.memory_space<smem>>, %arg3: memref<2xi32, #tpu.memory_space<smem>>) -> (i32, i32) {
    %c0_i32 = arith.constant 0 : i32
    %c0_i32_0 = arith.constant 0 : i32
    %c0_i32_1 = arith.constant 0 : i32
    return %c0_i32, %c0_i32_0 : i32, i32
  }
  func.func @transform_11(%arg0: i32, %arg1: i32, %arg2: memref<2xi32, #tpu.memory_space<smem>>, %arg3: memref<2xi32, #tpu.memory_space<smem>>) -> (i32, i32) {
    %c0_i32 = arith.constant 0 : i32
    %c0_i32_0 = arith.constant 0 : i32
    return %arg0, %c0_i32 : i32, i32
  }
}

</mosaic_0001>

<llo_original>
// kernel: net_forward.2
$region0: #{net_forward.2}
  #allocation0 [shape = 'u32[]', space=smem, size = 0x4, offset = 0x4, fixed_abs, tag = 'smem constant byte address 0x4 - core index']
  #allocation1 [shape = 'u32[144,128]{1,0:T(1,128)}', space=vmem, size = 0x12000, scoped, tag = 'internal scratch']
  #allocation2 [shape = 'f32[32,65]{1,0:T(8,128)}', space=vmem, size = 0x4000, scoped, tag = 'scratch operand']
  #allocation3 [shape = 'f32[32,32]{1,0:T(8,128)}', space=vmem, size = 0x4000, scoped, tag = 'scratch operand']
  #allocation4 [shape = 'f32[32,32]{1,0:T(8,128)}', space=vmem, size = 0x4000, scoped, tag = 'scratch operand']
  #allocation5 [shape = 's32[1]{0}', space=sflag, size = 0x4, scoped, tag = 'scoped memory for net_forward.2']
  #allocation6 [shape = 'u8[512]{0}', space=smem, size = 0x200, scoped, tag = 'prefetched SMEM operand 0']
  #allocation7 [shape = 'u8[512]{0}', space=smem, size = 0x200, scoped, tag = 'prefetched SMEM operand 1']
  %s0 = inlined_call_operand.vmem [shape: s32[2], index: 0, kind: input, shape index: {}]
  %s1 = inlined_call_operand.vmem [shape: s32[2], index: 1, kind: input, shape index: {}]
  %s2 = inlined_call_operand.vmem [shape: f32[384,68], index: 2, kind: input, shape index: {}]
  %s3 = inlined_call_operand.vmem [shape: s32[1,384], index: 3, kind: input, shape index: {}]
  %s4 = inlined_call_operand.vmem [shape: f32[64,32], index: 4, kind: input, shape index: {}]
  %s5 = inlined_call_operand.vmem [shape: f32[68,32], index: 5, kind: input, shape index: {}]
  %s6 = inlined_call_operand.vmem [shape: f32[1,32], index: 6, kind: input, shape index: {}]
  %s7 = inlined_call_operand.vmem [shape: f32[416,32], index: 7, kind: input, shape index: {}]
  %s8 = inlined_call_operand.vmem [shape: f32[1,32], index: 8, kind: input, shape index: {}]
  %s9 = inlined_call_operand.vmem [shape: f32[64,32], index: 9, kind: output, shape index: {}]
  %s10 = sld [smem:[#allocation0]]
  $region73: #{net_forward.2} parent=0
    _
  %s12 = ssub.s32 1, %s10
  %s13 = scalar_select 0, %s12, %s10
  %s14 = sshll.u32 %s0, 4
  %s15 = int_to_ptr.vmem [resolvable:$true] %s14
  %17 = dma.vmem_to_smem %s15, 16, [#allocation6], [#allocation5]
  %s18 = sshll.u32 %s1, 4
  %s19 = int_to_ptr.vmem [resolvable:$true] %s18
  %21 = dma.vmem_to_smem %s19, 16, [#allocation7], [#allocation5]
  %22 = dma.done [#allocation5], 32
  %23 = sfence
  loop: start=0, step=1, limit=6
  $region2: #{net_forward.2} parent=0 // loop_pre_header
    _
  $region3: #{net_forward.2} parent=0 // loop_header
    %s25 = sphi 0, %s29
    %p26 = scmp.ge.s32.totalorder %s25, 6
    %s32 = sphi 0, %s44
    %s33 = sphi 0, %s40
    %s34 = sphi 0, %s32
    %s35 = sphi 0, %s33
    %s36 = sphi 0, %s34
    %s37 = sphi 0, %s35
    %s59 = sphi 0, %s61
    %s62 = sphi 0, %s59
    %s63 = sphi 0, %s62
    %s79 = sphi 0, %s63
    %s97 = sphi 0, %s99
    %s100 = sphi 0, %s97
    %s101 = sphi 0, %s100
    %s117 = sphi 0, %s101
    %s123 = sphi 0, %s125
    %s126 = sphi 0, %s123
    %s127 = sphi 0, %s126
    %s143 = sphi 0, %s127
    %s147 = sphi 0, %s147
    %s149 = sphi 0, %s147
    %s150 = sphi 0, %s149
    %s164 = sphi 0, %s150
    %s168 = sphi 0, %s168
    %s170 = sphi 0, %s168
    %s171 = sphi 0, %s170
    %s185 = sphi 0, %s171
    %s189 = sphi 0, %s189
    %s191 = sphi 0, %s189
    %s192 = sphi 0, %s191
    %s206 = sphi 0, %s192
    %s210 = sphi 0, %s210
    %s212 = sphi 0, %s210
    %s213 = sphi 0, %s212
    %s227 = sphi 0, %s213
    %s233 = sphi 0, %s235
    %s236 = sphi 0, %s233
    %s237 = sphi 0, %s236
    %s253 = sphi 0, %s237
  $region4: #{net_forward.2} parent=0 // loop_header_branch
    %28 = sbr.rel (%p26) target = $region8
  $region5: #{net_forward.2} parent=0 // loop_body
    %s30 = ssub.s32 %s25, 1
    %s31 = ssub.s32 %s25, 2
    %s38 = sadd.s32 1, %s33
    %p39 = scmp.ge.s32.totalorder %s38, 2
    %s40 = scalar_select %p39, 0, %s38
    %s41 = sadd.s32 1, %s32
    %s42 = scalar_select %p39, %s41, %s32
    %p43 = scmp.ge.s32.totalorder %s42, 2
    %s44 = scalar_select %p43, 0, %s42
    %s45 = sld [smem:[#allocation6 + %s32]]
    %s46 = sld [smem:[#allocation7 + %s32]]
    %s47 = ssub.s32 %s46, 1
    %p48 = scmp.lt.s32.totalorder %s33, %s47
    %s49 = scalar_select %p48, %s33, %s47
    %s50 = sadd.s32 %s45, %s49
    %s51 = sld [smem:[#allocation6 + %s44]]
    %s52 = sld [smem:[#allocation7 + %s44]]
    %s53 = ssub.s32 %s52, 1
    %p54 = scmp.lt.s32.totalorder %s40, %s53
    %s55 = scalar_select %p54, %s40, %s53
    %s56 = sadd.s32 %s51, %s55
    %s57 = ssub.s32 %s50, %s56
    %p58 = scmp.eq.s32.totalorder %s57, 0
    %s60 = sadd.s32 %s59, 1
    %s61 = scalar_select %p58, %s59, %s60
    %p64 = pneg %p58
    %p65 = scmp.eq.s32.totalorder %s25, 3
    %p66 = por %p64, %p65
    %p67 = scmp.ne.s32.totalorder %s59, %s62
    %p68 = scmp.eq.s32.totalorder %s25, 0
    %p69 = por %p67, %p68
    %p70 = scmp.ne.s32.totalorder %s59, %s62
    %p71 = scmp.eq.s32.totalorder %s30, 3
    %p72 = por %p70, %p71
    %p73 = scmp.ne.s32.totalorder %s62, %s63
    %p74 = scmp.eq.s32.totalorder %s30, 0
    %p75 = por %p73, %p74
    %p76 = scmp.ne.s32.totalorder %s62, %s63
    %p77 = scmp.eq.s32.totalorder %s31, 3
    %p78 = por %p76, %p77
    %p80 = scmp.ne.s32.totalorder %s63, %s79
    %p81 = scmp.eq.s32.totalorder %s31, 0
    %p82 = por %p80, %p81
    %s83 = sld [smem:[#allocation6 + %s32]]
    %s84 = sld [smem:[#allocation7 + %s32]]
    %s85 = ssub.s32 %s84, 1
    %p86 = scmp.lt.s32.totalorder %s33, %s85
    %s87 = scalar_select %p86, %s33, %s85
    %s88 = sadd.s32 %s83, %s87
    %s89 = sld [smem:[#allocation6 + %s44]]
    %s90 = sld [smem:[#allocation7 + %s44]]
    %s91 = ssub.s32 %s90, 1
    %p92 = scmp.lt.s32.totalorder %s40, %s91
    %s93 = scalar_select %p92, %s40, %s91
    %s94 = sadd.s32 %s89, %s93
    %s95 = ssub.s32 %s88, %s94
    %p96 = scmp.eq.s32.totalorder %s95, 0
    %s98 = sadd.s32 %s97, 1
    %s99 = scalar_select %p96, %s97, %s98
    %p102 = pneg %p96
    %p103 = scmp.eq.s32.totalorder %s25, 3
    %p104 = por %p102, %p103
    %p105 = scmp.ne.s32.totalorder %s97, %s100
    %p106 = scmp.eq.s32.totalorder %s25, 0
    %p107 = por %p105, %p106
    %p108 = scmp.ne.s32.totalorder %s97, %s100
    %p109 = scmp.eq.s32.totalorder %s30, 3
    %p110 = por %p108, %p109
    %p111 = scmp.ne.s32.totalorder %s100, %s101
    %p112 = scmp.eq.s32.totalorder %s30, 0
    %p113 = por %p111, %p112
    %p114 = scmp.ne.s32.totalorder %s100, %s101
    %p115 = scmp.eq.s32.totalorder %s31, 3
    %p116 = por %p114, %p115
    %p118 = scmp.ne.s32.totalorder %s101, %s117
    %p119 = scmp.eq.s32.totalorder %s31, 0
    %p120 = por %p118, %p119
    %s121 = ssub.s32 %s32, %s44
    %p122 = scmp.eq.s32.totalorder %s121, 0
    %s124 = sadd.s32 %s123, 1
    %s125 = scalar_select %p122, %s123, %s124
    %p128 = pneg %p122
    %p129 = scmp.eq.s32.totalorder %s25, 3
    %p130 = por %p128, %p129
    %p131 = scmp.ne.s32.totalorder %s123, %s126
    %p132 = scmp.eq.s32.totalorder %s25, 0
    %p133 = por %p131, %p132
    %p134 = scmp.ne.s32.totalorder %s123, %s126
    %p135 = scmp.eq.s32.totalorder %s30, 3
    %p136 = por %p134, %p135
    %p137 = scmp.ne.s32.totalorder %s126, %s127
    %p138 = scmp.eq.s32.totalorder %s30, 0
    %p139 = por %p137, %p138
    %p140 = scmp.ne.s32.totalorder %s126, %s127
    %p141 = scmp.eq.s32.totalorder %s31, 3
    %p142 = por %p140, %p141
    %p144 = scmp.ne.s32.totalorder %s127, %s143
    %p145 = scmp.eq.s32.totalorder %s31, 0
    %p146 = por %p144, %p145
    %s148 = sadd.s32 %s147, 1
    %p151 = scmp.eq.s32.totalorder %s25, 3
    %p152 = scmp.ne.s32.totalorder %s147, %s149
    %p153 = scmp.eq.s32.totalorder %s25, 0
    %p154 = por %p152, %p153
    %p155 = scmp.ne.s32.totalorder %s147, %s149
    %p156 = scmp.eq.s32.totalorder %s30, 3
    %p157 = por %p155, %p156
    %p158 = scmp.ne.s32.totalorder %s149, %s150
    %p159 = scmp.eq.s32.totalorder %s30, 0
    %p160 = por %p158, %p159
    %p161 = scmp.ne.s32.totalorder %s149, %s150
    %p162 = scmp.eq.s32.totalorder %s31, 3
    %p163 = por %p161, %p162
    %p165 = scmp.ne.s32.totalorder %s150, %s164
    %p166 = scmp.eq.s32.totalorder %s31, 0
    %p167 = por %p165, %p166
    %s169 = sadd.s32 %s168, 1
    %p172 = scmp.eq.s32.totalorder %s25, 3
    %p173 = scmp.ne.s32.totalorder %s168, %s170
    %p174 = scmp.eq.s32.totalorder %s25, 0
    %p175 = por %p173, %p174
    %p176 = scmp.ne.s32.totalorder %s168, %s170
    %p177 = scmp.eq.s32.totalorder %s30, 3
    %p178 = por %p176, %p177
    %p179 = scmp.ne.s32.totalorder %s170, %s171
    %p180 = scmp.eq.s32.totalorder %s30, 0
    %p181 = por %p179, %p180
    %p182 = scmp.ne.s32.totalorder %s170, %s171
    %p183 = scmp.eq.s32.totalorder %s31, 3
    %p184 = por %p182, %p183
    %p186 = scmp.ne.s32.totalorder %s171, %s185
    %p187 = scmp.eq.s32.totalorder %s31, 0
    %p188 = por %p186, %p187
    %s190 = sadd.s32 %s189, 1
    %p193 = scmp.eq.s32.totalorder %s25, 3
    %p194 = scmp.ne.s32.totalorder %s189, %s191
    %p195 = scmp.eq.s32.totalorder %s25, 0
    %p196 = por %p194, %p195
    %p197 = scmp.ne.s32.totalorder %s189, %s191
    %p198 = scmp.eq.s32.totalorder %s30, 3
    %p199 = por %p197, %p198
    %p200 = scmp.ne.s32.totalorder %s191, %s192
    %p201 = scmp.eq.s32.totalorder %s30, 0
    %p202 = por %p200, %p201
    %p203 = scmp.ne.s32.totalorder %s191, %s192
    %p204 = scmp.eq.s32.totalorder %s31, 3
    %p205 = por %p203, %p204
    %p207 = scmp.ne.s32.totalorder %s192, %s206
    %p208 = scmp.eq.s32.totalorder %s31, 0
    %p209 = por %p207, %p208
    %s211 = sadd.s32 %s210, 1
    %p214 = scmp.eq.s32.totalorder %s25, 3
    %p215 = scmp.ne.s32.totalorder %s210, %s212
    %p216 = scmp.eq.s32.totalorder %s25, 0
    %p217 = por %p215, %p216
    %p218 = scmp.ne.s32.totalorder %s210, %s212
    %p219 = scmp.eq.s32.totalorder %s30, 3
    %p220 = por %p218, %p219
    %p221 = scmp.ne.s32.totalorder %s212, %s213
    %p222 = scmp.eq.s32.totalorder %s30, 0
    %p223 = por %p221, %p222
    %p224 = scmp.ne.s32.totalorder %s212, %s213
    %p225 = scmp.eq.s32.totalorder %s31, 3
    %p226 = por %p224, %p225
    %p228 = scmp.ne.s32.totalorder %s213, %s227
    %p229 = scmp.eq.s32.totalorder %s31, 0
    %p230 = por %p228, %p229
    %s231 = ssub.s32 %s32, %s44
    %p232 = scmp.eq.s32.totalorder %s231, 0
    %s234 = sadd.s32 %s233, 1
    %s235 = scalar_select %p232, %s233, %s234
    %p238 = pneg %p232
    %p239 = scmp.eq.s32.totalorder %s25, 3
    %p240 = por %p238, %p239
    %p241 = scmp.ne.s32.totalorder %s233, %s236
    %p242 = scmp.eq.s32.totalorder %s25, 0
    %p243 = por %p241, %p242
    %p244 = scmp.ne.s32.totalorder %s233, %s236
    %p245 = scmp.eq.s32.totalorder %s30, 3
    %p246 = por %p244, %p245
    %p247 = scmp.ne.s32.totalorder %s236, %s237
    %p248 = scmp.eq.s32.totalorder %s30, 0
    %p249 = por %p247, %p248
    %p250 = scmp.ne.s32.totalorder %s236, %s237
    %p251 = scmp.eq.s32.totalorder %s31, 3
    %p252 = por %p250, %p251
    %p254 = scmp.ne.s32.totalorder %s237, %s253
    %p255 = scmp.eq.s32.totalorder %s31, 0
    %p256 = por %p254, %p255
    %p257 = scmp.le.s32.totalorder 1, %s25
    %p258 = scmp.lt.s32.totalorder %s25, 5
    %p259 = pnand %p257, %p258
    %p260 = pneg %p259
    // Predicated region
    $region9: #{net_forward.2} parent=5 // pred_check
      _
    $region10: #{net_forward.2} parent=5 // pred_check_branch
      %262 = sbr.rel (%p259) target = $region12
    $region11: #{net_forward.2} parent=5 // pred_region
      %s263 = ssub.s32 %s25, 1
      // Predicated region
      $region13: #{net_forward.2} parent=11 // pred_check
        %p264 = pneg %p160
      $region14: #{net_forward.2} parent=11 // pred_check_branch
        %266 = sbr.rel (%p264) target = $region16
      $region15: #{net_forward.2} parent=11 // pred_region
        _
      $region16: #{net_forward.2} parent=11 // pred_fallthru
        _
      // Predicated region
      $region17: #{net_forward.2} parent=11 // pred_check
        %p267 = pneg %p181
      $region18: #{net_forward.2} parent=11 // pred_check_branch
        %269 = sbr.rel (%p267) target = $region20
      $region19: #{net_forward.2} parent=11 // pred_region
        _
      $region20: #{net_forward.2} parent=11 // pred_fallthru
        _
      // Predicated region
      $region21: #{net_forward.2} parent=11 // pred_check
        %p270 = pneg %p202
      $region22: #{net_forward.2} parent=11 // pred_check_branch
        %272 = sbr.rel (%p270) target = $region24
      $region23: #{net_forward.2} parent=11 // pred_region
        _
      $region24: #{net_forward.2} parent=11 // pred_fallthru
        _
      // Predicated region
      $region25: #{net_forward.2} parent=11 // pred_check
        %p273 = pneg %p223
      $region26: #{net_forward.2} parent=11 // pred_check_branch
        %275 = sbr.rel (%p273) target = $region28
      $region27: #{net_forward.2} parent=11 // pred_region
        _
      $region28: #{net_forward.2} parent=11 // pred_fallthru
        _
    $region12: #{net_forward.2} parent=5 // pred_fallthru
      _
    %p276 = scmp.lt.s32.totalorder %s25, 4
    // Predicated region
    $region29: #{net_forward.2} parent=5 // pred_check
      %p277 = pneg %p276
    $region30: #{net_forward.2} parent=5 // pred_check_branch
      %279 = sbr.rel (%p277) target = $region32
    $region31: #{net_forward.2} parent=5 // pred_region
      // Predicated region
      $region33: #{net_forward.2} parent=31 // pred_check
        %p280 = pneg %p69
      $region34: #{net_forward.2} parent=31 // pred_check_branch
        %282 = sbr.rel (%p280) target = $region36
      $region35: #{net_forward.2} parent=31 // pred_region
        %s283 = sld [smem:[#allocation6 + %s32]]
        %s284 = sld [smem:[#allocation7 + %s32]]
        %s285 = ssub.s32 %s284, 1
        %p286 = scmp.lt.s32.totalorder %s33, %s285
        %s287 = scalar_select %p286, %s33, %s285
        %s288 = sadd.s32 %s283, %s287
        %s289 = smul.u32 16, %s288
        %p290 = scmp.lt.s32.totalorder %s289, 47
        %s291 = scalar_select %p290, %s289, 47
        %s292 = smul.addr %s291, 8
        %s293 = scalar_lea.vmem %s2, %s292
        %s294 = sld [smem:[#allocation6 + %s32]]
        %s295 = sld [smem:[#allocation7 + %s32]]
        %s296 = ssub.s32 %s295, 1
        %p297 = scmp.lt.s32.totalorder %s33, %s296
        %s298 = scalar_select %p297, %s33, %s296
        %s299 = sadd.s32 %s294, %s298
        %s300 = smul.u32 16, %s299
      $region36: #{net_forward.2} parent=31 // pred_fallthru
        _
      // Predicated region
      $region37: #{net_forward.2} parent=31 // pred_check
        %p301 = pneg %p107
      $region38: #{net_forward.2} parent=31 // pred_check_branch
        %303 = sbr.rel (%p301) target = $region40
      $region39: #{net_forward.2} parent=31 // pred_region
        %s304 = sld [smem:[#allocation6 + %s32]]
        %s305 = sld [smem:[#allocation7 + %s32]]
        %s306 = ssub.s32 %s305, 1
        %p307 = scmp.lt.s32.totalorder %s33, %s306
        %s308 = scalar_select %p307, %s33, %s306
        %s309 = sadd.s32 %s304, %s308
        %p310 = scmp.lt.s32.totalorder %s309, 2
        %s311 = scalar_select %p310, %s309, 2
        %s312 = scalar_lea.vmem %s3, %s311
        %s313 = sld [smem:[#allocation6 + %s32]]
        %s314 = sld [smem:[#allocation7 + %s32]]
        %s315 = ssub.s32 %s314, 1
        %p316 = scmp.lt.s32.totalorder %s33, %s315
        %s317 = scalar_select %p316, %s33, %s315
        %s318 = sadd.s32 %s313, %s317
      $region40: #{net_forward.2} parent=31 // pred_fallthru
        _
      // Predicated region
      $region41: #{net_forward.2} parent=31 // pred_check
        %p319 = pneg %p133
      $region42: #{net_forward.2} parent=31 // pred_check_branch
        %321 = sbr.rel (%p319) target = $region44
      $region43: #{net_forward.2} parent=31 // pred_region
        %s322 = smul.u32 4, %s32
        %p323 = scmp.lt.s32.totalorder %s322, 7
        %s324 = scalar_select %p323, %s322, 7
        %s325 = smul.addr %s324, 8
        %s326 = scalar_lea.vmem %s4, %s325
        %s327 = smul.u32 4, %s32
      $region44: #{net_forward.2} parent=31 // pred_fallthru
        _
    $region32: #{net_forward.2} parent=5 // pred_fallthru
      _
    %p328 = scmp.le.s32.totalorder 1, %s25
    %p329 = scmp.lt.s32.totalorder %s25, 5
    %p330 = pnand %p328, %p329
    %p331 = pneg %p330
    // Predicated region
    $region45: #{net_forward.2} parent=5 // pred_check
      _
    $region46: #{net_forward.2} parent=5 // pred_check_branch
      %333 = sbr.rel (%p330) target = $region48
    $region47: #{net_forward.2} parent=5 // pred_region
      %s334 = ssub.s32 %s25, 1
      %s335 = sld [smem:[#allocation6 + %s34]]
      %s336 = sld [smem:[#allocation7 + %s34]]
      %s337 = ssub.s32 %s336, 1
      %p338 = scmp.lt.s32.totalorder %s35, %s337
      %s339 = scalar_select %p338, %s35, %s337
      %s340 = sadd.s32 %s335, %s339
      %s341 = smul.u32 16, %s340
      %p342 = scmp.lt.s32.totalorder %s341, 47
      %s343 = scalar_select %p342, %s341, 47
      %s344 = smul.addr %s343, 8
      %s345 = scalar_lea.vmem %s2, %s344
      %p346 = pneg %p75
      %p347 = pneg %p72
      %s348 = sld [smem:[#allocation6 + %s34]]
      %s349 = sld [smem:[#allocation7 + %s34]]
      %s350 = ssub.s32 %s349, 1
      %p351 = scmp.lt.s32.totalorder %s35, %s350
      %s352 = scalar_select %p351, %s35, %s350
      %s353 = sadd.s32 %s348, %s352
      %p354 = scmp.lt.s32.totalorder %s353, 2
      %s355 = scalar_select %p354, %s353, 2
      %s356 = scalar_lea.vmem %s3, %s355
      %p357 = pneg %p113
      %p358 = pneg %p110
      %s359 = smul.u32 4, %s34
      %p360 = scmp.lt.s32.totalorder %s359, 7
      %s361 = scalar_select %p360, %s359, 7
      %s362 = smul.addr %s361, 8
      %s363 = scalar_lea.vmem %s4, %s362
      %p364 = pneg %p139
      %p365 = pneg %p136
      %p366 = pneg %p160
      %p367 = pneg %p157
      %p368 = pneg %p181
      %p369 = pneg %p178
      %p370 = pneg %p202
      %p371 = pneg %p199
      %p372 = pneg %p223
      %p373 = pneg %p220
      %p374 = pneg %p249
      %p375 = pneg %p246
      %s376 = smul.u32 4, %s34
      %p377 = scmp.lt.s32.totalorder %s376, 7
      %s378 = scalar_select %p377, %s376, 7
      %s379 = smul.addr %s378, 8
      %s380 = scalar_lea.vmem %s9, %s379
      %s381 = sld [smem:[#allocation6 + %s34]]
      %s382 = sld [smem:[#allocation7 + %s34]]
      %s383 = ssub.s32 %s382, 1
      %p384 = scmp.lt.s32.totalorder %s35, %s383
      %s385 = scalar_select %p384, %s35, %s383
      %s386 = sadd.s32 %s381, %s385
      %s387 = smul.u32 16, %s386
      %p388 = scmp.lt.s32.totalorder %s387, 47
      %s389 = scalar_select %p388, %s387, 47
      %s390 = smul.addr %s389, 8
      %s391 = scalar_lea.vmem %s2, %s390
      %s392 = sld [smem:[#allocation6 + %s34]]
      %s393 = sld [smem:[#allocation7 + %s34]]
      %s394 = ssub.s32 %s393, 1
      %p395 = scmp.lt.s32.totalorder %s35, %s394
      %s396 = scalar_select %p395, %s35, %s394
      %s397 = sadd.s32 %s392, %s396
      %s398 = smul.u32 16, %s397
      %s399 = sld [smem:[#allocation6 + %s34]]
      %s400 = sld [smem:[#allocation7 + %s34]]
      %s401 = ssub.s32 %s400, 1
      %p402 = scmp.lt.s32.totalorder %s35, %s401
      %s403 = scalar_select %p402, %s35, %s401
      %s404 = sadd.s32 %s399, %s403
      %p405 = scmp.lt.s32.totalorder %s404, 2
      %s406 = scalar_select %p405, %s404, 2
      %s407 = scalar_lea.vmem %s3, %s406
      %s408 = sld [smem:[#allocation6 + %s34]]
      %s409 = sld [smem:[#allocation7 + %s34]]
      %s410 = ssub.s32 %s409, 1
      %p411 = scmp.lt.s32.totalorder %s35, %s410
      %s412 = scalar_select %p411, %s35, %s410
      %s413 = sadd.s32 %s408, %s412
      %s414 = smul.u32 4, %s34
      %p415 = scmp.lt.s32.totalorder %s414, 7
      %s416 = scalar_select %p415, %s414, 7
      %s417 = smul.addr %s416, 8
      %s418 = scalar_lea.vmem %s4, %s417
      %s419 = smul.u32 4, %s34
      %s420 = smul.u32 4, %s34
      %p421 = scmp.lt.s32.totalorder %s420, 7
      %s422 = scalar_select %p421, %s420, 7
      %s423 = smul.addr %s422, 8
      %s424 = scalar_lea.vmem %s9, %s423
      %s425 = smul.u32 4, %s34
      %p426 = scmp.eq.s32.totalorder %s35, 0
      // Predicated region
      $region49: #{net_forward.2} parent=47 // pred_check
        %p427 = pneg %p426
      $region50: #{net_forward.2} parent=47 // pred_check_branch
        %429 = sbr.rel (%p427) target = $region52
      $region51: #{net_forward.2} parent=47 // pred_region
        %vm430 = vcmask 531456
        %431 = vst.msk [vmem:[#allocation2] sm:$0xff] %vm430, 0.0
        %432 = vst.msk [vmem:[#allocation2 + $0x8] sm:$0xff] %vm430, 0.0
        %433 = vst.msk [vmem:[#allocation2 + $0x10] sm:$0xff] %vm430, 0.0
        %434 = vst.msk [vmem:[#allocation2 + $0x18] sm:$0xff] %vm430, 0.0
        %vm435 = vcmask 261120
        %436 = vst.msk [vmem:[#allocation3] sm:$0xff] %vm435, 1e+30
        %437 = vst.msk [vmem:[#allocation3 + $0x8] sm:$0xff] %vm435, 1e+30
        %438 = vst.msk [vmem:[#allocation3 + $0x10] sm:$0xff] %vm435, 1e+30
        %439 = vst.msk [vmem:[#allocation3 + $0x18] sm:$0xff] %vm435, 1e+30
        %440 = vst.msk [vmem:[#allocation4] sm:$0xff] %vm435, -1e+30
        %441 = vst.msk [vmem:[#allocation4 + $0x8] sm:$0xff] %vm435, -1e+30
        %442 = vst.msk [vmem:[#allocation4 + $0x10] sm:$0xff] %vm435, -1e+30
        %443 = vst.msk [vmem:[#allocation4 + $0x18] sm:$0xff] %vm435, -1e+30
      $region52: #{net_forward.2} parent=47 // pred_fallthru
        _
      %s444 = sld [smem:[#allocation7 + %s34]]
      %p445 = scmp.lt.s32.totalorder %s35, %s444
      // Predicated region
      $region53: #{net_forward.2} parent=47 // pred_check
        %p446 = pneg %p445
      $region54: #{net_forward.2} parent=47 // pred_check_branch
        %448 = sbr.rel (%p446) target = $region56
      $region55: #{net_forward.2} parent=47 // pred_region
        %v449 = vld [vmem:[%s391] sm:$0xff]
        %v450 = vld [vmem:[%s391 + $0x8] sm:$0xff]
        %v451 = vld [vmem:[%s391 + $0x10] sm:$0xff]
        %v452 = vld [vmem:[%s391 + $0x18] sm:$0xff]
        %v453 = vld [vmem:[%s391 + $0x20] sm:$0xff]
        %v454 = vld [vmem:[%s391 + $0x28] sm:$0xff]
        %v455 = vld [vmem:[%s391 + $0x30] sm:$0xff]
        %v456 = vld [vmem:[%s391 + $0x38] sm:$0xff]
        %v457 = vld [vmem:[%s391 + $0x40] sm:$0xff]
        %v458 = vld [vmem:[%s391 + $0x48] sm:$0xff]
        %v459 = vld [vmem:[%s391 + $0x50] sm:$0xff]
        %v460 = vld [vmem:[%s391 + $0x58] sm:$0xff]
        %v461 = vld [vmem:[%s391 + $0x60] sm:$0xff]
        %v462 = vld [vmem:[%s391 + $0x68] sm:$0xff]
        %v463 = vld [vmem:[%s391 + $0x70] sm:$0xff]
        %v464 = vld [vmem:[%s391 + $0x78] sm:$0xff]
        %v465 = vld [vmem:[%s5] sm:$0xff]
        %v466 = vld [vmem:[%s5 + $0x8] sm:$0xff]
        %v467 = vld [vmem:[%s5 + $0x10] sm:$0xff]
        %v468 = vld [vmem:[%s5 + $0x18] sm:$0xff]
        %v469 = vld [vmem:[%s5 + $0x20] sm:$0xff]
        %v470 = vld [vmem:[%s5 + $0x28] sm:$0xff]
        %v471 = vld [vmem:[%s5 + $0x30] sm:$0xff]
        %v472 = vld [vmem:[%s5 + $0x38] sm:$0xff]
        %v473 = vld [vmem:[%s5 + $0x40] sm:$0xf]
        %v474 = vld [vmem:[%s6] sm:$0x1]
        %v476 = vlaneseq
        %v477 = vshrl.u32 %v476, 7
        %v478 = vsub.s32 0, %v477
        %v479 = vrot.slane %v474, %v478
        %vm481 = vcmask 556032
        %v483 = vsel %vm481, %v449, 0
        %v486 = vsel %vm481, %v450, 0
        %v489 = vsel %vm481, %v451, 0
        %v492 = vsel %vm481, %v452, 0
        %v495 = vsel %vm481, %v453, 0
        %v498 = vsel %vm481, %v454, 0
        %v501 = vsel %vm481, %v455, 0
        %v504 = vsel %vm481, %v456, 0
        %v507 = vsel %vm481, %v457, 0
        %v510 = vsel %vm481, %v458, 0
        %v513 = vsel %vm481, %v459, 0
        %v516 = vsel %vm481, %v460, 0
        %v519 = vsel %vm481, %v461, 0
        %v522 = vsel %vm481, %v462, 0
        %v525 = vsel %vm481, %v463, 0
        %v528 = vsel %vm481, %v464, 0
        %vm530 = vcmask 1043456
        %v532 = vsel %vm530, %v473, 0
        %534 = vmatprep.subr.mxu0 0.0
        %535 = vmatpush1.msra.mxu0 %v465
        %536 = vmatprep.subr.mxu0 0.0
        %537 = vmatpush1.msra.mxu0 %v466
        %538 = vmatprep.subr.mxu0 0.0
        %539 = vmatpush1.msra.mxu0 %v467
        %540 = vmatprep.subr.mxu0 0.0
        %541 = vmatpush1.msra.mxu0 %v468
        %542 = vmatprep.subr.mxu0 0.0
        %543 = vmatpush1.msra.mxu0 %v469
        %544 = vmatprep.subr.mxu0 0.0
        %545 = vmatpush1.msra.mxu0 %v470
        %546 = vmatprep.subr.mxu0 0.0
        %547 = vmatpush1.msra.mxu0 %v471
        %548 = vmatprep.subr.mxu0 0.0
        %549 = vmatpush1.msra.mxu0 %v472
        %550 = vmatprep.subr.mxu0 0.0
        %551 = vmatpush1.msra.mxu0 %v532
        %552 = vmatprep.subr.mxu0 0.0
        %553 = vmatpush1.msra.mxu0 0.0
        %554 = vmatprep.subr.mxu0 0.0
        %555 = vmatpush1.msra.mxu0 0.0
        %556 = vmatprep.subr.mxu0 0.0
        %557 = vmatpush1.msra.mxu0 0.0
        %558 = vmatprep.subr.mxu0 0.0
        %559 = vmatpush1.msra.mxu0 0.0
        %560 = vmatprep.subr.mxu0 0.0
        %561 = vmatpush1.msra.mxu0 0.0
        %562 = vmatprep.subr.mxu0 0.0
        %563 = vmatpush1.msra.mxu0 0.0
        %564 = vmatprep.subr.mxu0 0.0
        %565 = vmatpush1.msra.mxu0 0.0
        %566 = vmatprep.subr.mxu0 0.0
        %567 = vmatpush1.msra.mxu0 0.0
        %568 = vmatprep.subr.mxu0 0.0
        %569 = vmatpush1.msra.mxu0 0.0
        %570 = vmatprep.subr.mxu0 0.0
        %571 = vmatpush1.msra.mxu0 0.0
        %572 = vmatprep.subr.mxu0 0.0
        %573 = vmatpush1.msra.mxu0 0.0
        %574 = vmatprep.subr.mxu0 0.0
        %575 = vmatpush1.msra.mxu0 0.0
        %576 = vmatprep.subr.mxu0 0.0
        %577 = vmatpush1.msra.mxu0 0.0
        %578 = vmatprep.subr.mxu0 0.0
        %579 = vmatpush1.msra.mxu0 0.0
        %580 = vmatprep.subr.mxu0 0.0
        %581 = vmatpush1.msra.mxu0 0.0
        %582 = vmatprep.subr.mxu0 0.0
        %583 = vmatpush1.msra.mxu0 0.0
        %584 = vmatprep.subr.mxu0 0.0
        %585 = vmatpush1.msra.mxu0 0.0
        %586 = vmatprep.subr.mxu0 0.0
        %587 = vmatpush1.msra.mxu0 0.0
        %588 = vmatprep.subr.mxu0 0.0
        %589 = vmatpush1.msra.mxu0 0.0
        %590 = vmatprep.subr.mxu0 0.0
        %591 = vmatpush1.msra.mxu0 0.0
        %592 = vmatprep.subr.mxu0 0.0
        %593 = vmatpush1.msra.mxu0 0.0
        %594 = vmatprep.subr.mxu0 0.0
        %595 = vmatpush1.msra.mxu0 0.0
        %596 = vmatprep.subr.mxu0 0.0
        %597 = vmatpush1.msra.mxu0 0.0
        %598 = vmatprep.mubr.f32.mxu0 0.0
        %599 = vmatmul.mubr.f32.gmra.mrb[0].mxu0 %v483
        %v600 = vpop.f32.mrb[0].mxu0
        %v601 = vadd.f32 %v479, %v600
        %v602 = vpop.f32.mrb[0].mxu0
        %603 = vmatprep.mubr.f32.mxu0 0.0
        %604 = vmatmul.mubr.f32.gmra.mrb[0].mxu0 %v486
        %v605 = vpop.f32.mrb[0].mxu0
        %v606 = vadd.f32 %v479, %v605
        %v607 = vpop.f32.mrb[0].mxu0
        %608 = vmatprep.mubr.f32.mxu0 0.0
        %609 = vmatmul.mubr.f32.gmra.mrb[0].mxu0 %v489
        %v610 = vpop.f32.mrb[0].mxu0
        %v611 = vadd.f32 %v479, %v610
        %v612 = vpop.f32.mrb[0].mxu0
        %613 = vmatprep.mubr.f32.mxu0 0.0
        %614 = vmatmul.mubr.f32.gmra.mrb[0].mxu0 %v492
        %v615 = vpop.f32.mrb[0].mxu0
        %v616 = vadd.f32 %v479, %v615
        %v617 = vpop.f32.mrb[0].mxu0
        %618 = vmatprep.mubr.f32.mxu0 0.0
        %619 = vmatmul.mubr.f32.gmra.mrb[0].mxu0 %v495
        %v620 = vpop.f32.mrb[0].mxu0
        %v621 = vadd.f32 %v479, %v620
        %v622 = vpop.f32.mrb[0].mxu0
        %623 = vmatprep.mubr.f32.mxu0 0.0
        %624 = vmatmul.mubr.f32.gmra.mrb[0].mxu0 %v498
        %v625 = vpop.f32.mrb[0].mxu0
        %v626 = vadd.f32 %v479, %v625
        %v627 = vpop.f32.mrb[0].mxu0
        %628 = vmatprep.mubr.f32.mxu0 0.0
        %629 = vmatmul.mubr.f32.gmra.mrb[0].mxu0 %v501
        %v630 = vpop.f32.mrb[0].mxu0
        %v631 = vadd.f32 %v479, %v630
        %v632 = vpop.f32.mrb[0].mxu0
        %633 = vmatprep.mubr.f32.mxu0 0.0
        %634 = vmatmul.mubr.f32.gmra.mrb[0].mxu0 %v504
        %v635 = vpop.f32.mrb[0].mxu0
        %v636 = vadd.f32 %v479, %v635
        %v637 = vpop.f32.mrb[0].mxu0
        %638 = vmatprep.mubr.f32.mxu0 0.0
        %639 = vmatmul.mubr.f32.gmra.mrb[0].mxu0 %v507
        %v640 = vpop.f32.mrb[0].mxu0
        %v641 = vadd.f32 %v479, %v640
        %v642 = vpop.f32.mrb[0].mxu0
        %643 = vmatprep.mubr.f32.mxu0 0.0
        %644 = vmatmul.mubr.f32.gmra.mrb[0].mxu0 %v510
        %v645 = vpop.f32.mrb[0].mxu0
        %v646 = vadd.f32 %v479, %v645
        %v647 = vpop.f32.mrb[0].mxu0
        %648 = vmatprep.mubr.f32.mxu0 0.0
        %649 = vmatmul.mubr.f32.gmra.mrb[0].mxu0 %v513
        %v650 = vpop.f32.mrb[0].mxu0
        %v651 = vadd.f32 %v479, %v650
        %v652 = vpop.f32.mrb[0].mxu0
        %653 = vmatprep.mubr.f32.mxu0 0.0
        %654 = vmatmul.mubr.f32.gmra.mrb[0].mxu0 %v516
        %v655 = vpop.f32.mrb[0].mxu0
        %v656 = vadd.f32 %v479, %v655
        %v657 = vpop.f32.mrb[0].mxu0
        %658 = vmatprep.mubr.f32.mxu0 0.0
        %659 = vmatmul.mubr.f32.gmra.mrb[0].mxu0 %v519
        %v660 = vpop.f32.mrb[0].mxu0
        %v661 = vadd.f32 %v479, %v660
        %v662 = vpop.f32.mrb[0].mxu0
        %663 = vmatprep.mubr.f32.mxu0 0.0
        %664 = vmatmul.mubr.f32.gmra.mrb[0].mxu0 %v522
        %v665 = vpop.f32.mrb[0].mxu0
        %v666 = vadd.f32 %v479, %v665
        %v667 = vpop.f32.mrb[0].mxu0
        %668 = vmatprep.mubr.f32.mxu0 0.0
        %669 = vmatmul.mubr.f32.gmra.mrb[0].mxu0 %v525
        %v670 = vpop.f32.mrb[0].mxu0
        %v671 = vadd.f32 %v479, %v670
        %v672 = vpop.f32.mrb[0].mxu0
        %673 = vmatprep.mubr.f32.mxu0 0.0
        %674 = vmatmul.mubr.f32.gmra.mrb[0].mxu0 %v528
        %v675 = vpop.f32.mrb[0].mxu0
        %v676 = vadd.f32 %v479, %v675
        %v677 = vpop.f32.mrb[0].mxu0
        %678 = vdwg.mxu0
        %s679 = smul.u32 %s34, 32
        %v680 = vlaneseq
        %v681 = vshrl.u32 %v680, 7
        %v682 = vadd.s32 %v681, 8
        %v683 = vadd.s32 %v681, 16
        %v684 = vadd.s32 %v681, 24
        %v685 = vstv %s679
        %v686 = vadd.s32 %v685, %v681
        %v687 = vadd.s32 %v685, %v682
        %v688 = vadd.s32 %v685, %v683
        %v689 = vadd.s32 %v685, %v684
        %v690 = vld [vmem:[%s407] sm:$0x1]
        %v691 = vlaneseq
        %v692 = vshrl.u32 %v691, 7
        %v693 = vsub.s32 0, %v692
        %v694 = vrot.slane %v690, %v693
        %vm695 = vcmp.eq.s32.totalorder %v686, %v694
        %vm696 = vcmp.eq.s32.totalorder %v687, %v694
        %vm697 = vcmp.eq.s32.totalorder %v688, %v694
        %vm698 = vcmp.eq.s32.totalorder %v689, %v694
        %v699 = vsel %vm695, 1, 0
        %v700 = vsel %vm696, 1, 0
        %v701 = vsel %vm697, 1, 0
        %v702 = vsel %vm698, 1, 0
        %v703 = vcvt.s32.f32 %v699
        %v704 = vcvt.s32.f32 %v700
        %v705 = vcvt.s32.f32 %v701
        %v706 = vcvt.s32.f32 %v702
        %v707 = vmul.f32 %v601, %v601
        %v708 = vmul.f32 %v606, %v606
        %v709 = vmul.f32 %v611, %v611
        %v710 = vmul.f32 %v616, %v616
        %v711 = vmul.f32 %v621, %v621
        %v712 = vmul.f32 %v626, %v626
        %v713 = vmul.f32 %v631, %v631
        %v714 = vmul.f32 %v636, %v636
        %v715 = vmul.f32 %v641, %v641
        %v716 = vmul.f32 %v646, %v646
        %v717 = vmul.f32 %v651, %v651
        %v718 = vmul.f32 %v656, %v656
        %v719 = vmul.f32 %v661, %v661
        %v720 = vmul.f32 %v666, %v666
        %v721 = vmul.f32 %v671, %v671
        %v722 = vmul.f32 %v676, %v676
        %739 = vrot.lane.b32.xlu0 %v707, 32
        %v740 = vpop.permute.xlu0 %739
        %741 = vrot.lane.b32.xlu0 %v708, 32
        %v742 = vpop.permute.xlu0 %741
        %743 = vrot.lane.b32.xlu0 %v709, 32
        %v744 = vpop.permute.xlu0 %743
        %745 = vrot.lane.b32.xlu0 %v710, 32
        %v746 = vpop.permute.xlu0 %745
        %747 = vrot.lane.b32.xlu0 %v711, 32
        %v748 = vpop.permute.xlu0 %747
        %749 = vrot.lane.b32.xlu0 %v712, 32
        %v750 = vpop.permute.xlu0 %749
        %751 = vrot.lane.b32.xlu0 %v713, 32
        %v752 = vpop.permute.xlu0 %751
        %753 = vrot.lane.b32.xlu0 %v714, 32
        %v754 = vpop.permute.xlu0 %753
        %755 = vrot.lane.b32.xlu0 %v715, 32
        %v756 = vpop.permute.xlu0 %755
        %757 = vrot.lane.b32.xlu0 %v716, 32
        %v758 = vpop.permute.xlu0 %757
        %759 = vrot.lane.b32.xlu0 %v717, 32
        %v760 = vpop.permute.xlu0 %759
        %761 = vrot.lane.b32.xlu0 %v718, 32
        %v762 = vpop.permute.xlu0 %761
        %763 = vrot.lane.b32.xlu0 %v719, 32
        %v764 = vpop.permute.xlu0 %763
        %765 = vrot.lane.b32.xlu0 %v720, 32
        %v766 = vpop.permute.xlu0 %765
        %767 = vrot.lane.b32.xlu0 %v721, 32
        %v768 = vpop.permute.xlu0 %767
        %769 = vrot.lane.b32.xlu0 %v722, 32
        %v770 = vpop.permute.xlu0 %769
        %vm787 = vcmask 261120
        %v788 = vsel %vm787, %v601, %v740
        %v789 = vsel %vm787, %v606, %v742
        %v790 = vsel %vm787, %v611, %v744
        %v791 = vsel %vm787, %v616, %v746
        %v792 = vsel %vm787, %v621, %v748
        %v793 = vsel %vm787, %v626, %v750
        %v794 = vsel %vm787, %v631, %v752
        %v795 = vsel %vm787, %v636, %v754
        %v796 = vsel %vm787, %v641, %v756
        %v797 = vsel %vm787, %v646, %v758
        %v798 = vsel %vm787, %v651, %v760
        %v799 = vsel %vm787, %v656, %v762
        %v800 = vsel %vm787, %v661, %v764
        %v801 = vsel %vm787, %v666, %v766
        %v802 = vsel %vm787, %v671, %v768
        %v803 = vsel %vm787, %v676, %v770
        %vm804 = vcmask 523264
        %v805 = vsel %vm804, %v788, 1.0
        %v806 = vsel %vm804, %v789, 1.0
        %v807 = vsel %vm804, %v790, 1.0
        %v808 = vsel %vm804, %v791, 1.0
        %v809 = vsel %vm804, %v792, 1.0
        %v810 = vsel %vm804, %v793, 1.0
        %v811 = vsel %vm804, %v794, 1.0
        %v812 = vsel %vm804, %v795, 1.0
        %v813 = vsel %vm804, %v796, 1.0
        %v814 = vsel %vm804, %v797, 1.0
        %v815 = vsel %vm804, %v798, 1.0
        %v816 = vsel %vm804, %v799, 1.0
        %v817 = vsel %vm804, %v800, 1.0
        %v818 = vsel %vm804, %v801, 1.0
        %v819 = vsel %vm804, %v802, 1.0
        %v820 = vsel %vm804, %v803, 1.0
        %v821 = vld [vmem:[#allocation2] sm:$0xff]
        %v822 = vld [vmem:[#allocation2 + $0x8] sm:$0xff]
        %v823 = vld [vmem:[#allocation2 + $0x10] sm:$0xff]
        %v824 = vld [vmem:[#allocation2 + $0x18] sm:$0xff]
        %825 = vmatprep.subr.mxu0 0.0
        %826 = vmatpush1.msra.mxu0 %v805
        %827 = vmatprep.subr.mxu0 0.0
        %828 = vmatpush1.msra.mxu0 %v806
        %829 = vmatprep.subr.mxu0 0.0
        %830 = vmatpush1.msra.mxu0 %v807
        %831 = vmatprep.subr.mxu0 0.0
        %832 = vmatpush1.msra.mxu0 %v808
        %833 = vmatprep.subr.mxu0 0.0
        %834 = vmatpush1.msra.mxu0 %v809
        %835 = vmatprep.subr.mxu0 0.0
        %836 = vmatpush1.msra.mxu0 %v810
        %837 = vmatprep.subr.mxu0 0.0
        %838 = vmatpush1.msra.mxu0 %v811
        %839 = vmatprep.subr.mxu0 0.0
        %840 = vmatpush1.msra.mxu0 %v812
        %841 = vmatprep.subr.mxu0 0.0
        %842 = vmatpush1.msra.mxu0 %v813
        %843 = vmatprep.subr.mxu0 0.0
        %844 = vmatpush1.msra.mxu0 %v814
        %845 = vmatprep.subr.mxu0 0.0
        %846 = vmatpush1.msra.mxu0 %v815
        %847 = vmatprep.subr.mxu0 0.0
        %848 = vmatpush1.msra.mxu0 %v816
        %849 = vmatprep.subr.mxu0 0.0
        %850 = vmatpush1.msra.mxu0 %v817
        %851 = vmatprep.subr.mxu0 0.0
        %852 = vmatpush1.msra.mxu0 %v818
        %853 = vmatprep.subr.mxu0 0.0
        %854 = vmatpush1.msra.mxu0 %v819
        %855 = vmatprep.subr.mxu0 0.0
        %856 = vmatpush1.msra.mxu0 %v820
        %857 = vmatprep.subr.mxu0 0.0
        %858 = vmatpush1.msra.mxu0 0.0
        %859 = vmatprep.subr.mxu0 0.0
        %860 = vmatpush1.msra.mxu0 0.0
        %861 = vmatprep.subr.mxu0 0.0
        %862 = vmatpush1.msra.mxu0 0.0
        %863 = vmatprep.subr.mxu0 0.0
        %864 = vmatpush1.msra.mxu0 0.0
        %865 = vmatprep.subr.mxu0 0.0
        %866 = vmatpush1.msra.mxu0 0.0
        %867 = vmatprep.subr.mxu0 0.0
        %868 = vmatpush1.msra.mxu0 0.0
        %869 = vmatprep.subr.mxu0 0.0
        %870 = vmatpush1.msra.mxu0 0.0
        %871 = vmatprep.subr.mxu0 0.0
        %872 = vmatpush1.msra.mxu0 0.0
        %873 = vmatprep.subr.mxu0 0.0
        %874 = vmatpush1.msra.mxu0 0.0
        %875 = vmatprep.subr.mxu0 0.0
        %876 = vmatpush1.msra.mxu0 0.0
        %877 = vmatprep.subr.mxu0 0.0
        %878 = vmatpush1.msra.mxu0 0.0
        %879 = vmatprep.subr.mxu0 0.0
        %880 = vmatpush1.msra.mxu0 0.0
        %881 = vmatprep.subr.mxu0 0.0
        %882 = vmatpush1.msra.mxu0 0.0
        %883 = vmatprep.subr.mxu0 0.0
        %884 = vmatpush1.msra.mxu0 0.0
        %885 = vmatprep.subr.mxu0 0.0
        %886 = vmatpush1.msra.mxu0 0.0
        %887 = vmatprep.subr.mxu0 0.0
        %888 = vmatpush1.msra.mxu0 0.0
        %889 = vmatprep.mubr.f32.mxu0 0.0
        %890 = vmatmul.mubr.f32.gmra.mrb[0].mxu0 %v703
        %v891 = vpop.f32.mrb[0].mxu0
        %v892 = vadd.f32 0.0, %v891
        %v893 = vpop.f32.mrb[0].mxu0
        %894 = vmatprep.mubr.f32.mxu0 0.0
        %895 = vmatmul.mubr.f32.gmra.mrb[0].mxu0 %v704
        %v896 = vpop.f32.mrb[0].mxu0
        %v897 = vadd.f32 0.0, %v896
        %v898 = vpop.f32.mrb[0].mxu0
        %899 = vmatprep.mubr.f32.mxu0 0.0
        %900 = vmatmul.mubr.f32.gmra.mrb[0].mxu0 %v705
        %v901 = vpop.f32.mrb[0].mxu0
        %v902 = vadd.f32 0.0, %v901
        %v903 = vpop.f32.mrb[0].mxu0
        %904 = vmatprep.mubr.f32.mxu0 0.0
        %905 = vmatmul.mubr.f32.gmra.mrb[0].mxu0 %v706
        %v906 = vpop.f32.mrb[0].mxu0
        %v907 = vadd.f32 0.0, %v906
        %v908 = vpop.f32.mrb[0].mxu0
        %909 = vdwg.mxu0
        %v910 = vadd.f32 %v821, %v892
        %v911 = vadd.f32 %v822, %v897
        %v912 = vadd.f32 %v823, %v902
        %v913 = vadd.f32 %v824, %v907
        %vm914 = vcmask 531456
        %915 = vst.msk [vmem:[#allocation2] sm:$0xff] %vm914, %v910
        %916 = vst.msk [vmem:[#allocation2 + $0x8] sm:$0xff] %vm914, %v911
        %917 = vst.msk [vmem:[#allocation2 + $0x10] sm:$0xff] %vm914, %v912
        %918 = vst.msk [vmem:[#allocation2 + $0x18] sm:$0xff] %vm914, %v913
        %v919 = vcombine.high %v699, %v699
        %v921 = vunpack.c.l.s4 1966171168
        %v922 = vunpack.c.0.s8 %v921
        %v923 = vlaneseq
        %v924 = vshrl.u32 %v923, 7
        %v925 = vsub.s32 %v922, %v924
        %v926 = vrot.slane %v699, %v925
        %v928 = vunpack.c.l.s4 1966171168
        %v929 = vunpack.c.0.s8 %v928
        %v930 = vlaneseq
        %v931 = vshrl.u32 %v930, 7
        %v932 = vsub.s32 %v929, %v931
        %v933 = vrot.slane %v919, %v932
        %v934 = vcombine.high %v926, %v926
        %v935 = vcombine.high %v933, %v933
        %v937 = vunpack.c.l.s4 1966171168
        %v938 = vunpack.c.0.s8 %v937
        %v939 = vlaneseq
        %v940 = vshrl.u32 %v939, 7
        %v941 = vsub.s32 %v938, %v940
        %v942 = vrot.slane %v926, %v941
        %v944 = vunpack.c.l.s4 1966171168
        %v945 = vunpack.c.0.s8 %v944
        %v946 = vlaneseq
        %v947 = vshrl.u32 %v946, 7
        %v948 = vsub.s32 %v945, %v947
        %v949 = vrot.slane %v933, %v948
        %v951 = vunpack.c.l.s4 1966171168
        %v952 = vunpack.c.0.s8 %v951
        %v953 = vlaneseq
        %v954 = vshrl.u32 %v953, 7
        %v955 = vsub.s32 %v952, %v954
        %v956 = vrot.slane %v934, %v955
        %v958 = vunpack.c.l.s4 1966171168
        %v959 = vunpack.c.0.s8 %v958
        %v960 = vlaneseq
        %v961 = vshrl.u32 %v960, 7
        %v962 = vsub.s32 %v959, %v961
        %v963 = vrot.slane %v935, %v962
        %v964 = vcombine.high %v942, %v942
        %v965 = vcombine.high %v949, %v949
        %v966 = vcombine.high %v956, %v956
        %v967 = vcombine.high %v963, %v963
        %v968 = vcombine.high %v700, %v700
        %v970 = vunpack.c.l.s4 1966171168
        %v971 = vunpack.c.0.s8 %v970
        %v972 = vlaneseq
        %v973 = vshrl.u32 %v972, 7
        %v974 = vsub.s32 %v971, %v973
        %v975 = vrot.slane %v700, %v974
        %v977 = vunpack.c.l.s4 1966171168
        %v978 = vunpack.c.0.s8 %v977
        %v979 = vlaneseq
        %v980 = vshrl.u32 %v979, 7
        %v981 = vsub.s32 %v978, %v980
        %v982 = vrot.slane %v968, %v981
        %v983 = vcombine.high %v975, %v975
        %v984 = vcombine.high %v982, %v982
        %v986 = vunpack.c.l.s4 1966171168
        %v987 = vunpack.c.0.s8 %v986
        %v988 = vlaneseq
        %v989 = vshrl.u32 %v988, 7
        %v990 = vsub.s32 %v987, %v989
        %v991 = vrot.slane %v975, %v990
        %v993 = vunpack.c.l.s4 1966171168
        %v994 = vunpack.c.0.s8 %v993
        %v995 = vlaneseq
        %v996 = vshrl.u32 %v995, 7
        %v997 = vsub.s32 %v994, %v996
        %v998 = vrot.slane %v982, %v997
        %v1000 = vunpack.c.l.s4 1966171168
        %v1001 = vunpack.c.0.s8 %v1000
        %v1002 = vlaneseq
        %v1003 = vshrl.u32 %v1002, 7
        %v1004 = vsub.s32 %v1001, %v1003
        %v1005 = vrot.slane %v983, %v1004
        %v1007 = vunpack.c.l.s4 1966171168
        %v1008 = vunpack.c.0.s8 %v1007
        %v1009 = vlaneseq
        %v1010 = vshrl.u32 %v1009, 7
        %v1011 = vsub.s32 %v1008, %v1010
        %v1012 = vrot.slane %v984, %v1011
        %v1013 = vcombine.high %v991, %v991
        %v1014 = vcombine.high %v998, %v998
        %v1015 = vcombine.high %v1005, %v1005
        %v1016 = vcombine.high %v1012, %v1012
        %v1017 = vcombine.high %v701, %v701
        %v1019 = vunpack.c.l.s4 1966171168
        %v1020 = vunpack.c.0.s8 %v1019
        %v1021 = vlaneseq
        %v1022 = vshrl.u32 %v1021, 7
        %v1023 = vsub.s32 %v1020, %v1022
        %v1024 = vrot.slane %v701, %v1023
        %v1026 = vunpack.c.l.s4 1966171168
        %v1027 = vunpack.c.0.s8 %v1026
        %v1028 = vlaneseq
        %v1029 = vshrl.u32 %v1028, 7
        %v1030 = vsub.s32 %v1027, %v1029
        %v1031 = vrot.slane %v1017, %v1030
        %v1032 = vcombine.high %v1024, %v1024
        %v1033 = vcombine.high %v1031, %v1031
        %v1035 = vunpack.c.l.s4 1966171168
        %v1036 = vunpack.c.0.s8 %v1035
        %v1037 = vlaneseq
        %v1038 = vshrl.u32 %v1037, 7
        %v1039 = vsub.s32 %v1036, %v1038
        %v1040 = vrot.slane %v1024, %v1039
        %v1042 = vunpack.c.l.s4 1966171168
        %v1043 = vunpack.c.0.s8 %v1042
        %v1044 = vlaneseq
        %v1045 = vshrl.u32 %v1044, 7
        %v1046 = vsub.s32 %v1043, %v1045
        %v1047 = vrot.slane %v1031, %v1046
        %v1049 = vunpack.c.l.s4 1966171168
        %v1050 = vunpack.c.0.s8 %v1049
        %v1051 = vlaneseq
        %v1052 = vshrl.u32 %v1051, 7
        %v1053 = vsub.s32 %v1050, %v1052
        %v1054 = vrot.slane %v1032, %v1053
        %v1056 = vunpack.c.l.s4 1966171168
        %v1057 = vunpack.c.0.s8 %v1056
        %v1058 = vlaneseq
        %v1059 = vshrl.u32 %v1058, 7
        %v1060 = vsub.s32 %v1057, %v1059
        %v1061 = vrot.slane %v1033, %v1060
        %v1062 = vcombine.high %v1040, %v1040
        %v1063 = vcombine.high %v1047, %v1047
        %v1064 = vcombine.high %v1054, %v1054
        %v1065 = vcombine.high %v1061, %v1061
        %v1066 = vcombine.high %v702, %v702
        %v1068 = vunpack.c.l.s4 1966171168
        %v1069 = vunpack.c.0.s8 %v1068
        %v1070 = vlaneseq
        %v1071 = vshrl.u32 %v1070, 7
        %v1072 = vsub.s32 %v1069, %v1071
        %v1073 = vrot.slane %v702, %v1072
        %v1075 = vunpack.c.l.s4 1966171168
        %v1076 = vunpack.c.0.s8 %v1075
        %v1077 = vlaneseq
        %v1078 = vshrl.u32 %v1077, 7
        %v1079 = vsub.s32 %v1076, %v1078
        %v1080 = vrot.slane %v1066, %v1079
        %v1081 = vcombine.high %v1073, %v1073
        %v1082 = vcombine.high %v1080, %v1080
        %v1084 = vunpack.c.l.s4 1966171168
        %v1085 = vunpack.c.0.s8 %v1084
        %v1086 = vlaneseq
        %v1087 = vshrl.u32 %v1086, 7
        %v1088 = vsub.s32 %v1085, %v1087
        %v1089 = vrot.slane %v1073, %v1088
        %v1091 = vunpack.c.l.s4 1966171168
        %v1092 = vunpack.c.0.s8 %v1091
        %v1093 = vlaneseq
        %v1094 = vshrl.u32 %v1093, 7
        %v1095 = vsub.s32 %v1092, %v1094
        %v1096 = vrot.slane %v1080, %v1095
        %v1098 = vunpack.c.l.s4 1966171168
        %v1099 = vunpack.c.0.s8 %v1098
        %v1100 = vlaneseq
        %v1101 = vshrl.u32 %v1100, 7
        %v1102 = vsub.s32 %v1099, %v1101
        %v1103 = vrot.slane %v1081, %v1102
        %v1105 = vunpack.c.l.s4 1966171168
        %v1106 = vunpack.c.0.s8 %v1105
        %v1107 = vlaneseq
        %v1108 = vshrl.u32 %v1107, 7
        %v1109 = vsub.s32 %v1106, %v1108
        %v1110 = vrot.slane %v1082, %v1109
        %v1111 = vcombine.high %v1089, %v1089
        %v1112 = vcombine.high %v1096, %v1096
        %v1113 = vcombine.high %v1103, %v1103
        %v1114 = vcombine.high %v1110, %v1110
        %vm1115 = vcmp.ne.s32.totalorder %v942, 0
        %vm1116 = vcmp.ne.s32.totalorder %v956, 0
        %vm1117 = vcmp.ne.s32.totalorder %v964, 0
        %vm1118 = vcmp.ne.s32.totalorder %v966, 0
        %vm1119 = vcmp.ne.s32.totalorder %v949, 0
        %vm1120 = vcmp.ne.s32.totalorder %v963, 0
        %vm1121 = vcmp.ne.s32.totalorder %v965, 0
        %vm1122 = vcmp.ne.s32.totalorder %v967, 0
        %vm1123 = vcmp.ne.s32.totalorder %v991, 0
        %vm1124 = vcmp.ne.s32.totalorder %v1005, 0
        %vm1125 = vcmp.ne.s32.totalorder %v1013, 0
        %vm1126 = vcmp.ne.s32.totalorder %v1015, 0
        %vm1127 = vcmp.ne.s32.totalorder %v998, 0
        %vm1128 = vcmp.ne.s32.totalorder %v1012, 0
        %vm1129 = vcmp.ne.s32.totalorder %v1014, 0
        %vm1130 = vcmp.ne.s32.totalorder %v1016, 0
        %vm1131 = vcmp.ne.s32.totalorder %v1040, 0
        %vm1132 = vcmp.ne.s32.totalorder %v1054, 0
        %vm1133 = vcmp.ne.s32.totalorder %v1062, 0
        %vm1134 = vcmp.ne.s32.totalorder %v1064, 0
        %vm1135 = vcmp.ne.s32.totalorder %v1047, 0
        %vm1136 = vcmp.ne.s32.totalorder %v1061, 0
        %vm1137 = vcmp.ne.s32.totalorder %v1063, 0
        %vm1138 = vcmp.ne.s32.totalorder %v1065, 0
        %vm1139 = vcmp.ne.s32.totalorder %v1089, 0
        %vm1140 = vcmp.ne.s32.totalorder %v1103, 0
        %vm1141 = vcmp.ne.s32.totalorder %v1111, 0
        %vm1142 = vcmp.ne.s32.totalorder %v1113, 0
        %vm1143 = vcmp.ne.s32.totalorder %v1096, 0
        %vm1144 = vcmp.ne.s32.totalorder %v1110, 0
        %vm1145 = vcmp.ne.s32.totalorder %v1112, 0
        %vm1146 = vcmp.ne.s32.totalorder %v1114, 0
        %1147 = vxpose.xlu0.b32.start [1/16] %v601, 128
        %1148 = vxpose.xlu0.b32.cont [2/16] %v606, 128
        %1149 = vxpose.xlu0.b32.cont [3/16] %v611, 128
        %1150 = vxpose.xlu0.b32.cont [4/16] %v616, 128
        %1151 = vxpose.xlu0.b32.cont [5/16] %v621, 128
        %1152 = vxpose.xlu0.b32.cont [6/16] %v626, 128
        %1153 = vxpose.xlu0.b32.cont [7/16] %v631, 128
        %1154 = vxpose.xlu0.b32.cont [8/16] %v636, 128
        %1155 = vxpose.xlu0.b32.cont [9/16] %v641, 128
        %1156 = vxpose.xlu0.b32.cont [10/16] %v646, 128
        %1157 = vxpose.xlu0.b32.cont [11/16] %v651, 128
        %1158 = vxpose.xlu0.b32.cont [12/16] %v656, 128
        %1159 = vxpose.xlu0.b32.cont [13/16] %v661, 128
        %1160 = vxpose.xlu0.b32.cont [14/16] %v666, 128
        %1161 = vxpose.xlu0.b32.cont [15/16] %v671, 128
        %1162 = vxpose.xlu0.b32.end [16/16] %v676, 128
        %v1163 = vpop.trf.xlu0
        %v1164 = vpop.trf.xlu0
        %v1165 = vpop.trf.xlu0
        %v1166 = vpop.trf.xlu0
        %v1167 = vpop.trf.xlu0
        %v1168 = vpop.trf.xlu0
        %v1169 = vpop.trf.xlu0
        %v1170 = vpop.trf.xlu0
        %v1171 = vpop.trf.xlu0
        %v1172 = vpop.trf.xlu0
        %v1173 = vpop.trf.xlu0
        %v1174 = vpop.trf.xlu0
        %v1175 = vpop.trf.xlu0
        %v1176 = vpop.trf.xlu0
        %v1177 = vpop.trf.xlu0
        %v1178 = vpop.trf.xlu0
        %v1179 = vsel %vm1115, 1, 0
        %v1180 = vsel %vm1116, 1, 0
        %v1181 = vsel %vm1117, 1, 0
        %v1182 = vsel %vm1118, 1, 0
        %v1183 = vsel %vm1119, 1, 0
        %v1184 = vsel %vm1120, 1, 0
        %v1185 = vsel %vm1121, 1, 0
        %v1186 = vsel %vm1122, 1, 0
        %v1187 = vsel %vm1123, 1, 0
        %v1188 = vsel %vm1124, 1, 0
        %v1189 = vsel %vm1125, 1, 0
        %v1190 = vsel %vm1126, 1, 0
        %v1191 = vsel %vm1127, 1, 0
        %v1192 = vsel %vm1128, 1, 0
        %v1193 = vsel %vm1129, 1, 0
        %v1194 = vsel %vm1130, 1, 0
        %v1195 = vsel %vm1131, 1, 0
        %v1196 = vsel %vm1132, 1, 0
        %v1197 = vsel %vm1133, 1, 0
        %v1198 = vsel %vm1134, 1, 0
        %v1199 = vsel %vm1135, 1, 0
        %v1200 = vsel %vm1136, 1, 0
        %v1201 = vsel %vm1137, 1, 0
        %v1202 = vsel %vm1138, 1, 0
        %v1203 = vsel %vm1139, 1, 0
        %v1204 = vsel %vm1140, 1, 0
        %v1205 = vsel %vm1141, 1, 0
        %v1206 = vsel %vm1142, 1, 0
        %v1207 = vsel %vm1143, 1, 0
        %v1208 = vsel %vm1144, 1, 0
        %v1209 = vsel %vm1145, 1, 0
        %v1210 = vsel %vm1146, 1, 0
        %v1211 = vlaneseq
        %v1212 = vshrl.u32 %v1211, 7
        %v1213 = vsub.s32 0, %v1212
        %v1214 = vrot.slane %v1179, %v1213
        %v1215 = vlaneseq
        %v1216 = vshrl.u32 %v1215, 7
        %v1217 = vsub.s32 0, %v1216
        %v1218 = vrot.slane %v1180, %v1217
        %v1219 = vlaneseq
        %v1220 = vshrl.u32 %v1219, 7
        %v1221 = vsub.s32 0, %v1220
        %v1222 = vrot.slane %v1181, %v1221
        %v1223 = vlaneseq
        %v1224 = vshrl.u32 %v1223, 7
        %v1225 = vsub.s32 0, %v1224
        %v1226 = vrot.slane %v1182, %v1225
        %v1227 = vlaneseq
        %v1228 = vshrl.u32 %v1227, 7
        %v1229 = vsub.s32 0, %v1228
        %v1230 = vrot.slane %v1183, %v1229
        %v1231 = vlaneseq
        %v1232 = vshrl.u32 %v1231, 7
        %v1233 = vsub.s32 0, %v1232
        %v1234 = vrot.slane %v1184, %v1233
        %v1235 = vlaneseq
        %v1236 = vshrl.u32 %v1235, 7
        %v1237 = vsub.s32 0, %v1236
        %v1238 = vrot.slane %v1185, %v1237
        %v1239 = vlaneseq
        %v1240 = vshrl.u32 %v1239, 7
        %v1241 = vsub.s32 0, %v1240
        %v1242 = vrot.slane %v1186, %v1241
        %v1243 = vlaneseq
        %v1244 = vshrl.u32 %v1243, 7
        %v1245 = vsub.s32 0, %v1244
        %v1246 = vrot.slane %v1187, %v1245
        %v1247 = vlaneseq
        %v1248 = vshrl.u32 %v1247, 7
        %v1249 = vsub.s32 0, %v1248
        %v1250 = vrot.slane %v1188, %v1249
        %v1251 = vlaneseq
        %v1252 = vshrl.u32 %v1251, 7
        %v1253 = vsub.s32 0, %v1252
        %v1254 = vrot.slane %v1189, %v1253
        %v1255 = vlaneseq
        %v1256 = vshrl.u32 %v1255, 7
        %v1257 = vsub.s32 0, %v1256
        %v1258 = vrot.slane %v1190, %v1257
        %v1259 = vlaneseq
        %v1260 = vshrl.u32 %v1259, 7
        %v1261 = vsub.s32 0, %v1260
        %v1262 = vrot.slane %v1191, %v1261
        %v1263 = vlaneseq
        %v1264 = vshrl.u32 %v1263, 7
        %v1265 = vsub.s32 0, %v1264
        %v1266 = vrot.slane %v1192, %v1265
        %v1267 = vlaneseq
        %v1268 = vshrl.u32 %v1267, 7
        %v1269 = vsub.s32 0, %v1268
        %v1270 = vrot.slane %v1193, %v1269
        %v1271 = vlaneseq
        %v1272 = vshrl.u32 %v1271, 7
        %v1273 = vsub.s32 0, %v1272
        %v1274 = vrot.slane %v1194, %v1273
        %v1275 = vlaneseq
        %v1276 = vshrl.u32 %v1275, 7
        %v1277 = vsub.s32 0, %v1276
        %v1278 = vrot.slane %v1195, %v1277
        %v1279 = vlaneseq
        %v1280 = vshrl.u32 %v1279, 7
        %v1281 = vsub.s32 0, %v1280
        %v1282 = vrot.slane %v1196, %v1281
        %v1283 = vlaneseq
        %v1284 = vshrl.u32 %v1283, 7
        %v1285 = vsub.s32 0, %v1284
        %v1286 = vrot.slane %v1197, %v1285
        %v1287 = vlaneseq
        %v1288 = vshrl.u32 %v1287, 7
        %v1289 = vsub.s32 0, %v1288
        %v1290 = vrot.slane %v1198, %v1289
        %v1291 = vlaneseq
        %v1292 = vshrl.u32 %v1291, 7
        %v1293 = vsub.s32 0, %v1292
        %v1294 = vrot.slane %v1199, %v1293
        %v1295 = vlaneseq
        %v1296 = vshrl.u32 %v1295, 7
        %v1297 = vsub.s32 0, %v1296
        %v1298 = vrot.slane %v1200, %v1297
        %v1299 = vlaneseq
        %v1300 = vshrl.u32 %v1299, 7
        %v1301 = vsub.s32 0, %v1300
        %v1302 = vrot.slane %v1201, %v1301
        %v1303 = vlaneseq
        %v1304 = vshrl.u32 %v1303, 7
        %v1305 = vsub.s32 0, %v1304
        %v1306 = vrot.slane %v1202, %v1305
        %v1307 = vlaneseq
        %v1308 = vshrl.u32 %v1307, 7
        %v1309 = vsub.s32 0, %v1308
        %v1310 = vrot.slane %v1203, %v1309
        %v1311 = vlaneseq
        %v1312 = vshrl.u32 %v1311, 7
        %v1313 = vsub.s32 0, %v1312
        %v1314 = vrot.slane %v1204, %v1313
        %v1315 = vlaneseq
        %v1316 = vshrl.u32 %v1315, 7
        %v1317 = vsub.s32 0, %v1316
        %v1318 = vrot.slane %v1205, %v1317
        %v1319 = vlaneseq
        %v1320 = vshrl.u32 %v1319, 7
        %v1321 = vsub.s32 0, %v1320
        %v1322 = vrot.slane %v1206, %v1321
        %v1323 = vlaneseq
        %v1324 = vshrl.u32 %v1323, 7
        %v1325 = vsub.s32 0, %v1324
        %v1326 = vrot.slane %v1207, %v1325
        %v1327 = vlaneseq
        %v1328 = vshrl.u32 %v1327, 7
        %v1329 = vsub.s32 0, %v1328
        %v1330 = vrot.slane %v1208, %v1329
        %v1331 = vlaneseq
        %v1332 = vshrl.u32 %v1331, 7
        %v1333 = vsub.s32 0, %v1332
        %v1334 = vrot.slane %v1209, %v1333
        %v1335 = vlaneseq
        %v1336 = vshrl.u32 %v1335, 7
        %v1337 = vsub.s32 0, %v1336
        %v1338 = vrot.slane %v1210, %v1337
        %vm1339 = vcmp.eq.s32.totalorder %v1214, 1
        %vm1340 = vcmp.eq.s32.totalorder %v1218, 1
        %vm1341 = vcmp.eq.s32.totalorder %v1222, 1
        %vm1342 = vcmp.eq.s32.totalorder %v1226, 1
        %vm1343 = vcmp.eq.s32.totalorder %v1230, 1
        %vm1344 = vcmp.eq.s32.totalorder %v1234, 1
        %vm1345 = vcmp.eq.s32.totalorder %v1238, 1
        %vm1346 = vcmp.eq.s32.totalorder %v1242, 1
        %vm1347 = vcmp.eq.s32.totalorder %v1246, 1
        %vm1348 = vcmp.eq.s32.totalorder %v1250, 1
        %vm1349 = vcmp.eq.s32.totalorder %v1254, 1
        %vm1350 = vcmp.eq.s32.totalorder %v1258, 1
        %vm1351 = vcmp.eq.s32.totalorder %v1262, 1
        %vm1352 = vcmp.eq.s32.totalorder %v1266, 1
        %vm1353 = vcmp.eq.s32.totalorder %v1270, 1
        %vm1354 = vcmp.eq.s32.totalorder %v1274, 1
        %vm1355 = vcmp.eq.s32.totalorder %v1278, 1
        %vm1356 = vcmp.eq.s32.totalorder %v1282, 1
        %vm1357 = vcmp.eq.s32.totalorder %v1286, 1
        %vm1358 = vcmp.eq.s32.totalorder %v1290, 1
        %vm1359 = vcmp.eq.s32.totalorder %v1294, 1
        %vm1360 = vcmp.eq.s32.totalorder %v1298, 1
        %vm1361 = vcmp.eq.s32.totalorder %v1302, 1
        %vm1362 = vcmp.eq.s32.totalorder %v1306, 1
        %vm1363 = vcmp.eq.s32.totalorder %v1310, 1
        %vm1364 = vcmp.eq.s32.totalorder %v1314, 1
        %vm1365 = vcmp.eq.s32.totalorder %v1318, 1
        %vm1366 = vcmp.eq.s32.totalorder %v1322, 1
        %vm1367 = vcmp.eq.s32.totalorder %v1326, 1
        %vm1368 = vcmp.eq.s32.totalorder %v1330, 1
        %vm1369 = vcmp.eq.s32.totalorder %v1334, 1
        %vm1370 = vcmp.eq.s32.totalorder %v1338, 1
        %v1371 = vsel %vm1339, %v1163, 1e+30
        %v1372 = vsel %vm1340, %v1163, 1e+30
        %v1373 = vsel %vm1341, %v1163, 1e+30
        %v1374 = vsel %vm1342, %v1163, 1e+30
        %v1375 = vsel %vm1343, %v1163, 1e+30
        %v1376 = vsel %vm1344, %v1163, 1e+30
        %v1377 = vsel %vm1345, %v1163, 1e+30
        %v1378 = vsel %vm1346, %v1163, 1e+30
        %v1379 = vsel %vm1347, %v1163, 1e+30
        %v1380 = vsel %vm1348, %v1163, 1e+30
        %v1381 = vsel %vm1349, %v1163, 1e+30
        %v1382 = vsel %vm1350, %v1163, 1e+30
        %v1383 = vsel %vm1351, %v1163, 1e+30
        %v1384 = vsel %vm1352, %v1163, 1e+30
        %v1385 = vsel %vm1353, %v1163, 1e+30
        %v1386 = vsel %vm1354, %v1163, 1e+30
        %v1387 = vsel %vm1355, %v1163, 1e+30
        %v1388 = vsel %vm1356, %v1163, 1e+30
        %v1389 = vsel %vm1357, %v1163, 1e+30
        %v1390 = vsel %vm1358, %v1163, 1e+30
        %v1391 = vsel %vm1359, %v1163, 1e+30
        %v1392 = vsel %vm1360, %v1163, 1e+30
        %v1393 = vsel %vm1361, %v1163, 1e+30
        %v1394 = vsel %vm1362, %v1163, 1e+30
        %v1395 = vsel %vm1363, %v1163, 1e+30
        %v1396 = vsel %vm1364, %v1163, 1e+30
        %v1397 = vsel %vm1365, %v1163, 1e+30
        %v1398 = vsel %vm1366, %v1163, 1e+30
        %v1399 = vsel %vm1367, %v1163, 1e+30
        %v1400 = vsel %vm1368, %v1163, 1e+30
        %v1401 = vsel %vm1369, %v1163, 1e+30
        %v1402 = vsel %vm1370, %v1163, 1e+30
        %1403 = vmin.xlane.f32.xlu0 %v1371
        %v1404 = vpop.xlane.xlu0 %1403
        %1405 = vmin.xlane.f32.xlu0 %v1372
        %v1406 = vpop.xlane.xlu0 %1405
        %1407 = vmin.xlane.f32.xlu0 %v1373
        %v1408 = vpop.xlane.xlu0 %1407
        %1409 = vmin.xlane.f32.xlu0 %v1374
        %v1410 = vpop.xlane.xlu0 %1409
        %1411 = vmin.xlane.f32.xlu0 %v1375
        %v1412 = vpop.xlane.xlu0 %1411
        %1413 = vmin.xlane.f32.xlu0 %v1376
        %v1414 = vpop.xlane.xlu0 %1413
        %1415 = vmin.xlane.f32.xlu0 %v1377
        %v1416 = vpop.xlane.xlu0 %1415
        %1417 = vmin.xlane.f32.xlu0 %v1378
        %v1418 = vpop.xlane.xlu0 %1417
        %1419 = vmin.xlane.f32.xlu0 %v1379
        %v1420 = vpop.xlane.xlu0 %1419
        %1421 = vmin.xlane.f32.xlu0 %v1380
        %v1422 = vpop.xlane.xlu0 %1421
        %1423 = vmin.xlane.f32.xlu0 %v1381
        %v1424 = vpop.xlane.xlu0 %1423
        %1425 = vmin.xlane.f32.xlu0 %v1382
        %v1426 = vpop.xlane.xlu0 %1425
        %1427 = vmin.xlane.f32.xlu0 %v1383
        %v1428 = vpop.xlane.xlu0 %1427
        %1429 = vmin.xlane.f32.xlu0 %v1384
        %v1430 = vpop.xlane.xlu0 %1429
        %1431 = vmin.xlane.f32.xlu0 %v1385
        %v1432 = vpop.xlane.xlu0 %1431
        %1433 = vmin.xlane.f32.xlu0 %v1386
        %v1434 = vpop.xlane.xlu0 %1433
        %1435 = vmin.xlane.f32.xlu0 %v1387
        %v1436 = vpop.xlane.xlu0 %1435
        %1437 = vmin.xlane.f32.xlu0 %v1388
        %v1438 = vpop.xlane.xlu0 %1437
        %1439 = vmin.xlane.f32.xlu0 %v1389
        %v1440 = vpop.xlane.xlu0 %1439
        %1441 = vmin.xlane.f32.xlu0 %v1390
        %v1442 = vpop.xlane.xlu0 %1441
        %1443 = vmin.xlane.f32.xlu0 %v1391
        %v1444 = vpop.xlane.xlu0 %1443
        %1445 = vmin.xlane.f32.xlu0 %v1392
        %v1446 = vpop.xlane.xlu0 %1445
        %1447 = vmin.xlane.f32.xlu0 %v1393
        %v1448 = vpop.xlane.xlu0 %1447
        %1449 = vmin.xlane.f32.xlu0 %v1394
        %v1450 = vpop.xlane.xlu0 %1449
        %1451 = vmin.xlane.f32.xlu0 %v1395
        %v1452 = vpop.xlane.xlu0 %1451
        %1453 = vmin.xlane.f32.xlu0 %v1396
        %v1454 = vpop.xlane.xlu0 %1453
        %1455 = vmin.xlane.f32.xlu0 %v1397
        %v1456 = vpop.xlane.xlu0 %1455
        %1457 = vmin.xlane.f32.xlu0 %v1398
        %v1458 = vpop.xlane.xlu0 %1457
        %1459 = vmin.xlane.f32.xlu0 %v1399
        %v1460 = vpop.xlane.xlu0 %1459
        %1461 = vmin.xlane.f32.xlu0 %v1400
        %v1462 = vpop.xlane.xlu0 %1461
        %1463 = vmin.xlane.f32.xlu0 %v1401
        %v1464 = vpop.xlane.xlu0 %1463
        %1465 = vmin.xlane.f32.xlu0 %v1402
        %v1466 = vpop.xlane.xlu0 %1465
        %v1467 = vsel %vm1339, %v1163, -1e+30
        %v1468 = vsel %vm1340, %v1163, -1e+30
        %v1469 = vsel %vm1341, %v1163, -1e+30
        %v1470 = vsel %vm1342, %v1163, -1e+30
        %v1471 = vsel %vm1343, %v1163, -1e+30
        %v1472 = vsel %vm1344, %v1163, -1e+30
        %v1473 = vsel %vm1345, %v1163, -1e+30
        %v1474 = vsel %vm1346, %v1163, -1e+30
        %v1475 = vsel %vm1347, %v1163, -1e+30
        %v1476 = vsel %vm1348, %v1163, -1e+30
        %v1477 = vsel %vm1349, %v1163, -1e+30
        %v1478 = vsel %vm1350, %v1163, -1e+30
        %v1479 = vsel %vm1351, %v1163, -1e+30
        %v1480 = vsel %vm1352, %v1163, -1e+30
        %v1481 = vsel %vm1353, %v1163, -1e+30
        %v1482 = vsel %vm1354, %v1163, -1e+30
        %v1483 = vsel %vm1355, %v1163, -1e+30
        %v1484 = vsel %vm1356, %v1163, -1e+30
        %v1485 = vsel %vm1357, %v1163, -1e+30
        %v1486 = vsel %vm1358, %v1163, -1e+30
        %v1487 = vsel %vm1359, %v1163, -1e+30
        %v1488 = vsel %vm1360, %v1163, -1e+30
        %v1489 = vsel %vm1361, %v1163, -1e+30
        %v1490 = vsel %vm1362, %v1163, -1e+30
        %v1491 = vsel %vm1363, %v1163, -1e+30
        %v1492 = vsel %vm1364, %v1163, -1e+30
        %v1493 = vsel %vm1365, %v1163, -1e+30
        %v1494 = vsel %vm1366, %v1163, -1e+30
        %v1495 = vsel %vm1367, %v1163, -1e+30
        %v1496 = vsel %vm1368, %v1163, -1e+30
        %v1497 = vsel %vm1369, %v1163, -1e+30
        %v1498 = vsel %vm1370, %v1163, -1e+30
        %1499 = vmax.xlane.f32.xlu0 %v1467
        %v1500 = vpop.xlane.xlu0 %1499
        %1501 = vmax.xlane.f32.xlu0 %v1468
        %v1502 = vpop.xlane.xlu0 %1501
        %1503 = vmax.xlane.f32.xlu0 %v1469
        %v1504 = vpop.xlane.xlu0 %1503
        %1505 = vmax.xlane.f32.xlu0 %v1470
        %v1506 = vpop.xlane.xlu0 %1505
        %1507 = vmax.xlane.f32.xlu0 %v1471
        %v1508 = vpop.xlane.xlu0 %1507
        %1509 = vmax.xlane.f32.xlu0 %v1472
        %v1510 = vpop.xlane.xlu0 %1509
        %1511 = vmax.xlane.f32.xlu0 %v1473
        %v1512 = vpop.xlane.xlu0 %1511
        %1513 = vmax.xlane.f32.xlu0 %v1474
        %v1514 = vpop.xlane.xlu0 %1513
        %1515 = vmax.xlane.f32.xlu0 %v1475
        %v1516 = vpop.xlane.xlu0 %1515
        %1517 = vmax.xlane.f32.xlu0 %v1476
        %v1518 = vpop.xlane.xlu0 %1517
        %1519 = vmax.xlane.f32.xlu0 %v1477
        %v1520 = vpop.xlane.xlu0 %1519
        %1521 = vmax.xlane.f32.xlu0 %v1478
        %v1522 = vpop.xlane.xlu0 %1521
        %1523 = vmax.xlane.f32.xlu0 %v1479
        %v1524 = vpop.xlane.xlu0 %1523
        %1525 = vmax.xlane.f32.xlu0 %v1480
        %v1526 = vpop.xlane.xlu0 %1525
        %1527 = vmax.xlane.f32.xlu0 %v1481
        %v1528 = vpop.xlane.xlu0 %1527
        %1529 = vmax.xlane.f32.xlu0 %v1482
        %v1530 = vpop.xlane.xlu0 %1529
        %1531 = vmax.xlane.f32.xlu0 %v1483
        %v1532 = vpop.xlane.xlu0 %1531
        %1533 = vmax.xlane.f32.xlu0 %v1484
        %v1534 = vpop.xlane.xlu0 %1533
        %1535 = vmax.xlane.f32.xlu0 %v1485
        %v1536 = vpop.xlane.xlu0 %1535
        %1537 = vmax.xlane.f32.xlu0 %v1486
        %v1538 = vpop.xlane.xlu0 %1537
        %1539 = vmax.xlane.f32.xlu0 %v1487
        %v1540 = vpop.xlane.xlu0 %1539
        %1541 = vmax.xlane.f32.xlu0 %v1488
        %v1542 = vpop.xlane.xlu0 %1541
        %1543 = vmax.xlane.f32.xlu0 %v1489
        %v1544 = vpop.xlane.xlu0 %1543
        %1545 = vmax.xlane.f32.xlu0 %v1490
        %v1546 = vpop.xlane.xlu0 %1545
        %1547 = vmax.xlane.f32.xlu0 %v1491
        %v1548 = vpop.xlane.xlu0 %1547
        %1549 = vmax.xlane.f32.xlu0 %v1492
        %v1550 = vpop.xlane.xlu0 %1549
        %1551 = vmax.xlane.f32.xlu0 %v1493
        %v1552 = vpop.xlane.xlu0 %1551
        %1553 = vmax.xlane.f32.xlu0 %v1494
        %v1554 = vpop.xlane.xlu0 %1553
        %1555 = vmax.xlane.f32.xlu0 %v1495
        %v1556 = vpop.xlane.xlu0 %1555
        %1557 = vmax.xlane.f32.xlu0 %v1496
        %v1558 = vpop.xlane.xlu0 %1557
        %1559 = vmax.xlane.f32.xlu0 %v1497
        %v1560 = vpop.xlane.xlu0 %1559
        %1561 = vmax.xlane.f32.xlu0 %v1498
        %v1562 = vpop.xlane.xlu0 %1561
        %1579 = vrot.lane.b32.xlu0 %v601, 120
        %v1580 = vpop.permute.xlu0 %1579
        %1581 = vrot.lane.b32.xlu0 %v606, 120
        %v1582 = vpop.permute.xlu0 %1581
        %1583 = vrot.lane.b32.xlu0 %v611, 120
        %v1584 = vpop.permute.xlu0 %1583
        %1585 = vrot.lane.b32.xlu0 %v616, 120
        %v1586 = vpop.permute.xlu0 %1585
        %1587 = vrot.lane.b32.xlu0 %v621, 120
        %v1588 = vpop.permute.xlu0 %1587
        %1589 = vrot.lane.b32.xlu0 %v626, 120
        %v1590 = vpop.permute.xlu0 %1589
        %1591 = vrot.lane.b32.xlu0 %v631, 120
        %v1592 = vpop.permute.xlu0 %1591
        %1593 = vrot.lane.b32.xlu0 %v636, 120
        %v1594 = vpop.permute.xlu0 %1593
        %1595 = vrot.lane.b32.xlu0 %v641, 120
        %v1596 = vpop.permute.xlu0 %1595
        %1597 = vrot.lane.b32.xlu0 %v646, 120
        %v1598 = vpop.permute.xlu0 %1597
        %1599 = vrot.lane.b32.xlu0 %v651, 120
        %v1600 = vpop.permute.xlu0 %1599
        %1601 = vrot.lane.b32.xlu0 %v656, 120
        %v1602 = vpop.permute.xlu0 %1601
        %1603 = vrot.lane.b32.xlu0 %v661, 120
        %v1604 = vpop.permute.xlu0 %1603
        %1605 = vrot.lane.b32.xlu0 %v666, 120
        %v1606 = vpop.permute.xlu0 %1605
        %1607 = vrot.lane.b32.xlu0 %v671, 120
        %v1608 = vpop.permute.xlu0 %1607
        %1609 = vrot.lane.b32.xlu0 %v676, 120
        %v1610 = vpop.permute.xlu0 %1609
        %1627 = vxpose.xlu0.b32.start [1/16] %v1580, 128
        %1628 = vxpose.xlu0.b32.cont [2/16] %v1582, 128
        %1629 = vxpose.xlu0.b32.cont [3/16] %v1584, 128
        %1630 = vxpose.xlu0.b32.cont [4/16] %v1586, 128
        %1631 = vxpose.xlu0.b32.cont [5/16] %v1588, 128
        %1632 = vxpose.xlu0.b32.cont [6/16] %v1590, 128
        %1633 = vxpose.xlu0.b32.cont [7/16] %v1592, 128
        %1634 = vxpose.xlu0.b32.cont [8/16] %v1594, 128
        %1635 = vxpose.xlu0.b32.cont [9/16] %v1596, 128
        %1636 = vxpose.xlu0.b32.cont [10/16] %v1598, 128
        %1637 = vxpose.xlu0.b32.cont [11/16] %v1600, 128
        %1638 = vxpose.xlu0.b32.cont [12/16] %v1602, 128
        %1639 = vxpose.xlu0.b32.cont [13/16] %v1604, 128
        %1640 = vxpose.xlu0.b32.cont [14/16] %v1606, 128
        %1641 = vxpose.xlu0.b32.cont [15/16] %v1608, 128
        %1642 = vxpose.xlu0.b32.end [16/16] %v1610, 128
        %v1643 = vpop.trf.xlu0
        %v1644 = vpop.trf.xlu0
        %v1645 = vpop.trf.xlu0
        %v1646 = vpop.trf.xlu0
        %v1647 = vpop.trf.xlu0
        %v1648 = vpop.trf.xlu0
        %v1649 = vpop.trf.xlu0
        %v1650 = vpop.trf.xlu0
        %v1651 = vpop.trf.xlu0
        %v1652 = vpop.trf.xlu0
        %v1653 = vpop.trf.xlu0
        %v1654 = vpop.trf.xlu0
        %v1655 = vpop.trf.xlu0
        %v1656 = vpop.trf.xlu0
        %v1657 = vpop.trf.xlu0
        %v1658 = vpop.trf.xlu0
        %v1659 = vsel %vm1339, %v1643, 1e+30
        %v1660 = vsel %vm1340, %v1643, 1e+30
        %v1661 = vsel %vm1341, %v1643, 1e+30
        %v1662 = vsel %vm1342, %v1643, 1e+30
        %v1663 = vsel %vm1343, %v1643, 1e+30
        %v1664 = vsel %vm1344, %v1643, 1e+30
        %v1665 = vsel %vm1345, %v1643, 1e+30
        %v1666 = vsel %vm1346, %v1643, 1e+30
        %v1667 = vsel %vm1347, %v1643, 1e+30
        %v1668 = vsel %vm1348, %v1643, 1e+30
        %v1669 = vsel %vm1349, %v1643, 1e+30
        %v1670 = vsel %vm1350, %v1643, 1e+30
        %v1671 = vsel %vm1351, %v1643, 1e+30
        %v1672 = vsel %vm1352, %v1643, 1e+30
        %v1673 = vsel %vm1353, %v1643, 1e+30
        %v1674 = vsel %vm1354, %v1643, 1e+30
        %v1675 = vsel %vm1355, %v1643, 1e+30
        %v1676 = vsel %vm1356, %v1643, 1e+30
        %v1677 = vsel %vm1357, %v1643, 1e+30
        %v1678 = vsel %vm1358, %v1643, 1e+30
        %v1679 = vsel %vm1359, %v1643, 1e+30
        %v1680 = vsel %vm1360, %v1643, 1e+30
        %v1681 = vsel %vm1361, %v1643, 1e+30
        %v1682 = vsel %vm1362, %v1643, 1e+30
        %v1683 = vsel %vm1363, %v1643, 1e+30
        %v1684 = vsel %vm1364, %v1643, 1e+30
        %v1685 = vsel %vm1365, %v1643, 1e+30
        %v1686 = vsel %vm1366, %v1643, 1e+30
        %v1687 = vsel %vm1367, %v1643, 1e+30
        %v1688 = vsel %vm1368, %v1643, 1e+30
        %v1689 = vsel %vm1369, %v1643, 1e+30
        %v1690 = vsel %vm1370, %v1643, 1e+30
        %1691 = vmin.xlane.f32.xlu0 %v1659
        %v1692 = vpop.xlane.xlu0 %1691
        %1693 = vmin.xlane.f32.xlu0 %v1660
        %v1694 = vpop.xlane.xlu0 %1693
        %1695 = vmin.xlane.f32.xlu0 %v1661
        %v1696 = vpop.xlane.xlu0 %1695
        %1697 = vmin.xlane.f32.xlu0 %v1662
        %v1698 = vpop.xlane.xlu0 %1697
        %1699 = vmin.xlane.f32.xlu0 %v1663
        %v1700 = vpop.xlane.xlu0 %1699
        %1701 = vmin.xlane.f32.xlu0 %v1664
        %v1702 = vpop.xlane.xlu0 %1701
        %1703 = vmin.xlane.f32.xlu0 %v1665
        %v1704 = vpop.xlane.xlu0 %1703
        %1705 = vmin.xlane.f32.xlu0 %v1666
        %v1706 = vpop.xlane.xlu0 %1705
        %1707 = vmin.xlane.f32.xlu0 %v1667
        %v1708 = vpop.xlane.xlu0 %1707
        %1709 = vmin.xlane.f32.xlu0 %v1668
        %v1710 = vpop.xlane.xlu0 %1709
        %1711 = vmin.xlane.f32.xlu0 %v1669
        %v1712 = vpop.xlane.xlu0 %1711
        %1713 = vmin.xlane.f32.xlu0 %v1670
        %v1714 = vpop.xlane.xlu0 %1713
        %1715 = vmin.xlane.f32.xlu0 %v1671
        %v1716 = vpop.xlane.xlu0 %1715
        %1717 = vmin.xlane.f32.xlu0 %v1672
        %v1718 = vpop.xlane.xlu0 %1717
        %1719 = vmin.xlane.f32.xlu0 %v1673
        %v1720 = vpop.xlane.xlu0 %1719
        %1721 = vmin.xlane.f32.xlu0 %v1674
        %v1722 = vpop.xlane.xlu0 %1721
        %1723 = vmin.xlane.f32.xlu0 %v1675
        %v1724 = vpop.xlane.xlu0 %1723
        %1725 = vmin.xlane.f32.xlu0 %v1676
        %v1726 = vpop.xlane.xlu0 %1725
        %1727 = vmin.xlane.f32.xlu0 %v1677
        %v1728 = vpop.xlane.xlu0 %1727
        %1729 = vmin.xlane.f32.xlu0 %v1678
        %v1730 = vpop.xlane.xlu0 %1729
        %1731 = vmin.xlane.f32.xlu0 %v1679
        %v1732 = vpop.xlane.xlu0 %1731
        %1733 = vmin.xlane.f32.xlu0 %v1680
        %v1734 = vpop.xlane.xlu0 %1733
        %1735 = vmin.xlane.f32.xlu0 %v1681
        %v1736 = vpop.xlane.xlu0 %1735
        %1737 = vmin.xlane.f32.xlu0 %v1682
        %v1738 = vpop.xlane.xlu0 %1737
        %1739 = vmin.xlane.f32.xlu0 %v1683
        %v1740 = vpop.xlane.xlu0 %1739
        %1741 = vmin.xlane.f32.xlu0 %v1684
        %v1742 = vpop.xlane.xlu0 %1741
        %1743 = vmin.xlane.f32.xlu0 %v1685
        %v1744 = vpop.xlane.xlu0 %1743
        %1745 = vmin.xlane.f32.xlu0 %v1686
        %v1746 = vpop.xlane.xlu0 %1745
        %1747 = vmin.xlane.f32.xlu0 %v1687
        %v1748 = vpop.xlane.xlu0 %1747
        %1749 = vmin.xlane.f32.xlu0 %v1688
        %v1750 = vpop.xlane.xlu0 %1749
        %1751 = vmin.xlane.f32.xlu0 %v1689
        %v1752 = vpop.xlane.xlu0 %1751
        %1753 = vmin.xlane.f32.xlu0 %v1690
        %v1754 = vpop.xlane.xlu0 %1753
        %v1755 = vsel %vm1339, %v1643, -1e+30
        %v1756 = vsel %vm1340, %v1643, -1e+30
        %v1757 = vsel %vm1341, %v1643, -1e+30
        %v1758 = vsel %vm1342, %v1643, -1e+30
        %v1759 = vsel %vm1343, %v1643, -1e+30
        %v1760 = vsel %vm1344, %v1643, -1e+30
        %v1761 = vsel %vm1345, %v1643, -1e+30
        %v1762 = vsel %vm1346, %v1643, -1e+30
        %v1763 = vsel %vm1347, %v1643, -1e+30
        %v1764 = vsel %vm1348, %v1643, -1e+30
        %v1765 = vsel %vm1349, %v1643, -1e+30
        %v1766 = vsel %vm1350, %v1643, -1e+30
        %v1767 = vsel %vm1351, %v1643, -1e+30
        %v1768 = vsel %vm1352, %v1643, -1e+30
        %v1769 = vsel %vm1353, %v1643, -1e+30
        %v1770 = vsel %vm1354, %v1643, -1e+30
        %v1771 = vsel %vm1355, %v1643, -1e+30
        %v1772 = vsel %vm1356, %v1643, -1e+30
        %v1773 = vsel %vm1357, %v1643, -1e+30
        %v1774 = vsel %vm1358, %v1643, -1e+30
        %v1775 = vsel %vm1359, %v1643, -1e+30
        %v1776 = vsel %vm1360, %v1643, -1e+30
        %v1777 = vsel %vm1361, %v1643, -1e+30
        %v1778 = vsel %vm1362, %v1643, -1e+30
        %v1779 = vsel %vm1363, %v1643, -1e+30
        %v1780 = vsel %vm1364, %v1643, -1e+30
        %v1781 = vsel %vm1365, %v1643, -1e+30
        %v1782 = vsel %vm1366, %v1643, -1e+30
        %v1783 = vsel %vm1367, %v1643, -1e+30
        %v1784 = vsel %vm1368, %v1643, -1e+30
        %v1785 = vsel %vm1369, %v1643, -1e+30
        %v1786 = vsel %vm1370, %v1643, -1e+30
        %1787 = vmax.xlane.f32.xlu0 %v1755
        %v1788 = vpop.xlane.xlu0 %1787
        %1789 = vmax.xlane.f32.xlu0 %v1756
        %v1790 = vpop.xlane.xlu0 %1789
        %1791 = vmax.xlane.f32.xlu0 %v1757
        %v1792 = vpop.xlane.xlu0 %1791
        %1793 = vmax.xlane.f32.xlu0 %v1758
        %v1794 = vpop.xlane.xlu0 %1793
        %1795 = vmax.xlane.f32.xlu0 %v1759
        %v1796 = vpop.xlane.xlu0 %1795
        %1797 = vmax.xlane.f32.xlu0 %v1760
        %v1798 = vpop.xlane.xlu0 %1797
        %1799 = vmax.xlane.f32.xlu0 %v1761
        %v1800 = vpop.xlane.xlu0 %1799
        %1801 = vmax.xlane.f32.xlu0 %v1762
        %v1802 = vpop.xlane.xlu0 %1801
        %1803 = vmax.xlane.f32.xlu0 %v1763
        %v1804 = vpop.xlane.xlu0 %1803
        %1805 = vmax.xlane.f32.xlu0 %v1764
        %v1806 = vpop.xlane.xlu0 %1805
        %1807 = vmax.xlane.f32.xlu0 %v1765
        %v1808 = vpop.xlane.xlu0 %1807
        %1809 = vmax.xlane.f32.xlu0 %v1766
        %v1810 = vpop.xlane.xlu0 %1809
        %1811 = vmax.xlane.f32.xlu0 %v1767
        %v1812 = vpop.xlane.xlu0 %1811
        %1813 = vmax.xlane.f32.xlu0 %v1768
        %v1814 = vpop.xlane.xlu0 %1813
        %1815 = vmax.xlane.f32.xlu0 %v1769
        %v1816 = vpop.xlane.xlu0 %1815
        %1817 = vmax.xlane.f32.xlu0 %v1770
        %v1818 = vpop.xlane.xlu0 %1817
        %1819 = vmax.xlane.f32.xlu0 %v1771
        %v1820 = vpop.xlane.xlu0 %1819
        %1821 = vmax.xlane.f32.xlu0 %v1772
        %v1822 = vpop.xlane.xlu0 %1821
        %1823 = vmax.xlane.f32.xlu0 %v1773
        %v1824 = vpop.xlane.xlu0 %1823
        %1825 = vmax.xlane.f32.xlu0 %v1774
        %v1826 = vpop.xlane.xlu0 %1825
        %1827 = vmax.xlane.f32.xlu0 %v1775
        %v1828 = vpop.xlane.xlu0 %1827
        %1829 = vmax.xlane.f32.xlu0 %v1776
        %v1830 = vpop.xlane.xlu0 %1829
        %1831 = vmax.xlane.f32.xlu0 %v1777
        %v1832 = vpop.xlane.xlu0 %1831
        %1833 = vmax.xlane.f32.xlu0 %v1778
        %v1834 = vpop.xlane.xlu0 %1833
        %1835 = vmax.xlane.f32.xlu0 %v1779
        %v1836 = vpop.xlane.xlu0 %1835
        %1837 = vmax.xlane.f32.xlu0 %v1780
        %v1838 = vpop.xlane.xlu0 %1837
        %1839 = vmax.xlane.f32.xlu0 %v1781
        %v1840 = vpop.xlane.xlu0 %1839
        %1841 = vmax.xlane.f32.xlu0 %v1782
        %v1842 = vpop.xlane.xlu0 %1841
        %1843 = vmax.xlane.f32.xlu0 %v1783
        %v1844 = vpop.xlane.xlu0 %1843
        %1845 = vmax.xlane.f32.xlu0 %v1784
        %v1846 = vpop.xlane.xlu0 %1845
        %1847 = vmax.xlane.f32.xlu0 %v1785
        %v1848 = vpop.xlane.xlu0 %1847
        %1849 = vmax.xlane.f32.xlu0 %v1786
        %v1850 = vpop.xlane.xlu0 %1849
        %1851 = vrot.lane.b32.xlu0 %v601, 112
        %v1852 = vpop.permute.xlu0 %1851
        %1853 = vrot.lane.b32.xlu0 %v606, 112
        %v1854 = vpop.permute.xlu0 %1853
        %1855 = vrot.lane.b32.xlu0 %v611, 112
        %v1856 = vpop.permute.xlu0 %1855
        %1857 = vrot.lane.b32.xlu0 %v616, 112
        %v1858 = vpop.permute.xlu0 %1857
        %1859 = vrot.lane.b32.xlu0 %v621, 112
        %v1860 = vpop.permute.xlu0 %1859
        %1861 = vrot.lane.b32.xlu0 %v626, 112
        %v1862 = vpop.permute.xlu0 %1861
        %1863 = vrot.lane.b32.xlu0 %v631, 112
        %v1864 = vpop.permute.xlu0 %1863
        %1865 = vrot.lane.b32.xlu0 %v636, 112
        %v1866 = vpop.permute.xlu0 %1865
        %1867 = vrot.lane.b32.xlu0 %v641, 112
        %v1868 = vpop.permute.xlu0 %1867
        %1869 = vrot.lane.b32.xlu0 %v646, 112
        %v1870 = vpop.permute.xlu0 %1869
        %1871 = vrot.lane.b32.xlu0 %v651, 112
        %v1872 = vpop.permute.xlu0 %1871
        %1873 = vrot.lane.b32.xlu0 %v656, 112
        %v1874 = vpop.permute.xlu0 %1873
        %1875 = vrot.lane.b32.xlu0 %v661, 112
        %v1876 = vpop.permute.xlu0 %1875
        %1877 = vrot.lane.b32.xlu0 %v666, 112
        %v1878 = vpop.permute.xlu0 %1877
        %1879 = vrot.lane.b32.xlu0 %v671, 112
        %v1880 = vpop.permute.xlu0 %1879
        %1881 = vrot.lane.b32.xlu0 %v676, 112
        %v1882 = vpop.permute.xlu0 %1881
        %1899 = vxpose.xlu0.b32.start [1/16] %v1852, 128
        %1900 = vxpose.xlu0.b32.cont [2/16] %v1854, 128
        %1901 = vxpose.xlu0.b32.cont [3/16] %v1856, 128
        %1902 = vxpose.xlu0.b32.cont [4/16] %v1858, 128
        %1903 = vxpose.xlu0.b32.cont [5/16] %v1860, 128
        %1904 = vxpose.xlu0.b32.cont [6/16] %v1862, 128
        %1905 = vxpose.xlu0.b32.cont [7/16] %v1864, 128
        %1906 = vxpose.xlu0.b32.cont [8/16] %v1866, 128
        %1907 = vxpose.xlu0.b32.cont [9/16] %v1868, 128
        %1908 = vxpose.xlu0.b32.cont [10/16] %v1870, 128
        %1909 = vxpose.xlu0.b32.cont [11/16] %v1872, 128
        %1910 = vxpose.xlu0.b32.cont [12/16] %v1874, 128
        %1911 = vxpose.xlu0.b32.cont [13/16] %v1876, 128
        %1912 = vxpose.xlu0.b32.cont [14/16] %v1878, 128
        %1913 = vxpose.xlu0.b32.cont [15/16] %v1880, 128
        %1914 = vxpose.xlu0.b32.end [16/16] %v1882, 128
        %v1915 = vpop.trf.xlu0
        %v1916 = vpop.trf.xlu0
        %v1917 = vpop.trf.xlu0
        %v1918 = vpop.trf.xlu0
        %v1919 = vpop.trf.xlu0
        %v1920 = vpop.trf.xlu0
        %v1921 = vpop.trf.xlu0
        %v1922 = vpop.trf.xlu0
        %v1923 = vpop.trf.xlu0
        %v1924 = vpop.trf.xlu0
        %v1925 = vpop.trf.xlu0
        %v1926 = vpop.trf.xlu0
        %v1927 = vpop.trf.xlu0
        %v1928 = vpop.trf.xlu0
        %v1929 = vpop.trf.xlu0
        %v1930 = vpop.trf.xlu0
        %v1931 = vsel %vm1339, %v1915, 1e+30
        %v1932 = vsel %vm1340, %v1915, 1e+30
        %v1933 = vsel %vm1341, %v1915, 1e+30
        %v1934 = vsel %vm1342, %v1915, 1e+30
        %v1935 = vsel %vm1343, %v1915, 1e+30
        %v1936 = vsel %vm1344, %v1915, 1e+30
        %v1937 = vsel %vm1345, %v1915, 1e+30
        %v1938 = vsel %vm1346, %v1915, 1e+30
        %v1939 = vsel %vm1347, %v1915, 1e+30
        %v1940 = vsel %vm1348, %v1915, 1e+30
        %v1941 = vsel %vm1349, %v1915, 1e+30
        %v1942 = vsel %vm1350, %v1915, 1e+30
        %v1943 = vsel %vm1351, %v1915, 1e+30
        %v1944 = vsel %vm1352, %v1915, 1e+30
        %v1945 = vsel %vm1353, %v1915, 1e+30
        %v1946 = vsel %vm1354, %v1915, 1e+30
        %v1947 = vsel %vm1355, %v1915, 1e+30
        %v1948 = vsel %vm1356, %v1915, 1e+30
        %v1949 = vsel %vm1357, %v1915, 1e+30
        %v1950 = vsel %vm1358, %v1915, 1e+30
        %v1951 = vsel %vm1359, %v1915, 1e+30
        %v1952 = vsel %vm1360, %v1915, 1e+30
        %v1953 = vsel %vm1361, %v1915, 1e+30
        %v1954 = vsel %vm1362, %v1915, 1e+30
        %v1955 = vsel %vm1363, %v1915, 1e+30
        %v1956 = vsel %vm1364, %v1915, 1e+30
        %v1957 = vsel %vm1365, %v1915, 1e+30
        %v1958 = vsel %vm1366, %v1915, 1e+30
        %v1959 = vsel %vm1367, %v1915, 1e+30
        %v1960 = vsel %vm1368, %v1915, 1e+30
        %v1961 = vsel %vm1369, %v1915, 1e+30
        %v1962 = vsel %vm1370, %v1915, 1e+30
        %1963 = vmin.xlane.f32.xlu0 %v1931
        %v1964 = vpop.xlane.xlu0 %1963
        %1965 = vmin.xlane.f32.xlu0 %v1932
        %v1966 = vpop.xlane.xlu0 %1965
        %1967 = vmin.xlane.f32.xlu0 %v1933
        %v1968 = vpop.xlane.xlu0 %1967
        %1969 = vmin.xlane.f32.xlu0 %v1934
        %v1970 = vpop.xlane.xlu0 %1969
        %1971 = vmin.xlane.f32.xlu0 %v1935
        %v1972 = vpop.xlane.xlu0 %1971
        %1973 = vmin.xlane.f32.xlu0 %v1936
        %v1974 = vpop.xlane.xlu0 %1973
        %1975 = vmin.xlane.f32.xlu0 %v1937
        %v1976 = vpop.xlane.xlu0 %1975
        %1977 = vmin.xlane.f32.xlu0 %v1938
        %v1978 = vpop.xlane.xlu0 %1977
        %1979 = vmin.xlane.f32.xlu0 %v1939
        %v1980 = vpop.xlane.xlu0 %1979
        %1981 = vmin.xlane.f32.xlu0 %v1940
        %v1982 = vpop.xlane.xlu0 %1981
        %1983 = vmin.xlane.f32.xlu0 %v1941
        %v1984 = vpop.xlane.xlu0 %1983
        %1985 = vmin.xlane.f32.xlu0 %v1942
        %v1986 = vpop.xlane.xlu0 %1985
        %1987 = vmin.xlane.f32.xlu0 %v1943
        %v1988 = vpop.xlane.xlu0 %1987
        %1989 = vmin.xlane.f32.xlu0 %v1944
        %v1990 = vpop.xlane.xlu0 %1989
        %1991 = vmin.xlane.f32.xlu0 %v1945
        %v1992 = vpop.xlane.xlu0 %1991
        %1993 = vmin.xlane.f32.xlu0 %v1946
        %v1994 = vpop.xlane.xlu0 %1993
        %1995 = vmin.xlane.f32.xlu0 %v1947
        %v1996 = vpop.xlane.xlu0 %1995
        %1997 = vmin.xlane.f32.xlu0 %v1948
        %v1998 = vpop.xlane.xlu0 %1997
        %1999 = vmin.xlane.f32.xlu0 %v1949
        %v2000 = vpop.xlane.xlu0 %1999
        %2001 = vmin.xlane.f32.xlu0 %v1950
        %v2002 = vpop.xlane.xlu0 %2001
        %2003 = vmin.xlane.f32.xlu0 %v1951
        %v2004 = vpop.xlane.xlu0 %2003
        %2005 = vmin.xlane.f32.xlu0 %v1952
        %v2006 = vpop.xlane.xlu0 %2005
        %2007 = vmin.xlane.f32.xlu0 %v1953
        %v2008 = vpop.xlane.xlu0 %2007
        %2009 = vmin.xlane.f32.xlu0 %v1954
        %v2010 = vpop.xlane.xlu0 %2009
        %2011 = vmin.xlane.f32.xlu0 %v1955
        %v2012 = vpop.xlane.xlu0 %2011
        %2013 = vmin.xlane.f32.xlu0 %v1956
        %v2014 = vpop.xlane.xlu0 %2013
        %2015 = vmin.xlane.f32.xlu0 %v1957
        %v2016 = vpop.xlane.xlu0 %2015
        %2017 = vmin.xlane.f32.xlu0 %v1958
        %v2018 = vpop.xlane.xlu0 %2017
        %2019 = vmin.xlane.f32.xlu0 %v1959
        %v2020 = vpop.xlane.xlu0 %2019
        %2021 = vmin.xlane.f32.xlu0 %v1960
        %v2022 = vpop.xlane.xlu0 %2021
        %2023 = vmin.xlane.f32.xlu0 %v1961
        %v2024 = vpop.xlane.xlu0 %2023
        %2025 = vmin.xlane.f32.xlu0 %v1962
        %v2026 = vpop.xlane.xlu0 %2025
        %v2027 = vsel %vm1339, %v1915, -1e+30
        %v2028 = vsel %vm1340, %v1915, -1e+30
        %v2029 = vsel %vm1341, %v1915, -1e+30
        %v2030 = vsel %vm1342, %v1915, -1e+30
        %v2031 = vsel %vm1343, %v1915, -1e+30
        %v2032 = vsel %vm1344, %v1915, -1e+30
        %v2033 = vsel %vm1345, %v1915, -1e+30
        %v2034 = vsel %vm1346, %v1915, -1e+30
        %v2035 = vsel %vm1347, %v1915, -1e+30
        %v2036 = vsel %vm1348, %v1915, -1e+30
        %v2037 = vsel %vm1349, %v1915, -1e+30
        %v2038 = vsel %vm1350, %v1915, -1e+30
        %v2039 = vsel %vm1351, %v1915, -1e+30
        %v2040 = vsel %vm1352, %v1915, -1e+30
        %v2041 = vsel %vm1353, %v1915, -1e+30
        %v2042 = vsel %vm1354, %v1915, -1e+30
        %v2043 = vsel %vm1355, %v1915, -1e+30
        %v2044 = vsel %vm1356, %v1915, -1e+30
        %v2045 = vsel %vm1357, %v1915, -1e+30
        %v2046 = vsel %vm1358, %v1915, -1e+30
        %v2047 = vsel %vm1359, %v1915, -1e+30
        %v2048 = vsel %vm1360, %v1915, -1e+30
        %v2049 = vsel %vm1361, %v1915, -1e+30
        %v2050 = vsel %vm1362, %v1915, -1e+30
        %v2051 = vsel %vm1363, %v1915, -1e+30
        %v2052 = vsel %vm1364, %v1915, -1e+30
        %v2053 = vsel %vm1365, %v1915, -1e+30
        %v2054 = vsel %vm1366, %v1915, -1e+30
        %v2055 = vsel %vm1367, %v1915, -1e+30
        %v2056 = vsel %vm1368, %v1915, -1e+30
        %v2057 = vsel %vm1369, %v1915, -1e+30
        %v2058 = vsel %vm1370, %v1915, -1e+30
        %2059 = vmax.xlane.f32.xlu0 %v2027
        %v2060 = vpop.xlane.xlu0 %2059
        %2061 = vmax.xlane.f32.xlu0 %v2028
        %v2062 = vpop.xlane.xlu0 %2061
        %2063 = vmax.xlane.f32.xlu0 %v2029
        %v2064 = vpop.xlane.xlu0 %2063
        %2065 = vmax.xlane.f32.xlu0 %v2030
        %v2066 = vpop.xlane.xlu0 %2065
        %2067 = vmax.xlane.f32.xlu0 %v2031
        %v2068 = vpop.xlane.xlu0 %2067
        %2069 = vmax.xlane.f32.xlu0 %v2032
        %v2070 = vpop.xlane.xlu0 %2069
        %2071 = vmax.xlane.f32.xlu0 %v2033
        %v2072 = vpop.xlane.xlu0 %2071
        %2073 = vmax.xlane.f32.xlu0 %v2034
        %v2074 = vpop.xlane.xlu0 %2073
        %2075 = vmax.xlane.f32.xlu0 %v2035
        %v2076 = vpop.xlane.xlu0 %2075
        %2077 = vmax.xlane.f32.xlu0 %v2036
        %v2078 = vpop.xlane.xlu0 %2077
        %2079 = vmax.xlane.f32.xlu0 %v2037
        %v2080 = vpop.xlane.xlu0 %2079
        %2081 = vmax.xlane.f32.xlu0 %v2038
        %v2082 = vpop.xlane.xlu0 %2081
        %2083 = vmax.xlane.f32.xlu0 %v2039
        %v2084 = vpop.xlane.xlu0 %2083
        %2085 = vmax.xlane.f32.xlu0 %v2040
        %v2086 = vpop.xlane.xlu0 %2085
        %2087 = vmax.xlane.f32.xlu0 %v2041
        %v2088 = vpop.xlane.xlu0 %2087
        %2089 = vmax.xlane.f32.xlu0 %v2042
        %v2090 = vpop.xlane.xlu0 %2089
        %2091 = vmax.xlane.f32.xlu0 %v2043
        %v2092 = vpop.xlane.xlu0 %2091
        %2093 = vmax.xlane.f32.xlu0 %v2044
        %v2094 = vpop.xlane.xlu0 %2093
        %2095 = vmax.xlane.f32.xlu0 %v2045
        %v2096 = vpop.xlane.xlu0 %2095
        %2097 = vmax.xlane.f32.xlu0 %v2046
        %v2098 = vpop.xlane.xlu0 %2097
        %2099 = vmax.xlane.f32.xlu0 %v2047
        %v2100 = vpop.xlane.xlu0 %2099
        %2101 = vmax.xlane.f32.xlu0 %v2048
        %v2102 = vpop.xlane.xlu0 %2101
        %2103 = vmax.xlane.f32.xlu0 %v2049
        %v2104 = vpop.xlane.xlu0 %2103
        %2105 = vmax.xlane.f32.xlu0 %v2050
        %v2106 = vpop.xlane.xlu0 %2105
        %2107 = vmax.xlane.f32.xlu0 %v2051
        %v2108 = vpop.xlane.xlu0 %2107
        %2109 = vmax.xlane.f32.xlu0 %v2052
        %v2110 = vpop.xlane.xlu0 %2109
        %2111 = vmax.xlane.f32.xlu0 %v2053
        %v2112 = vpop.xlane.xlu0 %2111
        %2113 = vmax.xlane.f32.xlu0 %v2054
        %v2114 = vpop.xlane.xlu0 %2113
        %2115 = vmax.xlane.f32.xlu0 %v2055
        %v2116 = vpop.xlane.xlu0 %2115
        %2117 = vmax.xlane.f32.xlu0 %v2056
        %v2118 = vpop.xlane.xlu0 %2117
        %2119 = vmax.xlane.f32.xlu0 %v2057
        %v2120 = vpop.xlane.xlu0 %2119
        %2121 = vmax.xlane.f32.xlu0 %v2058
        %v2122 = vpop.xlane.xlu0 %2121
        %2123 = vrot.lane.b32.xlu0 %v601, 104
        %v2124 = vpop.permute.xlu0 %2123
        %2125 = vrot.lane.b32.xlu0 %v606, 104
        %v2126 = vpop.permute.xlu0 %2125
        %2127 = vrot.lane.b32.xlu0 %v611, 104
        %v2128 = vpop.permute.xlu0 %2127
        %2129 = vrot.lane.b32.xlu0 %v616, 104
        %v2130 = vpop.permute.xlu0 %2129
        %2131 = vrot.lane.b32.xlu0 %v621, 104
        %v2132 = vpop.permute.xlu0 %2131
        %2133 = vrot.lane.b32.xlu0 %v626, 104
        %v2134 = vpop.permute.xlu0 %2133
        %2135 = vrot.lane.b32.xlu0 %v631, 104
        %v2136 = vpop.permute.xlu0 %2135
        %2137 = vrot.lane.b32.xlu0 %v636, 104
        %v2138 = vpop.permute.xlu0 %2137
        %2139 = vrot.lane.b32.xlu0 %v641, 104
        %v2140 = vpop.permute.xlu0 %2139
        %2141 = vrot.lane.b32.xlu0 %v646, 104
        %v2142 = vpop.permute.xlu0 %2141
        %2143 = vrot.lane.b32.xlu0 %v651, 104
        %v2144 = vpop.permute.xlu0 %2143
        %2145 = vrot.lane.b32.xlu0 %v656, 104
        %v2146 = vpop.permute.xlu0 %2145
        %2147 = vrot.lane.b32.xlu0 %v661, 104
        %v2148 = vpop.permute.xlu0 %2147
        %2149 = vrot.lane.b32.xlu0 %v666, 104
        %v2150 = vpop.permute.xlu0 %2149
        %2151 = vrot.lane.b32.xlu0 %v671, 104
        %v2152 = vpop.permute.xlu0 %2151
        %2153 = vrot.lane.b32.xlu0 %v676, 104
        %v2154 = vpop.permute.xlu0 %2153
        %2171 = vxpose.xlu0.b32.start [1/16] %v2124, 128
        %2172 = vxpose.xlu0.b32.cont [2/16] %v2126, 128
        %2173 = vxpose.xlu0.b32.cont [3/16] %v2128, 128
        %2174 = vxpose.xlu0.b32.cont [4/16] %v2130, 128
        %2175 = vxpose.xlu0.b32.cont [5/16] %v2132, 128
        %2176 = vxpose.xlu0.b32.cont [6/16] %v2134, 128
        %2177 = vxpose.xlu0.b32.cont [7/16] %v2136, 128
        %2178 = vxpose.xlu0.b32.cont [8/16] %v2138, 128
        %2179 = vxpose.xlu0.b32.cont [9/16] %v2140, 128
        %2180 = vxpose.xlu0.b32.cont [10/16] %v2142, 128
        %2181 = vxpose.xlu0.b32.cont [11/16] %v2144, 128
        %2182 = vxpose.xlu0.b32.cont [12/16] %v2146, 128
        %2183 = vxpose.xlu0.b32.cont [13/16] %v2148, 128
        %2184 = vxpose.xlu0.b32.cont [14/16] %v2150, 128
        %2185 = vxpose.xlu0.b32.cont [15/16] %v2152, 128
        %2186 = vxpose.xlu0.b32.end [16/16] %v2154, 128
        %v2187 = vpop.trf.xlu0
        %v2188 = vpop.trf.xlu0
        %v2189 = vpop.trf.xlu0
        %v2190 = vpop.trf.xlu0
        %v2191 = vpop.trf.xlu0
        %v2192 = vpop.trf.xlu0
        %v2193 = vpop.trf.xlu0
        %v2194 = vpop.trf.xlu0
        %v2195 = vpop.trf.xlu0
        %v2196 = vpop.trf.xlu0
        %v2197 = vpop.trf.xlu0
        %v2198 = vpop.trf.xlu0
        %v2199 = vpop.trf.xlu0
        %v2200 = vpop.trf.xlu0
        %v2201 = vpop.trf.xlu0
        %v2202 = vpop.trf.xlu0
        %v2203 = vsel %vm1339, %v2187, 1e+30
        %v2204 = vsel %vm1340, %v2187, 1e+30
        %v2205 = vsel %vm1341, %v2187, 1e+30
        %v2206 = vsel %vm1342, %v2187, 1e+30
        %v2207 = vsel %vm1343, %v2187, 1e+30
        %v2208 = vsel %vm1344, %v2187, 1e+30
        %v2209 = vsel %vm1345, %v2187, 1e+30
        %v2210 = vsel %vm1346, %v2187, 1e+30
        %v2211 = vsel %vm1347, %v2187, 1e+30
        %v2212 = vsel %vm1348, %v2187, 1e+30
        %v2213 = vsel %vm1349, %v2187, 1e+30
        %v2214 = vsel %vm1350, %v2187, 1e+30
        %v2215 = vsel %vm1351, %v2187, 1e+30
        %v2216 = vsel %vm1352, %v2187, 1e+30
        %v2217 = vsel %vm1353, %v2187, 1e+30
        %v2218 = vsel %vm1354, %v2187, 1e+30
        %v2219 = vsel %vm1355, %v2187, 1e+30
        %v2220 = vsel %vm1356, %v2187, 1e+30
        %v2221 = vsel %vm1357, %v2187, 1e+30
        %v2222 = vsel %vm1358, %v2187, 1e+30
        %v2223 = vsel %vm1359, %v2187, 1e+30
        %v2224 = vsel %vm1360, %v2187, 1e+30
        %v2225 = vsel %vm1361, %v2187, 1e+30
        %v2226 = vsel %vm1362, %v2187, 1e+30
        %v2227 = vsel %vm1363, %v2187, 1e+30
        %v2228 = vsel %vm1364, %v2187, 1e+30
        %v2229 = vsel %vm1365, %v2187, 1e+30
        %v2230 = vsel %vm1366, %v2187, 1e+30
        %v2231 = vsel %vm1367, %v2187, 1e+30
        %v2232 = vsel %vm1368, %v2187, 1e+30
        %v2233 = vsel %vm1369, %v2187, 1e+30
        %v2234 = vsel %vm1370, %v2187, 1e+30
        %2235 = vmin.xlane.f32.xlu0 %v2203
        %v2236 = vpop.xlane.xlu0 %2235
        %2237 = vmin.xlane.f32.xlu0 %v2204
        %v2238 = vpop.xlane.xlu0 %2237
        %2239 = vmin.xlane.f32.xlu0 %v2205
        %v2240 = vpop.xlane.xlu0 %2239
        %2241 = vmin.xlane.f32.xlu0 %v2206
        %v2242 = vpop.xlane.xlu0 %2241
        %2243 = vmin.xlane.f32.xlu0 %v2207
        %v2244 = vpop.xlane.xlu0 %2243
        %2245 = vmin.xlane.f32.xlu0 %v2208
        %v2246 = vpop.xlane.xlu0 %2245
        %2247 = vmin.xlane.f32.xlu0 %v2209
        %v2248 = vpop.xlane.xlu0 %2247
        %2249 = vmin.xlane.f32.xlu0 %v2210
        %v2250 = vpop.xlane.xlu0 %2249
        %2251 = vmin.xlane.f32.xlu0 %v2211
        %v2252 = vpop.xlane.xlu0 %2251
        %2253 = vmin.xlane.f32.xlu0 %v2212
        %v2254 = vpop.xlane.xlu0 %2253
        %2255 = vmin.xlane.f32.xlu0 %v2213
        %v2256 = vpop.xlane.xlu0 %2255
        %2257 = vmin.xlane.f32.xlu0 %v2214
        %v2258 = vpop.xlane.xlu0 %2257
        %2259 = vmin.xlane.f32.xlu0 %v2215
        %v2260 = vpop.xlane.xlu0 %2259
        %2261 = vmin.xlane.f32.xlu0 %v2216
        %v2262 = vpop.xlane.xlu0 %2261
        %2263 = vmin.xlane.f32.xlu0 %v2217
        %v2264 = vpop.xlane.xlu0 %2263
        %2265 = vmin.xlane.f32.xlu0 %v2218
        %v2266 = vpop.xlane.xlu0 %2265
        %2267 = vmin.xlane.f32.xlu0 %v2219
        %v2268 = vpop.xlane.xlu0 %2267
        %2269 = vmin.xlane.f32.xlu0 %v2220
        %v2270 = vpop.xlane.xlu0 %2269
        %2271 = vmin.xlane.f32.xlu0 %v2221
        %v2272 = vpop.xlane.xlu0 %2271
        %2273 = vmin.xlane.f32.xlu0 %v2222
        %v2274 = vpop.xlane.xlu0 %2273
        %2275 = vmin.xlane.f32.xlu0 %v2223
        %v2276 = vpop.xlane.xlu0 %2275
        %2277 = vmin.xlane.f32.xlu0 %v2224
        %v2278 = vpop.xlane.xlu0 %2277
        %2279 = vmin.xlane.f32.xlu0 %v2225
        %v2280 = vpop.xlane.xlu0 %2279
        %2281 = vmin.xlane.f32.xlu0 %v2226
        %v2282 = vpop.xlane.xlu0 %2281
        %2283 = vmin.xlane.f32.xlu0 %v2227
        %v2284 = vpop.xlane.xlu0 %2283
        %2285 = vmin.xlane.f32.xlu0 %v2228
        %v2286 = vpop.xlane.xlu0 %2285
        %2287 = vmin.xlane.f32.xlu0 %v2229
        %v2288 = vpop.xlane.xlu0 %2287
        %2289 = vmin.xlane.f32.xlu0 %v2230
        %v2290 = vpop.xlane.xlu0 %2289
        %2291 = vmin.xlane.f32.xlu0 %v2231
        %v2292 = vpop.xlane.xlu0 %2291
        %2293 = vmin.xlane.f32.xlu0 %v2232
        %v2294 = vpop.xlane.xlu0 %2293
        %2295 = vmin.xlane.f32.xlu0 %v2233
        %v2296 = vpop.xlane.xlu0 %2295
        %2297 = vmin.xlane.f32.xlu0 %v2234
        %v2298 = vpop.xlane.xlu0 %2297
        %v2299 = vsel %vm1339, %v2187, -1e+30
        %v2300 = vsel %vm1340, %v2187, -1e+30
        %v2301 = vsel %vm1341, %v2187, -1e+30
        %v2302 = vsel %vm1342, %v2187, -1e+30
        %v2303 = vsel %vm1343, %v2187, -1e+30
        %v2304 = vsel %vm1344, %v2187, -1e+30
        %v2305 = vsel %vm1345, %v2187, -1e+30
        %v2306 = vsel %vm1346, %v2187, -1e+30
        %v2307 = vsel %vm1347, %v2187, -1e+30
        %v2308 = vsel %vm1348, %v2187, -1e+30
        %v2309 = vsel %vm1349, %v2187, -1e+30
        %v2310 = vsel %vm1350, %v2187, -1e+30
        %v2311 = vsel %vm1351, %v2187, -1e+30
        %v2312 = vsel %vm1352, %v2187, -1e+30
        %v2313 = vsel %vm1353, %v2187, -1e+30
        %v2314 = vsel %vm1354, %v2187, -1e+30
        %v2315 = vsel %vm1355, %v2187, -1e+30
        %v2316 = vsel %vm1356, %v2187, -1e+30
        %v2317 = vsel %vm1357, %v2187, -1e+30
        %v2318 = vsel %vm1358, %v2187, -1e+30
        %v2319 = vsel %vm1359, %v2187, -1e+30
        %v2320 = vsel %vm1360, %v2187, -1e+30
        %v2321 = vsel %vm1361, %v2187, -1e+30
        %v2322 = vsel %vm1362, %v2187, -1e+30
        %v2323 = vsel %vm1363, %v2187, -1e+30
        %v2324 = vsel %vm1364, %v2187, -1e+30
        %v2325 = vsel %vm1365, %v2187, -1e+30
        %v2326 = vsel %vm1366, %v2187, -1e+30
        %v2327 = vsel %vm1367, %v2187, -1e+30
        %v2328 = vsel %vm1368, %v2187, -1e+30
        %v2329 = vsel %vm1369, %v2187, -1e+30
        %v2330 = vsel %vm1370, %v2187, -1e+30
        %2331 = vmax.xlane.f32.xlu0 %v2299
        %v2332 = vpop.xlane.xlu0 %2331
        %2333 = vmax.xlane.f32.xlu0 %v2300
        %v2334 = vpop.xlane.xlu0 %2333
        %2335 = vmax.xlane.f32.xlu0 %v2301
        %v2336 = vpop.xlane.xlu0 %2335
        %2337 = vmax.xlane.f32.xlu0 %v2302
        %v2338 = vpop.xlane.xlu0 %2337
        %2339 = vmax.xlane.f32.xlu0 %v2303
        %v2340 = vpop.xlane.xlu0 %2339
        %2341 = vmax.xlane.f32.xlu0 %v2304
        %v2342 = vpop.xlane.xlu0 %2341
        %2343 = vmax.xlane.f32.xlu0 %v2305
        %v2344 = vpop.xlane.xlu0 %2343
        %2345 = vmax.xlane.f32.xlu0 %v2306
        %v2346 = vpop.xlane.xlu0 %2345
        %2347 = vmax.xlane.f32.xlu0 %v2307
        %v2348 = vpop.xlane.xlu0 %2347
        %2349 = vmax.xlane.f32.xlu0 %v2308
        %v2350 = vpop.xlane.xlu0 %2349
        %2351 = vmax.xlane.f32.xlu0 %v2309
        %v2352 = vpop.xlane.xlu0 %2351
        %2353 = vmax.xlane.f32.xlu0 %v2310
        %v2354 = vpop.xlane.xlu0 %2353
        %2355 = vmax.xlane.f32.xlu0 %v2311
        %v2356 = vpop.xlane.xlu0 %2355
        %2357 = vmax.xlane.f32.xlu0 %v2312
        %v2358 = vpop.xlane.xlu0 %2357
        %2359 = vmax.xlane.f32.xlu0 %v2313
        %v2360 = vpop.xlane.xlu0 %2359
        %2361 = vmax.xlane.f32.xlu0 %v2314
        %v2362 = vpop.xlane.xlu0 %2361
        %2363 = vmax.xlane.f32.xlu0 %v2315
        %v2364 = vpop.xlane.xlu0 %2363
        %2365 = vmax.xlane.f32.xlu0 %v2316
        %v2366 = vpop.xlane.xlu0 %2365
        %2367 = vmax.xlane.f32.xlu0 %v2317
        %v2368 = vpop.xlane.xlu0 %2367
        %2369 = vmax.xlane.f32.xlu0 %v2318
        %v2370 = vpop.xlane.xlu0 %2369
        %2371 = vmax.xlane.f32.xlu0 %v2319
        %v2372 = vpop.xlane.xlu0 %2371
        %2373 = vmax.xlane.f32.xlu0 %v2320
        %v2374 = vpop.xlane.xlu0 %2373
        %2375 = vmax.xlane.f32.xlu0 %v2321
        %v2376 = vpop.xlane.xlu0 %2375
        %2377 = vmax.xlane.f32.xlu0 %v2322
        %v2378 = vpop.xlane.xlu0 %2377
        %2379 = vmax.xlane.f32.xlu0 %v2323
        %v2380 = vpop.xlane.xlu0 %2379
        %2381 = vmax.xlane.f32.xlu0 %v2324
        %v2382 = vpop.xlane.xlu0 %2381
        %2383 = vmax.xlane.f32.xlu0 %v2325
        %v2384 = vpop.xlane.xlu0 %2383
        %2385 = vmax.xlane.f32.xlu0 %v2326
        %v2386 = vpop.xlane.xlu0 %2385
        %2387 = vmax.xlane.f32.xlu0 %v2327
        %v2388 = vpop.xlane.xlu0 %2387
        %2389 = vmax.xlane.f32.xlu0 %v2328
        %v2390 = vpop.xlane.xlu0 %2389
        %2391 = vmax.xlane.f32.xlu0 %v2329
        %v2392 = vpop.xlane.xlu0 %2391
        %2393 = vmax.xlane.f32.xlu0 %v2330
        %v2394 = vpop.xlane.xlu0 %2393
        %v2395 = vld [vmem:[#allocation3] sm:$0xff]
        %v2396 = vld [vmem:[#allocation3 + $0x8] sm:$0xff]
        %v2397 = vld [vmem:[#allocation3 + $0x10] sm:$0xff]
        %v2398 = vld [vmem:[#allocation3 + $0x18] sm:$0xff]
        %v2431 = vlaneseq
        %v2432 = vand.u32 %v2431, 127
        %v2433 = vlaneseq
        %v2434 = vshrl.u32 %v2433, 7
        %v2435 = vsub.s32 %v2432, %v2434
        %v2436 = vrot.slane %v1404, %v2435
        %v2437 = vlaneseq
        %v2438 = vshrl.u32 %v2437, 7
        %v2439 = vsub.s32 %v2432, %v2438
        %v2440 = vrot.slane %v1406, %v2439
        %v2441 = vlaneseq
        %v2442 = vshrl.u32 %v2441, 7
        %v2443 = vsub.s32 %v2432, %v2442
        %v2444 = vrot.slane %v1408, %v2443
        %v2445 = vlaneseq
        %v2446 = vshrl.u32 %v2445, 7
        %v2447 = vsub.s32 %v2432, %v2446
        %v2448 = vrot.slane %v1410, %v2447
        %v2449 = vlaneseq
        %v2450 = vshrl.u32 %v2449, 7
        %v2451 = vsub.s32 %v2432, %v2450
        %v2452 = vrot.slane %v1412, %v2451
        %v2453 = vlaneseq
        %v2454 = vshrl.u32 %v2453, 7
        %v2455 = vsub.s32 %v2432, %v2454
        %v2456 = vrot.slane %v1414, %v2455
        %v2457 = vlaneseq
        %v2458 = vshrl.u32 %v2457, 7
        %v2459 = vsub.s32 %v2432, %v2458
        %v2460 = vrot.slane %v1416, %v2459
        %v2461 = vlaneseq
        %v2462 = vshrl.u32 %v2461, 7
        %v2463 = vsub.s32 %v2432, %v2462
        %v2464 = vrot.slane %v1418, %v2463
        %v2465 = vlaneseq
        %v2466 = vshrl.u32 %v2465, 7
        %v2467 = vsub.s32 %v2432, %v2466
        %v2468 = vrot.slane %v1420, %v2467
        %v2469 = vlaneseq
        %v2470 = vshrl.u32 %v2469, 7
        %v2471 = vsub.s32 %v2432, %v2470
        %v2472 = vrot.slane %v1422, %v2471
        %v2473 = vlaneseq
        %v2474 = vshrl.u32 %v2473, 7
        %v2475 = vsub.s32 %v2432, %v2474
        %v2476 = vrot.slane %v1424, %v2475
        %v2477 = vlaneseq
        %v2478 = vshrl.u32 %v2477, 7
        %v2479 = vsub.s32 %v2432, %v2478
        %v2480 = vrot.slane %v1426, %v2479
        %v2481 = vlaneseq
        %v2482 = vshrl.u32 %v2481, 7
        %v2483 = vsub.s32 %v2432, %v2482
        %v2484 = vrot.slane %v1428, %v2483
        %v2485 = vlaneseq
        %v2486 = vshrl.u32 %v2485, 7
        %v2487 = vsub.s32 %v2432, %v2486
        %v2488 = vrot.slane %v1430, %v2487
        %v2489 = vlaneseq
        %v2490 = vshrl.u32 %v2489, 7
        %v2491 = vsub.s32 %v2432, %v2490
        %v2492 = vrot.slane %v1432, %v2491
        %v2493 = vlaneseq
        %v2494 = vshrl.u32 %v2493, 7
        %v2495 = vsub.s32 %v2432, %v2494
        %v2496 = vrot.slane %v1434, %v2495
        %v2497 = vlaneseq
        %v2498 = vshrl.u32 %v2497, 7
        %v2499 = vsub.s32 %v2432, %v2498
        %v2500 = vrot.slane %v1436, %v2499
        %v2501 = vlaneseq
        %v2502 = vshrl.u32 %v2501, 7
        %v2503 = vsub.s32 %v2432, %v2502
        %v2504 = vrot.slane %v1438, %v2503
        %v2505 = vlaneseq
        %v2506 = vshrl.u32 %v2505, 7
        %v2507 = vsub.s32 %v2432, %v2506
        %v2508 = vrot.slane %v1440, %v2507
        %v2509 = vlaneseq
        %v2510 = vshrl.u32 %v2509, 7
        %v2511 = vsub.s32 %v2432, %v2510
        %v2512 = vrot.slane %v1442, %v2511
        %v2513 = vlaneseq
        %v2514 = vshrl.u32 %v2513, 7
        %v2515 = vsub.s32 %v2432, %v2514
        %v2516 = vrot.slane %v1444, %v2515
        %v2517 = vlaneseq
        %v2518 = vshrl.u32 %v2517, 7
        %v2519 = vsub.s32 %v2432, %v2518
        %v2520 = vrot.slane %v1446, %v2519
        %v2521 = vlaneseq
        %v2522 = vshrl.u32 %v2521, 7
        %v2523 = vsub.s32 %v2432, %v2522
        %v2524 = vrot.slane %v1448, %v2523
        %v2525 = vlaneseq
        %v2526 = vshrl.u32 %v2525, 7
        %v2527 = vsub.s32 %v2432, %v2526
        %v2528 = vrot.slane %v1450, %v2527
        %v2529 = vlaneseq
        %v2530 = vshrl.u32 %v2529, 7
        %v2531 = vsub.s32 %v2432, %v2530
        %v2532 = vrot.slane %v1452, %v2531
        %v2533 = vlaneseq
        %v2534 = vshrl.u32 %v2533, 7
        %v2535 = vsub.s32 %v2432, %v2534
        %v2536 = vrot.slane %v1454, %v2535
        %v2537 = vlaneseq
        %v2538 = vshrl.u32 %v2537, 7
        %v2539 = vsub.s32 %v2432, %v2538
        %v2540 = vrot.slane %v1456, %v2539
        %v2541 = vlaneseq
        %v2542 = vshrl.u32 %v2541, 7
        %v2543 = vsub.s32 %v2432, %v2542
        %v2544 = vrot.slane %v1458, %v2543
        %v2545 = vlaneseq
        %v2546 = vshrl.u32 %v2545, 7
        %v2547 = vsub.s32 %v2432, %v2546
        %v2548 = vrot.slane %v1460, %v2547
        %v2549 = vlaneseq
        %v2550 = vshrl.u32 %v2549, 7
        %v2551 = vsub.s32 %v2432, %v2550
        %v2552 = vrot.slane %v1462, %v2551
        %v2553 = vlaneseq
        %v2554 = vshrl.u32 %v2553, 7
        %v2555 = vsub.s32 %v2432, %v2554
        %v2556 = vrot.slane %v1464, %v2555
        %v2557 = vlaneseq
        %v2558 = vshrl.u32 %v2557, 7
        %v2559 = vsub.s32 %v2432, %v2558
        %v2560 = vrot.slane %v1466, %v2559
        %vm2561 = vcmask 1041409
        %v2562 = vsel %vm2561, %v2440, %v2436
        %vm2563 = vcmask 1042434
        %v2564 = vsel %vm2563, %v2444, %v2562
        %vm2565 = vcmask 1043459
        %v2566 = vsel %vm2565, %v2448, %v2564
        %vm2567 = vcmask 1044484
        %v2568 = vsel %vm2567, %v2452, %v2566
        %vm2569 = vcmask 1045509
        %v2570 = vsel %vm2569, %v2456, %v2568
        %vm2571 = vcmask 1046534
        %v2572 = vsel %vm2571, %v2460, %v2570
        %vm2573 = vcmask 1047559
        %v2574 = vsel %vm2573, %v2464, %v2572
        %v2575 = vsel %vm2561, %v2472, %v2468
        %v2576 = vsel %vm2563, %v2476, %v2575
        %v2577 = vsel %vm2565, %v2480, %v2576
        %v2578 = vsel %vm2567, %v2484, %v2577
        %v2579 = vsel %vm2569, %v2488, %v2578
        %v2580 = vsel %vm2571, %v2492, %v2579
        %v2581 = vsel %vm2573, %v2496, %v2580
        %v2582 = vsel %vm2561, %v2504, %v2500
        %v2583 = vsel %vm2563, %v2508, %v2582
        %v2584 = vsel %vm2565, %v2512, %v2583
        %v2585 = vsel %vm2567, %v2516, %v2584
        %v2586 = vsel %vm2569, %v2520, %v2585
        %v2587 = vsel %vm2571, %v2524, %v2586
        %v2588 = vsel %vm2573, %v2528, %v2587
        %v2589 = vsel %vm2561, %v2536, %v2532
        %v2590 = vsel %vm2563, %v2540, %v2589
        %v2591 = vsel %vm2565, %v2544, %v2590
        %v2592 = vsel %vm2567, %v2548, %v2591
        %v2593 = vsel %vm2569, %v2552, %v2592
        %v2594 = vsel %vm2571, %v2556, %v2593
        %v2595 = vsel %vm2573, %v2560, %v2594
        %v2632 = vadd.s32 %v2432, 4294967288
        %v2633 = vlaneseq
        %v2634 = vshrl.u32 %v2633, 7
        %v2635 = vsub.s32 %v2632, %v2634
        %v2636 = vrot.slane %v1692, %v2635
        %v2637 = vlaneseq
        %v2638 = vshrl.u32 %v2637, 7
        %v2639 = vsub.s32 %v2632, %v2638
        %v2640 = vrot.slane %v1694, %v2639
        %v2641 = vlaneseq
        %v2642 = vshrl.u32 %v2641, 7
        %v2643 = vsub.s32 %v2632, %v2642
        %v2644 = vrot.slane %v1696, %v2643
        %v2645 = vlaneseq
        %v2646 = vshrl.u32 %v2645, 7
        %v2647 = vsub.s32 %v2632, %v2646
        %v2648 = vrot.slane %v1698, %v2647
        %v2649 = vlaneseq
        %v2650 = vshrl.u32 %v2649, 7
        %v2651 = vsub.s32 %v2632, %v2650
        %v2652 = vrot.slane %v1700, %v2651
        %v2653 = vlaneseq
        %v2654 = vshrl.u32 %v2653, 7
        %v2655 = vsub.s32 %v2632, %v2654
        %v2656 = vrot.slane %v1702, %v2655
        %v2657 = vlaneseq
        %v2658 = vshrl.u32 %v2657, 7
        %v2659 = vsub.s32 %v2632, %v2658
        %v2660 = vrot.slane %v1704, %v2659
        %v2661 = vlaneseq
        %v2662 = vshrl.u32 %v2661, 7
        %v2663 = vsub.s32 %v2632, %v2662
        %v2664 = vrot.slane %v1706, %v2663
        %v2665 = vlaneseq
        %v2666 = vshrl.u32 %v2665, 7
        %v2667 = vsub.s32 %v2632, %v2666
        %v2668 = vrot.slane %v1708, %v2667
        %v2669 = vlaneseq
        %v2670 = vshrl.u32 %v2669, 7
        %v2671 = vsub.s32 %v2632, %v2670
        %v2672 = vrot.slane %v1710, %v2671
        %v2673 = vlaneseq
        %v2674 = vshrl.u32 %v2673, 7
        %v2675 = vsub.s32 %v2632, %v2674
        %v2676 = vrot.slane %v1712, %v2675
        %v2677 = vlaneseq
        %v2678 = vshrl.u32 %v2677, 7
        %v2679 = vsub.s32 %v2632, %v2678
        %v2680 = vrot.slane %v1714, %v2679
        %v2681 = vlaneseq
        %v2682 = vshrl.u32 %v2681, 7
        %v2683 = vsub.s32 %v2632, %v2682
        %v2684 = vrot.slane %v1716, %v2683
        %v2685 = vlaneseq
        %v2686 = vshrl.u32 %v2685, 7
        %v2687 = vsub.s32 %v2632, %v2686
        %v2688 = vrot.slane %v1718, %v2687
        %v2689 = vlaneseq
        %v2690 = vshrl.u32 %v2689, 7
        %v2691 = vsub.s32 %v2632, %v2690
        %v2692 = vrot.slane %v1720, %v2691
        %v2693 = vlaneseq
        %v2694 = vshrl.u32 %v2693, 7
        %v2695 = vsub.s32 %v2632, %v2694
        %v2696 = vrot.slane %v1722, %v2695
        %v2697 = vlaneseq
        %v2698 = vshrl.u32 %v2697, 7
        %v2699 = vsub.s32 %v2632, %v2698
        %v2700 = vrot.slane %v1724, %v2699
        %v2701 = vlaneseq
        %v2702 = vshrl.u32 %v2701, 7
        %v2703 = vsub.s32 %v2632, %v2702
        %v2704 = vrot.slane %v1726, %v2703
        %v2705 = vlaneseq
        %v2706 = vshrl.u32 %v2705, 7
        %v2707 = vsub.s32 %v2632, %v2706
        %v2708 = vrot.slane %v1728, %v2707
        %v2709 = vlaneseq
        %v2710 = vshrl.u32 %v2709, 7
        %v2711 = vsub.s32 %v2632, %v2710
        %v2712 = vrot.slane %v1730, %v2711
        %v2713 = vlaneseq
        %v2714 = vshrl.u32 %v2713, 7
        %v2715 = vsub.s32 %v2632, %v2714
        %v2716 = vrot.slane %v1732, %v2715
        %v2717 = vlaneseq
        %v2718 = vshrl.u32 %v2717, 7
        %v2719 = vsub.s32 %v2632, %v2718
        %v2720 = vrot.slane %v1734, %v2719
        %v2721 = vlaneseq
        %v2722 = vshrl.u32 %v2721, 7
        %v2723 = vsub.s32 %v2632, %v2722
        %v2724 = vrot.slane %v1736, %v2723
        %v2725 = vlaneseq
        %v2726 = vshrl.u32 %v2725, 7
        %v2727 = vsub.s32 %v2632, %v2726
        %v2728 = vrot.slane %v1738, %v2727
        %v2729 = vlaneseq
        %v2730 = vshrl.u32 %v2729, 7
        %v2731 = vsub.s32 %v2632, %v2730
        %v2732 = vrot.slane %v1740, %v2731
        %v2733 = vlaneseq
        %v2734 = vshrl.u32 %v2733, 7
        %v2735 = vsub.s32 %v2632, %v2734
        %v2736 = vrot.slane %v1742, %v2735
        %v2737 = vlaneseq
        %v2738 = vshrl.u32 %v2737, 7
        %v2739 = vsub.s32 %v2632, %v2738
        %v2740 = vrot.slane %v1744, %v2739
        %v2741 = vlaneseq
        %v2742 = vshrl.u32 %v2741, 7
        %v2743 = vsub.s32 %v2632, %v2742
        %v2744 = vrot.slane %v1746, %v2743
        %v2745 = vlaneseq
        %v2746 = vshrl.u32 %v2745, 7
        %v2747 = vsub.s32 %v2632, %v2746
        %v2748 = vrot.slane %v1748, %v2747
        %v2749 = vlaneseq
        %v2750 = vshrl.u32 %v2749, 7
        %v2751 = vsub.s32 %v2632, %v2750
        %v2752 = vrot.slane %v1750, %v2751
        %v2753 = vlaneseq
        %v2754 = vshrl.u32 %v2753, 7
        %v2755 = vsub.s32 %v2632, %v2754
        %v2756 = vrot.slane %v1752, %v2755
        %v2757 = vlaneseq
        %v2758 = vshrl.u32 %v2757, 7
        %v2759 = vsub.s32 %v2632, %v2758
        %v2760 = vrot.slane %v1754, %v2759
        %v2761 = vsel %vm2561, %v2640, %v2636
        %v2762 = vsel %vm2563, %v2644, %v2761
        %v2763 = vsel %vm2565, %v2648, %v2762
        %v2764 = vsel %vm2567, %v2652, %v2763
        %v2765 = vsel %vm2569, %v2656, %v2764
        %v2766 = vsel %vm2571, %v2660, %v2765
        %v2767 = vsel %vm2573, %v2664, %v2766
        %v2768 = vsel %vm2561, %v2672, %v2668
        %v2769 = vsel %vm2563, %v2676, %v2768
        %v2770 = vsel %vm2565, %v2680, %v2769
        %v2771 = vsel %vm2567, %v2684, %v2770
        %v2772 = vsel %vm2569, %v2688, %v2771
        %v2773 = vsel %vm2571, %v2692, %v2772
        %v2774 = vsel %vm2573, %v2696, %v2773
        %v2775 = vsel %vm2561, %v2704, %v2700
        %v2776 = vsel %vm2563, %v2708, %v2775
        %v2777 = vsel %vm2565, %v2712, %v2776
        %v2778 = vsel %vm2567, %v2716, %v2777
        %v2779 = vsel %vm2569, %v2720, %v2778
        %v2780 = vsel %vm2571, %v2724, %v2779
        %v2781 = vsel %vm2573, %v2728, %v2780
        %v2782 = vsel %vm2561, %v2736, %v2732
        %v2783 = vsel %vm2563, %v2740, %v2782
        %v2784 = vsel %vm2565, %v2744, %v2783
        %v2785 = vsel %vm2567, %v2748, %v2784
        %v2786 = vsel %vm2569, %v2752, %v2785
        %v2787 = vsel %vm2571, %v2756, %v2786
        %v2788 = vsel %vm2573, %v2760, %v2787
        %v2825 = vadd.s32 %v2432, 4294967280
        %v2826 = vlaneseq
        %v2827 = vshrl.u32 %v2826, 7
        %v2828 = vsub.s32 %v2825, %v2827
        %v2829 = vrot.slane %v1964, %v2828
        %v2830 = vlaneseq
        %v2831 = vshrl.u32 %v2830, 7
        %v2832 = vsub.s32 %v2825, %v2831
        %v2833 = vrot.slane %v1966, %v2832
        %v2834 = vlaneseq
        %v2835 = vshrl.u32 %v2834, 7
        %v2836 = vsub.s32 %v2825, %v2835
        %v2837 = vrot.slane %v1968, %v2836
        %v2838 = vlaneseq
        %v2839 = vshrl.u32 %v2838, 7
        %v2840 = vsub.s32 %v2825, %v2839
        %v2841 = vrot.slane %v1970, %v2840
        %v2842 = vlaneseq
        %v2843 = vshrl.u32 %v2842, 7
        %v2844 = vsub.s32 %v2825, %v2843
        %v2845 = vrot.slane %v1972, %v2844
        %v2846 = vlaneseq
        %v2847 = vshrl.u32 %v2846, 7
        %v2848 = vsub.s32 %v2825, %v2847
        %v2849 = vrot.slane %v1974, %v2848
        %v2850 = vlaneseq
        %v2851 = vshrl.u32 %v2850, 7
        %v2852 = vsub.s32 %v2825, %v2851
        %v2853 = vrot.slane %v1976, %v2852
        %v2854 = vlaneseq
        %v2855 = vshrl.u32 %v2854, 7
        %v2856 = vsub.s32 %v2825, %v2855
        %v2857 = vrot.slane %v1978, %v2856
        %v2858 = vlaneseq
        %v2859 = vshrl.u32 %v2858, 7
        %v2860 = vsub.s32 %v2825, %v2859
        %v2861 = vrot.slane %v1980, %v2860
        %v2862 = vlaneseq
        %v2863 = vshrl.u32 %v2862, 7
        %v2864 = vsub.s32 %v2825, %v2863
        %v2865 = vrot.slane %v1982, %v2864
        %v2866 = vlaneseq
        %v2867 = vshrl.u32 %v2866, 7
        %v2868 = vsub.s32 %v2825, %v2867
        %v2869 = vrot.slane %v1984, %v2868
        %v2870 = vlaneseq
        %v2871 = vshrl.u32 %v2870, 7
        %v2872 = vsub.s32 %v2825, %v2871
        %v2873 = vrot.slane %v1986, %v2872
        %v2874 = vlaneseq
        %v2875 = vshrl.u32 %v2874, 7
        %v2876 = vsub.s32 %v2825, %v2875
        %v2877 = vrot.slane %v1988, %v2876
        %v2878 = vlaneseq
        %v2879 = vshrl.u32 %v2878, 7
        %v2880 = vsub.s32 %v2825, %v2879
        %v2881 = vrot.slane %v1990, %v2880
        %v2882 = vlaneseq
        %v2883 = vshrl.u32 %v2882, 7
        %v2884 = vsub.s32 %v2825, %v2883
        %v2885 = vrot.slane %v1992, %v2884
        %v2886 = vlaneseq
        %v2887 = vshrl.u32 %v2886, 7
        %v2888 = vsub.s32 %v2825, %v2887
        %v2889 = vrot.slane %v1994, %v2888
        %v2890 = vlaneseq
        %v2891 = vshrl.u32 %v2890, 7
        %v2892 = vsub.s32 %v2825, %v2891
        %v2893 = vrot.slane %v1996, %v2892
        %v2894 = vlaneseq
        %v2895 = vshrl.u32 %v2894, 7
        %v2896 = vsub.s32 %v2825, %v2895
        %v2897 = vrot.slane %v1998, %v2896
        %v2898 = vlaneseq
        %v2899 = vshrl.u32 %v2898, 7
        %v2900 = vsub.s32 %v2825, %v2899
        %v2901 = vrot.slane %v2000, %v2900
        %v2902 = vlaneseq
        %v2903 = vshrl.u32 %v2902, 7
        %v2904 = vsub.s32 %v2825, %v2903
        %v2905 = vrot.slane %v2002, %v2904
        %v2906 = vlaneseq
        %v2907 = vshrl.u32 %v2906, 7
        %v2908 = vsub.s32 %v2825, %v2907
        %v2909 = vrot.slane %v2004, %v2908
        %v2910 = vlaneseq
        %v2911 = vshrl.u32 %v2910, 7
        %v2912 = vsub.s32 %v2825, %v2911
        %v2913 = vrot.slane %v2006, %v2912
        %v2914 = vlaneseq
        %v2915 = vshrl.u32 %v2914, 7
        %v2916 = vsub.s32 %v2825, %v2915
        %v2917 = vrot.slane %v2008, %v2916
        %v2918 = vlaneseq
        %v2919 = vshrl.u32 %v2918, 7
        %v2920 = vsub.s32 %v2825, %v2919
        %v2921 = vrot.slane %v2010, %v2920
        %v2922 = vlaneseq
        %v2923 = vshrl.u32 %v2922, 7
        %v2924 = vsub.s32 %v2825, %v2923
        %v2925 = vrot.slane %v2012, %v2924
        %v2926 = vlaneseq
        %v2927 = vshrl.u32 %v2926, 7
        %v2928 = vsub.s32 %v2825, %v2927
        %v2929 = vrot.slane %v2014, %v2928
        %v2930 = vlaneseq
        %v2931 = vshrl.u32 %v2930, 7
        %v2932 = vsub.s32 %v2825, %v2931
        %v2933 = vrot.slane %v2016, %v2932
        %v2934 = vlaneseq
        %v2935 = vshrl.u32 %v2934, 7
        %v2936 = vsub.s32 %v2825, %v2935
        %v2937 = vrot.slane %v2018, %v2936
        %v2938 = vlaneseq
        %v2939 = vshrl.u32 %v2938, 7
        %v2940 = vsub.s32 %v2825, %v2939
        %v2941 = vrot.slane %v2020, %v2940
        %v2942 = vlaneseq
        %v2943 = vshrl.u32 %v2942, 7
        %v2944 = vsub.s32 %v2825, %v2943
        %v2945 = vrot.slane %v2022, %v2944
        %v2946 = vlaneseq
        %v2947 = vshrl.u32 %v2946, 7
        %v2948 = vsub.s32 %v2825, %v2947
        %v2949 = vrot.slane %v2024, %v2948
        %v2950 = vlaneseq
        %v2951 = vshrl.u32 %v2950, 7
        %v2952 = vsub.s32 %v2825, %v2951
        %v2953 = vrot.slane %v2026, %v2952
        %v2954 = vsel %vm2561, %v2833, %v2829
        %v2955 = vsel %vm2563, %v2837, %v2954
        %v2956 = vsel %vm2565, %v2841, %v2955
        %v2957 = vsel %vm2567, %v2845, %v2956
        %v2958 = vsel %vm2569, %v2849, %v2957
        %v2959 = vsel %vm2571, %v2853, %v2958
        %v2960 = vsel %vm2573, %v2857, %v2959
        %v2961 = vsel %vm2561, %v2865, %v2861
        %v2962 = vsel %vm2563, %v2869, %v2961
        %v2963 = vsel %vm2565, %v2873, %v2962
        %v2964 = vsel %vm2567, %v2877, %v2963
        %v2965 = vsel %vm2569, %v2881, %v2964
        %v2966 = vsel %vm2571, %v2885, %v2965
        %v2967 = vsel %vm2573, %v2889, %v2966
        %v2968 = vsel %vm2561, %v2897, %v2893
        %v2969 = vsel %vm2563, %v2901, %v2968
        %v2970 = vsel %vm2565, %v2905, %v2969
        %v2971 = vsel %vm2567, %v2909, %v2970
        %v2972 = vsel %vm2569, %v2913, %v2971
        %v2973 = vsel %vm2571, %v2917, %v2972
        %v2974 = vsel %vm2573, %v2921, %v2973
        %v2975 = vsel %vm2561, %v2929, %v2925
        %v2976 = vsel %vm2563, %v2933, %v2975
        %v2977 = vsel %vm2565, %v2937, %v2976
        %v2978 = vsel %vm2567, %v2941, %v2977
        %v2979 = vsel %vm2569, %v2945, %v2978
        %v2980 = vsel %vm2571, %v2949, %v2979
        %v2981 = vsel %vm2573, %v2953, %v2980
        %v3018 = vadd.s32 %v2432, 4294967272
        %v3019 = vlaneseq
        %v3020 = vshrl.u32 %v3019, 7
        %v3021 = vsub.s32 %v3018, %v3020
        %v3022 = vrot.slane %v2236, %v3021
        %v3023 = vlaneseq
        %v3024 = vshrl.u32 %v3023, 7
        %v3025 = vsub.s32 %v3018, %v3024
        %v3026 = vrot.slane %v2238, %v3025
        %v3027 = vlaneseq
        %v3028 = vshrl.u32 %v3027, 7
        %v3029 = vsub.s32 %v3018, %v3028
        %v3030 = vrot.slane %v2240, %v3029
        %v3031 = vlaneseq
        %v3032 = vshrl.u32 %v3031, 7
        %v3033 = vsub.s32 %v3018, %v3032
        %v3034 = vrot.slane %v2242, %v3033
        %v3035 = vlaneseq
        %v3036 = vshrl.u32 %v3035, 7
        %v3037 = vsub.s32 %v3018, %v3036
        %v3038 = vrot.slane %v2244, %v3037
        %v3039 = vlaneseq
        %v3040 = vshrl.u32 %v3039, 7
        %v3041 = vsub.s32 %v3018, %v3040
        %v3042 = vrot.slane %v2246, %v3041
        %v3043 = vlaneseq
        %v3044 = vshrl.u32 %v3043, 7
        %v3045 = vsub.s32 %v3018, %v3044
        %v3046 = vrot.slane %v2248, %v3045
        %v3047 = vlaneseq
        %v3048 = vshrl.u32 %v3047, 7
        %v3049 = vsub.s32 %v3018, %v3048
        %v3050 = vrot.slane %v2250, %v3049
        %v3051 = vlaneseq
        %v3052 = vshrl.u32 %v3051, 7
        %v3053 = vsub.s32 %v3018, %v3052
        %v3054 = vrot.slane %v2252, %v3053
        %v3055 = vlaneseq
        %v3056 = vshrl.u32 %v3055, 7
        %v3057 = vsub.s32 %v3018, %v3056
        %v3058 = vrot.slane %v2254, %v3057
        %v3059 = vlaneseq
        %v3060 = vshrl.u32 %v3059, 7
        %v3061 = vsub.s32 %v3018, %v3060
        %v3062 = vrot.slane %v2256, %v3061
        %v3063 = vlaneseq
        %v3064 = vshrl.u32 %v3063, 7
        %v3065 = vsub.s32 %v3018, %v3064
        %v3066 = vrot.slane %v2258, %v3065
        %v3067 = vlaneseq
        %v3068 = vshrl.u32 %v3067, 7
        %v3069 = vsub.s32 %v3018, %v3068
        %v3070 = vrot.slane %v2260, %v3069
        %v3071 = vlaneseq
        %v3072 = vshrl.u32 %v3071, 7
        %v3073 = vsub.s32 %v3018, %v3072
        %v3074 = vrot.slane %v2262, %v3073
        %v3075 = vlaneseq
        %v3076 = vshrl.u32 %v3075, 7
        %v3077 = vsub.s32 %v3018, %v3076
        %v3078 = vrot.slane %v2264, %v3077
        %v3079 = vlaneseq
        %v3080 = vshrl.u32 %v3079, 7
        %v3081 = vsub.s32 %v3018, %v3080
        %v3082 = vrot.slane %v2266, %v3081
        %v3083 = vlaneseq
        %v3084 = vshrl.u32 %v3083, 7
        %v3085 = vsub.s32 %v3018, %v3084
        %v3086 = vrot.slane %v2268, %v3085
        %v3087 = vlaneseq
        %v3088 = vshrl.u32 %v3087, 7
        %v3089 = vsub.s32 %v3018, %v3088
        %v3090 = vrot.slane %v2270, %v3089
        %v3091 = vlaneseq
        %v3092 = vshrl.u32 %v3091, 7
        %v3093 = vsub.s32 %v3018, %v3092
        %v3094 = vrot.slane %v2272, %v3093
        %v3095 = vlaneseq
        %v3096 = vshrl.u32 %v3095, 7
        %v3097 = vsub.s32 %v3018, %v3096
        %v3098 = vrot.slane %v2274, %v3097
        %v3099 = vlaneseq
        %v3100 = vshrl.u32 %v3099, 7
        %v3101 = vsub.s32 %v3018, %v3100
        %v3102 = vrot.slane %v2276, %v3101
        %v3103 = vlaneseq
        %v3104 = vshrl.u32 %v3103, 7
        %v3105 = vsub.s32 %v3018, %v3104
        %v3106 = vrot.slane %v2278, %v3105
        %v3107 = vlaneseq
        %v3108 = vshrl.u32 %v3107, 7
        %v3109 = vsub.s32 %v3018, %v3108
        %v3110 = vrot.slane %v2280, %v3109
        %v3111 = vlaneseq
        %v3112 = vshrl.u32 %v3111, 7
        %v3113 = vsub.s32 %v3018, %v3112
        %v3114 = vrot.slane %v2282, %v3113
        %v3115 = vlaneseq
        %v3116 = vshrl.u32 %v3115, 7
        %v3117 = vsub.s32 %v3018, %v3116
        %v3118 = vrot.slane %v2284, %v3117
        %v3119 = vlaneseq
        %v3120 = vshrl.u32 %v3119, 7
        %v3121 = vsub.s32 %v3018, %v3120
        %v3122 = vrot.slane %v2286, %v3121
        %v3123 = vlaneseq
        %v3124 = vshrl.u32 %v3123, 7
        %v3125 = vsub.s32 %v3018, %v3124
        %v3126 = vrot.slane %v2288, %v3125
        %v3127 = vlaneseq
        %v3128 = vshrl.u32 %v3127, 7
        %v3129 = vsub.s32 %v3018, %v3128
        %v3130 = vrot.slane %v2290, %v3129
        %v3131 = vlaneseq
        %v3132 = vshrl.u32 %v3131, 7
        %v3133 = vsub.s32 %v3018, %v3132
        %v3134 = vrot.slane %v2292, %v3133
        %v3135 = vlaneseq
        %v3136 = vshrl.u32 %v3135, 7
        %v3137 = vsub.s32 %v3018, %v3136
        %v3138 = vrot.slane %v2294, %v3137
        %v3139 = vlaneseq
        %v3140 = vshrl.u32 %v3139, 7
        %v3141 = vsub.s32 %v3018, %v3140
        %v3142 = vrot.slane %v2296, %v3141
        %v3143 = vlaneseq
        %v3144 = vshrl.u32 %v3143, 7
        %v3145 = vsub.s32 %v3018, %v3144
        %v3146 = vrot.slane %v2298, %v3145
        %v3147 = vsel %vm2561, %v3026, %v3022
        %v3148 = vsel %vm2563, %v3030, %v3147
        %v3149 = vsel %vm2565, %v3034, %v3148
        %v3150 = vsel %vm2567, %v3038, %v3149
        %v3151 = vsel %vm2569, %v3042, %v3150
        %v3152 = vsel %vm2571, %v3046, %v3151
        %v3153 = vsel %vm2573, %v3050, %v3152
        %v3154 = vsel %vm2561, %v3058, %v3054
        %v3155 = vsel %vm2563, %v3062, %v3154
        %v3156 = vsel %vm2565, %v3066, %v3155
        %v3157 = vsel %vm2567, %v3070, %v3156
        %v3158 = vsel %vm2569, %v3074, %v3157
        %v3159 = vsel %vm2571, %v3078, %v3158
        %v3160 = vsel %vm2573, %v3082, %v3159
        %v3161 = vsel %vm2561, %v3090, %v3086
        %v3162 = vsel %vm2563, %v3094, %v3161
        %v3163 = vsel %vm2565, %v3098, %v3162
        %v3164 = vsel %vm2567, %v3102, %v3163
        %v3165 = vsel %vm2569, %v3106, %v3164
        %v3166 = vsel %vm2571, %v3110, %v3165
        %v3167 = vsel %vm2573, %v3114, %v3166
        %v3168 = vsel %vm2561, %v3122, %v3118
        %v3169 = vsel %vm2563, %v3126, %v3168
        %v3170 = vsel %vm2565, %v3130, %v3169
        %v3171 = vsel %vm2567, %v3134, %v3170
        %v3172 = vsel %vm2569, %v3138, %v3171
        %v3173 = vsel %vm2571, %v3142, %v3172
        %v3174 = vsel %vm2573, %v3146, %v3173
        %vm3179 = vcmask 64512
        %v3180 = vsel %vm3179, %v2574, %v2767
        %v3181 = vsel %vm3179, %v2581, %v2774
        %v3182 = vsel %vm3179, %v2588, %v2781
        %v3183 = vsel %vm3179, %v2595, %v2788
        %vm3184 = vcmask 130048
        %v3185 = vsel %vm3184, %v3180, %v2960
        %v3186 = vsel %vm3184, %v3181, %v2967
        %v3187 = vsel %vm3184, %v3182, %v2974
        %v3188 = vsel %vm3184, %v3183, %v2981
        %vm3189 = vcmask 195584
        %v3190 = vsel %vm3189, %v3185, %v3153
        %v3191 = vsel %vm3189, %v3186, %v3160
        %v3192 = vsel %vm3189, %v3187, %v3167
        %v3193 = vsel %vm3189, %v3188, %v3174
        %v3194 = vmin.f32 %v2395, %v3190
        %v3195 = vmin.f32 %v2396, %v3191
        %v3196 = vmin.f32 %v2397, %v3192
        %v3197 = vmin.f32 %v2398, %v3193
        %3198 = vst.msk [vmem:[#allocation3] sm:$0xff] %vm787, %v3194
        %3199 = vst.msk [vmem:[#allocation3 + $0x8] sm:$0xff] %vm787, %v3195
        %3200 = vst.msk [vmem:[#allocation3 + $0x10] sm:$0xff] %vm787, %v3196
        %3201 = vst.msk [vmem:[#allocation3 + $0x18] sm:$0xff] %vm787, %v3197
        %v3202 = vld [vmem:[#allocation4] sm:$0xff]
        %v3203 = vld [vmem:[#allocation4 + $0x8] sm:$0xff]
        %v3204 = vld [vmem:[#allocation4 + $0x10] sm:$0xff]
        %v3205 = vld [vmem:[#allocation4 + $0x18] sm:$0xff]
        %v3238 = vlaneseq
        %v3239 = vshrl.u32 %v3238, 7
        %v3240 = vsub.s32 %v2432, %v3239
        %v3241 = vrot.slane %v1500, %v3240
        %v3242 = vlaneseq
        %v3243 = vshrl.u32 %v3242, 7
        %v3244 = vsub.s32 %v2432, %v3243
        %v3245 = vrot.slane %v1502, %v3244
        %v3246 = vlaneseq
        %v3247 = vshrl.u32 %v3246, 7
        %v3248 = vsub.s32 %v2432, %v3247
        %v3249 = vrot.slane %v1504, %v3248
        %v3250 = vlaneseq
        %v3251 = vshrl.u32 %v3250, 7
        %v3252 = vsub.s32 %v2432, %v3251
        %v3253 = vrot.slane %v1506, %v3252
        %v3254 = vlaneseq
        %v3255 = vshrl.u32 %v3254, 7
        %v3256 = vsub.s32 %v2432, %v3255
        %v3257 = vrot.slane %v1508, %v3256
        %v3258 = vlaneseq
        %v3259 = vshrl.u32 %v3258, 7
        %v3260 = vsub.s32 %v2432, %v3259
        %v3261 = vrot.slane %v1510, %v3260
        %v3262 = vlaneseq
        %v3263 = vshrl.u32 %v3262, 7
        %v3264 = vsub.s32 %v2432, %v3263
        %v3265 = vrot.slane %v1512, %v3264
        %v3266 = vlaneseq
        %v3267 = vshrl.u32 %v3266, 7
        %v3268 = vsub.s32 %v2432, %v3267
        %v3269 = vrot.slane %v1514, %v3268
        %v3270 = vlaneseq
        %v3271 = vshrl.u32 %v3270, 7
        %v3272 = vsub.s32 %v2432, %v3271
        %v3273 = vrot.slane %v1516, %v3272
        %v3274 = vlaneseq
        %v3275 = vshrl.u32 %v3274, 7
        %v3276 = vsub.s32 %v2432, %v3275
        %v3277 = vrot.slane %v1518, %v3276
        %v3278 = vlaneseq
        %v3279 = vshrl.u32 %v3278, 7
        %v3280 = vsub.s32 %v2432, %v3279
        %v3281 = vrot.slane %v1520, %v3280
        %v3282 = vlaneseq
        %v3283 = vshrl.u32 %v3282, 7
        %v3284 = vsub.s32 %v2432, %v3283
        %v3285 = vrot.slane %v1522, %v3284
        %v3286 = vlaneseq
        %v3287 = vshrl.u32 %v3286, 7
        %v3288 = vsub.s32 %v2432, %v3287
        %v3289 = vrot.slane %v1524, %v3288
        %v3290 = vlaneseq
        %v3291 = vshrl.u32 %v3290, 7
        %v3292 = vsub.s32 %v2432, %v3291
        %v3293 = vrot.slane %v1526, %v3292
        %v3294 = vlaneseq
        %v3295 = vshrl.u32 %v3294, 7
        %v3296 = vsub.s32 %v2432, %v3295
        %v3297 = vrot.slane %v1528, %v3296
        %v3298 = vlaneseq
        %v3299 = vshrl.u32 %v3298, 7
        %v3300 = vsub.s32 %v2432, %v3299
        %v3301 = vrot.slane %v1530, %v3300
        %v3302 = vlaneseq
        %v3303 = vshrl.u32 %v3302, 7
        %v3304 = vsub.s32 %v2432, %v3303
        %v3305 = vrot.slane %v1532, %v3304
        %v3306 = vlaneseq
        %v3307 = vshrl.u32 %v3306, 7
        %v3308 = vsub.s32 %v2432, %v3307
        %v3309 = vrot.slane %v1534, %v3308
        %v3310 = vlaneseq
        %v3311 = vshrl.u32 %v3310, 7
        %v3312 = vsub.s32 %v2432, %v3311
        %v3313 = vrot.slane %v1536, %v3312
        %v3314 = vlaneseq
        %v3315 = vshrl.u32 %v3314, 7
        %v3316 = vsub.s32 %v2432, %v3315
        %v3317 = vrot.slane %v1538, %v3316
        %v3318 = vlaneseq
        %v3319 = vshrl.u32 %v3318, 7
        %v3320 = vsub.s32 %v2432, %v3319
        %v3321 = vrot.slane %v1540, %v3320
        %v3322 = vlaneseq
        %v3323 = vshrl.u32 %v3322, 7
        %v3324 = vsub.s32 %v2432, %v3323
        %v3325 = vrot.slane %v1542, %v3324
        %v3326 = vlaneseq
        %v3327 = vshrl.u32 %v3326, 7
        %v3328 = vsub.s32 %v2432, %v3327
        %v3329 = vrot.slane %v1544, %v3328
        %v3330 = vlaneseq
        %v3331 = vshrl.u32 %v3330, 7
        %v3332 = vsub.s32 %v2432, %v3331
        %v3333 = vrot.slane %v1546, %v3332
        %v3334 = vlaneseq
        %v3335 = vshrl.u32 %v3334, 7
        %v3336 = vsub.s32 %v2432, %v3335
        %v3337 = vrot.slane %v1548, %v3336
        %v3338 = vlaneseq
        %v3339 = vshrl.u32 %v3338, 7
        %v3340 = vsub.s32 %v2432, %v3339
        %v3341 = vrot.slane %v1550, %v3340
        %v3342 = vlaneseq
        %v3343 = vshrl.u32 %v3342, 7
        %v3344 = vsub.s32 %v2432, %v3343
        %v3345 = vrot.slane %v1552, %v3344
        %v3346 = vlaneseq
        %v3347 = vshrl.u32 %v3346, 7
        %v3348 = vsub.s32 %v2432, %v3347
        %v3349 = vrot.slane %v1554, %v3348
        %v3350 = vlaneseq
        %v3351 = vshrl.u32 %v3350, 7
        %v3352 = vsub.s32 %v2432, %v3351
        %v3353 = vrot.slane %v1556, %v3352
        %v3354 = vlaneseq
        %v3355 = vshrl.u32 %v3354, 7
        %v3356 = vsub.s32 %v2432, %v3355
        %v3357 = vrot.slane %v1558, %v3356
        %v3358 = vlaneseq
        %v3359 = vshrl.u32 %v3358, 7
        %v3360 = vsub.s32 %v2432, %v3359
        %v3361 = vrot.slane %v1560, %v3360
        %v3362 = vlaneseq
        %v3363 = vshrl.u32 %v3362, 7
        %v3364 = vsub.s32 %v2432, %v3363
        %v3365 = vrot.slane %v1562, %v3364
        %v3366 = vsel %vm2561, %v3245, %v3241
        %v3367 = vsel %vm2563, %v3249, %v3366
        %v3368 = vsel %vm2565, %v3253, %v3367
        %v3369 = vsel %vm2567, %v3257, %v3368
        %v3370 = vsel %vm2569, %v3261, %v3369
        %v3371 = vsel %vm2571, %v3265, %v3370
        %v3372 = vsel %vm2573, %v3269, %v3371
        %v3373 = vsel %vm2561, %v3277, %v3273
        %v3374 = vsel %vm2563, %v3281, %v3373
        %v3375 = vsel %vm2565, %v3285, %v3374
        %v3376 = vsel %vm2567, %v3289, %v3375
        %v3377 = vsel %vm2569, %v3293, %v3376
        %v3378 = vsel %vm2571, %v3297, %v3377
        %v3379 = vsel %vm2573, %v3301, %v3378
        %v3380 = vsel %vm2561, %v3309, %v3305
        %v3381 = vsel %vm2563, %v3313, %v3380
        %v3382 = vsel %vm2565, %v3317, %v3381
        %v3383 = vsel %vm2567, %v3321, %v3382
        %v3384 = vsel %vm2569, %v3325, %v3383
        %v3385 = vsel %vm2571, %v3329, %v3384
        %v3386 = vsel %vm2573, %v3333, %v3385
        %v3387 = vsel %vm2561, %v3341, %v3337
        %v3388 = vsel %vm2563, %v3345, %v3387
        %v3389 = vsel %vm2565, %v3349, %v3388
        %v3390 = vsel %vm2567, %v3353, %v3389
        %v3391 = vsel %vm2569, %v3357, %v3390
        %v3392 = vsel %vm2571, %v3361, %v3391
        %v3393 = vsel %vm2573, %v3365, %v3392
        %v3430 = vlaneseq
        %v3431 = vshrl.u32 %v3430, 7
        %v3432 = vsub.s32 %v2632, %v3431
        %v3433 = vrot.slane %v1788, %v3432
        %v3434 = vlaneseq
        %v3435 = vshrl.u32 %v3434, 7
        %v3436 = vsub.s32 %v2632, %v3435
        %v3437 = vrot.slane %v1790, %v3436
        %v3438 = vlaneseq
        %v3439 = vshrl.u32 %v3438, 7
        %v3440 = vsub.s32 %v2632, %v3439
        %v3441 = vrot.slane %v1792, %v3440
        %v3442 = vlaneseq
        %v3443 = vshrl.u32 %v3442, 7
        %v3444 = vsub.s32 %v2632, %v3443
        %v3445 = vrot.slane %v1794, %v3444
        %v3446 = vlaneseq
        %v3447 = vshrl.u32 %v3446, 7
        %v3448 = vsub.s32 %v2632, %v3447
        %v3449 = vrot.slane %v1796, %v3448
        %v3450 = vlaneseq
        %v3451 = vshrl.u32 %v3450, 7
        %v3452 = vsub.s32 %v2632, %v3451
        %v3453 = vrot.slane %v1798, %v3452
        %v3454 = vlaneseq
        %v3455 = vshrl.u32 %v3454, 7
        %v3456 = vsub.s32 %v2632, %v3455
        %v3457 = vrot.slane %v1800, %v3456
        %v3458 = vlaneseq
        %v3459 = vshrl.u32 %v3458, 7
        %v3460 = vsub.s32 %v2632, %v3459
        %v3461 = vrot.slane %v1802, %v3460
        %v3462 = vlaneseq
        %v3463 = vshrl.u32 %v3462, 7
        %v3464 = vsub.s32 %v2632, %v3463
        %v3465 = vrot.slane %v1804, %v3464
        %v3466 = vlaneseq
        %v3467 = vshrl.u32 %v3466, 7
        %v3468 = vsub.s32 %v2632, %v3467
        %v3469 = vrot.slane %v1806, %v3468
        %v3470 = vlaneseq
        %v3471 = vshrl.u32 %v3470, 7
        %v3472 = vsub.s32 %v2632, %v3471
        %v3473 = vrot.slane %v1808, %v3472
        %v3474 = vlaneseq
        %v3475 = vshrl.u32 %v3474, 7
        %v3476 = vsub.s32 %v2632, %v3475
        %v3477 = vrot.slane %v1810, %v3476
        %v3478 = vlaneseq
        %v3479 = vshrl.u32 %v3478, 7
        %v3480 = vsub.s32 %v2632, %v3479
        %v3481 = vrot.slane %v1812, %v3480
        %v3482 = vlaneseq
        %v3483 = vshrl.u32 %v3482, 7
        %v3484 = vsub.s32 %v2632, %v3483
        %v3485 = vrot.slane %v1814, %v3484
        %v3486 = vlaneseq
        %v3487 = vshrl.u32 %v3486, 7
        %v3488 = vsub.s32 %v2632, %v3487
        %v3489 = vrot.slane %v1816, %v3488
        %v3490 = vlaneseq
        %v3491 = vshrl.u32 %v3490, 7
        %v3492 = vsub.s32 %v2632, %v3491
        %v3493 = vrot.slane %v1818, %v3492
        %v3494 = vlaneseq
        %v3495 = vshrl.u32 %v3494, 7
        %v3496 = vsub.s32 %v2632, %v3495
        %v3497 = vrot.slane %v1820, %v3496
        %v3498 = vlaneseq
        %v3499 = vshrl.u32 %v3498, 7
        %v3500 = vsub.s32 %v2632, %v3499
        %v3501 = vrot.slane %v1822, %v3500
        %v3502 = vlaneseq
        %v3503 = vshrl.u32 %v3502, 7
        %v3504 = vsub.s32 %v2632, %v3503
        %v3505 = vrot.slane %v1824, %v3504
        %v3506 = vlaneseq
        %v3507 = vshrl.u32 %v3506, 7
        %v3508 = vsub.s32 %v2632, %v3507
        %v3509 = vrot.slane %v1826, %v3508
        %v3510 = vlaneseq
        %v3511 = vshrl.u32 %v3510, 7
        %v3512 = vsub.s32 %v2632, %v3511
        %v3513 = vrot.slane %v1828, %v3512
        %v3514 = vlaneseq
        %v3515 = vshrl.u32 %v3514, 7
        %v3516 = vsub.s32 %v2632, %v3515
        %v3517 = vrot.slane %v1830, %v3516
        %v3518 = vlaneseq
        %v3519 = vshrl.u32 %v3518, 7
        %v3520 = vsub.s32 %v2632, %v3519
        %v3521 = vrot.slane %v1832, %v3520
        %v3522 = vlaneseq
        %v3523 = vshrl.u32 %v3522, 7
        %v3524 = vsub.s32 %v2632, %v3523
        %v3525 = vrot.slane %v1834, %v3524
        %v3526 = vlaneseq
        %v3527 = vshrl.u32 %v3526, 7
        %v3528 = vsub.s32 %v2632, %v3527
        %v3529 = vrot.slane %v1836, %v3528
        %v3530 = vlaneseq
        %v3531 = vshrl.u32 %v3530, 7
        %v3532 = vsub.s32 %v2632, %v3531
        %v3533 = vrot.slane %v1838, %v3532
        %v3534 = vlaneseq
        %v3535 = vshrl.u32 %v3534, 7
        %v3536 = vsub.s32 %v2632, %v3535
        %v3537 = vrot.slane %v1840, %v3536
        %v3538 = vlaneseq
        %v3539 = vshrl.u32 %v3538, 7
        %v3540 = vsub.s32 %v2632, %v3539
        %v3541 = vrot.slane %v1842, %v3540
        %v3542 = vlaneseq
        %v3543 = vshrl.u32 %v3542, 7
        %v3544 = vsub.s32 %v2632, %v3543
        %v3545 = vrot.slane %v1844, %v3544
        %v3546 = vlaneseq
        %v3547 = vshrl.u32 %v3546, 7
        %v3548 = vsub.s32 %v2632, %v3547
        %v3549 = vrot.slane %v1846, %v3548
        %v3550 = vlaneseq
        %v3551 = vshrl.u32 %v3550, 7
        %v3552 = vsub.s32 %v2632, %v3551
        %v3553 = vrot.slane %v1848, %v3552
        %v3554 = vlaneseq
        %v3555 = vshrl.u32 %v3554, 7
        %v3556 = vsub.s32 %v2632, %v3555
        %v3557 = vrot.slane %v1850, %v3556
        %v3558 = vsel %vm2561, %v3437, %v3433
        %v3559 = vsel %vm2563, %v3441, %v3558
        %v3560 = vsel %vm2565, %v3445, %v3559
        %v3561 = vsel %vm2567, %v3449, %v3560
        %v3562 = vsel %vm2569, %v3453, %v3561
        %v3563 = vsel %vm2571, %v3457, %v3562
        %v3564 = vsel %vm2573, %v3461, %v3563
        %v3565 = vsel %vm2561, %v3469, %v3465
        %v3566 = vsel %vm2563, %v3473, %v3565
        %v3567 = vsel %vm2565, %v3477, %v3566
        %v3568 = vsel %vm2567, %v3481, %v3567
        %v3569 = vsel %vm2569, %v3485, %v3568
        %v3570 = vsel %vm2571, %v3489, %v3569
        %v3571 = vsel %vm2573, %v3493, %v3570
        %v3572 = vsel %vm2561, %v3501, %v3497
        %v3573 = vsel %vm2563, %v3505, %v3572
        %v3574 = vsel %vm2565, %v3509, %v3573
        %v3575 = vsel %vm2567, %v3513, %v3574
        %v3576 = vsel %vm2569, %v3517, %v3575
        %v3577 = vsel %vm2571, %v3521, %v3576
        %v3578 = vsel %vm2573, %v3525, %v3577
        %v3579 = vsel %vm2561, %v3533, %v3529
        %v3580 = vsel %vm2563, %v3537, %v3579
        %v3581 = vsel %vm2565, %v3541, %v3580
        %v3582 = vsel %vm2567, %v3545, %v3581
        %v3583 = vsel %vm2569, %v3549, %v3582
        %v3584 = vsel %vm2571, %v3553, %v3583
        %v3585 = vsel %vm2573, %v3557, %v3584
        %v3622 = vlaneseq
        %v3623 = vshrl.u32 %v3622, 7
        %v3624 = vsub.s32 %v2825, %v3623
        %v3625 = vrot.slane %v2060, %v3624
        %v3626 = vlaneseq
        %v3627 = vshrl.u32 %v3626, 7
        %v3628 = vsub.s32 %v2825, %v3627
        %v3629 = vrot.slane %v2062, %v3628
        %v3630 = vlaneseq
        %v3631 = vshrl.u32 %v3630, 7
        %v3632 = vsub.s32 %v2825, %v3631
        %v3633 = vrot.slane %v2064, %v3632
        %v3634 = vlaneseq
        %v3635 = vshrl.u32 %v3634, 7
        %v3636 = vsub.s32 %v2825, %v3635
        %v3637 = vrot.slane %v2066, %v3636
        %v3638 = vlaneseq
        %v3639 = vshrl.u32 %v3638, 7
        %v3640 = vsub.s32 %v2825, %v3639
        %v3641 = vrot.slane %v2068, %v3640
        %v3642 = vlaneseq
        %v3643 = vshrl.u32 %v3642, 7
        %v3644 = vsub.s32 %v2825, %v3643
        %v3645 = vrot.slane %v2070, %v3644
        %v3646 = vlaneseq
        %v3647 = vshrl.u32 %v3646, 7
        %v3648 = vsub.s32 %v2825, %v3647
        %v3649 = vrot.slane %v2072, %v3648
        %v3650 = vlaneseq
        %v3651 = vshrl.u32 %v3650, 7
        %v3652 = vsub.s32 %v2825, %v3651
        %v3653 = vrot.slane %v2074, %v3652
        %v3654 = vlaneseq
        %v3655 = vshrl.u32 %v3654, 7
        %v3656 = vsub.s32 %v2825, %v3655
        %v3657 = vrot.slane %v2076, %v3656
        %v3658 = vlaneseq
        %v3659 = vshrl.u32 %v3658, 7
        %v3660 = vsub.s32 %v2825, %v3659
        %v3661 = vrot.slane %v2078, %v3660
        %v3662 = vlaneseq
        %v3663 = vshrl.u32 %v3662, 7
        %v3664 = vsub.s32 %v2825, %v3663
        %v3665 = vrot.slane %v2080, %v3664
        %v3666 = vlaneseq
        %v3667 = vshrl.u32 %v3666, 7
        %v3668 = vsub.s32 %v2825, %v3667
        %v3669 = vrot.slane %v2082, %v3668
        %v3670 = vlaneseq
        %v3671 = vshrl.u32 %v3670, 7
        %v3672 = vsub.s32 %v2825, %v3671
        %v3673 = vrot.slane %v2084, %v3672
        %v3674 = vlaneseq
        %v3675 = vshrl.u32 %v3674, 7
        %v3676 = vsub.s32 %v2825, %v3675
        %v3677 = vrot.slane %v2086, %v3676
        %v3678 = vlaneseq
        %v3679 = vshrl.u32 %v3678, 7
        %v3680 = vsub.s32 %v2825, %v3679
        %v3681 = vrot.slane %v2088, %v3680
        %v3682 = vlaneseq
        %v3683 = vshrl.u32 %v3682, 7
        %v3684 = vsub.s32 %v2825, %v3683
        %v3685 = vrot.slane %v2090, %v3684
        %v3686 = vlaneseq
        %v3687 = vshrl.u32 %v3686, 7
        %v3688 = vsub.s32 %v2825, %v3687
        %v3689 = vrot.slane %v2092, %v3688
        %v3690 = vlaneseq
        %v3691 = vshrl.u32 %v3690, 7
        %v3692 = vsub.s32 %v2825, %v3691
        %v3693 = vrot.slane %v2094, %v3692
        %v3694 = vlaneseq
        %v3695 = vshrl.u32 %v3694, 7
        %v3696 = vsub.s32 %v2825, %v3695
        %v3697 = vrot.slane %v2096, %v3696
        %v3698 = vlaneseq
        %v3699 = vshrl.u32 %v3698, 7
        %v3700 = vsub.s32 %v2825, %v3699
        %v3701 = vrot.slane %v2098, %v3700
        %v3702 = vlaneseq
        %v3703 = vshrl.u32 %v3702, 7
        %v3704 = vsub.s32 %v2825, %v3703
        %v3705 = vrot.slane %v2100, %v3704
        %v3706 = vlaneseq
        %v3707 = vshrl.u32 %v3706, 7
        %v3708 = vsub.s32 %v2825, %v3707
        %v3709 = vrot.slane %v2102, %v3708
        %v3710 = vlaneseq
        %v3711 = vshrl.u32 %v3710, 7
        %v3712 = vsub.s32 %v2825, %v3711
        %v3713 = vrot.slane %v2104, %v3712
        %v3714 = vlaneseq
        %v3715 = vshrl.u32 %v3714, 7
        %v3716 = vsub.s32 %v2825, %v3715
        %v3717 = vrot.slane %v2106, %v3716
        %v3718 = vlaneseq
        %v3719 = vshrl.u32 %v3718, 7
        %v3720 = vsub.s32 %v2825, %v3719
        %v3721 = vrot.slane %v2108, %v3720
        %v3722 = vlaneseq
        %v3723 = vshrl.u32 %v3722, 7
        %v3724 = vsub.s32 %v2825, %v3723
        %v3725 = vrot.slane %v2110, %v3724
        %v3726 = vlaneseq
        %v3727 = vshrl.u32 %v3726, 7
        %v3728 = vsub.s32 %v2825, %v3727
        %v3729 = vrot.slane %v2112, %v3728
        %v3730 = vlaneseq
        %v3731 = vshrl.u32 %v3730, 7
        %v3732 = vsub.s32 %v2825, %v3731
        %v3733 = vrot.slane %v2114, %v3732
        %v3734 = vlaneseq
        %v3735 = vshrl.u32 %v3734, 7
        %v3736 = vsub.s32 %v2825, %v3735
        %v3737 = vrot.slane %v2116, %v3736
        %v3738 = vlaneseq
        %v3739 = vshrl.u32 %v3738, 7
        %v3740 = vsub.s32 %v2825, %v3739
        %v3741 = vrot.slane %v2118, %v3740
        %v3742 = vlaneseq
        %v3743 = vshrl.u32 %v3742, 7
        %v3744 = vsub.s32 %v2825, %v3743
        %v3745 = vrot.slane %v2120, %v3744
        %v3746 = vlaneseq
        %v3747 = vshrl.u32 %v3746, 7
        %v3748 = vsub.s32 %v2825, %v3747
        %v3749 = vrot.slane %v2122, %v3748
        %v3750 = vsel %vm2561, %v3629, %v3625
        %v3751 = vsel %vm2563, %v3633, %v3750
        %v3752 = vsel %vm2565, %v3637, %v3751
        %v3753 = vsel %vm2567, %v3641, %v3752
        %v3754 = vsel %vm2569, %v3645, %v3753
        %v3755 = vsel %vm2571, %v3649, %v3754
        %v3756 = vsel %vm2573, %v3653, %v3755
        %v3757 = vsel %vm2561, %v3661, %v3657
        %v3758 = vsel %vm2563, %v3665, %v3757
        %v3759 = vsel %vm2565, %v3669, %v3758
        %v3760 = vsel %vm2567, %v3673, %v3759
        %v3761 = vsel %vm2569, %v3677, %v3760
        %v3762 = vsel %vm2571, %v3681, %v3761
        %v3763 = vsel %vm2573, %v3685, %v3762
        %v3764 = vsel %vm2561, %v3693, %v3689
        %v3765 = vsel %vm2563, %v3697, %v3764
        %v3766 = vsel %vm2565, %v3701, %v3765
        %v3767 = vsel %vm2567, %v3705, %v3766
        %v3768 = vsel %vm2569, %v3709, %v3767
        %v3769 = vsel %vm2571, %v3713, %v3768
        %v3770 = vsel %vm2573, %v3717, %v3769
        %v3771 = vsel %vm2561, %v3725, %v3721
        %v3772 = vsel %vm2563, %v3729, %v3771
        %v3773 = vsel %vm2565, %v3733, %v3772
        %v3774 = vsel %vm2567, %v3737, %v3773
        %v3775 = vsel %vm2569, %v3741, %v3774
        %v3776 = vsel %vm2571, %v3745, %v3775
        %v3777 = vsel %vm2573, %v3749, %v3776
        %v3814 = vlaneseq
        %v3815 = vshrl.u32 %v3814, 7
        %v3816 = vsub.s32 %v3018, %v3815
        %v3817 = vrot.slane %v2332, %v3816
        %v3818 = vlaneseq
        %v3819 = vshrl.u32 %v3818, 7
        %v3820 = vsub.s32 %v3018, %v3819
        %v3821 = vrot.slane %v2334, %v3820
        %v3822 = vlaneseq
        %v3823 = vshrl.u32 %v3822, 7
        %v3824 = vsub.s32 %v3018, %v3823
        %v3825 = vrot.slane %v2336, %v3824
        %v3826 = vlaneseq
        %v3827 = vshrl.u32 %v3826, 7
        %v3828 = vsub.s32 %v3018, %v3827
        %v3829 = vrot.slane %v2338, %v3828
        %v3830 = vlaneseq
        %v3831 = vshrl.u32 %v3830, 7
        %v3832 = vsub.s32 %v3018, %v3831
        %v3833 = vrot.slane %v2340, %v3832
        %v3834 = vlaneseq
        %v3835 = vshrl.u32 %v3834, 7
        %v3836 = vsub.s32 %v3018, %v3835
        %v3837 = vrot.slane %v2342, %v3836
        %v3838 = vlaneseq
        %v3839 = vshrl.u32 %v3838, 7
        %v3840 = vsub.s32 %v3018, %v3839
        %v3841 = vrot.slane %v2344, %v3840
        %v3842 = vlaneseq
        %v3843 = vshrl.u32 %v3842, 7
        %v3844 = vsub.s32 %v3018, %v3843
        %v3845 = vrot.slane %v2346, %v3844
        %v3846 = vlaneseq
        %v3847 = vshrl.u32 %v3846, 7
        %v3848 = vsub.s32 %v3018, %v3847
        %v3849 = vrot.slane %v2348, %v3848
        %v3850 = vlaneseq
        %v3851 = vshrl.u32 %v3850, 7
        %v3852 = vsub.s32 %v3018, %v3851
        %v3853 = vrot.slane %v2350, %v3852
        %v3854 = vlaneseq
        %v3855 = vshrl.u32 %v3854, 7
        %v3856 = vsub.s32 %v3018, %v3855
        %v3857 = vrot.slane %v2352, %v3856
        %v3858 = vlaneseq
        %v3859 = vshrl.u32 %v3858, 7
        %v3860 = vsub.s32 %v3018, %v3859
        %v3861 = vrot.slane %v2354, %v3860
        %v3862 = vlaneseq
        %v3863 = vshrl.u32 %v3862, 7
        %v3864 = vsub.s32 %v3018, %v3863
        %v3865 = vrot.slane %v2356, %v3864
        %v3866 = vlaneseq
        %v3867 = vshrl.u32 %v3866, 7
        %v3868 = vsub.s32 %v3018, %v3867
        %v3869 = vrot.slane %v2358, %v3868
        %v3870 = vlaneseq
        %v3871 = vshrl.u32 %v3870, 7
        %v3872 = vsub.s32 %v3018, %v3871
        %v3873 = vrot.slane %v2360, %v3872
        %v3874 = vlaneseq
        %v3875 = vshrl.u32 %v3874, 7
        %v3876 = vsub.s32 %v3018, %v3875
        %v3877 = vrot.slane %v2362, %v3876
        %v3878 = vlaneseq
        %v3879 = vshrl.u32 %v3878, 7
        %v3880 = vsub.s32 %v3018, %v3879
        %v3881 = vrot.slane %v2364, %v3880
        %v3882 = vlaneseq
        %v3883 = vshrl.u32 %v3882, 7
        %v3884 = vsub.s32 %v3018, %v3883
        %v3885 = vrot.slane %v2366, %v3884
        %v3886 = vlaneseq
        %v3887 = vshrl.u32 %v3886, 7
        %v3888 = vsub.s32 %v3018, %v3887
        %v3889 = vrot.slane %v2368, %v3888
        %v3890 = vlaneseq
        %v3891 = vshrl.u32 %v3890, 7
        %v3892 = vsub.s32 %v3018, %v3891
        %v3893 = vrot.slane %v2370, %v3892
        %v3894 = vlaneseq
        %v3895 = vshrl.u32 %v3894, 7
        %v3896 = vsub.s32 %v3018, %v3895
        %v3897 = vrot.slane %v2372, %v3896
        %v3898 = vlaneseq
        %v3899 = vshrl.u32 %v3898, 7
        %v3900 = vsub.s32 %v3018, %v3899
        %v3901 = vrot.slane %v2374, %v3900
        %v3902 = vlaneseq
        %v3903 = vshrl.u32 %v3902, 7
        %v3904 = vsub.s32 %v3018, %v3903
        %v3905 = vrot.slane %v2376, %v3904
        %v3906 = vlaneseq
        %v3907 = vshrl.u32 %v3906, 7
        %v3908 = vsub.s32 %v3018, %v3907
        %v3909 = vrot.slane %v2378, %v3908
        %v3910 = vlaneseq
        %v3911 = vshrl.u32 %v3910, 7
        %v3912 = vsub.s32 %v3018, %v3911
        %v3913 = vrot.slane %v2380, %v3912
        %v3914 = vlaneseq
        %v3915 = vshrl.u32 %v3914, 7
        %v3916 = vsub.s32 %v3018, %v3915
        %v3917 = vrot.slane %v2382, %v3916
        %v3918 = vlaneseq
        %v3919 = vshrl.u32 %v3918, 7
        %v3920 = vsub.s32 %v3018, %v3919
        %v3921 = vrot.slane %v2384, %v3920
        %v3922 = vlaneseq
        %v3923 = vshrl.u32 %v3922, 7
        %v3924 = vsub.s32 %v3018, %v3923
        %v3925 = vrot.slane %v2386, %v3924
        %v3926 = vlaneseq
        %v3927 = vshrl.u32 %v3926, 7
        %v3928 = vsub.s32 %v3018, %v3927
        %v3929 = vrot.slane %v2388, %v3928
        %v3930 = vlaneseq
        %v3931 = vshrl.u32 %v3930, 7
        %v3932 = vsub.s32 %v3018, %v3931
        %v3933 = vrot.slane %v2390, %v3932
        %v3934 = vlaneseq
        %v3935 = vshrl.u32 %v3934, 7
        %v3936 = vsub.s32 %v3018, %v3935
        %v3937 = vrot.slane %v2392, %v3936
        %v3938 = vlaneseq
        %v3939 = vshrl.u32 %v3938, 7
        %v3940 = vsub.s32 %v3018, %v3939
        %v3941 = vrot.slane %v2394, %v3940
        %v3942 = vsel %vm2561, %v3821, %v3817
        %v3943 = vsel %vm2563, %v3825, %v3942
        %v3944 = vsel %vm2565, %v3829, %v3943
        %v3945 = vsel %vm2567, %v3833, %v3944
        %v3946 = vsel %vm2569, %v3837, %v3945
        %v3947 = vsel %vm2571, %v3841, %v3946
        %v3948 = vsel %vm2573, %v3845, %v3947
        %v3949 = vsel %vm2561, %v3853, %v3849
        %v3950 = vsel %vm2563, %v3857, %v3949
        %v3951 = vsel %vm2565, %v3861, %v3950
        %v3952 = vsel %vm2567, %v3865, %v3951
        %v3953 = vsel %vm2569, %v3869, %v3952
        %v3954 = vsel %vm2571, %v3873, %v3953
        %v3955 = vsel %vm2573, %v3877, %v3954
        %v3956 = vsel %vm2561, %v3885, %v3881
        %v3957 = vsel %vm2563, %v3889, %v3956
        %v3958 = vsel %vm2565, %v3893, %v3957
        %v3959 = vsel %vm2567, %v3897, %v3958
        %v3960 = vsel %vm2569, %v3901, %v3959
        %v3961 = vsel %vm2571, %v3905, %v3960
        %v3962 = vsel %vm2573, %v3909, %v3961
        %v3963 = vsel %vm2561, %v3917, %v3913
        %v3964 = vsel %vm2563, %v3921, %v3963
        %v3965 = vsel %vm2565, %v3925, %v3964
        %v3966 = vsel %vm2567, %v3929, %v3965
        %v3967 = vsel %vm2569, %v3933, %v3966
        %v3968 = vsel %vm2571, %v3937, %v3967
        %v3969 = vsel %vm2573, %v3941, %v3968
        %v3974 = vsel %vm3179, %v3372, %v3564
        %v3975 = vsel %vm3179, %v3379, %v3571
        %v3976 = vsel %vm3179, %v3386, %v3578
        %v3977 = vsel %vm3179, %v3393, %v3585
        %v3978 = vsel %vm3184, %v3974, %v3756
        %v3979 = vsel %vm3184, %v3975, %v3763
        %v3980 = vsel %vm3184, %v3976, %v3770
        %v3981 = vsel %vm3184, %v3977, %v3777
        %v3982 = vsel %vm3189, %v3978, %v3948
        %v3983 = vsel %vm3189, %v3979, %v3955
        %v3984 = vsel %vm3189, %v3980, %v3962
        %v3985 = vsel %vm3189, %v3981, %v3969
        %v3986 = vmax.f32 %v3202, %v3982
        %v3987 = vmax.f32 %v3203, %v3983
        %v3988 = vmax.f32 %v3204, %v3984
        %v3989 = vmax.f32 %v3205, %v3985
        %3990 = vst.msk [vmem:[#allocation4] sm:$0xff] %vm787, %v3986
        %3991 = vst.msk [vmem:[#allocation4 + $0x8] sm:$0xff] %vm787, %v3987
        %3992 = vst.msk [vmem:[#allocation4 + $0x10] sm:$0xff] %vm787, %v3988
        %3993 = vst.msk [vmem:[#allocation4 + $0x18] sm:$0xff] %vm787, %v3989
      $region56: #{net_forward.2} parent=47 // pred_fallthru
        _
      %p3994 = scmp.eq.s32.totalorder %s35, 1
      // Predicated region
      $region57: #{net_forward.2} parent=47 // pred_check
        %p3995 = pneg %p3994
      $region58: #{net_forward.2} parent=47 // pred_check_branch
        %3997 = sbr.rel (%p3995) target = $region60
      $region59: #{net_forward.2} parent=47 // pred_region
        %v3998 = vld [vmem:[#allocation2] sm:$0xff]
        %v3999 = vld [vmem:[#allocation2 + $0x8] sm:$0xff]
        %v4000 = vld [vmem:[#allocation2 + $0x10] sm:$0xff]
        %v4001 = vld [vmem:[#allocation2 + $0x18] sm:$0xff]
        %v4002 = vmax.f32 %v3998, 1.0
        %v4003 = vmax.f32 %v3999, 1.0
        %v4004 = vmax.f32 %v4000, 1.0
        %v4005 = vmax.f32 %v4001, 1.0
        %v4006 = vrcp.pop %v4002
        %v4007 = vrcp.pop %v4003
        %v4008 = vrcp.pop %v4004
        %v4009 = vrcp.pop %v4005
        %4011 = vset.pattern.permute.xlu0 64
        %4012 = vperm.xlu0 %4011, %v4006
        %v4013 = vpop.permute.xlu0 %4012
        %4016 = vset.pattern.permute.xlu0 64
        %4017 = vperm.xlu0 %4016, %v4007
        %v4018 = vpop.permute.xlu0 %4017
        %4021 = vset.pattern.permute.xlu0 64
        %4022 = vperm.xlu0 %4021, %v4008
        %v4023 = vpop.permute.xlu0 %4022
        %4026 = vset.pattern.permute.xlu0 64
        %4027 = vperm.xlu0 %4026, %v4009
        %v4028 = vpop.permute.xlu0 %4027
        %v4030 = vmul.f32 %v3998, %v4013
        %v4031 = vmul.f32 %v3999, %v4018
        %v4032 = vmul.f32 %v4000, %v4023
        %v4033 = vmul.f32 %v4001, %v4028
        %v4034 = vmul.f32 %v4030, %v4030
        %v4035 = vmul.f32 %v4031, %v4031
        %v4036 = vmul.f32 %v4032, %v4032
        %v4037 = vmul.f32 %v4033, %v4033
        %4042 = vrot.lane.b32.xlu0 %v4034, 32
        %v4043 = vpop.permute.xlu0 %4042
        %4044 = vrot.lane.b32.xlu0 %v4035, 32
        %v4045 = vpop.permute.xlu0 %4044
        %4046 = vrot.lane.b32.xlu0 %v4036, 32
        %v4047 = vpop.permute.xlu0 %4046
        %4048 = vrot.lane.b32.xlu0 %v4037, 32
        %v4049 = vpop.permute.xlu0 %4048
        %v4054 = vsub.f32 %v4030, %v4043
        %v4055 = vsub.f32 %v4031, %v4045
        %v4056 = vsub.f32 %v4032, %v4047
        %v4057 = vsub.f32 %v4033, %v4049
        %v4058 = vmax.f32 %v4054, 0.0
        %v4059 = vmax.f32 %v4055, 0.0
        %v4060 = vmax.f32 %v4056, 0.0
        %v4061 = vmax.f32 %v4057, 0.0
        %v4062 = vadd.f32 %v4058, 1e-05
        %v4063 = vadd.f32 %v4059, 1e-05
        %v4064 = vadd.f32 %v4060, 1e-05
        %v4065 = vadd.f32 %v4061, 1e-05
        %v4066 = vrsqrt.pop %v4062
        %v4067 = vmul.f32 %v4062, %v4066
        %vm4068 = vcmp.eq.f32.partialorder %v4062, inf
        %v4069 = vsel %vm4068, %v4062, %v4067
        %vm4070 = vcmp.eq.f32.partialorder %v4062, 0.0
        %v4071 = vand.u32 %v4062, 2147483648
        %v4072 = vsel %vm4070, %v4071, %v4069
        %v4073 = vrsqrt.pop %v4063
        %v4074 = vmul.f32 %v4063, %v4073
        %vm4075 = vcmp.eq.f32.partialorder %v4063, inf
        %v4076 = vsel %vm4075, %v4063, %v4074
        %vm4077 = vcmp.eq.f32.partialorder %v4063, 0.0
        %v4078 = vand.u32 %v4063, 2147483648
        %v4079 = vsel %vm4077, %v4078, %v4076
        %v4080 = vrsqrt.pop %v4064
        %v4081 = vmul.f32 %v4064, %v4080
        %vm4082 = vcmp.eq.f32.partialorder %v4064, inf
        %v4083 = vsel %vm4082, %v4064, %v4081
        %vm4084 = vcmp.eq.f32.partialorder %v4064, 0.0
        %v4085 = vand.u32 %v4064, 2147483648
        %v4086 = vsel %vm4084, %v4085, %v4083
        %v4087 = vrsqrt.pop %v4065
        %v4088 = vmul.f32 %v4065, %v4087
        %vm4089 = vcmp.eq.f32.partialorder %v4065, inf
        %v4090 = vsel %vm4089, %v4065, %v4088
        %vm4091 = vcmp.eq.f32.partialorder %v4065, 0.0
        %v4092 = vand.u32 %v4065, 2147483648
        %v4093 = vsel %vm4091, %v4092, %v4090
        %vm4094 = vcmp.gt.f32.partialorder %v3998, 0.5
        %vm4095 = vcmp.gt.f32.partialorder %v3999, 0.5
        %vm4096 = vcmp.gt.f32.partialorder %v4000, 0.5
        %vm4097 = vcmp.gt.f32.partialorder %v4001, 0.5
        %v4098 = vld [vmem:[#allocation3] sm:$0xff]
        %v4099 = vld [vmem:[#allocation3 + $0x8] sm:$0xff]
        %v4100 = vld [vmem:[#allocation3 + $0x10] sm:$0xff]
        %v4101 = vld [vmem:[#allocation3 + $0x18] sm:$0xff]
        %v4102 = vsel %vm4094, 1, 0
        %v4103 = vsel %vm4095, 1, 0
        %v4104 = vsel %vm4096, 1, 0
        %v4105 = vsel %vm4097, 1, 0
        %4106 = vset.pattern.permute.xlu0 64
        %4107 = vperm.xlu0 %4106, %v4102
        %v4108 = vpop.permute.xlu0 %4107
        %4109 = vset.pattern.permute.xlu0 64
        %4110 = vperm.xlu0 %4109, %v4103
        %v4111 = vpop.permute.xlu0 %4110
        %4112 = vset.pattern.permute.xlu0 64
        %4113 = vperm.xlu0 %4112, %v4104
        %v4114 = vpop.permute.xlu0 %4113
        %4115 = vset.pattern.permute.xlu0 64
        %4116 = vperm.xlu0 %4115, %v4105
        %v4117 = vpop.permute.xlu0 %4116
        %vm4118 = vcmp.eq.s32.totalorder %v4108, 1
        %vm4119 = vcmp.eq.s32.totalorder %v4111, 1
        %vm4120 = vcmp.eq.s32.totalorder %v4114, 1
        %vm4121 = vcmp.eq.s32.totalorder %v4117, 1
        %v4122 = vsel %vm4118, %v4098, 0.0
        %v4123 = vsel %vm4119, %v4099, 0.0
        %v4124 = vsel %vm4120, %v4100, 0.0
        %v4125 = vsel %vm4121, %v4101, 0.0
        %v4126 = vld [vmem:[#allocation4] sm:$0xff]
        %v4127 = vld [vmem:[#allocation4 + $0x8] sm:$0xff]
        %v4128 = vld [vmem:[#allocation4 + $0x10] sm:$0xff]
        %v4129 = vld [vmem:[#allocation4 + $0x18] sm:$0xff]
        %v4130 = vsel %vm4118, %v4126, 0.0
        %v4131 = vsel %vm4119, %v4127, 0.0
        %v4132 = vsel %vm4120, %v4128, 0.0
        %v4133 = vsel %vm4121, %v4129, 0.0
        %4138 = vrot.lane.b32.xlu0 %v4122, 32
        %v4139 = vpop.permute.xlu0 %4138
        %4140 = vrot.lane.b32.xlu0 %v4123, 32
        %v4141 = vpop.permute.xlu0 %4140
        %4142 = vrot.lane.b32.xlu0 %v4124, 32
        %v4143 = vpop.permute.xlu0 %4142
        %4144 = vrot.lane.b32.xlu0 %v4125, 32
        %v4145 = vpop.permute.xlu0 %4144
        %4154 = vrot.lane.b32.xlu0 %v4130, 64
        %v4155 = vpop.permute.xlu0 %4154
        %4156 = vrot.lane.b32.xlu0 %v4131, 64
        %v4157 = vpop.permute.xlu0 %4156
        %4158 = vrot.lane.b32.xlu0 %v4132, 64
        %v4159 = vpop.permute.xlu0 %4158
        %4160 = vrot.lane.b32.xlu0 %v4133, 64
        %v4161 = vpop.permute.xlu0 %4160
        %4170 = vrot.lane.b32.xlu0 %v4072, 64
        %v4171 = vpop.permute.xlu0 %4170
        %4172 = vrot.lane.b32.xlu0 %v4079, 64
        %v4173 = vpop.permute.xlu0 %4172
        %4174 = vrot.lane.b32.xlu0 %v4086, 64
        %v4175 = vpop.permute.xlu0 %4174
        %4176 = vrot.lane.b32.xlu0 %v4093, 64
        %v4177 = vpop.permute.xlu0 %4176
        %vm4182 = vcmask 261120
        %v4183 = vsel %vm4182, %v4030, %v4139
        %v4184 = vsel %vm4182, %v4031, %v4141
        %v4185 = vsel %vm4182, %v4032, %v4143
        %v4186 = vsel %vm4182, %v4033, %v4145
        %vm4187 = vcmask 523264
        %v4188 = vsel %vm4187, %v4183, %v4155
        %v4189 = vsel %vm4187, %v4184, %v4157
        %v4190 = vsel %vm4187, %v4185, %v4159
        %v4191 = vsel %vm4187, %v4186, %v4161
        %vm4192 = vcmask 785408
        %v4193 = vsel %vm4192, %v4188, %v4171
        %v4194 = vsel %vm4192, %v4189, %v4173
        %v4195 = vsel %vm4192, %v4190, %v4175
        %v4196 = vsel %vm4192, %v4191, %v4177
        %v4197 = vadd.f32 %v4002, 1.0
        %v4198 = vadd.f32 %v4003, 1.0
        %v4199 = vadd.f32 %v4004, 1.0
        %v4200 = vadd.f32 %v4005, 1.0
        %v4201 = vlog2.pop %v4197
        %v4202 = vmul.f32 %v4201, 0.6931472
        %v4203 = vlog2.pop %v4198
        %v4204 = vmul.f32 %v4203, 0.6931472
        %v4205 = vlog2.pop %v4199
        %v4206 = vmul.f32 %v4205, 0.6931472
        %v4207 = vlog2.pop %v4200
        %v4208 = vmul.f32 %v4207, 0.6931472
        %v4209 = vmul.f32 %v4202, 0.66028255
        %v4210 = vmul.f32 %v4204, 0.66028255
        %v4211 = vmul.f32 %v4206, 0.66028255
        %v4212 = vmul.f32 %v4208, 0.66028255
        %v4213 = vrcp.pop %v4202
        %v4214 = vrcp.pop %v4204
        %v4215 = vrcp.pop %v4206
        %v4216 = vrcp.pop %v4208
        %v4217 = vmul.f32 %v4213, 1.5145031
        %v4218 = vmul.f32 %v4214, 1.5145031
        %v4219 = vmul.f32 %v4215, 1.5145031
        %v4220 = vmul.f32 %v4216, 1.5145031
        %4222 = vset.pattern.permute.xlu0 64
        %4223 = vperm.xlu0 %4222, %v4209
        %v4224 = vpop.permute.xlu0 %4223
        %4227 = vset.pattern.permute.xlu0 64
        %4228 = vperm.xlu0 %4227, %v4210
        %v4229 = vpop.permute.xlu0 %4228
        %4232 = vset.pattern.permute.xlu0 64
        %4233 = vperm.xlu0 %4232, %v4211
        %v4234 = vpop.permute.xlu0 %4233
        %4237 = vset.pattern.permute.xlu0 64
        %4238 = vperm.xlu0 %4237, %v4212
        %v4239 = vpop.permute.xlu0 %4238
        %v4241 = vmul.f32 %v4193, %v4224
        %v4242 = vmul.f32 %v4194, %v4229
        %v4243 = vmul.f32 %v4195, %v4234
        %v4244 = vmul.f32 %v4196, %v4239
        %4246 = vset.pattern.permute.xlu0 64
        %4247 = vperm.xlu0 %4246, %v4217
        %v4248 = vpop.permute.xlu0 %4247
        %4251 = vset.pattern.permute.xlu0 64
        %4252 = vperm.xlu0 %4251, %v4218
        %v4253 = vpop.permute.xlu0 %4252
        %4256 = vset.pattern.permute.xlu0 64
        %4257 = vperm.xlu0 %4256, %v4219
        %v4258 = vpop.permute.xlu0 %4257
        %4261 = vset.pattern.permute.xlu0 64
        %4262 = vperm.xlu0 %4261, %v4220
        %v4263 = vpop.permute.xlu0 %4262
        %v4265 = vmul.f32 %v4193, %v4248
        %v4266 = vmul.f32 %v4194, %v4253
        %v4267 = vmul.f32 %v4195, %v4258
        %v4268 = vmul.f32 %v4196, %v4263
        %v4269 = vld [vmem:[%s418] sm:$0xff]
        %v4270 = vld [vmem:[%s418 + $0x8] sm:$0xff]
        %v4271 = vld [vmem:[%s418 + $0x10] sm:$0xff]
        %v4272 = vld [vmem:[%s418 + $0x18] sm:$0xff]
        %4285 = vrot.lane.b32.xlu0 %v4193, 32
        %v4286 = vpop.permute.xlu0 %4285
        %4287 = vrot.lane.b32.xlu0 %v4241, 32
        %v4288 = vpop.permute.xlu0 %4287
        %4289 = vrot.lane.b32.xlu0 %v4265, 32
        %v4290 = vpop.permute.xlu0 %4289
        %4291 = vrot.lane.b32.xlu0 %v4194, 32
        %v4292 = vpop.permute.xlu0 %4291
        %4293 = vrot.lane.b32.xlu0 %v4242, 32
        %v4294 = vpop.permute.xlu0 %4293
        %4295 = vrot.lane.b32.xlu0 %v4266, 32
        %v4296 = vpop.permute.xlu0 %4295
        %4297 = vrot.lane.b32.xlu0 %v4195, 32
        %v4298 = vpop.permute.xlu0 %4297
        %4299 = vrot.lane.b32.xlu0 %v4243, 32
        %v4300 = vpop.permute.xlu0 %4299
        %4301 = vrot.lane.b32.xlu0 %v4267, 32
        %v4302 = vpop.permute.xlu0 %4301
        %4303 = vrot.lane.b32.xlu0 %v4196, 32
        %v4304 = vpop.permute.xlu0 %4303
        %4305 = vrot.lane.b32.xlu0 %v4244, 32
        %v4306 = vpop.permute.xlu0 %4305
        %4307 = vrot.lane.b32.xlu0 %v4268, 32
        %v4308 = vpop.permute.xlu0 %4307
        %v4309 = vsel %vm4182, %v4286, %v4288
        %v4310 = vsel %vm4182, %v4288, %v4290
        %v4311 = vsel %vm4182, %v4292, %v4294
        %v4312 = vsel %vm4182, %v4294, %v4296
        %v4313 = vsel %vm4182, %v4298, %v4300
        %v4314 = vsel %vm4182, %v4300, %v4302
        %v4315 = vsel %vm4182, %v4304, %v4306
        %v4316 = vsel %vm4182, %v4306, %v4308
        %v4329 = vsel %vm4182, %v4269, %v4286
        %v4330 = vsel %vm4182, %v4270, %v4292
        %v4331 = vsel %vm4182, %v4271, %v4298
        %v4332 = vsel %vm4182, %v4272, %v4304
        %v4333 = vld [vmem:[%s7] sm:$0xff]
        %v4334 = vld [vmem:[%s7 + $0x8] sm:$0xff]
        %v4335 = vld [vmem:[%s7 + $0x10] sm:$0xff]
        %v4336 = vld [vmem:[%s7 + $0x18] sm:$0xff]
        %v4337 = vld [vmem:[%s7 + $0x20] sm:$0xff]
        %v4338 = vld [vmem:[%s7 + $0x28] sm:$0xff]
        %v4339 = vld [vmem:[%s7 + $0x30] sm:$0xff]
        %v4340 = vld [vmem:[%s7 + $0x38] sm:$0xff]
        %v4341 = vld [vmem:[%s7 + $0x40] sm:$0xff]
        %v4342 = vld [vmem:[%s7 + $0x48] sm:$0xff]
        %v4343 = vld [vmem:[%s7 + $0x50] sm:$0xff]
        %v4344 = vld [vmem:[%s7 + $0x58] sm:$0xff]
        %v4345 = vld [vmem:[%s7 + $0x60] sm:$0xff]
        %v4346 = vld [vmem:[%s7 + $0x68] sm:$0xff]
        %v4347 = vld [vmem:[%s7 + $0x70] sm:$0xff]
        %v4348 = vld [vmem:[%s7 + $0x78] sm:$0xff]
        %v4349 = vld [vmem:[%s7 + $0x80] sm:$0xff]
        %v4350 = vld [vmem:[%s7 + $0x88] sm:$0xff]
        %v4351 = vld [vmem:[%s7 + $0x90] sm:$0xff]
        %v4352 = vld [vmem:[%s7 + $0x98] sm:$0xff]
        %v4353 = vld [vmem:[%s7 + $0xa0] sm:$0xff]
        %v4354 = vld [vmem:[%s7 + $0xa8] sm:$0xff]
        %v4355 = vld [vmem:[%s7 + $0xb0] sm:$0xff]
        %v4356 = vld [vmem:[%s7 + $0xb8] sm:$0xff]
        %v4357 = vld [vmem:[%s7 + $0xc0] sm:$0xff]
        %v4358 = vld [vmem:[%s7 + $0xc8] sm:$0xff]
        %v4359 = vld [vmem:[%s7 + $0xd0] sm:$0xff]
        %v4360 = vld [vmem:[%s7 + $0xd8] sm:$0xff]
        %v4361 = vld [vmem:[%s7 + $0xe0] sm:$0xff]
        %v4362 = vld [vmem:[%s7 + $0xe8] sm:$0xff]
        %v4363 = vld [vmem:[%s7 + $0xf0] sm:$0xff]
        %v4364 = vld [vmem:[%s7 + $0xf8] sm:$0xff]
        %v4365 = vld [vmem:[%s7 + $0x100] sm:$0xff]
        %v4366 = vld [vmem:[%s7 + $0x108] sm:$0xff]
        %v4367 = vld [vmem:[%s7 + $0x110] sm:$0xff]
        %v4368 = vld [vmem:[%s7 + $0x118] sm:$0xff]
        %v4369 = vld [vmem:[%s7 + $0x120] sm:$0xff]
        %v4370 = vld [vmem:[%s7 + $0x128] sm:$0xff]
        %v4371 = vld [vmem:[%s7 + $0x130] sm:$0xff]
        %v4372 = vld [vmem:[%s7 + $0x138] sm:$0xff]
        %v4373 = vld [vmem:[%s7 + $0x140] sm:$0xff]
        %v4374 = vld [vmem:[%s7 + $0x148] sm:$0xff]
        %v4375 = vld [vmem:[%s7 + $0x150] sm:$0xff]
        %v4376 = vld [vmem:[%s7 + $0x158] sm:$0xff]
        %v4377 = vld [vmem:[%s7 + $0x160] sm:$0xff]
        %v4378 = vld [vmem:[%s7 + $0x168] sm:$0xff]
        %v4379 = vld [vmem:[%s7 + $0x170] sm:$0xff]
        %v4380 = vld [vmem:[%s7 + $0x178] sm:$0xff]
        %v4381 = vld [vmem:[%s7 + $0x180] sm:$0xff]
        %v4382 = vld [vmem:[%s7 + $0x188] sm:$0xff]
        %v4383 = vld [vmem:[%s7 + $0x190] sm:$0xff]
        %v4384 = vld [vmem:[%s7 + $0x198] sm:$0xff]
        %v4385 = vld [vmem:[%s8] sm:$0x1]
        %v4387 = vlaneseq
        %v4388 = vshrl.u32 %v4387, 7
        %v4389 = vsub.s32 0, %v4388
        %v4390 = vrot.slane %v4385, %v4389
        %v4392 = vsel %vm4182, %v4290, 0
        %v4394 = vsel %vm4182, %v4296, 0
        %v4396 = vsel %vm4182, %v4302, 0
        %v4398 = vsel %vm4182, %v4308, 0
        %4400 = vmatprep.subr.mxu0 0.0
        %4401 = vmatpush1.msra.mxu0 %v4333
        %4402 = vmatprep.subr.mxu0 0.0
        %4403 = vmatpush1.msra.mxu0 %v4334
        %4404 = vmatprep.subr.mxu0 0.0
        %4405 = vmatpush1.msra.mxu0 %v4335
        %4406 = vmatprep.subr.mxu0 0.0
        %4407 = vmatpush1.msra.mxu0 %v4336
        %4408 = vmatprep.subr.mxu0 0.0
        %4409 = vmatpush1.msra.mxu0 %v4337
        %4410 = vmatprep.subr.mxu0 0.0
        %4411 = vmatpush1.msra.mxu0 %v4338
        %4412 = vmatprep.subr.mxu0 0.0
        %4413 = vmatpush1.msra.mxu0 %v4339
        %4414 = vmatprep.subr.mxu0 0.0
        %4415 = vmatpush1.msra.mxu0 %v4340
        %4416 = vmatprep.subr.mxu0 0.0
        %4417 = vmatpush1.msra.mxu0 %v4341
        %4418 = vmatprep.subr.mxu0 0.0
        %4419 = vmatpush1.msra.mxu0 %v4342
        %4420 = vmatprep.subr.mxu0 0.0
        %4421 = vmatpush1.msra.mxu0 %v4343
        %4422 = vmatprep.subr.mxu0 0.0
        %4423 = vmatpush1.msra.mxu0 %v4344
        %4424 = vmatprep.subr.mxu0 0.0
        %4425 = vmatpush1.msra.mxu0 %v4345
        %4426 = vmatprep.subr.mxu0 0.0
        %4427 = vmatpush1.msra.mxu0 %v4346
        %4428 = vmatprep.subr.mxu0 0.0
        %4429 = vmatpush1.msra.mxu0 %v4347
        %4430 = vmatprep.subr.mxu0 0.0
        %4431 = vmatpush1.msra.mxu0 %v4348
        %4432 = vmatprep.subr.mxu0 0.0
        %4433 = vmatpush1.msra.mxu0 %v4349
        %4434 = vmatprep.subr.mxu0 0.0
        %4435 = vmatpush1.msra.mxu0 %v4350
        %4436 = vmatprep.subr.mxu0 0.0
        %4437 = vmatpush1.msra.mxu0 %v4351
        %4438 = vmatprep.subr.mxu0 0.0
        %4439 = vmatpush1.msra.mxu0 %v4352
        %4440 = vmatprep.subr.mxu0 0.0
        %4441 = vmatpush1.msra.mxu0 %v4353
        %4442 = vmatprep.subr.mxu0 0.0
        %4443 = vmatpush1.msra.mxu0 %v4354
        %4444 = vmatprep.subr.mxu0 0.0
        %4445 = vmatpush1.msra.mxu0 %v4355
        %4446 = vmatprep.subr.mxu0 0.0
        %4447 = vmatpush1.msra.mxu0 %v4356
        %4448 = vmatprep.subr.mxu0 0.0
        %4449 = vmatpush1.msra.mxu0 %v4357
        %4450 = vmatprep.subr.mxu0 0.0
        %4451 = vmatpush1.msra.mxu0 %v4358
        %4452 = vmatprep.subr.mxu0 0.0
        %4453 = vmatpush1.msra.mxu0 %v4359
        %4454 = vmatprep.subr.mxu0 0.0
        %4455 = vmatpush1.msra.mxu0 %v4360
        %4456 = vmatprep.subr.mxu0 0.0
        %4457 = vmatpush1.msra.mxu0 %v4361
        %4458 = vmatprep.subr.mxu0 0.0
        %4459 = vmatpush1.msra.mxu0 %v4362
        %4460 = vmatprep.subr.mxu0 0.0
        %4461 = vmatpush1.msra.mxu0 %v4363
        %4462 = vmatprep.subr.mxu0 0.0
        %4463 = vmatpush1.msra.mxu0 %v4364
        %4464 = vmatprep.mubr.f32.mxu0 %v4309
        %4465 = vmatmul.mubr.f32.gmra.mrb[0].mxu0 %v4329
        %v4466 = vpop.f32.mrb[0].mxu0
        %v4467 = vadd.f32 %v4390, %v4466
        %v4468 = vpop.f32.mrb[0].mxu0
        %4469 = vmatprep.mubr.f32.mxu0 %v4311
        %4470 = vmatmul.mubr.f32.gmra.mrb[0].mxu0 %v4330
        %v4471 = vpop.f32.mrb[0].mxu0
        %v4472 = vadd.f32 %v4390, %v4471
        %v4473 = vpop.f32.mrb[0].mxu0
        %4474 = vmatprep.mubr.f32.mxu0 %v4313
        %4475 = vmatmul.mubr.f32.gmra.mrb[0].mxu0 %v4331
        %v4476 = vpop.f32.mrb[0].mxu0
        %v4477 = vadd.f32 %v4390, %v4476
        %v4478 = vpop.f32.mrb[0].mxu0
        %4479 = vmatprep.mubr.f32.mxu0 %v4315
        %4480 = vmatmul.mubr.f32.gmra.mrb[0].mxu0 %v4332
        %v4481 = vpop.f32.mrb[0].mxu0
        %v4482 = vadd.f32 %v4390, %v4481
        %v4483 = vpop.f32.mrb[0].mxu0
        %4484 = vdwg.mxu0
        %4485 = vmatprep.subr.mxu0 0.0
        %4486 = vmatpush1.msra.mxu0 %v4365
        %4487 = vmatprep.subr.mxu0 0.0
        %4488 = vmatpush1.msra.mxu0 %v4366
        %4489 = vmatprep.subr.mxu0 0.0
        %4490 = vmatpush1.msra.mxu0 %v4367
        %4491 = vmatprep.subr.mxu0 0.0
        %4492 = vmatpush1.msra.mxu0 %v4368
        %4493 = vmatprep.subr.mxu0 0.0
        %4494 = vmatpush1.msra.mxu0 %v4369
        %4495 = vmatprep.subr.mxu0 0.0
        %4496 = vmatpush1.msra.mxu0 %v4370
        %4497 = vmatprep.subr.mxu0 0.0
        %4498 = vmatpush1.msra.mxu0 %v4371
        %4499 = vmatprep.subr.mxu0 0.0
        %4500 = vmatpush1.msra.mxu0 %v4372
        %4501 = vmatprep.subr.mxu0 0.0
        %4502 = vmatpush1.msra.mxu0 %v4373
        %4503 = vmatprep.subr.mxu0 0.0
        %4504 = vmatpush1.msra.mxu0 %v4374
        %4505 = vmatprep.subr.mxu0 0.0
        %4506 = vmatpush1.msra.mxu0 %v4375
        %4507 = vmatprep.subr.mxu0 0.0
        %4508 = vmatpush1.msra.mxu0 %v4376
        %4509 = vmatprep.subr.mxu0 0.0
        %4510 = vmatpush1.msra.mxu0 %v4377
        %4511 = vmatprep.subr.mxu0 0.0
        %4512 = vmatpush1.msra.mxu0 %v4378
        %4513 = vmatprep.subr.mxu0 0.0
        %4514 = vmatpush1.msra.mxu0 %v4379
        %4515 = vmatprep.subr.mxu0 0.0
        %4516 = vmatpush1.msra.mxu0 %v4380
        %4517 = vmatprep.subr.mxu0 0.0
        %4518 = vmatpush1.msra.mxu0 %v4381
        %4519 = vmatprep.subr.mxu0 0.0
        %4520 = vmatpush1.msra.mxu0 %v4382
        %4521 = vmatprep.subr.mxu0 0.0
        %4522 = vmatpush1.msra.mxu0 %v4383
        %4523 = vmatprep.subr.mxu0 0.0
        %4524 = vmatpush1.msra.mxu0 %v4384
        %4525 = vmatprep.subr.mxu0 0.0
        %4526 = vmatpush1.msra.mxu0 0.0
        %4527 = vmatprep.subr.mxu0 0.0
        %4528 = vmatpush1.msra.mxu0 0.0
        %4529 = vmatprep.subr.mxu0 0.0
        %4530 = vmatpush1.msra.mxu0 0.0
        %4531 = vmatprep.subr.mxu0 0.0
        %4532 = vmatpush1.msra.mxu0 0.0
        %4533 = vmatprep.subr.mxu0 0.0
        %4534 = vmatpush1.msra.mxu0 0.0
        %4535 = vmatprep.subr.mxu0 0.0
        %4536 = vmatpush1.msra.mxu0 0.0
        %4537 = vmatprep.subr.mxu0 0.0
        %4538 = vmatpush1.msra.mxu0 0.0
        %4539 = vmatprep.subr.mxu0 0.0
        %4540 = vmatpush1.msra.mxu0 0.0
        %4541 = vmatprep.subr.mxu0 0.0
        %4542 = vmatpush1.msra.mxu0 0.0
        %4543 = vmatprep.subr.mxu0 0.0
        %4544 = vmatpush1.msra.mxu0 0.0
        %4545 = vmatprep.subr.mxu0 0.0
        %4546 = vmatpush1.msra.mxu0 0.0
        %4547 = vmatprep.subr.mxu0 0.0
        %4548 = vmatpush1.msra.mxu0 0.0
        %4549 = vmatprep.mubr.f32.mxu0 %v4392
        %4550 = vmatmul.mubr.f32.gmra.mrb[0].mxu0 %v4310
        %v4551 = vpop.f32.mrb[0].mxu0
        %v4552 = vadd.f32 %v4467, %v4551
        %v4553 = vpop.f32.mrb[0].mxu0
        %4554 = vmatprep.mubr.f32.mxu0 %v4394
        %4555 = vmatmul.mubr.f32.gmra.mrb[0].mxu0 %v4312
        %v4556 = vpop.f32.mrb[0].mxu0
        %v4557 = vadd.f32 %v4472, %v4556
        %v4558 = vpop.f32.mrb[0].mxu0
        %4559 = vmatprep.mubr.f32.mxu0 %v4396
        %4560 = vmatmul.mubr.f32.gmra.mrb[0].mxu0 %v4314
        %v4561 = vpop.f32.mrb[0].mxu0
        %v4562 = vadd.f32 %v4477, %v4561
        %v4563 = vpop.f32.mrb[0].mxu0
        %4564 = vmatprep.mubr.f32.mxu0 %v4398
        %4565 = vmatmul.mubr.f32.gmra.mrb[0].mxu0 %v4316
        %v4566 = vpop.f32.mrb[0].mxu0
        %v4567 = vadd.f32 %v4482, %v4566
        %v4568 = vpop.f32.mrb[0].mxu0
        %4569 = vdwg.mxu0
        %v4570 = vmax.f32 %v4552, 0.0
        %v4571 = vmax.f32 %v4557, 0.0
        %v4572 = vmax.f32 %v4562, 0.0
        %v4573 = vmax.f32 %v4567, 0.0
        %4574 = vst.msk [vmem:[%s424] sm:$0xff] %vm4182, %v4570
        %4575 = vst.msk [vmem:[%s424 + $0x8] sm:$0xff] %vm4182, %v4571
        %4576 = vst.msk [vmem:[%s424 + $0x10] sm:$0xff] %vm4182, %v4572
        %4577 = vst.msk [vmem:[%s424 + $0x18] sm:$0xff] %vm4182, %v4573
      $region60: #{net_forward.2} parent=47 // pred_fallthru
        _
      %s4578 = smul.u32 4, %s34
      %p4579 = scmp.lt.s32.totalorder %s4578, 7
      %s4580 = scalar_select %p4579, %s4578, 7
      %s4581 = smul.addr %s4580, 8
      %s4582 = scalar_lea.vmem %s9, %s4581
      // Predicated region
      $region61: #{net_forward.2} parent=47 // pred_check
        %p4583 = pneg %p246
      $region62: #{net_forward.2} parent=47 // pred_check_branch
        %4585 = sbr.rel (%p4583) target = $region64
      $region63: #{net_forward.2} parent=47 // pred_region
        %s4586 = smul.u32 4, %s34
      $region64: #{net_forward.2} parent=47 // pred_fallthru
        _
    $region48: #{net_forward.2} parent=5 // pred_fallthru
      _
    %p4587 = scmp.le.s32.totalorder 2, %s25
    // Predicated region
    $region65: #{net_forward.2} parent=5 // pred_check
      %p4588 = pneg %p4587
    $region66: #{net_forward.2} parent=5 // pred_check_branch
      %4590 = sbr.rel (%p4588) target = $region68
    $region67: #{net_forward.2} parent=5 // pred_region
      %s4591 = ssub.s32 %s25, 2
      // Predicated region
      $region69: #{net_forward.2} parent=67 // pred_check
        %p4592 = pneg %p252
      $region70: #{net_forward.2} parent=67 // pred_check_branch
        %4594 = sbr.rel (%p4592) target = $region72
      $region71: #{net_forward.2} parent=67 // pred_region
        %s4595 = smul.u32 4, %s36
        %p4596 = scmp.lt.s32.totalorder %s4595, 7
        %s4597 = scalar_select %p4596, %s4595, 7
        %s4598 = smul.addr %s4597, 8
        %s4599 = scalar_lea.vmem %s9, %s4598
      $region72: #{net_forward.2} parent=67 // pred_fallthru
        _
    $region68: #{net_forward.2} parent=5 // pred_fallthru
      _
  $region6: #{net_forward.2} parent=0 // loop_footer
    %s29 = sadd.s32 1, %s25
  $region7: #{net_forward.2} parent=0 // loop_footer_branch
    %24 = sbr.rel target = $region3
  $region8: #{net_forward.2} parent=0 // loop_exit
    _

// kernel: net_forward.3
$region0: #{net_forward.3}
  #allocation0 [shape = 'u32[]', space=smem, size = 0x4, offset = 0x4, fixed_abs, tag = 'smem constant byte address 0x4 - core index']
  #allocation1 [shape = 'u32[144,128]{1,0:T(1,128)}', space=vmem, size = 0x12000, scoped, tag = 'internal scratch']
  #allocation2 [shape = 'f32[32,65]{1,0:T(8,128)}', space=vmem, size = 0x4000, scoped, tag = 'scratch operand']
  #allocation3 [shape = 'f32[32,32]{1,0:T(8,128)}', space=vmem, size = 0x4000, scoped, tag = 'scratch operand']
  #allocation4 [shape = 'f32[32,32]{1,0:T(8,128)}', space=vmem, size = 0x4000, scoped, tag = 'scratch operand']
  #allocation5 [shape = 's32[1]{0}', space=sflag, size = 0x4, scoped, tag = 'scoped memory for net_forward.3']
  #allocation6 [shape = 'u8[512]{0}', space=smem, size = 0x200, scoped, tag = 'prefetched SMEM operand 0']
  #allocation7 [shape = 'u8[512]{0}', space=smem, size = 0x200, scoped, tag = 'prefetched SMEM operand 1']
  %s0 = inlined_call_operand.vmem [shape: s32[2], index: 0, kind: input, shape index: {}]
  %s1 = inlined_call_operand.vmem [shape: s32[2], index: 1, kind: input, shape index: {}]
  %s2 = inlined_call_operand.vmem [shape: f32[384,68], index: 2, kind: input, shape index: {}]
  %s3 = inlined_call_operand.vmem [shape: s32[1,384], index: 3, kind: input, shape index: {}]
  %s4 = inlined_call_operand.vmem [shape: f32[64,32], index: 4, kind: input, shape index: {}]
  %s5 = inlined_call_operand.vmem [shape: f32[68,32], index: 5, kind: input, shape index: {}]
  %s6 = inlined_call_operand.vmem [shape: f32[1,32], index: 6, kind: input, shape index: {}]
  %s7 = inlined_call_operand.vmem [shape: f32[416,32], index: 7, kind: input, shape index: {}]
  %s8 = inlined_call_operand.vmem [shape: f32[1,32], index: 8, kind: input, shape index: {}]
  %s9 = inlined_call_operand.vmem [shape: f32[32,16], index: 9, kind: input, shape index: {}]
  %s10 = inlined_call_operand.vmem [shape: f32[1,16], index: 10, kind: input, shape index: {}]
  %s11 = inlined_call_operand.vmem [shape: f32[16,8], index: 11, kind: input, shape index: {}]
  %s12 = inlined_call_operand.vmem [shape: f32[1,8], index: 12, kind: input, shape index: {}]
  %s13 = inlined_call_operand.vmem [shape: f32[64,8], index: 13, kind: output, shape index: {}]
  %s14 = sld [smem:[#allocation0]]
  $region89: #{net_forward.3} parent=0
    _
  %s16 = ssub.s32 1, %s14
  %s17 = scalar_select 0, %s16, %s14
  %s18 = sshll.u32 %s0, 4
  %s19 = int_to_ptr.vmem [resolvable:$true] %s18
  %21 = dma.vmem_to_smem %s19, 16, [#allocation6], [#allocation5]
  %s22 = sshll.u32 %s1, 4
  %s23 = int_to_ptr.vmem [resolvable:$true] %s22
  %25 = dma.vmem_to_smem %s23, 16, [#allocation7], [#allocation5]
  %26 = dma.done [#allocation5], 32
  %27 = sfence
  loop: start=0, step=1, limit=6
  $region2: #{net_forward.3} parent=0 // loop_pre_header
    _
  $region3: #{net_forward.3} parent=0 // loop_header
    %s29 = sphi 0, %s33
    %p30 = scmp.ge.s32.totalorder %s29, 6
    %s36 = sphi 0, %s48
    %s37 = sphi 0, %s44
    %s38 = sphi 0, %s36
    %s39 = sphi 0, %s37
    %s40 = sphi 0, %s38
    %s41 = sphi 0, %s39
    %s63 = sphi 0, %s65
    %s66 = sphi 0, %s63
    %s67 = sphi 0, %s66
    %s83 = sphi 0, %s67
    %s101 = sphi 0, %s103
    %s104 = sphi 0, %s101
    %s105 = sphi 0, %s104
    %s121 = sphi 0, %s105
    %s127 = sphi 0, %s129
    %s130 = sphi 0, %s127
    %s131 = sphi 0, %s130
    %s147 = sphi 0, %s131
    %s151 = sphi 0, %s151
    %s153 = sphi 0, %s151
    %s154 = sphi 0, %s153
    %s168 = sphi 0, %s154
    %s172 = sphi 0, %s172
    %s174 = sphi 0, %s172
    %s175 = sphi 0, %s174
    %s189 = sphi 0, %s175
    %s193 = sphi 0, %s193
    %s195 = sphi 0, %s193
    %s196 = sphi 0, %s195
    %s210 = sphi 0, %s196
    %s214 = sphi 0, %s214
    %s216 = sphi 0, %s214
    %s217 = sphi 0, %s216
    %s231 = sphi 0, %s217
    %s235 = sphi 0, %s235
    %s237 = sphi 0, %s235
    %s238 = sphi 0, %s237
    %s252 = sphi 0, %s238
    %s256 = sphi 0, %s256
    %s258 = sphi 0, %s256
    %s259 = sphi 0, %s258
    %s273 = sphi 0, %s259
    %s277 = sphi 0, %s277
    %s279 = sphi 0, %s277
    %s280 = sphi 0, %s279
    %s294 = sphi 0, %s280
    %s298 = sphi 0, %s298
    %s300 = sphi 0, %s298
    %s301 = sphi 0, %s300
    %s315 = sphi 0, %s301
    %s321 = sphi 0, %s323
    %s324 = sphi 0, %s321
    %s325 = sphi 0, %s324
    %s341 = sphi 0, %s325
  $region4: #{net_forward.3} parent=0 // loop_header_branch
    %32 = sbr.rel (%p30) target = $region8
  $region5: #{net_forward.3} parent=0 // loop_body
    %s34 = ssub.s32 %s29, 1
    %s35 = ssub.s32 %s29, 2
    %s42 = sadd.s32 1, %s37
    %p43 = scmp.ge.s32.totalorder %s42, 2
    %s44 = scalar_select %p43, 0, %s42
    %s45 = sadd.s32 1, %s36
    %s46 = scalar_select %p43, %s45, %s36
    %p47 = scmp.ge.s32.totalorder %s46, 2
    %s48 = scalar_select %p47, 0, %s46
    %s49 = sld [smem:[#allocation6 + %s36]]
    %s50 = sld [smem:[#allocation7 + %s36]]
    %s51 = ssub.s32 %s50, 1
    %p52 = scmp.lt.s32.totalorder %s37, %s51
    %s53 = scalar_select %p52, %s37, %s51
    %s54 = sadd.s32 %s49, %s53
    %s55 = sld [smem:[#allocation6 + %s48]]
    %s56 = sld [smem:[#allocation7 + %s48]]
    %s57 = ssub.s32 %s56, 1
    %p58 = scmp.lt.s32.totalorder %s44, %s57
    %s59 = scalar_select %p58, %s44, %s57
    %s60 = sadd.s32 %s55, %s59
    %s61 = ssub.s32 %s54, %s60
    %p62 = scmp.eq.s32.totalorder %s61, 0
    %s64 = sadd.s32 %s63, 1
    %s65 = scalar_select %p62, %s63, %s64
    %p68 = pneg %p62
    %p69 = scmp.eq.s32.totalorder %s29, 3
    %p70 = por %p68, %p69
    %p71 = scmp.ne.s32.totalorder %s63, %s66
    %p72 = scmp.eq.s32.totalorder %s29, 0
    %p73 = por %p71, %p72
    %p74 = scmp.ne.s32.totalorder %s63, %s66
    %p75 = scmp.eq.s32.totalorder %s34, 3
    %p76 = por %p74, %p75
    %p77 = scmp.ne.s32.totalorder %s66, %s67
    %p78 = scmp.eq.s32.totalorder %s34, 0
    %p79 = por %p77, %p78
    %p80 = scmp.ne.s32.totalorder %s66, %s67
    %p81 = scmp.eq.s32.totalorder %s35, 3
    %p82 = por %p80, %p81
    %p84 = scmp.ne.s32.totalorder %s67, %s83
    %p85 = scmp.eq.s32.totalorder %s35, 0
    %p86 = por %p84, %p85
    %s87 = sld [smem:[#allocation6 + %s36]]
    %s88 = sld [smem:[#allocation7 + %s36]]
    %s89 = ssub.s32 %s88, 1
    %p90 = scmp.lt.s32.totalorder %s37, %s89
    %s91 = scalar_select %p90, %s37, %s89
    %s92 = sadd.s32 %s87, %s91
    %s93 = sld [smem:[#allocation6 + %s48]]
    %s94 = sld [smem:[#allocation7 + %s48]]
    %s95 = ssub.s32 %s94, 1
    %p96 = scmp.lt.s32.totalorder %s44, %s95
    %s97 = scalar_select %p96, %s44, %s95
    %s98 = sadd.s32 %s93, %s97
    %s99 = ssub.s32 %s92, %s98
    %p100 = scmp.eq.s32.totalorder %s99, 0
    %s102 = sadd.s32 %s101, 1
    %s103 = scalar_select %p100, %s101, %s102
    %p106 = pneg %p100
    %p107 = scmp.eq.s32.totalorder %s29, 3
    %p108 = por %p106, %p107
    %p109 = scmp.ne.s32.totalorder %s101, %s104
    %p110 = scmp.eq.s32.totalorder %s29, 0
    %p111 = por %p109, %p110
    %p112 = scmp.ne.s32.totalorder %s101, %s104
    %p113 = scmp.eq.s32.totalorder %s34, 3
    %p114 = por %p112, %p113
    %p115 = scmp.ne.s32.totalorder %s104, %s105
    %p116 = scmp.eq.s32.totalorder %s34, 0
    %p117 = por %p115, %p116
    %p118 = scmp.ne.s32.totalorder %s104, %s105
    %p119 = scmp.eq.s32.totalorder %s35, 3
    %p120 = por %p118, %p119
    %p122 = scmp.ne.s32.totalorder %s105, %s121
    %p123 = scmp.eq.s32.totalorder %s35, 0
    %p124 = por %p122, %p123
    %s125 = ssub.s32 %s36, %s48
    %p126 = scmp.eq.s32.totalorder %s125, 0
    %s128 = sadd.s32 %s127, 1
    %s129 = scalar_select %p126, %s127, %s128
    %p132 = pneg %p126
    %p133 = scmp.eq.s32.totalorder %s29, 3
    %p134 = por %p132, %p133
    %p135 = scmp.ne.s32.totalorder %s127, %s130
    %p136 = scmp.eq.s32.totalorder %s29, 0
    %p137 = por %p135, %p136
    %p138 = scmp.ne.s32.totalorder %s127, %s130
    %p139 = scmp.eq.s32.totalorder %s34, 3
    %p140 = por %p138, %p139
    %p141 = scmp.ne.s32.totalorder %s130, %s131
    %p142 = scmp.eq.s32.totalorder %s34, 0
    %p143 = por %p141, %p142
    %p144 = scmp.ne.s32.totalorder %s130, %s131
    %p145 = scmp.eq.s32.totalorder %s35, 3
    %p146 = por %p144, %p145
    %p148 = scmp.ne.s32.totalorder %s131, %s147
    %p149 = scmp.eq.s32.totalorder %s35, 0
    %p150 = por %p148, %p149
    %s152 = sadd.s32 %s151, 1
    %p155 = scmp.eq.s32.totalorder %s29, 3
    %p156 = scmp.ne.s32.totalorder %s151, %s153
    %p157 = scmp.eq.s32.totalorder %s29, 0
    %p158 = por %p156, %p157
    %p159 = scmp.ne.s32.totalorder %s151, %s153
    %p160 = scmp.eq.s32.totalorder %s34, 3
    %p161 = por %p159, %p160
    %p162 = scmp.ne.s32.totalorder %s153, %s154
    %p163 = scmp.eq.s32.totalorder %s34, 0
    %p164 = por %p162, %p163
    %p165 = scmp.ne.s32.totalorder %s153, %s154
    %p166 = scmp.eq.s32.totalorder %s35, 3
    %p167 = por %p165, %p166
    %p169 = scmp.ne.s32.totalorder %s154, %s168
    %p170 = scmp.eq.s32.totalorder %s35, 0
    %p171 = por %p169, %p170
    %s173 = sadd.s32 %s172, 1
    %p176 = scmp.eq.s32.totalorder %s29, 3
    %p177 = scmp.ne.s32.totalorder %s172, %s174
    %p178 = scmp.eq.s32.totalorder %s29, 0
    %p179 = por %p177, %p178
    %p180 = scmp.ne.s32.totalorder %s172, %s174
    %p181 = scmp.eq.s32.totalorder %s34, 3
    %p182 = por %p180, %p181
    %p183 = scmp.ne.s32.totalorder %s174, %s175
    %p184 = scmp.eq.s32.totalorder %s34, 0
    %p185 = por %p183, %p184
    %p186 = scmp.ne.s32.totalorder %s174, %s175
    %p187 = scmp.eq.s32.totalorder %s35, 3
    %p188 = por %p186, %p187
    %p190 = scmp.ne.s32.totalorder %s175, %s189
    %p191 = scmp.eq.s32.totalorder %s35, 0
    %p192 = por %p190, %p191
    %s194 = sadd.s32 %s193, 1
    %p197 = scmp.eq.s32.totalorder %s29, 3
    %p198 = scmp.ne.s32.totalorder %s193, %s195
    %p199 = scmp.eq.s32.totalorder %s29, 0
    %p200 = por %p198, %p199
    %p201 = scmp.ne.s32.totalorder %s193, %s195
    %p202 = scmp.eq.s32.totalorder %s34, 3
    %p203 = por %p201, %p202
    %p204 = scmp.ne.s32.totalorder %s195, %s196
    %p205 = scmp.eq.s32.totalorder %s34, 0
    %p206 = por %p204, %p205
    %p207 = scmp.ne.s32.totalorder %s195, %s196
    %p208 = scmp.eq.s32.totalorder %s35, 3
    %p209 = por %p207, %p208
    %p211 = scmp.ne.s32.totalorder %s196, %s210
    %p212 = scmp.eq.s32.totalorder %s35, 0
    %p213 = por %p211, %p212
    %s215 = sadd.s32 %s214, 1
    %p218 = scmp.eq.s32.totalorder %s29, 3
    %p219 = scmp.ne.s32.totalorder %s214, %s216
    %p220 = scmp.eq.s32.totalorder %s29, 0
    %p221 = por %p219, %p220
    %p222 = scmp.ne.s32.totalorder %s214, %s216
    %p223 = scmp.eq.s32.totalorder %s34, 3
    %p224 = por %p222, %p223
    %p225 = scmp.ne.s32.totalorder %s216, %s217
    %p226 = scmp.eq.s32.totalorder %s34, 0
    %p227 = por %p225, %p226
    %p228 = scmp.ne.s32.totalorder %s216, %s217
    %p229 = scmp.eq.s32.totalorder %s35, 3
    %p230 = por %p228, %p229
    %p232 = scmp.ne.s32.totalorder %s217, %s231
    %p233 = scmp.eq.s32.totalorder %s35, 0
    %p234 = por %p232, %p233
    %s236 = sadd.s32 %s235, 1
    %p239 = scmp.eq.s32.totalorder %s29, 3
    %p240 = scmp.ne.s32.totalorder %s235, %s237
    %p241 = scmp.eq.s32.totalorder %s29, 0
    %p242 = por %p240, %p241
    %p243 = scmp.ne.s32.totalorder %s235, %s237
    %p244 = scmp.eq.s32.totalorder %s34, 3
    %p245 = por %p243, %p244
    %p246 = scmp.ne.s32.totalorder %s237, %s238
    %p247 = scmp.eq.s32.totalorder %s34, 0
    %p248 = por %p246, %p247
    %p249 = scmp.ne.s32.totalorder %s237, %s238
    %p250 = scmp.eq.s32.totalorder %s35, 3
    %p251 = por %p249, %p250
    %p253 = scmp.ne.s32.totalorder %s238, %s252
    %p254 = scmp.eq.s32.totalorder %s35, 0
    %p255 = por %p253, %p254
    %s257 = sadd.s32 %s256, 1
    %p260 = scmp.eq.s32.totalorder %s29, 3
    %p261 = scmp.ne.s32.totalorder %s256, %s258
    %p262 = scmp.eq.s32.totalorder %s29, 0
    %p263 = por %p261, %p262
    %p264 = scmp.ne.s32.totalorder %s256, %s258
    %p265 = scmp.eq.s32.totalorder %s34, 3
    %p266 = por %p264, %p265
    %p267 = scmp.ne.s32.totalorder %s258, %s259
    %p268 = scmp.eq.s32.totalorder %s34, 0
    %p269 = por %p267, %p268
    %p270 = scmp.ne.s32.totalorder %s258, %s259
    %p271 = scmp.eq.s32.totalorder %s35, 3
    %p272 = por %p270, %p271
    %p274 = scmp.ne.s32.totalorder %s259, %s273
    %p275 = scmp.eq.s32.totalorder %s35, 0
    %p276 = por %p274, %p275
    %s278 = sadd.s32 %s277, 1
    %p281 = scmp.eq.s32.totalorder %s29, 3
    %p282 = scmp.ne.s32.totalorder %s277, %s279
    %p283 = scmp.eq.s32.totalorder %s29, 0
    %p284 = por %p282, %p283
    %p285 = scmp.ne.s32.totalorder %s277, %s279
    %p286 = scmp.eq.s32.totalorder %s34, 3
    %p287 = por %p285, %p286
    %p288 = scmp.ne.s32.totalorder %s279, %s280
    %p289 = scmp.eq.s32.totalorder %s34, 0
    %p290 = por %p288, %p289
    %p291 = scmp.ne.s32.totalorder %s279, %s280
    %p292 = scmp.eq.s32.totalorder %s35, 3
    %p293 = por %p291, %p292
    %p295 = scmp.ne.s32.totalorder %s280, %s294
    %p296 = scmp.eq.s32.totalorder %s35, 0
    %p297 = por %p295, %p296
    %s299 = sadd.s32 %s298, 1
    %p302 = scmp.eq.s32.totalorder %s29, 3
    %p303 = scmp.ne.s32.totalorder %s298, %s300
    %p304 = scmp.eq.s32.totalorder %s29, 0
    %p305 = por %p303, %p304
    %p306 = scmp.ne.s32.totalorder %s298, %s300
    %p307 = scmp.eq.s32.totalorder %s34, 3
    %p308 = por %p306, %p307
    %p309 = scmp.ne.s32.totalorder %s300, %s301
    %p310 = scmp.eq.s32.totalorder %s34, 0
    %p311 = por %p309, %p310
    %p312 = scmp.ne.s32.totalorder %s300, %s301
    %p313 = scmp.eq.s32.totalorder %s35, 3
    %p314 = por %p312, %p313
    %p316 = scmp.ne.s32.totalorder %s301, %s315
    %p317 = scmp.eq.s32.totalorder %s35, 0
    %p318 = por %p316, %p317
    %s319 = ssub.s32 %s36, %s48
    %p320 = scmp.eq.s32.totalorder %s319, 0
    %s322 = sadd.s32 %s321, 1
    %s323 = scalar_select %p320, %s321, %s322
    %p326 = pneg %p320
    %p327 = scmp.eq.s32.totalorder %s29, 3
    %p328 = por %p326, %p327
    %p329 = scmp.ne.s32.totalorder %s321, %s324
    %p330 = scmp.eq.s32.totalorder %s29, 0
    %p331 = por %p329, %p330
    %p332 = scmp.ne.s32.totalorder %s321, %s324
    %p333 = scmp.eq.s32.totalorder %s34, 3
    %p334 = por %p332, %p333
    %p335 = scmp.ne.s32.totalorder %s324, %s325
    %p336 = scmp.eq.s32.totalorder %s34, 0
    %p337 = por %p335, %p336
    %p338 = scmp.ne.s32.totalorder %s324, %s325
    %p339 = scmp.eq.s32.totalorder %s35, 3
    %p340 = por %p338, %p339
    %p342 = scmp.ne.s32.totalorder %s325, %s341
    %p343 = scmp.eq.s32.totalorder %s35, 0
    %p344 = por %p342, %p343
    %p345 = scmp.le.s32.totalorder 1, %s29
    %p346 = scmp.lt.s32.totalorder %s29, 5
    %p347 = pnand %p345, %p346
    %p348 = pneg %p347
    // Predicated region
    $region9: #{net_forward.3} parent=5 // pred_check
      _
    $region10: #{net_forward.3} parent=5 // pred_check_branch
      %350 = sbr.rel (%p347) target = $region12
    $region11: #{net_forward.3} parent=5 // pred_region
      %s351 = ssub.s32 %s29, 1
      // Predicated region
      $region13: #{net_forward.3} parent=11 // pred_check
        %p352 = pneg %p164
      $region14: #{net_forward.3} parent=11 // pred_check_branch
        %354 = sbr.rel (%p352) target = $region16
      $region15: #{net_forward.3} parent=11 // pred_region
        _
      $region16: #{net_forward.3} parent=11 // pred_fallthru
        _
      // Predicated region
      $region17: #{net_forward.3} parent=11 // pred_check
        %p355 = pneg %p185
      $region18: #{net_forward.3} parent=11 // pred_check_branch
        %357 = sbr.rel (%p355) target = $region20
      $region19: #{net_forward.3} parent=11 // pred_region
        _
      $region20: #{net_forward.3} parent=11 // pred_fallthru
        _
      // Predicated region
      $region21: #{net_forward.3} parent=11 // pred_check
        %p358 = pneg %p206
      $region22: #{net_forward.3} parent=11 // pred_check_branch
        %360 = sbr.rel (%p358) target = $region24
      $region23: #{net_forward.3} parent=11 // pred_region
        _
      $region24: #{net_forward.3} parent=11 // pred_fallthru
        _
      // Predicated region
      $region25: #{net_forward.3} parent=11 // pred_check
        %p361 = pneg %p227
      $region26: #{net_forward.3} parent=11 // pred_check_branch
        %363 = sbr.rel (%p361) target = $region28
      $region27: #{net_forward.3} parent=11 // pred_region
        _
      $region28: #{net_forward.3} parent=11 // pred_fallthru
        _
      // Predicated region
      $region29: #{net_forward.3} parent=11 // pred_check
        %p364 = pneg %p248
      $region30: #{net_forward.3} parent=11 // pred_check_branch
        %366 = sbr.rel (%p364) target = $region32
      $region31: #{net_forward.3} parent=11 // pred_region
        _
      $region32: #{net_forward.3} parent=11 // pred_fallthru
        _
      // Predicated region
      $region33: #{net_forward.3} parent=11 // pred_check
        %p367 = pneg %p269
      $region34: #{net_forward.3} parent=11 // pred_check_branch
        %369 = sbr.rel (%p367) target = $region36
      $region35: #{net_forward.3} parent=11 // pred_region
        _
      $region36: #{net_forward.3} parent=11 // pred_fallthru
        _
      // Predicated region
      $region37: #{net_forward.3} parent=11 // pred_check
        %p370 = pneg %p290
      $region38: #{net_forward.3} parent=11 // pred_check_branch
        %372 = sbr.rel (%p370) target = $region40
      $region39: #{net_forward.3} parent=11 // pred_region
        _
      $region40: #{net_forward.3} parent=11 // pred_fallthru
        _
      // Predicated region
      $region41: #{net_forward.3} parent=11 // pred_check
        %p373 = pneg %p311
      $region42: #{net_forward.3} parent=11 // pred_check_branch
        %375 = sbr.rel (%p373) target = $region44
      $region43: #{net_forward.3} parent=11 // pred_region
        _
      $region44: #{net_forward.3} parent=11 // pred_fallthru
        _
    $region12: #{net_forward.3} parent=5 // pred_fallthru
      _
    %p376 = scmp.lt.s32.totalorder %s29, 4
    // Predicated region
    $region45: #{net_forward.3} parent=5 // pred_check
      %p377 = pneg %p376
    $region46: #{net_forward.3} parent=5 // pred_check_branch
      %379 = sbr.rel (%p377) target = $region48
    $region47: #{net_forward.3} parent=5 // pred_region
      // Predicated region
      $region49: #{net_forward.3} parent=47 // pred_check
        %p380 = pneg %p73
      $region50: #{net_forward.3} parent=47 // pred_check_branch
        %382 = sbr.rel (%p380) target = $region52
      $region51: #{net_forward.3} parent=47 // pred_region
        %s383 = sld [smem:[#allocation6 + %s36]]
        %s384 = sld [smem:[#allocation7 + %s36]]
        %s385 = ssub.s32 %s384, 1
        %p386 = scmp.lt.s32.totalorder %s37, %s385
        %s387 = scalar_select %p386, %s37, %s385
        %s388 = sadd.s32 %s383, %s387
        %s389 = smul.u32 16, %s388
        %p390 = scmp.lt.s32.totalorder %s389, 47
        %s391 = scalar_select %p390, %s389, 47
        %s392 = smul.addr %s391, 8
        %s393 = scalar_lea.vmem %s2, %s392
        %s394 = sld [smem:[#allocation6 + %s36]]
        %s395 = sld [smem:[#allocation7 + %s36]]
        %s396 = ssub.s32 %s395, 1
        %p397 = scmp.lt.s32.totalorder %s37, %s396
        %s398 = scalar_select %p397, %s37, %s396
        %s399 = sadd.s32 %s394, %s398
        %s400 = smul.u32 16, %s399
      $region52: #{net_forward.3} parent=47 // pred_fallthru
        _
      // Predicated region
      $region53: #{net_forward.3} parent=47 // pred_check
        %p401 = pneg %p111
      $region54: #{net_forward.3} parent=47 // pred_check_branch
        %403 = sbr.rel (%p401) target = $region56
      $region55: #{net_forward.3} parent=47 // pred_region
        %s404 = sld [smem:[#allocation6 + %s36]]
        %s405 = sld [smem:[#allocation7 + %s36]]
        %s406 = ssub.s32 %s405, 1
        %p407 = scmp.lt.s32.totalorder %s37, %s406
        %s408 = scalar_select %p407, %s37, %s406
        %s409 = sadd.s32 %s404, %s408
        %p410 = scmp.lt.s32.totalorder %s409, 2
        %s411 = scalar_select %p410, %s409, 2
        %s412 = scalar_lea.vmem %s3, %s411
        %s413 = sld [smem:[#allocation6 + %s36]]
        %s414 = sld [smem:[#allocation7 + %s36]]
        %s415 = ssub.s32 %s414, 1
        %p416 = scmp.lt.s32.totalorder %s37, %s415
        %s417 = scalar_select %p416, %s37, %s415
        %s418 = sadd.s32 %s413, %s417
      $region56: #{net_forward.3} parent=47 // pred_fallthru
        _
      // Predicated region
      $region57: #{net_forward.3} parent=47 // pred_check
        %p419 = pneg %p137
      $region58: #{net_forward.3} parent=47 // pred_check_branch
        %421 = sbr.rel (%p419) target = $region60
      $region59: #{net_forward.3} parent=47 // pred_region
        %s422 = smul.u32 4, %s36
        %p423 = scmp.lt.s32.totalorder %s422, 7
        %s424 = scalar_select %p423, %s422, 7
        %s425 = smul.addr %s424, 8
        %s426 = scalar_lea.vmem %s4, %s425
        %s427 = smul.u32 4, %s36
      $region60: #{net_forward.3} parent=47 // pred_fallthru
        _
    $region48: #{net_forward.3} parent=5 // pred_fallthru
      _
    %p428 = scmp.le.s32.totalorder 1, %s29
    %p429 = scmp.lt.s32.totalorder %s29, 5
    %p430 = pnand %p428, %p429
    %p431 = pneg %p430
    // Predicated region
    $region61: #{net_forward.3} parent=5 // pred_check
      _
    $region62: #{net_forward.3} parent=5 // pred_check_branch
      %433 = sbr.rel (%p430) target = $region64
    $region63: #{net_forward.3} parent=5 // pred_region
      %s434 = ssub.s32 %s29, 1
      %s435 = sld [smem:[#allocation6 + %s38]]
      %s436 = sld [smem:[#allocation7 + %s38]]
      %s437 = ssub.s32 %s436, 1
      %p438 = scmp.lt.s32.totalorder %s39, %s437
      %s439 = scalar_select %p438, %s39, %s437
      %s440 = sadd.s32 %s435, %s439
      %s441 = smul.u32 16, %s440
      %p442 = scmp.lt.s32.totalorder %s441, 47
      %s443 = scalar_select %p442, %s441, 47
      %s444 = smul.addr %s443, 8
      %s445 = scalar_lea.vmem %s2, %s444
      %p446 = pneg %p79
      %p447 = pneg %p76
      %s448 = sld [smem:[#allocation6 + %s38]]
      %s449 = sld [smem:[#allocation7 + %s38]]
      %s450 = ssub.s32 %s449, 1
      %p451 = scmp.lt.s32.totalorder %s39, %s450
      %s452 = scalar_select %p451, %s39, %s450
      %s453 = sadd.s32 %s448, %s452
      %p454 = scmp.lt.s32.totalorder %s453, 2
      %s455 = scalar_select %p454, %s453, 2
      %s456 = scalar_lea.vmem %s3, %s455
      %p457 = pneg %p117
      %p458 = pneg %p114
      %s459 = smul.u32 4, %s38
      %p460 = scmp.lt.s32.totalorder %s459, 7
      %s461 = scalar_select %p460, %s459, 7
      %s462 = smul.addr %s461, 8
      %s463 = scalar_lea.vmem %s4, %s462
      %p464 = pneg %p143
      %p465 = pneg %p140
      %p466 = pneg %p164
      %p467 = pneg %p161
      %p468 = pneg %p185
      %p469 = pneg %p182
      %p470 = pneg %p206
      %p471 = pneg %p203
      %p472 = pneg %p227
      %p473 = pneg %p224
      %p474 = pneg %p248
      %p475 = pneg %p245
      %p476 = pneg %p269
      %p477 = pneg %p266
      %p478 = pneg %p290
      %p479 = pneg %p287
      %p480 = pneg %p311
      %p481 = pneg %p308
      %p482 = pneg %p337
      %p483 = pneg %p334
      %s484 = smul.u32 4, %s38
      %p485 = scmp.lt.s32.totalorder %s484, 7
      %s486 = scalar_select %p485, %s484, 7
      %s487 = smul.addr %s486, 8
      %s488 = scalar_lea.vmem %s13, %s487
      %s489 = sld [smem:[#allocation6 + %s38]]
      %s490 = sld [smem:[#allocation7 + %s38]]
      %s491 = ssub.s32 %s490, 1
      %p492 = scmp.lt.s32.totalorder %s39, %s491
      %s493 = scalar_select %p492, %s39, %s491
      %s494 = sadd.s32 %s489, %s493
      %s495 = smul.u32 16, %s494
      %p496 = scmp.lt.s32.totalorder %s495, 47
      %s497 = scalar_select %p496, %s495, 47
      %s498 = smul.addr %s497, 8
      %s499 = scalar_lea.vmem %s2, %s498
      %s500 = sld [smem:[#allocation6 + %s38]]
      %s501 = sld [smem:[#allocation7 + %s38]]
      %s502 = ssub.s32 %s501, 1
      %p503 = scmp.lt.s32.totalorder %s39, %s502
      %s504 = scalar_select %p503, %s39, %s502
      %s505 = sadd.s32 %s500, %s504
      %s506 = smul.u32 16, %s505
      %s507 = sld [smem:[#allocation6 + %s38]]
      %s508 = sld [smem:[#allocation7 + %s38]]
      %s509 = ssub.s32 %s508, 1
      %p510 = scmp.lt.s32.totalorder %s39, %s509
      %s511 = scalar_select %p510, %s39, %s509
      %s512 = sadd.s32 %s507, %s511
      %p513 = scmp.lt.s32.totalorder %s512, 2
      %s514 = scalar_select %p513, %s512, 2
      %s515 = scalar_lea.vmem %s3, %s514
      %s516 = sld [smem:[#allocation6 + %s38]]
      %s517 = sld [smem:[#allocation7 + %s38]]
      %s518 = ssub.s32 %s517, 1
      %p519 = scmp.lt.s32.totalorder %s39, %s518
      %s520 = scalar_select %p519, %s39, %s518
      %s521 = sadd.s32 %s516, %s520
      %s522 = smul.u32 4, %s38
      %p523 = scmp.lt.s32.totalorder %s522, 7
      %s524 = scalar_select %p523, %s522, 7
      %s525 = smul.addr %s524, 8
      %s526 = scalar_lea.vmem %s4, %s525
      %s527 = smul.u32 4, %s38
      %s528 = smul.u32 4, %s38
      %p529 = scmp.lt.s32.totalorder %s528, 7
      %s530 = scalar_select %p529, %s528, 7
      %s531 = smul.addr %s530, 8
      %s532 = scalar_lea.vmem %s13, %s531
      %s533 = smul.u32 4, %s38
      %p534 = scmp.eq.s32.totalorder %s39, 0
      // Predicated region
      $region65: #{net_forward.3} parent=63 // pred_check
        %p535 = pneg %p534
      $region66: #{net_forward.3} parent=63 // pred_check_branch
        %537 = sbr.rel (%p535) target = $region68
      $region67: #{net_forward.3} parent=63 // pred_region
        %vm538 = vcmask 531456
        %539 = vst.msk [vmem:[#allocation2] sm:$0xff] %vm538, 0.0
        %540 = vst.msk [vmem:[#allocation2 + $0x8] sm:$0xff] %vm538, 0.0
        %541 = vst.msk [vmem:[#allocation2 + $0x10] sm:$0xff] %vm538, 0.0
        %542 = vst.msk [vmem:[#allocation2 + $0x18] sm:$0xff] %vm538, 0.0
        %vm543 = vcmask 261120
        %544 = vst.msk [vmem:[#allocation3] sm:$0xff] %vm543, 1e+30
        %545 = vst.msk [vmem:[#allocation3 + $0x8] sm:$0xff] %vm543, 1e+30
        %546 = vst.msk [vmem:[#allocation3 + $0x10] sm:$0xff] %vm543, 1e+30
        %547 = vst.msk [vmem:[#allocation3 + $0x18] sm:$0xff] %vm543, 1e+30
        %548 = vst.msk [vmem:[#allocation4] sm:$0xff] %vm543, -1e+30
        %549 = vst.msk [vmem:[#allocation4 + $0x8] sm:$0xff] %vm543, -1e+30
        %550 = vst.msk [vmem:[#allocation4 + $0x10] sm:$0xff] %vm543, -1e+30
        %551 = vst.msk [vmem:[#allocation4 + $0x18] sm:$0xff] %vm543, -1e+30
      $region68: #{net_forward.3} parent=63 // pred_fallthru
        _
      %s552 = sld [smem:[#allocation7 + %s38]]
      %p553 = scmp.lt.s32.totalorder %s39, %s552
      // Predicated region
      $region69: #{net_forward.3} parent=63 // pred_check
        %p554 = pneg %p553
      $region70: #{net_forward.3} parent=63 // pred_check_branch
        %556 = sbr.rel (%p554) target = $region72
      $region71: #{net_forward.3} parent=63 // pred_region
        %v557 = vld [vmem:[%s499] sm:$0xff]
        %v558 = vld [vmem:[%s499 + $0x8] sm:$0xff]
        %v559 = vld [vmem:[%s499 + $0x10] sm:$0xff]
        %v560 = vld [vmem:[%s499 + $0x18] sm:$0xff]
        %v561 = vld [vmem:[%s499 + $0x20] sm:$0xff]
        %v562 = vld [vmem:[%s499 + $0x28] sm:$0xff]
        %v563 = vld [vmem:[%s499 + $0x30] sm:$0xff]
        %v564 = vld [vmem:[%s499 + $0x38] sm:$0xff]
        %v565 = vld [vmem:[%s499 + $0x40] sm:$0xff]
        %v566 = vld [vmem:[%s499 + $0x48] sm:$0xff]
        %v567 = vld [vmem:[%s499 + $0x50] sm:$0xff]
        %v568 = vld [vmem:[%s499 + $0x58] sm:$0xff]
        %v569 = vld [vmem:[%s499 + $0x60] sm:$0xff]
        %v570 = vld [vmem:[%s499 + $0x68] sm:$0xff]
        %v571 = vld [vmem:[%s499 + $0x70] sm:$0xff]
        %v572 = vld [vmem:[%s499 + $0x78] sm:$0xff]
        %v573 = vld [vmem:[%s5] sm:$0xff]
        %v574 = vld [vmem:[%s5 + $0x8] sm:$0xff]
        %v575 = vld [vmem:[%s5 + $0x10] sm:$0xff]
        %v576 = vld [vmem:[%s5 + $0x18] sm:$0xff]
        %v577 = vld [vmem:[%s5 + $0x20] sm:$0xff]
        %v578 = vld [vmem:[%s5 + $0x28] sm:$0xff]
        %v579 = vld [vmem:[%s5 + $0x30] sm:$0xff]
        %v580 = vld [vmem:[%s5 + $0x38] sm:$0xff]
        %v581 = vld [vmem:[%s5 + $0x40] sm:$0xf]
        %v582 = vld [vmem:[%s6] sm:$0x1]
        %v584 = vlaneseq
        %v585 = vshrl.u32 %v584, 7
        %v586 = vsub.s32 0, %v585
        %v587 = vrot.slane %v582, %v586
        %vm589 = vcmask 556032
        %v591 = vsel %vm589, %v557, 0
        %v594 = vsel %vm589, %v558, 0
        %v597 = vsel %vm589, %v559, 0
        %v600 = vsel %vm589, %v560, 0
        %v603 = vsel %vm589, %v561, 0
        %v606 = vsel %vm589, %v562, 0
        %v609 = vsel %vm589, %v563, 0
        %v612 = vsel %vm589, %v564, 0
        %v615 = vsel %vm589, %v565, 0
        %v618 = vsel %vm589, %v566, 0
        %v621 = vsel %vm589, %v567, 0
        %v624 = vsel %vm589, %v568, 0
        %v627 = vsel %vm589, %v569, 0
        %v630 = vsel %vm589, %v570, 0
        %v633 = vsel %vm589, %v571, 0
        %v636 = vsel %vm589, %v572, 0
        %vm638 = vcmask 1043456
        %v640 = vsel %vm638, %v581, 0
        %642 = vmatprep.subr.mxu0 0.0
        %643 = vmatpush1.msra.mxu0 %v573
        %644 = vmatprep.subr.mxu0 0.0
        %645 = vmatpush1.msra.mxu0 %v574
        %646 = vmatprep.subr.mxu0 0.0
        %647 = vmatpush1.msra.mxu0 %v575
        %648 = vmatprep.subr.mxu0 0.0
        %649 = vmatpush1.msra.mxu0 %v576
        %650 = vmatprep.subr.mxu0 0.0
        %651 = vmatpush1.msra.mxu0 %v577
        %652 = vmatprep.subr.mxu0 0.0
        %653 = vmatpush1.msra.mxu0 %v578
        %654 = vmatprep.subr.mxu0 0.0
        %655 = vmatpush1.msra.mxu0 %v579
        %656 = vmatprep.subr.mxu0 0.0
        %657 = vmatpush1.msra.mxu0 %v580
        %658 = vmatprep.subr.mxu0 0.0
        %659 = vmatpush1.msra.mxu0 %v640
        %660 = vmatprep.subr.mxu0 0.0
        %661 = vmatpush1.msra.mxu0 0.0
        %662 = vmatprep.subr.mxu0 0.0
        %663 = vmatpush1.msra.mxu0 0.0
        %664 = vmatprep.subr.mxu0 0.0
        %665 = vmatpush1.msra.mxu0 0.0
        %666 = vmatprep.subr.mxu0 0.0
        %667 = vmatpush1.msra.mxu0 0.0
        %668 = vmatprep.subr.mxu0 0.0
        %669 = vmatpush1.msra.mxu0 0.0
        %670 = vmatprep.subr.mxu0 0.0
        %671 = vmatpush1.msra.mxu0 0.0
        %672 = vmatprep.subr.mxu0 0.0
        %673 = vmatpush1.msra.mxu0 0.0
        %674 = vmatprep.subr.mxu0 0.0
        %675 = vmatpush1.msra.mxu0 0.0
        %676 = vmatprep.subr.mxu0 0.0
        %677 = vmatpush1.msra.mxu0 0.0
        %678 = vmatprep.subr.mxu0 0.0
        %679 = vmatpush1.msra.mxu0 0.0
        %680 = vmatprep.subr.mxu0 0.0
        %681 = vmatpush1.msra.mxu0 0.0
        %682 = vmatprep.subr.mxu0 0.0
        %683 = vmatpush1.msra.mxu0 0.0
        %684 = vmatprep.subr.mxu0 0.0
        %685 = vmatpush1.msra.mxu0 0.0
        %686 = vmatprep.subr.mxu0 0.0
        %687 = vmatpush1.msra.mxu0 0.0
        %688 = vmatprep.subr.mxu0 0.0
        %689 = vmatpush1.msra.mxu0 0.0
        %690 = vmatprep.subr.mxu0 0.0
        %691 = vmatpush1.msra.mxu0 0.0
        %692 = vmatprep.subr.mxu0 0.0
        %693 = vmatpush1.msra.mxu0 0.0
        %694 = vmatprep.subr.mxu0 0.0
        %695 = vmatpush1.msra.mxu0 0.0
        %696 = vmatprep.subr.mxu0 0.0
        %697 = vmatpush1.msra.mxu0 0.0
        %698 = vmatprep.subr.mxu0 0.0
        %699 = vmatpush1.msra.mxu0 0.0
        %700 = vmatprep.subr.mxu0 0.0
        %701 = vmatpush1.msra.mxu0 0.0
        %702 = vmatprep.subr.mxu0 0.0
        %703 = vmatpush1.msra.mxu0 0.0
        %704 = vmatprep.subr.mxu0 0.0
        %705 = vmatpush1.msra.mxu0 0.0
        %706 = vmatprep.mubr.f32.mxu0 0.0
        %707 = vmatmul.mubr.f32.gmra.mrb[0].mxu0 %v591
        %v708 = vpop.f32.mrb[0].mxu0
        %v709 = vadd.f32 %v587, %v708
        %v710 = vpop.f32.mrb[0].mxu0
        %711 = vmatprep.mubr.f32.mxu0 0.0
        %712 = vmatmul.mubr.f32.gmra.mrb[0].mxu0 %v594
        %v713 = vpop.f32.mrb[0].mxu0
        %v714 = vadd.f32 %v587, %v713
        %v715 = vpop.f32.mrb[0].mxu0
        %716 = vmatprep.mubr.f32.mxu0 0.0
        %717 = vmatmul.mubr.f32.gmra.mrb[0].mxu0 %v597
        %v718 = vpop.f32.mrb[0].mxu0
        %v719 = vadd.f32 %v587, %v718
        %v720 = vpop.f32.mrb[0].mxu0
        %721 = vmatprep.mubr.f32.mxu0 0.0
        %722 = vmatmul.mubr.f32.gmra.mrb[0].mxu0 %v600
        %v723 = vpop.f32.mrb[0].mxu0
        %v724 = vadd.f32 %v587, %v723
        %v725 = vpop.f32.mrb[0].mxu0
        %726 = vmatprep.mubr.f32.mxu0 0.0
        %727 = vmatmul.mubr.f32.gmra.mrb[0].mxu0 %v603
        %v728 = vpop.f32.mrb[0].mxu0
        %v729 = vadd.f32 %v587, %v728
        %v730 = vpop.f32.mrb[0].mxu0
        %731 = vmatprep.mubr.f32.mxu0 0.0
        %732 = vmatmul.mubr.f32.gmra.mrb[0].mxu0 %v606
        %v733 = vpop.f32.mrb[0].mxu0
        %v734 = vadd.f32 %v587, %v733
        %v735 = vpop.f32.mrb[0].mxu0
        %736 = vmatprep.mubr.f32.mxu0 0.0
        %737 = vmatmul.mubr.f32.gmra.mrb[0].mxu0 %v609
        %v738 = vpop.f32.mrb[0].mxu0
        %v739 = vadd.f32 %v587, %v738
        %v740 = vpop.f32.mrb[0].mxu0
        %741 = vmatprep.mubr.f32.mxu0 0.0
        %742 = vmatmul.mubr.f32.gmra.mrb[0].mxu0 %v612
        %v743 = vpop.f32.mrb[0].mxu0
        %v744 = vadd.f32 %v587, %v743
        %v745 = vpop.f32.mrb[0].mxu0
        %746 = vmatprep.mubr.f32.mxu0 0.0
        %747 = vmatmul.mubr.f32.gmra.mrb[0].mxu0 %v615
        %v748 = vpop.f32.mrb[0].mxu0
        %v749 = vadd.f32 %v587, %v748
        %v750 = vpop.f32.mrb[0].mxu0
        %751 = vmatprep.mubr.f32.mxu0 0.0
        %752 = vmatmul.mubr.f32.gmra.mrb[0].mxu0 %v618
        %v753 = vpop.f32.mrb[0].mxu0
        %v754 = vadd.f32 %v587, %v753
        %v755 = vpop.f32.mrb[0].mxu0
        %756 = vmatprep.mubr.f32.mxu0 0.0
        %757 = vmatmul.mubr.f32.gmra.mrb[0].mxu0 %v621
        %v758 = vpop.f32.mrb[0].mxu0
        %v759 = vadd.f32 %v587, %v758
        %v760 = vpop.f32.mrb[0].mxu0
        %761 = vmatprep.mubr.f32.mxu0 0.0
        %762 = vmatmul.mubr.f32.gmra.mrb[0].mxu0 %v624
        %v763 = vpop.f32.mrb[0].mxu0
        %v764 = vadd.f32 %v587, %v763
        %v765 = vpop.f32.mrb[0].mxu0
        %766 = vmatprep.mubr.f32.mxu0 0.0
        %767 = vmatmul.mubr.f32.gmra.mrb[0].mxu0 %v627
        %v768 = vpop.f32.mrb[0].mxu0
        %v769 = vadd.f32 %v587, %v768
        %v770 = vpop.f32.mrb[0].mxu0
        %771 = vmatprep.mubr.f32.mxu0 0.0
        %772 = vmatmul.mubr.f32.gmra.mrb[0].mxu0 %v630
        %v773 = vpop.f32.mrb[0].mxu0
        %v774 = vadd.f32 %v587, %v773
        %v775 = vpop.f32.mrb[0].mxu0
        %776 = vmatprep.mubr.f32.mxu0 0.0
        %777 = vmatmul.mubr.f32.gmra.mrb[0].mxu0 %v633
        %v778 = vpop.f32.mrb[0].mxu0
        %v779 = vadd.f32 %v587, %v778
        %v780 = vpop.f32.mrb[0].mxu0
        %781 = vmatprep.mubr.f32.mxu0 0.0
        %782 = vmatmul.mubr.f32.gmra.mrb[0].mxu0 %v636
        %v783 = vpop.f32.mrb[0].mxu0
        %v784 = vadd.f32 %v587, %v783
        %v785 = vpop.f32.mrb[0].mxu0
        %786 = vdwg.mxu0
        %s787 = smul.u32 %s38, 32
        %v788 = vlaneseq
        %v789 = vshrl.u32 %v788, 7
        %v790 = vadd.s32 %v789, 8
        %v791 = vadd.s32 %v789, 16
        %v792 = vadd.s32 %v789, 24
        %v793 = vstv %s787
        %v794 = vadd.s32 %v793, %v789
        %v795 = vadd.s32 %v793, %v790
        %v796 = vadd.s32 %v793, %v791
        %v797 = vadd.s32 %v793, %v792
        %v798 = vld [vmem:[%s515] sm:$0x1]
        %v799 = vlaneseq
        %v800 = vshrl.u32 %v799, 7
        %v801 = vsub.s32 0, %v800
        %v802 = vrot.slane %v798, %v801
        %vm803 = vcmp.eq.s32.totalorder %v794, %v802
        %vm804 = vcmp.eq.s32.totalorder %v795, %v802
        %vm805 = vcmp.eq.s32.totalorder %v796, %v802
        %vm806 = vcmp.eq.s32.totalorder %v797, %v802
        %v807 = vsel %vm803, 1, 0
        %v808 = vsel %vm804, 1, 0
        %v809 = vsel %vm805, 1, 0
        %v810 = vsel %vm806, 1, 0
        %v811 = vcvt.s32.f32 %v807
        %v812 = vcvt.s32.f32 %v808
        %v813 = vcvt.s32.f32 %v809
        %v814 = vcvt.s32.f32 %v810
        %v815 = vmul.f32 %v709, %v709
        %v816 = vmul.f32 %v714, %v714
        %v817 = vmul.f32 %v719, %v719
        %v818 = vmul.f32 %v724, %v724
        %v819 = vmul.f32 %v729, %v729
        %v820 = vmul.f32 %v734, %v734
        %v821 = vmul.f32 %v739, %v739
        %v822 = vmul.f32 %v744, %v744
        %v823 = vmul.f32 %v749, %v749
        %v824 = vmul.f32 %v754, %v754
        %v825 = vmul.f32 %v759, %v759
        %v826 = vmul.f32 %v764, %v764
        %v827 = vmul.f32 %v769, %v769
        %v828 = vmul.f32 %v774, %v774
        %v829 = vmul.f32 %v779, %v779
        %v830 = vmul.f32 %v784, %v784
        %847 = vrot.lane.b32.xlu0 %v815, 32
        %v848 = vpop.permute.xlu0 %847
        %849 = vrot.lane.b32.xlu0 %v816, 32
        %v850 = vpop.permute.xlu0 %849
        %851 = vrot.lane.b32.xlu0 %v817, 32
        %v852 = vpop.permute.xlu0 %851
        %853 = vrot.lane.b32.xlu0 %v818, 32
        %v854 = vpop.permute.xlu0 %853
        %855 = vrot.lane.b32.xlu0 %v819, 32
        %v856 = vpop.permute.xlu0 %855
        %857 = vrot.lane.b32.xlu0 %v820, 32
        %v858 = vpop.permute.xlu0 %857
        %859 = vrot.lane.b32.xlu0 %v821, 32
        %v860 = vpop.permute.xlu0 %859
        %861 = vrot.lane.b32.xlu0 %v822, 32
        %v862 = vpop.permute.xlu0 %861
        %863 = vrot.lane.b32.xlu0 %v823, 32
        %v864 = vpop.permute.xlu0 %863
        %865 = vrot.lane.b32.xlu0 %v824, 32
        %v866 = vpop.permute.xlu0 %865
        %867 = vrot.lane.b32.xlu0 %v825, 32
        %v868 = vpop.permute.xlu0 %867
        %869 = vrot.lane.b32.xlu0 %v826, 32
        %v870 = vpop.permute.xlu0 %869
        %871 = vrot.lane.b32.xlu0 %v827, 32
        %v872 = vpop.permute.xlu0 %871
        %873 = vrot.lane.b32.xlu0 %v828, 32
        %v874 = vpop.permute.xlu0 %873
        %875 = vrot.lane.b32.xlu0 %v829, 32
        %v876 = vpop.permute.xlu0 %875
        %877 = vrot.lane.b32.xlu0 %v830, 32
        %v878 = vpop.permute.xlu0 %877
        %vm895 = vcmask 261120
        %v896 = vsel %vm895, %v709, %v848
        %v897 = vsel %vm895, %v714, %v850
        %v898 = vsel %vm895, %v719, %v852
        %v899 = vsel %vm895, %v724, %v854
        %v900 = vsel %vm895, %v729, %v856
        %v901 = vsel %vm895, %v734, %v858
        %v902 = vsel %vm895, %v739, %v860
        %v903 = vsel %vm895, %v744, %v862
        %v904 = vsel %vm895, %v749, %v864
        %v905 = vsel %vm895, %v754, %v866
        %v906 = vsel %vm895, %v759, %v868
        %v907 = vsel %vm895, %v764, %v870
        %v908 = vsel %vm895, %v769, %v872
        %v909 = vsel %vm895, %v774, %v874
        %v910 = vsel %vm895, %v779, %v876
        %v911 = vsel %vm895, %v784, %v878
        %vm912 = vcmask 523264
        %v913 = vsel %vm912, %v896, 1.0
        %v914 = vsel %vm912, %v897, 1.0
        %v915 = vsel %vm912, %v898, 1.0
        %v916 = vsel %vm912, %v899, 1.0
        %v917 = vsel %vm912, %v900, 1.0
        %v918 = vsel %vm912, %v901, 1.0
        %v919 = vsel %vm912, %v902, 1.0
        %v920 = vsel %vm912, %v903, 1.0
        %v921 = vsel %vm912, %v904, 1.0
        %v922 = vsel %vm912, %v905, 1.0
        %v923 = vsel %vm912, %v906, 1.0
        %v924 = vsel %vm912, %v907, 1.0
        %v925 = vsel %vm912, %v908, 1.0
        %v926 = vsel %vm912, %v909, 1.0
        %v927 = vsel %vm912, %v910, 1.0
        %v928 = vsel %vm912, %v911, 1.0
        %v929 = vld [vmem:[#allocation2] sm:$0xff]
        %v930 = vld [vmem:[#allocation2 + $0x8] sm:$0xff]
        %v931 = vld [vmem:[#allocation2 + $0x10] sm:$0xff]
        %v932 = vld [vmem:[#allocation2 + $0x18] sm:$0xff]
        %933 = vmatprep.subr.mxu0 0.0
        %934 = vmatpush1.msra.mxu0 %v913
        %935 = vmatprep.subr.mxu0 0.0
        %936 = vmatpush1.msra.mxu0 %v914
        %937 = vmatprep.subr.mxu0 0.0
        %938 = vmatpush1.msra.mxu0 %v915
        %939 = vmatprep.subr.mxu0 0.0
        %940 = vmatpush1.msra.mxu0 %v916
        %941 = vmatprep.subr.mxu0 0.0
        %942 = vmatpush1.msra.mxu0 %v917
        %943 = vmatprep.subr.mxu0 0.0
        %944 = vmatpush1.msra.mxu0 %v918
        %945 = vmatprep.subr.mxu0 0.0
        %946 = vmatpush1.msra.mxu0 %v919
        %947 = vmatprep.subr.mxu0 0.0
        %948 = vmatpush1.msra.mxu0 %v920
        %949 = vmatprep.subr.mxu0 0.0
        %950 = vmatpush1.msra.mxu0 %v921
        %951 = vmatprep.subr.mxu0 0.0
        %952 = vmatpush1.msra.mxu0 %v922
        %953 = vmatprep.subr.mxu0 0.0
        %954 = vmatpush1.msra.mxu0 %v923
        %955 = vmatprep.subr.mxu0 0.0
        %956 = vmatpush1.msra.mxu0 %v924
        %957 = vmatprep.subr.mxu0 0.0
        %958 = vmatpush1.msra.mxu0 %v925
        %959 = vmatprep.subr.mxu0 0.0
        %960 = vmatpush1.msra.mxu0 %v926
        %961 = vmatprep.subr.mxu0 0.0
        %962 = vmatpush1.msra.mxu0 %v927
        %963 = vmatprep.subr.mxu0 0.0
        %964 = vmatpush1.msra.mxu0 %v928
        %965 = vmatprep.subr.mxu0 0.0
        %966 = vmatpush1.msra.mxu0 0.0
        %967 = vmatprep.subr.mxu0 0.0
        %968 = vmatpush1.msra.mxu0 0.0
        %969 = vmatprep.subr.mxu0 0.0
        %970 = vmatpush1.msra.mxu0 0.0
        %971 = vmatprep.subr.mxu0 0.0
        %972 = vmatpush1.msra.mxu0 0.0
        %973 = vmatprep.subr.mxu0 0.0
        %974 = vmatpush1.msra.mxu0 0.0
        %975 = vmatprep.subr.mxu0 0.0
        %976 = vmatpush1.msra.mxu0 0.0
        %977 = vmatprep.subr.mxu0 0.0
        %978 = vmatpush1.msra.mxu0 0.0
        %979 = vmatprep.subr.mxu0 0.0
        %980 = vmatpush1.msra.mxu0 0.0
        %981 = vmatprep.subr.mxu0 0.0
        %982 = vmatpush1.msra.mxu0 0.0
        %983 = vmatprep.subr.mxu0 0.0
        %984 = vmatpush1.msra.mxu0 0.0
        %985 = vmatprep.subr.mxu0 0.0
        %986 = vmatpush1.msra.mxu0 0.0
        %987 = vmatprep.subr.mxu0 0.0
        %988 = vmatpush1.msra.mxu0 0.0
        %989 = vmatprep.subr.mxu0 0.0
        %990 = vmatpush1.msra.mxu0 0.0
        %991 = vmatprep.subr.mxu0 0.0
        %992 = vmatpush1.msra.mxu0 0.0
        %993 = vmatprep.subr.mxu0 0.0
        %994 = vmatpush1.msra.mxu0 0.0
        %995 = vmatprep.subr.mxu0 0.0
        %996 = vmatpush1.msra.mxu0 0.0
        %997 = vmatprep.mubr.f32.mxu0 0.0
        %998 = vmatmul.mubr.f32.gmra.mrb[0].mxu0 %v811
        %v999 = vpop.f32.mrb[0].mxu0
        %v1000 = vadd.f32 0.0, %v999
        %v1001 = vpop.f32.mrb[0].mxu0
        %1002 = vmatprep.mubr.f32.mxu0 0.0
        %1003 = vmatmul.mubr.f32.gmra.mrb[0].mxu0 %v812
        %v1004 = vpop.f32.mrb[0].mxu0
        %v1005 = vadd.f32 0.0, %v1004
        %v1006 = vpop.f32.mrb[0].mxu0
        %1007 = vmatprep.mubr.f32.mxu0 0.0
        %1008 = vmatmul.mubr.f32.gmra.mrb[0].mxu0 %v813
        %v1009 = vpop.f32.mrb[0].mxu0
        %v1010 = vadd.f32 0.0, %v1009
        %v1011 = vpop.f32.mrb[0].mxu0
        %1012 = vmatprep.mubr.f32.mxu0 0.0
        %1013 = vmatmul.mubr.f32.gmra.mrb[0].mxu0 %v814
        %v1014 = vpop.f32.mrb[0].mxu0
        %v1015 = vadd.f32 0.0, %v1014
        %v1016 = vpop.f32.mrb[0].mxu0
        %1017 = vdwg.mxu0
        %v1018 = vadd.f32 %v929, %v1000
        %v1019 = vadd.f32 %v930, %v1005
        %v1020 = vadd.f32 %v931, %v1010
        %v1021 = vadd.f32 %v932, %v1015
        %vm1022 = vcmask 531456
        %1023 = vst.msk [vmem:[#allocation2] sm:$0xff] %vm1022, %v1018
        %1024 = vst.msk [vmem:[#allocation2 + $0x8] sm:$0xff] %vm1022, %v1019
        %1025 = vst.msk [vmem:[#allocation2 + $0x10] sm:$0xff] %vm1022, %v1020
        %1026 = vst.msk [vmem:[#allocation2 + $0x18] sm:$0xff] %vm1022, %v1021
        %v1027 = vcombine.high %v807, %v807
        %v1029 = vunpack.c.l.s4 1966171168
        %v1030 = vunpack.c.0.s8 %v1029
        %v1031 = vlaneseq
        %v1032 = vshrl.u32 %v1031, 7
        %v1033 = vsub.s32 %v1030, %v1032
        %v1034 = vrot.slane %v807, %v1033
        %v1036 = vunpack.c.l.s4 1966171168
        %v1037 = vunpack.c.0.s8 %v1036
        %v1038 = vlaneseq
        %v1039 = vshrl.u32 %v1038, 7
        %v1040 = vsub.s32 %v1037, %v1039
        %v1041 = vrot.slane %v1027, %v1040
        %v1042 = vcombine.high %v1034, %v1034
        %v1043 = vcombine.high %v1041, %v1041
        %v1045 = vunpack.c.l.s4 1966171168
        %v1046 = vunpack.c.0.s8 %v1045
        %v1047 = vlaneseq
        %v1048 = vshrl.u32 %v1047, 7
        %v1049 = vsub.s32 %v1046, %v1048
        %v1050 = vrot.slane %v1034, %v1049
        %v1052 = vunpack.c.l.s4 1966171168
        %v1053 = vunpack.c.0.s8 %v1052
        %v1054 = vlaneseq
        %v1055 = vshrl.u32 %v1054, 7
        %v1056 = vsub.s32 %v1053, %v1055
        %v1057 = vrot.slane %v1041, %v1056
        %v1059 = vunpack.c.l.s4 1966171168
        %v1060 = vunpack.c.0.s8 %v1059
        %v1061 = vlaneseq
        %v1062 = vshrl.u32 %v1061, 7
        %v1063 = vsub.s32 %v1060, %v1062
        %v1064 = vrot.slane %v1042, %v1063
        %v1066 = vunpack.c.l.s4 1966171168
        %v1067 = vunpack.c.0.s8 %v1066
        %v1068 = vlaneseq
        %v1069 = vshrl.u32 %v1068, 7
        %v1070 = vsub.s32 %v1067, %v1069
        %v1071 = vrot.slane %v1043, %v1070
        %v1072 = vcombine.high %v1050, %v1050
        %v1073 = vcombine.high %v1057, %v1057
        %v1074 = vcombine.high %v1064, %v1064
        %v1075 = vcombine.high %v1071, %v1071
        %v1076 = vcombine.high %v808, %v808
        %v1078 = vunpack.c.l.s4 1966171168
        %v1079 = vunpack.c.0.s8 %v1078
        %v1080 = vlaneseq
        %v1081 = vshrl.u32 %v1080, 7
        %v1082 = vsub.s32 %v1079, %v1081
        %v1083 = vrot.slane %v808, %v1082
        %v1085 = vunpack.c.l.s4 1966171168
        %v1086 = vunpack.c.0.s8 %v1085
        %v1087 = vlaneseq
        %v1088 = vshrl.u32 %v1087, 7
        %v1089 = vsub.s32 %v1086, %v1088
        %v1090 = vrot.slane %v1076, %v1089
        %v1091 = vcombine.high %v1083, %v1083
        %v1092 = vcombine.high %v1090, %v1090
        %v1094 = vunpack.c.l.s4 1966171168
        %v1095 = vunpack.c.0.s8 %v1094
        %v1096 = vlaneseq
        %v1097 = vshrl.u32 %v1096, 7
        %v1098 = vsub.s32 %v1095, %v1097
        %v1099 = vrot.slane %v1083, %v1098
        %v1101 = vunpack.c.l.s4 1966171168
        %v1102 = vunpack.c.0.s8 %v1101
        %v1103 = vlaneseq
        %v1104 = vshrl.u32 %v1103, 7
        %v1105 = vsub.s32 %v1102, %v1104
        %v1106 = vrot.slane %v1090, %v1105
        %v1108 = vunpack.c.l.s4 1966171168
        %v1109 = vunpack.c.0.s8 %v1108
        %v1110 = vlaneseq
        %v1111 = vshrl.u32 %v1110, 7
        %v1112 = vsub.s32 %v1109, %v1111
        %v1113 = vrot.slane %v1091, %v1112
        %v1115 = vunpack.c.l.s4 1966171168
        %v1116 = vunpack.c.0.s8 %v1115
        %v1117 = vlaneseq
        %v1118 = vshrl.u32 %v1117, 7
        %v1119 = vsub.s32 %v1116, %v1118
        %v1120 = vrot.slane %v1092, %v1119
        %v1121 = vcombine.high %v1099, %v1099
        %v1122 = vcombine.high %v1106, %v1106
        %v1123 = vcombine.high %v1113, %v1113
        %v1124 = vcombine.high %v1120, %v1120
        %v1125 = vcombine.high %v809, %v809
        %v1127 = vunpack.c.l.s4 1966171168
        %v1128 = vunpack.c.0.s8 %v1127
        %v1129 = vlaneseq
        %v1130 = vshrl.u32 %v1129, 7
        %v1131 = vsub.s32 %v1128, %v1130
        %v1132 = vrot.slane %v809, %v1131
        %v1134 = vunpack.c.l.s4 1966171168
        %v1135 = vunpack.c.0.s8 %v1134
        %v1136 = vlaneseq
        %v1137 = vshrl.u32 %v1136, 7
        %v1138 = vsub.s32 %v1135, %v1137
        %v1139 = vrot.slane %v1125, %v1138
        %v1140 = vcombine.high %v1132, %v1132
        %v1141 = vcombine.high %v1139, %v1139
        %v1143 = vunpack.c.l.s4 1966171168
        %v1144 = vunpack.c.0.s8 %v1143
        %v1145 = vlaneseq
        %v1146 = vshrl.u32 %v1145, 7
        %v1147 = vsub.s32 %v1144, %v1146
        %v1148 = vrot.slane %v1132, %v1147
        %v1150 = vunpack.c.l.s4 1966171168
        %v1151 = vunpack.c.0.s8 %v1150
        %v1152 = vlaneseq
        %v1153 = vshrl.u32 %v1152, 7
        %v1154 = vsub.s32 %v1151, %v1153
        %v1155 = vrot.slane %v1139, %v1154
        %v1157 = vunpack.c.l.s4 1966171168
        %v1158 = vunpack.c.0.s8 %v1157
        %v1159 = vlaneseq
        %v1160 = vshrl.u32 %v1159, 7
        %v1161 = vsub.s32 %v1158, %v1160
        %v1162 = vrot.slane %v1140, %v1161
        %v1164 = vunpack.c.l.s4 1966171168
        %v1165 = vunpack.c.0.s8 %v1164
        %v1166 = vlaneseq
        %v1167 = vshrl.u32 %v1166, 7
        %v1168 = vsub.s32 %v1165, %v1167
        %v1169 = vrot.slane %v1141, %v1168
        %v1170 = vcombine.high %v1148, %v1148
        %v1171 = vcombine.high %v1155, %v1155
        %v1172 = vcombine.high %v1162, %v1162
        %v1173 = vcombine.high %v1169, %v1169
        %v1174 = vcombine.high %v810, %v810
        %v1176 = vunpack.c.l.s4 1966171168
        %v1177 = vunpack.c.0.s8 %v1176
        %v1178 = vlaneseq
        %v1179 = vshrl.u32 %v1178, 7
        %v1180 = vsub.s32 %v1177, %v1179
        %v1181 = vrot.slane %v810, %v1180
        %v1183 = vunpack.c.l.s4 1966171168
        %v1184 = vunpack.c.0.s8 %v1183
        %v1185 = vlaneseq
        %v1186 = vshrl.u32 %v1185, 7
        %v1187 = vsub.s32 %v1184, %v1186
        %v1188 = vrot.slane %v1174, %v1187
        %v1189 = vcombine.high %v1181, %v1181
        %v1190 = vcombine.high %v1188, %v1188
        %v1192 = vunpack.c.l.s4 1966171168
        %v1193 = vunpack.c.0.s8 %v1192
        %v1194 = vlaneseq
        %v1195 = vshrl.u32 %v1194, 7
        %v1196 = vsub.s32 %v1193, %v1195
        %v1197 = vrot.slane %v1181, %v1196
        %v1199 = vunpack.c.l.s4 1966171168
        %v1200 = vunpack.c.0.s8 %v1199
        %v1201 = vlaneseq
        %v1202 = vshrl.u32 %v1201, 7
        %v1203 = vsub.s32 %v1200, %v1202
        %v1204 = vrot.slane %v1188, %v1203
        %v1206 = vunpack.c.l.s4 1966171168
        %v1207 = vunpack.c.0.s8 %v1206
        %v1208 = vlaneseq
        %v1209 = vshrl.u32 %v1208, 7
        %v1210 = vsub.s32 %v1207, %v1209
        %v1211 = vrot.slane %v1189, %v1210
        %v1213 = vunpack.c.l.s4 1966171168
        %v1214 = vunpack.c.0.s8 %v1213
        %v1215 = vlaneseq
        %v1216 = vshrl.u32 %v1215, 7
        %v1217 = vsub.s32 %v1214, %v1216
        %v1218 = vrot.slane %v1190, %v1217
        %v1219 = vcombine.high %v1197, %v1197
        %v1220 = vcombine.high %v1204, %v1204
        %v1221 = vcombine.high %v1211, %v1211
        %v1222 = vcombine.high %v1218, %v1218
        %vm1223 = vcmp.ne.s32.totalorder %v1050, 0
        %vm1224 = vcmp.ne.s32.totalorder %v1064, 0
        %vm1225 = vcmp.ne.s32.totalorder %v1072, 0
        %vm1226 = vcmp.ne.s32.totalorder %v1074, 0
        %vm1227 = vcmp.ne.s32.totalorder %v1057, 0
        %vm1228 = vcmp.ne.s32.totalorder %v1071, 0
        %vm1229 = vcmp.ne.s32.totalorder %v1073, 0
        %vm1230 = vcmp.ne.s32.totalorder %v1075, 0
        %vm1231 = vcmp.ne.s32.totalorder %v1099, 0
        %vm1232 = vcmp.ne.s32.totalorder %v1113, 0
        %vm1233 = vcmp.ne.s32.totalorder %v1121, 0
        %vm1234 = vcmp.ne.s32.totalorder %v1123, 0
        %vm1235 = vcmp.ne.s32.totalorder %v1106, 0
        %vm1236 = vcmp.ne.s32.totalorder %v1120, 0
        %vm1237 = vcmp.ne.s32.totalorder %v1122, 0
        %vm1238 = vcmp.ne.s32.totalorder %v1124, 0
        %vm1239 = vcmp.ne.s32.totalorder %v1148, 0
        %vm1240 = vcmp.ne.s32.totalorder %v1162, 0
        %vm1241 = vcmp.ne.s32.totalorder %v1170, 0
        %vm1242 = vcmp.ne.s32.totalorder %v1172, 0
        %vm1243 = vcmp.ne.s32.totalorder %v1155, 0
        %vm1244 = vcmp.ne.s32.totalorder %v1169, 0
        %vm1245 = vcmp.ne.s32.totalorder %v1171, 0
        %vm1246 = vcmp.ne.s32.totalorder %v1173, 0
        %vm1247 = vcmp.ne.s32.totalorder %v1197, 0
        %vm1248 = vcmp.ne.s32.totalorder %v1211, 0
        %vm1249 = vcmp.ne.s32.totalorder %v1219, 0
        %vm1250 = vcmp.ne.s32.totalorder %v1221, 0
        %vm1251 = vcmp.ne.s32.totalorder %v1204, 0
        %vm1252 = vcmp.ne.s32.totalorder %v1218, 0
        %vm1253 = vcmp.ne.s32.totalorder %v1220, 0
        %vm1254 = vcmp.ne.s32.totalorder %v1222, 0
        %1255 = vxpose.xlu0.b32.start [1/16] %v709, 128
        %1256 = vxpose.xlu0.b32.cont [2/16] %v714, 128
        %1257 = vxpose.xlu0.b32.cont [3/16] %v719, 128
        %1258 = vxpose.xlu0.b32.cont [4/16] %v724, 128
        %1259 = vxpose.xlu0.b32.cont [5/16] %v729, 128
        %1260 = vxpose.xlu0.b32.cont [6/16] %v734, 128
        %1261 = vxpose.xlu0.b32.cont [7/16] %v739, 128
        %1262 = vxpose.xlu0.b32.cont [8/16] %v744, 128
        %1263 = vxpose.xlu0.b32.cont [9/16] %v749, 128
        %1264 = vxpose.xlu0.b32.cont [10/16] %v754, 128
        %1265 = vxpose.xlu0.b32.cont [11/16] %v759, 128
        %1266 = vxpose.xlu0.b32.cont [12/16] %v764, 128
        %1267 = vxpose.xlu0.b32.cont [13/16] %v769, 128
        %1268 = vxpose.xlu0.b32.cont [14/16] %v774, 128
        %1269 = vxpose.xlu0.b32.cont [15/16] %v779, 128
        %1270 = vxpose.xlu0.b32.end [16/16] %v784, 128
        %v1271 = vpop.trf.xlu0
        %v1272 = vpop.trf.xlu0
        %v1273 = vpop.trf.xlu0
        %v1274 = vpop.trf.xlu0
        %v1275 = vpop.trf.xlu0
        %v1276 = vpop.trf.xlu0
        %v1277 = vpop.trf.xlu0
        %v1278 = vpop.trf.xlu0
        %v1279 = vpop.trf.xlu0
        %v1280 = vpop.trf.xlu0
        %v1281 = vpop.trf.xlu0
        %v1282 = vpop.trf.xlu0
        %v1283 = vpop.trf.xlu0
        %v1284 = vpop.trf.xlu0
        %v1285 = vpop.trf.xlu0
        %v1286 = vpop.trf.xlu0
        %v1287 = vsel %vm1223, 1, 0
        %v1288 = vsel %vm1224, 1, 0
        %v1289 = vsel %vm1225, 1, 0
        %v1290 = vsel %vm1226, 1, 0
        %v1291 = vsel %vm1227, 1, 0
        %v1292 = vsel %vm1228, 1, 0
        %v1293 = vsel %vm1229, 1, 0
        %v1294 = vsel %vm1230, 1, 0
        %v1295 = vsel %vm1231, 1, 0
        %v1296 = vsel %vm1232, 1, 0
        %v1297 = vsel %vm1233, 1, 0
        %v1298 = vsel %vm1234, 1, 0
        %v1299 = vsel %vm1235, 1, 0
        %v1300 = vsel %vm1236, 1, 0
        %v1301 = vsel %vm1237, 1, 0
        %v1302 = vsel %vm1238, 1, 0
        %v1303 = vsel %vm1239, 1, 0
        %v1304 = vsel %vm1240, 1, 0
        %v1305 = vsel %vm1241, 1, 0
        %v1306 = vsel %vm1242, 1, 0
        %v1307 = vsel %vm1243, 1, 0
        %v1308 = vsel %vm1244, 1, 0
        %v1309 = vsel %vm1245, 1, 0
        %v1310 = vsel %vm1246, 1, 0
        %v1311 = vsel %vm1247, 1, 0
        %v1312 = vsel %vm1248, 1, 0
        %v1313 = vsel %vm1249, 1, 0
        %v1314 = vsel %vm1250, 1, 0
        %v1315 = vsel %vm1251, 1, 0
        %v1316 = vsel %vm1252, 1, 0
        %v1317 = vsel %vm1253, 1, 0
        %v1318 = vsel %vm1254, 1, 0
        %v1319 = vlaneseq
        %v1320 = vshrl.u32 %v1319, 7
        %v1321 = vsub.s32 0, %v1320
        %v1322 = vrot.slane %v1287, %v1321
        %v1323 = vlaneseq
        %v1324 = vshrl.u32 %v1323, 7
        %v1325 = vsub.s32 0, %v1324
        %v1326 = vrot.slane %v1288, %v1325
        %v1327 = vlaneseq
        %v1328 = vshrl.u32 %v1327, 7
        %v1329 = vsub.s32 0, %v1328
        %v1330 = vrot.slane %v1289, %v1329
        %v1331 = vlaneseq
        %v1332 = vshrl.u32 %v1331, 7
        %v1333 = vsub.s32 0, %v1332
        %v1334 = vrot.slane %v1290, %v1333
        %v1335 = vlaneseq
        %v1336 = vshrl.u32 %v1335, 7
        %v1337 = vsub.s32 0, %v1336
        %v1338 = vrot.slane %v1291, %v1337
        %v1339 = vlaneseq
        %v1340 = vshrl.u32 %v1339, 7
        %v1341 = vsub.s32 0, %v1340
        %v1342 = vrot.slane %v1292, %v1341
        %v1343 = vlaneseq
        %v1344 = vshrl.u32 %v1343, 7
        %v1345 = vsub.s32 0, %v1344
        %v1346 = vrot.slane %v1293, %v1345
        %v1347 = vlaneseq
        %v1348 = vshrl.u32 %v1347, 7
        %v1349 = vsub.s32 0, %v1348
        %v1350 = vrot.slane %v1294, %v1349
        %v1351 = vlaneseq
        %v1352 = vshrl.u32 %v1351, 7
        %v1353 = vsub.s32 0, %v1352
        %v1354 = vrot.slane %v1295, %v1353
        %v1355 = vlaneseq
        %v1356 = vshrl.u32 %v1355, 7
        %v1357 = vsub.s32 0, %v1356
        %v1358 = vrot.slane %v1296, %v1357
        %v1359 = vlaneseq
        %v1360 = vshrl.u32 %v1359, 7
        %v1361 = vsub.s32 0, %v1360
        %v1362 = vrot.slane %v1297, %v1361
        %v1363 = vlaneseq
        %v1364 = vshrl.u32 %v1363, 7
        %v1365 = vsub.s32 0, %v1364
        %v1366 = vrot.slane %v1298, %v1365
        %v1367 = vlaneseq
        %v1368 = vshrl.u32 %v1367, 7
        %v1369 = vsub.s32 0, %v1368
        %v1370 = vrot.slane %v1299, %v1369
        %v1371 = vlaneseq
        %v1372 = vshrl.u32 %v1371, 7
        %v1373 = vsub.s32 0, %v1372
        %v1374 = vrot.slane %v1300, %v1373
        %v1375 = vlaneseq
        %v1376 = vshrl.u32 %v1375, 7
        %v1377 = vsub.s32 0, %v1376
        %v1378 = vrot.slane %v1301, %v1377
        %v1379 = vlaneseq
        %v1380 = vshrl.u32 %v1379, 7
        %v1381 = vsub.s32 0, %v1380
        %v1382 = vrot.slane %v1302, %v1381
        %v1383 = vlaneseq
        %v1384 = vshrl.u32 %v1383, 7
        %v1385 = vsub.s32 0, %v1384
        %v1386 = vrot.slane %v1303, %v1385
        %v1387 = vlaneseq
        %v1388 = vshrl.u32 %v1387, 7
        %v1389 = vsub.s32 0, %v1388
        %v1390 = vrot.slane %v1304, %v1389
        %v1391 = vlaneseq
        %v1392 = vshrl.u32 %v1391, 7
        %v1393 = vsub.s32 0, %v1392
        %v1394 = vrot.slane %v1305, %v1393
        %v1395 = vlaneseq
        %v1396 = vshrl.u32 %v1395, 7
        %v1397 = vsub.s32 0, %v1396
        %v1398 = vrot.slane %v1306, %v1397
        %v1399 = vlaneseq
        %v1400 = vshrl.u32 %v1399, 7
        %v1401 = vsub.s32 0, %v1400
        %v1402 = vrot.slane %v1307, %v1401
        %v1403 = vlaneseq
        %v1404 = vshrl.u32 %v1403, 7
        %v1405 = vsub.s32 0, %v1404
        %v1406 = vrot.slane %v1308, %v1405
        %v1407 = vlaneseq
        %v1408 = vshrl.u32 %v1407, 7
        %v1409 = vsub.s32 0, %v1408
        %v1410 = vrot.slane %v1309, %v1409
        %v1411 = vlaneseq
        %v1412 = vshrl.u32 %v1411, 7
        %v1413 = vsub.s32 0, %v1412
        %v1414 = vrot.slane %v1310, %v1413
        %v1415 = vlaneseq
        %v1416 = vshrl.u32 %v1415, 7
        %v1417 = vsub.s32 0, %v1416
        %v1418 = vrot.slane %v1311, %v1417
        %v1419 = vlaneseq
        %v1420 = vshrl.u32 %v1419, 7
        %v1421 = vsub.s32 0, %v1420
        %v1422 = vrot.slane %v1312, %v1421
        %v1423 = vlaneseq
        %v1424 = vshrl.u32 %v1423, 7
        %v1425 = vsub.s32 0, %v1424
        %v1426 = vrot.slane %v1313, %v1425
        %v1427 = vlaneseq
        %v1428 = vshrl.u32 %v1427, 7
        %v1429 = vsub.s32 0, %v1428
        %v1430 = vrot.slane %v1314, %v1429
        %v1431 = vlaneseq
        %v1432 = vshrl.u32 %v1431, 7
        %v1433 = vsub.s32 0, %v1432
        %v1434 = vrot.slane %v1315, %v1433
        %v1435 = vlaneseq
        %v1436 = vshrl.u32 %v1435, 7
        %v1437 = vsub.s32 0, %v1436
        %v1438 = vrot.slane %v1316, %v1437
        %v1439 = vlaneseq
        %v1440 = vshrl.u32 %v1439, 7
        %v1441 = vsub.s32 0, %v1440
        %v1442 = vrot.slane %v1317, %v1441
        %v1443 = vlaneseq
        %v1444 = vshrl.u32 %v1443, 7
        %v1445 = vsub.s32 0, %v1444
        %v1446 = vrot.slane %v1318, %v1445
        %vm1447 = vcmp.eq.s32.totalorder %v1322, 1
        %vm1448 = vcmp.eq.s32.totalorder %v1326, 1
        %vm1449 = vcmp.eq.s32.totalorder %v1330, 1
        %vm1450 = vcmp.eq.s32.totalorder %v1334, 1
        %vm1451 = vcmp.eq.s32.totalorder %v1338, 1
        %vm1452 = vcmp.eq.s32.totalorder %v1342, 1
        %vm1453 = vcmp.eq.s32.totalorder %v1346, 1
        %vm1454 = vcmp.eq.s32.totalorder %v1350, 1
        %vm1455 = vcmp.eq.s32.totalorder %v1354, 1
        %vm1456 = vcmp.eq.s32.totalorder %v1358, 1
        %vm1457 = vcmp.eq.s32.totalorder %v1362, 1
        %vm1458 = vcmp.eq.s32.totalorder %v1366, 1
        %vm1459 = vcmp.eq.s32.totalorder %v1370, 1
        %vm1460 = vcmp.eq.s32.totalorder %v1374, 1
        %vm1461 = vcmp.eq.s32.totalorder %v1378, 1
        %vm1462 = vcmp.eq.s32.totalorder %v1382, 1
        %vm1463 = vcmp.eq.s32.totalorder %v1386, 1
        %vm1464 = vcmp.eq.s32.totalorder %v1390, 1
        %vm1465 = vcmp.eq.s32.totalorder %v1394, 1
        %vm1466 = vcmp.eq.s32.totalorder %v1398, 1
        %vm1467 = vcmp.eq.s32.totalorder %v1402, 1
        %vm1468 = vcmp.eq.s32.totalorder %v1406, 1
        %vm1469 = vcmp.eq.s32.totalorder %v1410, 1
        %vm1470 = vcmp.eq.s32.totalorder %v1414, 1
        %vm1471 = vcmp.eq.s32.totalorder %v1418, 1
        %vm1472 = vcmp.eq.s32.totalorder %v1422, 1
        %vm1473 = vcmp.eq.s32.totalorder %v1426, 1
        %vm1474 = vcmp.eq.s32.totalorder %v1430, 1
        %vm1475 = vcmp.eq.s32.totalorder %v1434, 1
        %vm1476 = vcmp.eq.s32.totalorder %v1438, 1
        %vm1477 = vcmp.eq.s32.totalorder %v1442, 1
        %vm1478 = vcmp.eq.s32.totalorder %v1446, 1
        %v1479 = vsel %vm1447, %v1271, 1e+30
        %v1480 = vsel %vm1448, %v1271, 1e+30
        %v1481 = vsel %vm1449, %v1271, 1e+30
        %v1482 = vsel %vm1450, %v1271, 1e+30
        %v1483 = vsel %vm1451, %v1271, 1e+30
        %v1484 = vsel %vm1452, %v1271, 1e+30
        %v1485 = vsel %vm1453, %v1271, 1e+30
        %v1486 = vsel %vm1454, %v1271, 1e+30
        %v1487 = vsel %vm1455, %v1271, 1e+30
        %v1488 = vsel %vm1456, %v1271, 1e+30
        %v1489 = vsel %vm1457, %v1271, 1e+30
        %v1490 = vsel %vm1458, %v1271, 1e+30
        %v1491 = vsel %vm1459, %v1271, 1e+30
        %v1492 = vsel %vm1460, %v1271, 1e+30
        %v1493 = vsel %vm1461, %v1271, 1e+30
        %v1494 = vsel %vm1462, %v1271, 1e+30
        %v1495 = vsel %vm1463, %v1271, 1e+30
        %v1496 = vsel %vm1464, %v1271, 1e+30
        %v1497 = vsel %vm1465, %v1271, 1e+30
        %v1498 = vsel %vm1466, %v1271, 1e+30
        %v1499 = vsel %vm1467, %v1271, 1e+30
        %v1500 = vsel %vm1468, %v1271, 1e+30
        %v1501 = vsel %vm1469, %v1271, 1e+30
        %v1502 = vsel %vm1470, %v1271, 1e+30
        %v1503 = vsel %vm1471, %v1271, 1e+30
        %v1504 = vsel %vm1472, %v1271, 1e+30
        %v1505 = vsel %vm1473, %v1271, 1e+30
        %v1506 = vsel %vm1474, %v1271, 1e+30
        %v1507 = vsel %vm1475, %v1271, 1e+30
        %v1508 = vsel %vm1476, %v1271, 1e+30
        %v1509 = vsel %vm1477, %v1271, 1e+30
        %v1510 = vsel %vm1478, %v1271, 1e+30
        %1511 = vmin.xlane.f32.xlu0 %v1479
        %v1512 = vpop.xlane.xlu0 %1511
        %1513 = vmin.xlane.f32.xlu0 %v1480
        %v1514 = vpop.xlane.xlu0 %1513
        %1515 = vmin.xlane.f32.xlu0 %v1481
        %v1516 = vpop.xlane.xlu0 %1515
        %1517 = vmin.xlane.f32.xlu0 %v1482
        %v1518 = vpop.xlane.xlu0 %1517
        %1519 = vmin.xlane.f32.xlu0 %v1483
        %v1520 = vpop.xlane.xlu0 %1519
        %1521 = vmin.xlane.f32.xlu0 %v1484
        %v1522 = vpop.xlane.xlu0 %1521
        %1523 = vmin.xlane.f32.xlu0 %v1485
        %v1524 = vpop.xlane.xlu0 %1523
        %1525 = vmin.xlane.f32.xlu0 %v1486
        %v1526 = vpop.xlane.xlu0 %1525
        %1527 = vmin.xlane.f32.xlu0 %v1487
        %v1528 = vpop.xlane.xlu0 %1527
        %1529 = vmin.xlane.f32.xlu0 %v1488
        %v1530 = vpop.xlane.xlu0 %1529
        %1531 = vmin.xlane.f32.xlu0 %v1489
        %v1532 = vpop.xlane.xlu0 %1531
        %1533 = vmin.xlane.f32.xlu0 %v1490
        %v1534 = vpop.xlane.xlu0 %1533
        %1535 = vmin.xlane.f32.xlu0 %v1491
        %v1536 = vpop.xlane.xlu0 %1535
        %1537 = vmin.xlane.f32.xlu0 %v1492
        %v1538 = vpop.xlane.xlu0 %1537
        %1539 = vmin.xlane.f32.xlu0 %v1493
        %v1540 = vpop.xlane.xlu0 %1539
        %1541 = vmin.xlane.f32.xlu0 %v1494
        %v1542 = vpop.xlane.xlu0 %1541
        %1543 = vmin.xlane.f32.xlu0 %v1495
        %v1544 = vpop.xlane.xlu0 %1543
        %1545 = vmin.xlane.f32.xlu0 %v1496
        %v1546 = vpop.xlane.xlu0 %1545
        %1547 = vmin.xlane.f32.xlu0 %v1497
        %v1548 = vpop.xlane.xlu0 %1547
        %1549 = vmin.xlane.f32.xlu0 %v1498
        %v1550 = vpop.xlane.xlu0 %1549
        %1551 = vmin.xlane.f32.xlu0 %v1499
        %v1552 = vpop.xlane.xlu0 %1551
        %1553 = vmin.xlane.f32.xlu0 %v1500
        %v1554 = vpop.xlane.xlu0 %1553
        %1555 = vmin.xlane.f32.xlu0 %v1501
        %v1556 = vpop.xlane.xlu0 %1555
        %1557 = vmin.xlane.f32.xlu0 %v1502
        %v1558 = vpop.xlane.xlu0 %1557
        %1559 = vmin.xlane.f32.xlu0 %v1503
        %v1560 = vpop.xlane.xlu0 %1559
        %1561 = vmin.xlane.f32.xlu0 %v1504
        %v1562 = vpop.xlane.xlu0 %1561
        %1563 = vmin.xlane.f32.xlu0 %v1505
        %v1564 = vpop.xlane.xlu0 %1563
        %1565 = vmin.xlane.f32.xlu0 %v1506
        %v1566 = vpop.xlane.xlu0 %1565
        %1567 = vmin.xlane.f32.xlu0 %v1507
        %v1568 = vpop.xlane.xlu0 %1567
        %1569 = vmin.xlane.f32.xlu0 %v1508
        %v1570 = vpop.xlane.xlu0 %1569
        %1571 = vmin.xlane.f32.xlu0 %v1509
        %v1572 = vpop.xlane.xlu0 %1571
        %1573 = vmin.xlane.f32.xlu0 %v1510
        %v1574 = vpop.xlane.xlu0 %1573
        %v1575 = vsel %vm1447, %v1271, -1e+30
        %v1576 = vsel %vm1448, %v1271, -1e+30
        %v1577 = vsel %vm1449, %v1271, -1e+30
        %v1578 = vsel %vm1450, %v1271, -1e+30
        %v1579 = vsel %vm1451, %v1271, -1e+30
        %v1580 = vsel %vm1452, %v1271, -1e+30
        %v1581 = vsel %vm1453, %v1271, -1e+30
        %v1582 = vsel %vm1454, %v1271, -1e+30
        %v1583 = vsel %vm1455, %v1271, -1e+30
        %v1584 = vsel %vm1456, %v1271, -1e+30
        %v1585 = vsel %vm1457, %v1271, -1e+30
        %v1586 = vsel %vm1458, %v1271, -1e+30
        %v1587 = vsel %vm1459, %v1271, -1e+30
        %v1588 = vsel %vm1460, %v1271, -1e+30
        %v1589 = vsel %vm1461, %v1271, -1e+30
        %v1590 = vsel %vm1462, %v1271, -1e+30
        %v1591 = vsel %vm1463, %v1271, -1e+30
        %v1592 = vsel %vm1464, %v1271, -1e+30
        %v1593 = vsel %vm1465, %v1271, -1e+30
        %v1594 = vsel %vm1466, %v1271, -1e+30
        %v1595 = vsel %vm1467, %v1271, -1e+30
        %v1596 = vsel %vm1468, %v1271, -1e+30
        %v1597 = vsel %vm1469, %v1271, -1e+30
        %v1598 = vsel %vm1470, %v1271, -1e+30
        %v1599 = vsel %vm1471, %v1271, -1e+30
        %v1600 = vsel %vm1472, %v1271, -1e+30
        %v1601 = vsel %vm1473, %v1271, -1e+30
        %v1602 = vsel %vm1474, %v1271, -1e+30
        %v1603 = vsel %vm1475, %v1271, -1e+30
        %v1604 = vsel %vm1476, %v1271, -1e+30
        %v1605 = vsel %vm1477, %v1271, -1e+30
        %v1606 = vsel %vm1478, %v1271, -1e+30
        %1607 = vmax.xlane.f32.xlu0 %v1575
        %v1608 = vpop.xlane.xlu0 %1607
        %1609 = vmax.xlane.f32.xlu0 %v1576
        %v1610 = vpop.xlane.xlu0 %1609
        %1611 = vmax.xlane.f32.xlu0 %v1577
        %v1612 = vpop.xlane.xlu0 %1611
        %1613 = vmax.xlane.f32.xlu0 %v1578
        %v1614 = vpop.xlane.xlu0 %1613
        %1615 = vmax.xlane.f32.xlu0 %v1579
        %v1616 = vpop.xlane.xlu0 %1615
        %1617 = vmax.xlane.f32.xlu0 %v1580
        %v1618 = vpop.xlane.xlu0 %1617
        %1619 = vmax.xlane.f32.xlu0 %v1581
        %v1620 = vpop.xlane.xlu0 %1619
        %1621 = vmax.xlane.f32.xlu0 %v1582
        %v1622 = vpop.xlane.xlu0 %1621
        %1623 = vmax.xlane.f32.xlu0 %v1583
        %v1624 = vpop.xlane.xlu0 %1623
        %1625 = vmax.xlane.f32.xlu0 %v1584
        %v1626 = vpop.xlane.xlu0 %1625
        %1627 = vmax.xlane.f32.xlu0 %v1585
        %v1628 = vpop.xlane.xlu0 %1627
        %1629 = vmax.xlane.f32.xlu0 %v1586
        %v1630 = vpop.xlane.xlu0 %1629
        %1631 = vmax.xlane.f32.xlu0 %v1587
        %v1632 = vpop.xlane.xlu0 %1631
        %1633 = vmax.xlane.f32.xlu0 %v1588
        %v1634 = vpop.xlane.xlu0 %1633
        %1635 = vmax.xlane.f32.xlu0 %v1589
        %v1636 = vpop.xlane.xlu0 %1635
        %1637 = vmax.xlane.f32.xlu0 %v1590
        %v1638 = vpop.xlane.xlu0 %1637
        %1639 = vmax.xlane.f32.xlu0 %v1591
        %v1640 = vpop.xlane.xlu0 %1639
        %1641 = vmax.xlane.f32.xlu0 %v1592
        %v1642 = vpop.xlane.xlu0 %1641
        %1643 = vmax.xlane.f32.xlu0 %v1593
        %v1644 = vpop.xlane.xlu0 %1643
        %1645 = vmax.xlane.f32.xlu0 %v1594
        %v1646 = vpop.xlane.xlu0 %1645
        %1647 = vmax.xlane.f32.xlu0 %v1595
        %v1648 = vpop.xlane.xlu0 %1647
        %1649 = vmax.xlane.f32.xlu0 %v1596
        %v1650 = vpop.xlane.xlu0 %1649
        %1651 = vmax.xlane.f32.xlu0 %v1597
        %v1652 = vpop.xlane.xlu0 %1651
        %1653 = vmax.xlane.f32.xlu0 %v1598
        %v1654 = vpop.xlane.xlu0 %1653
        %1655 = vmax.xlane.f32.xlu0 %v1599
        %v1656 = vpop.xlane.xlu0 %1655
        %1657 = vmax.xlane.f32.xlu0 %v1600
        %v1658 = vpop.xlane.xlu0 %1657
        %1659 = vmax.xlane.f32.xlu0 %v1601
        %v1660 = vpop.xlane.xlu0 %1659
        %1661 = vmax.xlane.f32.xlu0 %v1602
        %v1662 = vpop.xlane.xlu0 %1661
        %1663 = vmax.xlane.f32.xlu0 %v1603
        %v1664 = vpop.xlane.xlu0 %1663
        %1665 = vmax.xlane.f32.xlu0 %v1604
        %v1666 = vpop.xlane.xlu0 %1665
        %1667 = vmax.xlane.f32.xlu0 %v1605
        %v1668 = vpop.xlane.xlu0 %1667
        %1669 = vmax.xlane.f32.xlu0 %v1606
        %v1670 = vpop.xlane.xlu0 %1669
        %1687 = vrot.lane.b32.xlu0 %v709, 120
        %v1688 = vpop.permute.xlu0 %1687
        %1689 = vrot.lane.b32.xlu0 %v714, 120
        %v1690 = vpop.permute.xlu0 %1689
        %1691 = vrot.lane.b32.xlu0 %v719, 120
        %v1692 = vpop.permute.xlu0 %1691
        %1693 = vrot.lane.b32.xlu0 %v724, 120
        %v1694 = vpop.permute.xlu0 %1693
        %1695 = vrot.lane.b32.xlu0 %v729, 120
        %v1696 = vpop.permute.xlu0 %1695
        %1697 = vrot.lane.b32.xlu0 %v734, 120
        %v1698 = vpop.permute.xlu0 %1697
        %1699 = vrot.lane.b32.xlu0 %v739, 120
        %v1700 = vpop.permute.xlu0 %1699
        %1701 = vrot.lane.b32.xlu0 %v744, 120
        %v1702 = vpop.permute.xlu0 %1701
        %1703 = vrot.lane.b32.xlu0 %v749, 120
        %v1704 = vpop.permute.xlu0 %1703
        %1705 = vrot.lane.b32.xlu0 %v754, 120
        %v1706 = vpop.permute.xlu0 %1705
        %1707 = vrot.lane.b32.xlu0 %v759, 120
        %v1708 = vpop.permute.xlu0 %1707
        %1709 = vrot.lane.b32.xlu0 %v764, 120
        %v1710 = vpop.permute.xlu0 %1709
        %1711 = vrot.lane.b32.xlu0 %v769, 120
        %v1712 = vpop.permute.xlu0 %1711
        %1713 = vrot.lane.b32.xlu0 %v774, 120
        %v1714 = vpop.permute.xlu0 %1713
        %1715 = vrot.lane.b32.xlu0 %v779, 120
        %v1716 = vpop.permute.xlu0 %1715
        %1717 = vrot.lane.b32.xlu0 %v784, 120
        %v1718 = vpop.permute.xlu0 %1717
        %1735 = vxpose.xlu0.b32.start [1/16] %v1688, 128
        %1736 = vxpose.xlu0.b32.cont [2/16] %v1690, 128
        %1737 = vxpose.xlu0.b32.cont [3/16] %v1692, 128
        %1738 = vxpose.xlu0.b32.cont [4/16] %v1694, 128
        %1739 = vxpose.xlu0.b32.cont [5/16] %v1696, 128
        %1740 = vxpose.xlu0.b32.cont [6/16] %v1698, 128
        %1741 = vxpose.xlu0.b32.cont [7/16] %v1700, 128
        %1742 = vxpose.xlu0.b32.cont [8/16] %v1702, 128
        %1743 = vxpose.xlu0.b32.cont [9/16] %v1704, 128
        %1744 = vxpose.xlu0.b32.cont [10/16] %v1706, 128
        %1745 = vxpose.xlu0.b32.cont [11/16] %v1708, 128
        %1746 = vxpose.xlu0.b32.cont [12/16] %v1710, 128
        %1747 = vxpose.xlu0.b32.cont [13/16] %v1712, 128
        %1748 = vxpose.xlu0.b32.cont [14/16] %v1714, 128
        %1749 = vxpose.xlu0.b32.cont [15/16] %v1716, 128
        %1750 = vxpose.xlu0.b32.end [16/16] %v1718, 128
        %v1751 = vpop.trf.xlu0
        %v1752 = vpop.trf.xlu0
        %v1753 = vpop.trf.xlu0
        %v1754 = vpop.trf.xlu0
        %v1755 = vpop.trf.xlu0
        %v1756 = vpop.trf.xlu0
        %v1757 = vpop.trf.xlu0
        %v1758 = vpop.trf.xlu0
        %v1759 = vpop.trf.xlu0
        %v1760 = vpop.trf.xlu0
        %v1761 = vpop.trf.xlu0
        %v1762 = vpop.trf.xlu0
        %v1763 = vpop.trf.xlu0
        %v1764 = vpop.trf.xlu0
        %v1765 = vpop.trf.xlu0
        %v1766 = vpop.trf.xlu0
        %v1767 = vsel %vm1447, %v1751, 1e+30
        %v1768 = vsel %vm1448, %v1751, 1e+30
        %v1769 = vsel %vm1449, %v1751, 1e+30
        %v1770 = vsel %vm1450, %v1751, 1e+30
        %v1771 = vsel %vm1451, %v1751, 1e+30
        %v1772 = vsel %vm1452, %v1751, 1e+30
        %v1773 = vsel %vm1453, %v1751, 1e+30
        %v1774 = vsel %vm1454, %v1751, 1e+30
        %v1775 = vsel %vm1455, %v1751, 1e+30
        %v1776 = vsel %vm1456, %v1751, 1e+30
        %v1777 = vsel %vm1457, %v1751, 1e+30
        %v1778 = vsel %vm1458, %v1751, 1e+30
        %v1779 = vsel %vm1459, %v1751, 1e+30
        %v1780 = vsel %vm1460, %v1751, 1e+30
        %v1781 = vsel %vm1461, %v1751, 1e+30
        %v1782 = vsel %vm1462, %v1751, 1e+30
        %v1783 = vsel %vm1463, %v1751, 1e+30
        %v1784 = vsel %vm1464, %v1751, 1e+30
        %v1785 = vsel %vm1465, %v1751, 1e+30
        %v1786 = vsel %vm1466, %v1751, 1e+30
        %v1787 = vsel %vm1467, %v1751, 1e+30
        %v1788 = vsel %vm1468, %v1751, 1e+30
        %v1789 = vsel %vm1469, %v1751, 1e+30
        %v1790 = vsel %vm1470, %v1751, 1e+30
        %v1791 = vsel %vm1471, %v1751, 1e+30
        %v1792 = vsel %vm1472, %v1751, 1e+30
        %v1793 = vsel %vm1473, %v1751, 1e+30
        %v1794 = vsel %vm1474, %v1751, 1e+30
        %v1795 = vsel %vm1475, %v1751, 1e+30
        %v1796 = vsel %vm1476, %v1751, 1e+30
        %v1797 = vsel %vm1477, %v1751, 1e+30
        %v1798 = vsel %vm1478, %v1751, 1e+30
        %1799 = vmin.xlane.f32.xlu0 %v1767
        %v1800 = vpop.xlane.xlu0 %1799
        %1801 = vmin.xlane.f32.xlu0 %v1768
        %v1802 = vpop.xlane.xlu0 %1801
        %1803 = vmin.xlane.f32.xlu0 %v1769
        %v1804 = vpop.xlane.xlu0 %1803
        %1805 = vmin.xlane.f32.xlu0 %v1770
        %v1806 = vpop.xlane.xlu0 %1805
        %1807 = vmin.xlane.f32.xlu0 %v1771
        %v1808 = vpop.xlane.xlu0 %1807
        %1809 = vmin.xlane.f32.xlu0 %v1772
        %v1810 = vpop.xlane.xlu0 %1809
        %1811 = vmin.xlane.f32.xlu0 %v1773
        %v1812 = vpop.xlane.xlu0 %1811
        %1813 = vmin.xlane.f32.xlu0 %v1774
        %v1814 = vpop.xlane.xlu0 %1813
        %1815 = vmin.xlane.f32.xlu0 %v1775
        %v1816 = vpop.xlane.xlu0 %1815
        %1817 = vmin.xlane.f32.xlu0 %v1776
        %v1818 = vpop.xlane.xlu0 %1817
        %1819 = vmin.xlane.f32.xlu0 %v1777
        %v1820 = vpop.xlane.xlu0 %1819
        %1821 = vmin.xlane.f32.xlu0 %v1778
        %v1822 = vpop.xlane.xlu0 %1821
        %1823 = vmin.xlane.f32.xlu0 %v1779
        %v1824 = vpop.xlane.xlu0 %1823
        %1825 = vmin.xlane.f32.xlu0 %v1780
        %v1826 = vpop.xlane.xlu0 %1825
        %1827 = vmin.xlane.f32.xlu0 %v1781
        %v1828 = vpop.xlane.xlu0 %1827
        %1829 = vmin.xlane.f32.xlu0 %v1782
        %v1830 = vpop.xlane.xlu0 %1829
        %1831 = vmin.xlane.f32.xlu0 %v1783
        %v1832 = vpop.xlane.xlu0 %1831
        %1833 = vmin.xlane.f32.xlu0 %v1784
        %v1834 = vpop.xlane.xlu0 %1833
        %1835 = vmin.xlane.f32.xlu0 %v1785
        %v1836 = vpop.xlane.xlu0 %1835
        %1837 = vmin.xlane.f32.xlu0 %v1786
        %v1838 = vpop.xlane.xlu0 %1837
        %1839 = vmin.xlane.f32.xlu0 %v1787
        %v1840 = vpop.xlane.xlu0 %1839
        %1841 = vmin.xlane.f32.xlu0 %v1788
        %v1842 = vpop.xlane.xlu0 %1841
        %1843 = vmin.xlane.f32.xlu0 %v1789
        %v1844 = vpop.xlane.xlu0 %1843
        %1845 = vmin.xlane.f32.xlu0 %v1790
        %v1846 = vpop.xlane.xlu0 %1845
        %1847 = vmin.xlane.f32.xlu0 %v1791
        %v1848 = vpop.xlane.xlu0 %1847
        %1849 = vmin.xlane.f32.xlu0 %v1792
        %v1850 = vpop.xlane.xlu0 %1849
        %1851 = vmin.xlane.f32.xlu0 %v1793
        %v1852 = vpop.xlane.xlu0 %1851
        %1853 = vmin.xlane.f32.xlu0 %v1794
        %v1854 = vpop.xlane.xlu0 %1853
        %1855 = vmin.xlane.f32.xlu0 %v1795
        %v1856 = vpop.xlane.xlu0 %1855
        %1857 = vmin.xlane.f32.xlu0 %v1796
        %v1858 = vpop.xlane.xlu0 %1857
        %1859 = vmin.xlane.f32.xlu0 %v1797
        %v1860 = vpop.xlane.xlu0 %1859
        %1861 = vmin.xlane.f32.xlu0 %v1798
        %v1862 = vpop.xlane.xlu0 %1861
        %v1863 = vsel %vm1447, %v1751, -1e+30
        %v1864 = vsel %vm1448, %v1751, -1e+30
        %v1865 = vsel %vm1449, %v1751, -1e+30
        %v1866 = vsel %vm1450, %v1751, -1e+30
        %v1867 = vsel %vm1451, %v1751, -1e+30
        %v1868 = vsel %vm1452, %v1751, -1e+30
        %v1869 = vsel %vm1453, %v1751, -1e+30
        %v1870 = vsel %vm1454, %v1751, -1e+30
        %v1871 = vsel %vm1455, %v1751, -1e+30
        %v1872 = vsel %vm1456, %v1751, -1e+30
        %v1873 = vsel %vm1457, %v1751, -1e+30
        %v1874 = vsel %vm1458, %v1751, -1e+30
        %v1875 = vsel %vm1459, %v1751, -1e+30
        %v1876 = vsel %vm1460, %v1751, -1e+30
        %v1877 = vsel %vm1461, %v1751, -1e+30
        %v1878 = vsel %vm1462, %v1751, -1e+30
        %v1879 = vsel %vm1463, %v1751, -1e+30
        %v1880 = vsel %vm1464, %v1751, -1e+30
        %v1881 = vsel %vm1465, %v1751, -1e+30
        %v1882 = vsel %vm1466, %v1751, -1e+30
        %v1883 = vsel %vm1467, %v1751, -1e+30
        %v1884 = vsel %vm1468, %v1751, -1e+30
        %v1885 = vsel %vm1469, %v1751, -1e+30
        %v1886 = vsel %vm1470, %v1751, -1e+30
        %v1887 = vsel %vm1471, %v1751, -1e+30
        %v1888 = vsel %vm1472, %v1751, -1e+30
        %v1889 = vsel %vm1473, %v1751, -1e+30
        %v1890 = vsel %vm1474, %v1751, -1e+30
        %v1891 = vsel %vm1475, %v1751, -1e+30
        %v1892 = vsel %vm1476, %v1751, -1e+30
        %v1893 = vsel %vm1477, %v1751, -1e+30
        %v1894 = vsel %vm1478, %v1751, -1e+30
        %1895 = vmax.xlane.f32.xlu0 %v1863
        %v1896 = vpop.xlane.xlu0 %1895
        %1897 = vmax.xlane.f32.xlu0 %v1864
        %v1898 = vpop.xlane.xlu0 %1897
        %1899 = vmax.xlane.f32.xlu0 %v1865
        %v1900 = vpop.xlane.xlu0 %1899
        %1901 = vmax.xlane.f32.xlu0 %v1866
        %v1902 = vpop.xlane.xlu0 %1901
        %1903 = vmax.xlane.f32.xlu0 %v1867
        %v1904 = vpop.xlane.xlu0 %1903
        %1905 = vmax.xlane.f32.xlu0 %v1868
        %v1906 = vpop.xlane.xlu0 %1905
        %1907 = vmax.xlane.f32.xlu0 %v1869
        %v1908 = vpop.xlane.xlu0 %1907
        %1909 = vmax.xlane.f32.xlu0 %v1870
        %v1910 = vpop.xlane.xlu0 %1909
        %1911 = vmax.xlane.f32.xlu0 %v1871
        %v1912 = vpop.xlane.xlu0 %1911
        %1913 = vmax.xlane.f32.xlu0 %v1872
        %v1914 = vpop.xlane.xlu0 %1913
        %1915 = vmax.xlane.f32.xlu0 %v1873
        %v1916 = vpop.xlane.xlu0 %1915
        %1917 = vmax.xlane.f32.xlu0 %v1874
        %v1918 = vpop.xlane.xlu0 %1917
        %1919 = vmax.xlane.f32.xlu0 %v1875
        %v1920 = vpop.xlane.xlu0 %1919
        %1921 = vmax.xlane.f32.xlu0 %v1876
        %v1922 = vpop.xlane.xlu0 %1921
        %1923 = vmax.xlane.f32.xlu0 %v1877
        %v1924 = vpop.xlane.xlu0 %1923
        %1925 = vmax.xlane.f32.xlu0 %v1878
        %v1926 = vpop.xlane.xlu0 %1925
        %1927 = vmax.xlane.f32.xlu0 %v1879
        %v1928 = vpop.xlane.xlu0 %1927
        %1929 = vmax.xlane.f32.xlu0 %v1880
        %v1930 = vpop.xlane.xlu0 %1929
        %1931 = vmax.xlane.f32.xlu0 %v1881
        %v1932 = vpop.xlane.xlu0 %1931
        %1933 = vmax.xlane.f32.xlu0 %v1882
        %v1934 = vpop.xlane.xlu0 %1933
        %1935 = vmax.xlane.f32.xlu0 %v1883
        %v1936 = vpop.xlane.xlu0 %1935
        %1937 = vmax.xlane.f32.xlu0 %v1884
        %v1938 = vpop.xlane.xlu0 %1937
        %1939 = vmax.xlane.f32.xlu0 %v1885
        %v1940 = vpop.xlane.xlu0 %1939
        %1941 = vmax.xlane.f32.xlu0 %v1886
        %v1942 = vpop.xlane.xlu0 %1941
        %1943 = vmax.xlane.f32.xlu0 %v1887
        %v1944 = vpop.xlane.xlu0 %1943
        %1945 = vmax.xlane.f32.xlu0 %v1888
        %v1946 = vpop.xlane.xlu0 %1945
        %1947 = vmax.xlane.f32.xlu0 %v1889
        %v1948 = vpop.xlane.xlu0 %1947
        %1949 = vmax.xlane.f32.xlu0 %v1890
        %v1950 = vpop.xlane.xlu0 %1949
        %1951 = vmax.xlane.f32.xlu0 %v1891
        %v1952 = vpop.xlane.xlu0 %1951
        %1953 = vmax.xlane.f32.xlu0 %v1892
        %v1954 = vpop.xlane.xlu0 %1953
        %1955 = vmax.xlane.f32.xlu0 %v1893
        %v1956 = vpop.xlane.xlu0 %1955
        %1957 = vmax.xlane.f32.xlu0 %v1894
        %v1958 = vpop.xlane.xlu0 %1957
        %1959 = vrot.lane.b32.xlu0 %v709, 112
        %v1960 = vpop.permute.xlu0 %1959
        %1961 = vrot.lane.b32.xlu0 %v714, 112
        %v1962 = vpop.permute.xlu0 %1961
        %1963 = vrot.lane.b32.xlu0 %v719, 112
        %v1964 = vpop.permute.xlu0 %1963
        %1965 = vrot.lane.b32.xlu0 %v724, 112
        %v1966 = vpop.permute.xlu0 %1965
        %1967 = vrot.lane.b32.xlu0 %v729, 112
        %v1968 = vpop.permute.xlu0 %1967
        %1969 = vrot.lane.b32.xlu0 %v734, 112
        %v1970 = vpop.permute.xlu0 %1969
        %1971 = vrot.lane.b32.xlu0 %v739, 112
        %v1972 = vpop.permute.xlu0 %1971
        %1973 = vrot.lane.b32.xlu0 %v744, 112
        %v1974 = vpop.permute.xlu0 %1973
        %1975 = vrot.lane.b32.xlu0 %v749, 112
        %v1976 = vpop.permute.xlu0 %1975
        %1977 = vrot.lane.b32.xlu0 %v754, 112
        %v1978 = vpop.permute.xlu0 %1977
        %1979 = vrot.lane.b32.xlu0 %v759, 112
        %v1980 = vpop.permute.xlu0 %1979
        %1981 = vrot.lane.b32.xlu0 %v764, 112
        %v1982 = vpop.permute.xlu0 %1981
        %1983 = vrot.lane.b32.xlu0 %v769, 112
        %v1984 = vpop.permute.xlu0 %1983
        %1985 = vrot.lane.b32.xlu0 %v774, 112
        %v1986 = vpop.permute.xlu0 %1985
        %1987 = vrot.lane.b32.xlu0 %v779, 112
        %v1988 = vpop.permute.xlu0 %1987
        %1989 = vrot.lane.b32.xlu0 %v784, 112
        %v1990 = vpop.permute.xlu0 %1989
        %2007 = vxpose.xlu0.b32.start [1/16] %v1960, 128
        %2008 = vxpose.xlu0.b32.cont [2/16] %v1962, 128
        %2009 = vxpose.xlu0.b32.cont [3/16] %v1964, 128
        %2010 = vxpose.xlu0.b32.cont [4/16] %v1966, 128
        %2011 = vxpose.xlu0.b32.cont [5/16] %v1968, 128
        %2012 = vxpose.xlu0.b32.cont [6/16] %v1970, 128
        %2013 = vxpose.xlu0.b32.cont [7/16] %v1972, 128
        %2014 = vxpose.xlu0.b32.cont [8/16] %v1974, 128
        %2015 = vxpose.xlu0.b32.cont [9/16] %v1976, 128
        %2016 = vxpose.xlu0.b32.cont [10/16] %v1978, 128
        %2017 = vxpose.xlu0.b32.cont [11/16] %v1980, 128
        %2018 = vxpose.xlu0.b32.cont [12/16] %v1982, 128
        %2019 = vxpose.xlu0.b32.cont [13/16] %v1984, 128
        %2020 = vxpose.xlu0.b32.cont [14/16] %v1986, 128
        %2021 = vxpose.xlu0.b32.cont [15/16] %v1988, 128
        %2022 = vxpose.xlu0.b32.end [16/16] %v1990, 128
        %v2023 = vpop.trf.xlu0
        %v2024 = vpop.trf.xlu0
        %v2025 = vpop.trf.xlu0
        %v2026 = vpop.trf.xlu0
        %v2027 = vpop.trf.xlu0
        %v2028 = vpop.trf.xlu0
        %v2029 = vpop.trf.xlu0
        %v2030 = vpop.trf.xlu0
        %v2031 = vpop.trf.xlu0
        %v2032 = vpop.trf.xlu0
        %v2033 = vpop.trf.xlu0
        %v2034 = vpop.trf.xlu0
        %v2035 = vpop.trf.xlu0
        %v2036 = vpop.trf.xlu0
        %v2037 = vpop.trf.xlu0
        %v2038 = vpop.trf.xlu0
        %v2039 = vsel %vm1447, %v2023, 1e+30
        %v2040 = vsel %vm1448, %v2023, 1e+30
        %v2041 = vsel %vm1449, %v2023, 1e+30
        %v2042 = vsel %vm1450, %v2023, 1e+30
        %v2043 = vsel %vm1451, %v2023, 1e+30
        %v2044 = vsel %vm1452, %v2023, 1e+30
        %v2045 = vsel %vm1453, %v2023, 1e+30
        %v2046 = vsel %vm1454, %v2023, 1e+30
        %v2047 = vsel %vm1455, %v2023, 1e+30
        %v2048 = vsel %vm1456, %v2023, 1e+30
        %v2049 = vsel %vm1457, %v2023, 1e+30
        %v2050 = vsel %vm1458, %v2023, 1e+30
        %v2051 = vsel %vm1459, %v2023, 1e+30
        %v2052 = vsel %vm1460, %v2023, 1e+30
        %v2053 = vsel %vm1461, %v2023, 1e+30
        %v2054 = vsel %vm1462, %v2023, 1e+30
        %v2055 = vsel %vm1463, %v2023, 1e+30
        %v2056 = vsel %vm1464, %v2023, 1e+30
        %v2057 = vsel %vm1465, %v2023, 1e+30
        %v2058 = vsel %vm1466, %v2023, 1e+30
        %v2059 = vsel %vm1467, %v2023, 1e+30
        %v2060 = vsel %vm1468, %v2023, 1e+30
        %v2061 = vsel %vm1469, %v2023, 1e+30
        %v2062 = vsel %vm1470, %v2023, 1e+30
        %v2063 = vsel %vm1471, %v2023, 1e+30
        %v2064 = vsel %vm1472, %v2023, 1e+30
        %v2065 = vsel %vm1473, %v2023, 1e+30
        %v2066 = vsel %vm1474, %v2023, 1e+30
        %v2067 = vsel %vm1475, %v2023, 1e+30
        %v2068 = vsel %vm1476, %v2023, 1e+30
        %v2069 = vsel %vm1477, %v2023, 1e+30
        %v2070 = vsel %vm1478, %v2023, 1e+30
        %2071 = vmin.xlane.f32.xlu0 %v2039
        %v2072 = vpop.xlane.xlu0 %2071
        %2073 = vmin.xlane.f32.xlu0 %v2040
        %v2074 = vpop.xlane.xlu0 %2073
        %2075 = vmin.xlane.f32.xlu0 %v2041
        %v2076 = vpop.xlane.xlu0 %2075
        %2077 = vmin.xlane.f32.xlu0 %v2042
        %v2078 = vpop.xlane.xlu0 %2077
        %2079 = vmin.xlane.f32.xlu0 %v2043
        %v2080 = vpop.xlane.xlu0 %2079
        %2081 = vmin.xlane.f32.xlu0 %v2044
        %v2082 = vpop.xlane.xlu0 %2081
        %2083 = vmin.xlane.f32.xlu0 %v2045
        %v2084 = vpop.xlane.xlu0 %2083
        %2085 = vmin.xlane.f32.xlu0 %v2046
        %v2086 = vpop.xlane.xlu0 %2085
        %2087 = vmin.xlane.f32.xlu0 %v2047
        %v2088 = vpop.xlane.xlu0 %2087
        %2089 = vmin.xlane.f32.xlu0 %v2048
        %v2090 = vpop.xlane.xlu0 %2089
        %2091 = vmin.xlane.f32.xlu0 %v2049
        %v2092 = vpop.xlane.xlu0 %2091
        %2093 = vmin.xlane.f32.xlu0 %v2050
        %v2094 = vpop.xlane.xlu0 %2093
        %2095 = vmin.xlane.f32.xlu0 %v2051
        %v2096 = vpop.xlane.xlu0 %2095
        %2097 = vmin.xlane.f32.xlu0 %v2052
        %v2098 = vpop.xlane.xlu0 %2097
        %2099 = vmin.xlane.f32.xlu0 %v2053
        %v2100 = vpop.xlane.xlu0 %2099
        %2101 = vmin.xlane.f32.xlu0 %v2054
        %v2102 = vpop.xlane.xlu0 %2101
        %2103 = vmin.xlane.f32.xlu0 %v2055
        %v2104 = vpop.xlane.xlu0 %2103
        %2105 = vmin.xlane.f32.xlu0 %v2056
        %v2106 = vpop.xlane.xlu0 %2105
        %2107 = vmin.xlane.f32.xlu0 %v2057
        %v2108 = vpop.xlane.xlu0 %2107
        %2109 = vmin.xlane.f32.xlu0 %v2058
        %v2110 = vpop.xlane.xlu0 %2109
        %2111 = vmin.xlane.f32.xlu0 %v2059
        %v2112 = vpop.xlane.xlu0 %2111
        %2113 = vmin.xlane.f32.xlu0 %v2060
        %v2114 = vpop.xlane.xlu0 %2113
        %2115 = vmin.xlane.f32.xlu0 %v2061
        %v2116 = vpop.xlane.xlu0 %2115
        %2117 = vmin.xlane.f32.xlu0 %v2062
        %v2118 = vpop.xlane.xlu0 %2117
        %2119 = vmin.xlane.f32.xlu0 %v2063
        %v2120 = vpop.xlane.xlu0 %2119
        %2121 = vmin.xlane.f32.xlu0 %v2064
        %v2122 = vpop.xlane.xlu0 %2121
        %2123 = vmin.xlane.f32.xlu0 %v2065
        %v2124 = vpop.xlane.xlu0 %2123
        %2125 = vmin.xlane.f32.xlu0 %v2066
        %v2126 = vpop.xlane.xlu0 %2125
        %2127 = vmin.xlane.f32.xlu0 %v2067
        %v2128 = vpop.xlane.xlu0 %2127
        %2129 = vmin.xlane.f32.xlu0 %v2068
        %v2130 = vpop.xlane.xlu0 %2129
        %2131 = vmin.xlane.f32.xlu0 %v2069
        %v2132 = vpop.xlane.xlu0 %2131
        %2133 = vmin.xlane.f32.xlu0 %v2070
        %v2134 = vpop.xlane.xlu0 %2133
        %v2135 = vsel %vm1447, %v2023, -1e+30
        %v2136 = vsel %vm1448, %v2023, -1e+30
        %v2137 = vsel %vm1449, %v2023, -1e+30
        %v2138 = vsel %vm1450, %v2023, -1e+30
        %v2139 = vsel %vm1451, %v2023, -1e+30
        %v2140 = vsel %vm1452, %v2023, -1e+30
        %v2141 = vsel %vm1453, %v2023, -1e+30
        %v2142 = vsel %vm1454, %v2023, -1e+30
        %v2143 = vsel %vm1455, %v2023, -1e+30
        %v2144 = vsel %vm1456, %v2023, -1e+30
        %v2145 = vsel %vm1457, %v2023, -1e+30
        %v2146 = vsel %vm1458, %v2023, -1e+30
        %v2147 = vsel %vm1459, %v2023, -1e+30
        %v2148 = vsel %vm1460, %v2023, -1e+30
        %v2149 = vsel %vm1461, %v2023, -1e+30
        %v2150 = vsel %vm1462, %v2023, -1e+30
        %v2151 = vsel %vm1463, %v2023, -1e+30
        %v2152 = vsel %vm1464, %v2023, -1e+30
        %v2153 = vsel %vm1465, %v2023, -1e+30
        %v2154 = vsel %vm1466, %v2023, -1e+30
        %v2155 = vsel %vm1467, %v2023, -1e+30
        %v2156 = vsel %vm1468, %v2023, -1e+30
        %v2157 = vsel %vm1469, %v2023, -1e+30
        %v2158 = vsel %vm1470, %v2023, -1e+30
        %v2159 = vsel %vm1471, %v2023, -1e+30
        %v2160 = vsel %vm1472, %v2023, -1e+30
        %v2161 = vsel %vm1473, %v2023, -1e+30
        %v2162 = vsel %vm1474, %v2023, -1e+30
        %v2163 = vsel %vm1475, %v2023, -1e+30
        %v2164 = vsel %vm1476, %v2023, -1e+30
        %v2165 = vsel %vm1477, %v2023, -1e+30
        %v2166 = vsel %vm1478, %v2023, -1e+30
        %2167 = vmax.xlane.f32.xlu0 %v2135
        %v2168 = vpop.xlane.xlu0 %2167
        %2169 = vmax.xlane.f32.xlu0 %v2136
        %v2170 = vpop.xlane.xlu0 %2169
        %2171 = vmax.xlane.f32.xlu0 %v2137
        %v2172 = vpop.xlane.xlu0 %2171
        %2173 = vmax.xlane.f32.xlu0 %v2138
        %v2174 = vpop.xlane.xlu0 %2173
        %2175 = vmax.xlane.f32.xlu0 %v2139
        %v2176 = vpop.xlane.xlu0 %2175
        %2177 = vmax.xlane.f32.xlu0 %v2140
        %v2178 = vpop.xlane.xlu0 %2177
        %2179 = vmax.xlane.f32.xlu0 %v2141
        %v2180 = vpop.xlane.xlu0 %2179
        %2181 = vmax.xlane.f32.xlu0 %v2142
        %v2182 = vpop.xlane.xlu0 %2181
        %2183 = vmax.xlane.f32.xlu0 %v2143
        %v2184 = vpop.xlane.xlu0 %2183
        %2185 = vmax.xlane.f32.xlu0 %v2144
        %v2186 = vpop.xlane.xlu0 %2185
        %2187 = vmax.xlane.f32.xlu0 %v2145
        %v2188 = vpop.xlane.xlu0 %2187
        %2189 = vmax.xlane.f32.xlu0 %v2146
        %v2190 = vpop.xlane.xlu0 %2189
        %2191 = vmax.xlane.f32.xlu0 %v2147
        %v2192 = vpop.xlane.xlu0 %2191
        %2193 = vmax.xlane.f32.xlu0 %v2148
        %v2194 = vpop.xlane.xlu0 %2193
        %2195 = vmax.xlane.f32.xlu0 %v2149
        %v2196 = vpop.xlane.xlu0 %2195
        %2197 = vmax.xlane.f32.xlu0 %v2150
        %v2198 = vpop.xlane.xlu0 %2197
        %2199 = vmax.xlane.f32.xlu0 %v2151
        %v2200 = vpop.xlane.xlu0 %2199
        %2201 = vmax.xlane.f32.xlu0 %v2152
        %v2202 = vpop.xlane.xlu0 %2201
        %2203 = vmax.xlane.f32.xlu0 %v2153
        %v2204 = vpop.xlane.xlu0 %2203
        %2205 = vmax.xlane.f32.xlu0 %v2154
        %v2206 = vpop.xlane.xlu0 %2205
        %2207 = vmax.xlane.f32.xlu0 %v2155
        %v2208 = vpop.xlane.xlu0 %2207
        %2209 = vmax.xlane.f32.xlu0 %v2156
        %v2210 = vpop.xlane.xlu0 %2209
        %2211 = vmax.xlane.f32.xlu0 %v2157
        %v2212 = vpop.xlane.xlu0 %2211
        %2213 = vmax.xlane.f32.xlu0 %v2158
        %v2214 = vpop.xlane.xlu0 %2213
        %2215 = vmax.xlane.f32.xlu0 %v2159
        %v2216 = vpop.xlane.xlu0 %2215
        %2217 = vmax.xlane.f32.xlu0 %v2160
        %v2218 = vpop.xlane.xlu0 %2217
        %2219 = vmax.xlane.f32.xlu0 %v2161
        %v2220 = vpop.xlane.xlu0 %2219
        %2221 = vmax.xlane.f32.xlu0 %v2162
        %v2222 = vpop.xlane.xlu0 %2221
        %2223 = vmax.xlane.f32.xlu0 %v2163
        %v2224 = vpop.xlane.xlu0 %2223
        %2225 = vmax.xlane.f32.xlu0 %v2164
        %v2226 = vpop.xlane.xlu0 %2225
        %2227 = vmax.xlane.f32.xlu0 %v2165
        %v2228 = vpop.xlane.xlu0 %2227
        %2229 = vmax.xlane.f32.xlu0 %v2166
        %v2230 = vpop.xlane.xlu0 %2229
        %2231 = vrot.lane.b32.xlu0 %v709, 104
        %v2232 = vpop.permute.xlu0 %2231
        %2233 = vrot.lane.b32.xlu0 %v714, 104
        %v2234 = vpop.permute.xlu0 %2233
        %2235 = vrot.lane.b32.xlu0 %v719, 104
        %v2236 = vpop.permute.xlu0 %2235
        %2237 = vrot.lane.b32.xlu0 %v724, 104
        %v2238 = vpop.permute.xlu0 %2237
        %2239 = vrot.lane.b32.xlu0 %v729, 104
        %v2240 = vpop.permute.xlu0 %2239
        %2241 = vrot.lane.b32.xlu0 %v734, 104
        %v2242 = vpop.permute.xlu0 %2241
        %2243 = vrot.lane.b32.xlu0 %v739, 104
        %v2244 = vpop.permute.xlu0 %2243
        %2245 = vrot.lane.b32.xlu0 %v744, 104
        %v2246 = vpop.permute.xlu0 %2245
        %2247 = vrot.lane.b32.xlu0 %v749, 104
        %v2248 = vpop.permute.xlu0 %2247
        %2249 = vrot.lane.b32.xlu0 %v754, 104
        %v2250 = vpop.permute.xlu0 %2249
        %2251 = vrot.lane.b32.xlu0 %v759, 104
        %v2252 = vpop.permute.xlu0 %2251
        %2253 = vrot.lane.b32.xlu0 %v764, 104
        %v2254 = vpop.permute.xlu0 %2253
        %2255 = vrot.lane.b32.xlu0 %v769, 104
        %v2256 = vpop.permute.xlu0 %2255
        %2257 = vrot.lane.b32.xlu0 %v774, 104
        %v2258 = vpop.permute.xlu0 %2257
        %2259 = vrot.lane.b32.xlu0 %v779, 104
        %v2260 = vpop.permute.xlu0 %2259
        %2261 = vrot.lane.b32.xlu0 %v784, 104
        %v2262 = vpop.permute.xlu0 %2261
        %2279 = vxpose.xlu0.b32.start [1/16] %v2232, 128
        %2280 = vxpose.xlu0.b32.cont [2/16] %v2234, 128
        %2281 = vxpose.xlu0.b32.cont [3/16] %v2236, 128
        %2282 = vxpose.xlu0.b32.cont [4/16] %v2238, 128
        %2283 = vxpose.xlu0.b32.cont [5/16] %v2240, 128
        %2284 = vxpose.xlu0.b32.cont [6/16] %v2242, 128
        %2285 = vxpose.xlu0.b32.cont [7/16] %v2244, 128
        %2286 = vxpose.xlu0.b32.cont [8/16] %v2246, 128
        %2287 = vxpose.xlu0.b32.cont [9/16] %v2248, 128
        %2288 = vxpose.xlu0.b32.cont [10/16] %v2250, 128
        %2289 = vxpose.xlu0.b32.cont [11/16] %v2252, 128
        %2290 = vxpose.xlu0.b32.cont [12/16] %v2254, 128
        %2291 = vxpose.xlu0.b32.cont [13/16] %v2256, 128
        %2292 = vxpose.xlu0.b32.cont [14/16] %v2258, 128
        %2293 = vxpose.xlu0.b32.cont [15/16] %v2260, 128
        %2294 = vxpose.xlu0.b32.end [16/16] %v2262, 128
        %v2295 = vpop.trf.xlu0
        %v2296 = vpop.trf.xlu0
        %v2297 = vpop.trf.xlu0
        %v2298 = vpop.trf.xlu0
        %v2299 = vpop.trf.xlu0
        %v2300 = vpop.trf.xlu0
        %v2301 = vpop.trf.xlu0
        %v2302 = vpop.trf.xlu0
        %v2303 = vpop.trf.xlu0
        %v2304 = vpop.trf.xlu0
        %v2305 = vpop.trf.xlu0
        %v2306 = vpop.trf.xlu0
        %v2307 = vpop.trf.xlu0
        %v2308 = vpop.trf.xlu0
        %v2309 = vpop.trf.xlu0
        %v2310 = vpop.trf.xlu0
        %v2311 = vsel %vm1447, %v2295, 1e+30
        %v2312 = vsel %vm1448, %v2295, 1e+30
        %v2313 = vsel %vm1449, %v2295, 1e+30
        %v2314 = vsel %vm1450, %v2295, 1e+30
        %v2315 = vsel %vm1451, %v2295, 1e+30
        %v2316 = vsel %vm1452, %v2295, 1e+30
        %v2317 = vsel %vm1453, %v2295, 1e+30
        %v2318 = vsel %vm1454, %v2295, 1e+30
        %v2319 = vsel %vm1455, %v2295, 1e+30
        %v2320 = vsel %vm1456, %v2295, 1e+30
        %v2321 = vsel %vm1457, %v2295, 1e+30
        %v2322 = vsel %vm1458, %v2295, 1e+30
        %v2323 = vsel %vm1459, %v2295, 1e+30
        %v2324 = vsel %vm1460, %v2295, 1e+30
        %v2325 = vsel %vm1461, %v2295, 1e+30
        %v2326 = vsel %vm1462, %v2295, 1e+30
        %v2327 = vsel %vm1463, %v2295, 1e+30
        %v2328 = vsel %vm1464, %v2295, 1e+30
        %v2329 = vsel %vm1465, %v2295, 1e+30
        %v2330 = vsel %vm1466, %v2295, 1e+30
        %v2331 = vsel %vm1467, %v2295, 1e+30
        %v2332 = vsel %vm1468, %v2295, 1e+30
        %v2333 = vsel %vm1469, %v2295, 1e+30
        %v2334 = vsel %vm1470, %v2295, 1e+30
        %v2335 = vsel %vm1471, %v2295, 1e+30
        %v2336 = vsel %vm1472, %v2295, 1e+30
        %v2337 = vsel %vm1473, %v2295, 1e+30
        %v2338 = vsel %vm1474, %v2295, 1e+30
        %v2339 = vsel %vm1475, %v2295, 1e+30
        %v2340 = vsel %vm1476, %v2295, 1e+30
        %v2341 = vsel %vm1477, %v2295, 1e+30
        %v2342 = vsel %vm1478, %v2295, 1e+30
        %2343 = vmin.xlane.f32.xlu0 %v2311
        %v2344 = vpop.xlane.xlu0 %2343
        %2345 = vmin.xlane.f32.xlu0 %v2312
        %v2346 = vpop.xlane.xlu0 %2345
        %2347 = vmin.xlane.f32.xlu0 %v2313
        %v2348 = vpop.xlane.xlu0 %2347
        %2349 = vmin.xlane.f32.xlu0 %v2314
        %v2350 = vpop.xlane.xlu0 %2349
        %2351 = vmin.xlane.f32.xlu0 %v2315
        %v2352 = vpop.xlane.xlu0 %2351
        %2353 = vmin.xlane.f32.xlu0 %v2316
        %v2354 = vpop.xlane.xlu0 %2353
        %2355 = vmin.xlane.f32.xlu0 %v2317
        %v2356 = vpop.xlane.xlu0 %2355
        %2357 = vmin.xlane.f32.xlu0 %v2318
        %v2358 = vpop.xlane.xlu0 %2357
        %2359 = vmin.xlane.f32.xlu0 %v2319
        %v2360 = vpop.xlane.xlu0 %2359
        %2361 = vmin.xlane.f32.xlu0 %v2320
        %v2362 = vpop.xlane.xlu0 %2361
        %2363 = vmin.xlane.f32.xlu0 %v2321
        %v2364 = vpop.xlane.xlu0 %2363
        %2365 = vmin.xlane.f32.xlu0 %v2322
        %v2366 = vpop.xlane.xlu0 %2365
        %2367 = vmin.xlane.f32.xlu0 %v2323
        %v2368 = vpop.xlane.xlu0 %2367
        %2369 = vmin.xlane.f32.xlu0 %v2324
        %v2370 = vpop.xlane.xlu0 %2369
        %2371 = vmin.xlane.f32.xlu0 %v2325
        %v2372 = vpop.xlane.xlu0 %2371
        %2373 = vmin.xlane.f32.xlu0 %v2326
        %v2374 = vpop.xlane.xlu0 %2373
        %2375 = vmin.xlane.f32.xlu0 %v2327
        %v2376 = vpop.xlane.xlu0 %2375
        %2377 = vmin.xlane.f32.xlu0 %v2328
        %v2378 = vpop.xlane.xlu0 %2377
        %2379 = vmin.xlane.f32.xlu0 %v2329
        %v2380 = vpop.xlane.xlu0 %2379
        %2381 = vmin.xlane.f32.xlu0 %v2330
        %v2382 = vpop.xlane.xlu0 %2381
        %2383 = vmin.xlane.f32.xlu0 %v2331
        %v2384 = vpop.xlane.xlu0 %2383
        %2385 = vmin.xlane.f32.xlu0 %v2332
        %v2386 = vpop.xlane.xlu0 %2385
        %2387 = vmin.xlane.f32.xlu0 %v2333
        %v2388 = vpop.xlane.xlu0 %2387
        %2389 = vmin.xlane.f32.xlu0 %v2334
        %v2390 = vpop.xlane.xlu0 %2389
        %2391 = vmin.xlane.f32.xlu0 %v2335
        %v2392 = vpop.xlane.xlu0 %2391
        %2393 = vmin.xlane.f32.xlu0 %v2336
        %v2394 = vpop.xlane.xlu0 %2393
        %2395 = vmin.xlane.f32.xlu0 %v2337
        %v2396 = vpop.xlane.xlu0 %2395
        %2397 = vmin.xlane.f32.xlu0 %v2338
        %v2398 = vpop.xlane.xlu0 %2397
        %2399 = vmin.xlane.f32.xlu0 %v2339
        %v2400 = vpop.xlane.xlu0 %2399
        %2401 = vmin.xlane.f32.xlu0 %v2340
        %v2402 = vpop.xlane.xlu0 %2401
        %2403 = vmin.xlane.f32.xlu0 %v2341
        %v2404 = vpop.xlane.xlu0 %2403
        %2405 = vmin.xlane.f32.xlu0 %v2342
        %v2406 = vpop.xlane.xlu0 %2405
        %v2407 = vsel %vm1447, %v2295, -1e+30
        %v2408 = vsel %vm1448, %v2295, -1e+30
        %v2409 = vsel %vm1449, %v2295, -1e+30
        %v2410 = vsel %vm1450, %v2295, -1e+30
        %v2411 = vsel %vm1451, %v2295, -1e+30
        %v2412 = vsel %vm1452, %v2295, -1e+30
        %v2413 = vsel %vm1453, %v2295, -1e+30
        %v2414 = vsel %vm1454, %v2295, -1e+30
        %v2415 = vsel %vm1455, %v2295, -1e+30
        %v2416 = vsel %vm1456, %v2295, -1e+30
        %v2417 = vsel %vm1457, %v2295, -1e+30
        %v2418 = vsel %vm1458, %v2295, -1e+30
        %v2419 = vsel %vm1459, %v2295, -1e+30
        %v2420 = vsel %vm1460, %v2295, -1e+30
        %v2421 = vsel %vm1461, %v2295, -1e+30
        %v2422 = vsel %vm1462, %v2295, -1e+30
        %v2423 = vsel %vm1463, %v2295, -1e+30
        %v2424 = vsel %vm1464, %v2295, -1e+30
        %v2425 = vsel %vm1465, %v2295, -1e+30
        %v2426 = vsel %vm1466, %v2295, -1e+30
        %v2427 = vsel %vm1467, %v2295, -1e+30
        %v2428 = vsel %vm1468, %v2295, -1e+30
        %v2429 = vsel %vm1469, %v2295, -1e+30
        %v2430 = vsel %vm1470, %v2295, -1e+30
        %v2431 = vsel %vm1471, %v2295, -1e+30
        %v2432 = vsel %vm1472, %v2295, -1e+30
        %v2433 = vsel %vm1473, %v2295, -1e+30
        %v2434 = vsel %vm1474, %v2295, -1e+30
        %v2435 = vsel %vm1475, %v2295, -1e+30
        %v2436 = vsel %vm1476, %v2295, -1e+30
        %v2437 = vsel %vm1477, %v2295, -1e+30
        %v2438 = vsel %vm1478, %v2295, -1e+30
        %2439 = vmax.xlane.f32.xlu0 %v2407
        %v2440 = vpop.xlane.xlu0 %2439
        %2441 = vmax.xlane.f32.xlu0 %v2408
        %v2442 = vpop.xlane.xlu0 %2441
        %2443 = vmax.xlane.f32.xlu0 %v2409
        %v2444 = vpop.xlane.xlu0 %2443
        %2445 = vmax.xlane.f32.xlu0 %v2410
        %v2446 = vpop.xlane.xlu0 %2445
        %2447 = vmax.xlane.f32.xlu0 %v2411
        %v2448 = vpop.xlane.xlu0 %2447
        %2449 = vmax.xlane.f32.xlu0 %v2412
        %v2450 = vpop.xlane.xlu0 %2449
        %2451 = vmax.xlane.f32.xlu0 %v2413
        %v2452 = vpop.xlane.xlu0 %2451
        %2453 = vmax.xlane.f32.xlu0 %v2414
        %v2454 = vpop.xlane.xlu0 %2453
        %2455 = vmax.xlane.f32.xlu0 %v2415
        %v2456 = vpop.xlane.xlu0 %2455
        %2457 = vmax.xlane.f32.xlu0 %v2416
        %v2458 = vpop.xlane.xlu0 %2457
        %2459 = vmax.xlane.f32.xlu0 %v2417
        %v2460 = vpop.xlane.xlu0 %2459
        %2461 = vmax.xlane.f32.xlu0 %v2418
        %v2462 = vpop.xlane.xlu0 %2461
        %2463 = vmax.xlane.f32.xlu0 %v2419
        %v2464 = vpop.xlane.xlu0 %2463
        %2465 = vmax.xlane.f32.xlu0 %v2420
        %v2466 = vpop.xlane.xlu0 %2465
        %2467 = vmax.xlane.f32.xlu0 %v2421
        %v2468 = vpop.xlane.xlu0 %2467
        %2469 = vmax.xlane.f32.xlu0 %v2422
        %v2470 = vpop.xlane.xlu0 %2469
        %2471 = vmax.xlane.f32.xlu0 %v2423
        %v2472 = vpop.xlane.xlu0 %2471
        %2473 = vmax.xlane.f32.xlu0 %v2424
        %v2474 = vpop.xlane.xlu0 %2473
        %2475 = vmax.xlane.f32.xlu0 %v2425
        %v2476 = vpop.xlane.xlu0 %2475
        %2477 = vmax.xlane.f32.xlu0 %v2426
        %v2478 = vpop.xlane.xlu0 %2477
        %2479 = vmax.xlane.f32.xlu0 %v2427
        %v2480 = vpop.xlane.xlu0 %2479
        %2481 = vmax.xlane.f32.xlu0 %v2428
        %v2482 = vpop.xlane.xlu0 %2481
        %2483 = vmax.xlane.f32.xlu0 %v2429
        %v2484 = vpop.xlane.xlu0 %2483
        %2485 = vmax.xlane.f32.xlu0 %v2430
        %v2486 = vpop.xlane.xlu0 %2485
        %2487 = vmax.xlane.f32.xlu0 %v2431
        %v2488 = vpop.xlane.xlu0 %2487
        %2489 = vmax.xlane.f32.xlu0 %v2432
        %v2490 = vpop.xlane.xlu0 %2489
        %2491 = vmax.xlane.f32.xlu0 %v2433
        %v2492 = vpop.xlane.xlu0 %2491
        %2493 = vmax.xlane.f32.xlu0 %v2434
        %v2494 = vpop.xlane.xlu0 %2493
        %2495 = vmax.xlane.f32.xlu0 %v2435
        %v2496 = vpop.xlane.xlu0 %2495
        %2497 = vmax.xlane.f32.xlu0 %v2436
        %v2498 = vpop.xlane.xlu0 %2497
        %2499 = vmax.xlane.f32.xlu0 %v2437
        %v2500 = vpop.xlane.xlu0 %2499
        %2501 = vmax.xlane.f32.xlu0 %v2438
        %v2502 = vpop.xlane.xlu0 %2501
        %v2503 = vld [vmem:[#allocation3] sm:$0xff]
        %v2504 = vld [vmem:[#allocation3 + $0x8] sm:$0xff]
        %v2505 = vld [vmem:[#allocation3 + $0x10] sm:$0xff]
        %v2506 = vld [vmem:[#allocation3 + $0x18] sm:$0xff]
        %v2539 = vlaneseq
        %v2540 = vand.u32 %v2539, 127
        %v2541 = vlaneseq
        %v2542 = vshrl.u32 %v2541, 7
        %v2543 = vsub.s32 %v2540, %v2542
        %v2544 = vrot.slane %v1512, %v2543
        %v2545 = vlaneseq
        %v2546 = vshrl.u32 %v2545, 7
        %v2547 = vsub.s32 %v2540, %v2546
        %v2548 = vrot.slane %v1514, %v2547
        %v2549 = vlaneseq
        %v2550 = vshrl.u32 %v2549, 7
        %v2551 = vsub.s32 %v2540, %v2550
        %v2552 = vrot.slane %v1516, %v2551
        %v2553 = vlaneseq
        %v2554 = vshrl.u32 %v2553, 7
        %v2555 = vsub.s32 %v2540, %v2554
        %v2556 = vrot.slane %v1518, %v2555
        %v2557 = vlaneseq
        %v2558 = vshrl.u32 %v2557, 7
        %v2559 = vsub.s32 %v2540, %v2558
        %v2560 = vrot.slane %v1520, %v2559
        %v2561 = vlaneseq
        %v2562 = vshrl.u32 %v2561, 7
        %v2563 = vsub.s32 %v2540, %v2562
        %v2564 = vrot.slane %v1522, %v2563
        %v2565 = vlaneseq
        %v2566 = vshrl.u32 %v2565, 7
        %v2567 = vsub.s32 %v2540, %v2566
        %v2568 = vrot.slane %v1524, %v2567
        %v2569 = vlaneseq
        %v2570 = vshrl.u32 %v2569, 7
        %v2571 = vsub.s32 %v2540, %v2570
        %v2572 = vrot.slane %v1526, %v2571
        %v2573 = vlaneseq
        %v2574 = vshrl.u32 %v2573, 7
        %v2575 = vsub.s32 %v2540, %v2574
        %v2576 = vrot.slane %v1528, %v2575
        %v2577 = vlaneseq
        %v2578 = vshrl.u32 %v2577, 7
        %v2579 = vsub.s32 %v2540, %v2578
        %v2580 = vrot.slane %v1530, %v2579
        %v2581 = vlaneseq
        %v2582 = vshrl.u32 %v2581, 7
        %v2583 = vsub.s32 %v2540, %v2582
        %v2584 = vrot.slane %v1532, %v2583
        %v2585 = vlaneseq
        %v2586 = vshrl.u32 %v2585, 7
        %v2587 = vsub.s32 %v2540, %v2586
        %v2588 = vrot.slane %v1534, %v2587
        %v2589 = vlaneseq
        %v2590 = vshrl.u32 %v2589, 7
        %v2591 = vsub.s32 %v2540, %v2590
        %v2592 = vrot.slane %v1536, %v2591
        %v2593 = vlaneseq
        %v2594 = vshrl.u32 %v2593, 7
        %v2595 = vsub.s32 %v2540, %v2594
        %v2596 = vrot.slane %v1538, %v2595
        %v2597 = vlaneseq
        %v2598 = vshrl.u32 %v2597, 7
        %v2599 = vsub.s32 %v2540, %v2598
        %v2600 = vrot.slane %v1540, %v2599
        %v2601 = vlaneseq
        %v2602 = vshrl.u32 %v2601, 7
        %v2603 = vsub.s32 %v2540, %v2602
        %v2604 = vrot.slane %v1542, %v2603
        %v2605 = vlaneseq
        %v2606 = vshrl.u32 %v2605, 7
        %v2607 = vsub.s32 %v2540, %v2606
        %v2608 = vrot.slane %v1544, %v2607
        %v2609 = vlaneseq
        %v2610 = vshrl.u32 %v2609, 7
        %v2611 = vsub.s32 %v2540, %v2610
        %v2612 = vrot.slane %v1546, %v2611
        %v2613 = vlaneseq
        %v2614 = vshrl.u32 %v2613, 7
        %v2615 = vsub.s32 %v2540, %v2614
        %v2616 = vrot.slane %v1548, %v2615
        %v2617 = vlaneseq
        %v2618 = vshrl.u32 %v2617, 7
        %v2619 = vsub.s32 %v2540, %v2618
        %v2620 = vrot.slane %v1550, %v2619
        %v2621 = vlaneseq
        %v2622 = vshrl.u32 %v2621, 7
        %v2623 = vsub.s32 %v2540, %v2622
        %v2624 = vrot.slane %v1552, %v2623
        %v2625 = vlaneseq
        %v2626 = vshrl.u32 %v2625, 7
        %v2627 = vsub.s32 %v2540, %v2626
        %v2628 = vrot.slane %v1554, %v2627
        %v2629 = vlaneseq
        %v2630 = vshrl.u32 %v2629, 7
        %v2631 = vsub.s32 %v2540, %v2630
        %v2632 = vrot.slane %v1556, %v2631
        %v2633 = vlaneseq
        %v2634 = vshrl.u32 %v2633, 7
        %v2635 = vsub.s32 %v2540, %v2634
        %v2636 = vrot.slane %v1558, %v2635
        %v2637 = vlaneseq
        %v2638 = vshrl.u32 %v2637, 7
        %v2639 = vsub.s32 %v2540, %v2638
        %v2640 = vrot.slane %v1560, %v2639
        %v2641 = vlaneseq
        %v2642 = vshrl.u32 %v2641, 7
        %v2643 = vsub.s32 %v2540, %v2642
        %v2644 = vrot.slane %v1562, %v2643
        %v2645 = vlaneseq
        %v2646 = vshrl.u32 %v2645, 7
        %v2647 = vsub.s32 %v2540, %v2646
        %v2648 = vrot.slane %v1564, %v2647
        %v2649 = vlaneseq
        %v2650 = vshrl.u32 %v2649, 7
        %v2651 = vsub.s32 %v2540, %v2650
        %v2652 = vrot.slane %v1566, %v2651
        %v2653 = vlaneseq
        %v2654 = vshrl.u32 %v2653, 7
        %v2655 = vsub.s32 %v2540, %v2654
        %v2656 = vrot.slane %v1568, %v2655
        %v2657 = vlaneseq
        %v2658 = vshrl.u32 %v2657, 7
        %v2659 = vsub.s32 %v2540, %v2658
        %v2660 = vrot.slane %v1570, %v2659
        %v2661 = vlaneseq
        %v2662 = vshrl.u32 %v2661, 7
        %v2663 = vsub.s32 %v2540, %v2662
        %v2664 = vrot.slane %v1572, %v2663
        %v2665 = vlaneseq
        %v2666 = vshrl.u32 %v2665, 7
        %v2667 = vsub.s32 %v2540, %v2666
        %v2668 = vrot.slane %v1574, %v2667
        %vm2669 = vcmask 1041409
        %v2670 = vsel %vm2669, %v2548, %v2544
        %vm2671 = vcmask 1042434
        %v2672 = vsel %vm2671, %v2552, %v2670
        %vm2673 = vcmask 1043459
        %v2674 = vsel %vm2673, %v2556, %v2672
        %vm2675 = vcmask 1044484
        %v2676 = vsel %vm2675, %v2560, %v2674
        %vm2677 = vcmask 1045509
        %v2678 = vsel %vm2677, %v2564, %v2676
        %vm2679 = vcmask 1046534
        %v2680 = vsel %vm2679, %v2568, %v2678
        %vm2681 = vcmask 1047559
        %v2682 = vsel %vm2681, %v2572, %v2680
        %v2683 = vsel %vm2669, %v2580, %v2576
        %v2684 = vsel %vm2671, %v2584, %v2683
        %v2685 = vsel %vm2673, %v2588, %v2684
        %v2686 = vsel %vm2675, %v2592, %v2685
        %v2687 = vsel %vm2677, %v2596, %v2686
        %v2688 = vsel %vm2679, %v2600, %v2687
        %v2689 = vsel %vm2681, %v2604, %v2688
        %v2690 = vsel %vm2669, %v2612, %v2608
        %v2691 = vsel %vm2671, %v2616, %v2690
        %v2692 = vsel %vm2673, %v2620, %v2691
        %v2693 = vsel %vm2675, %v2624, %v2692
        %v2694 = vsel %vm2677, %v2628, %v2693
        %v2695 = vsel %vm2679, %v2632, %v2694
        %v2696 = vsel %vm2681, %v2636, %v2695
        %v2697 = vsel %vm2669, %v2644, %v2640
        %v2698 = vsel %vm2671, %v2648, %v2697
        %v2699 = vsel %vm2673, %v2652, %v2698
        %v2700 = vsel %vm2675, %v2656, %v2699
        %v2701 = vsel %vm2677, %v2660, %v2700
        %v2702 = vsel %vm2679, %v2664, %v2701
        %v2703 = vsel %vm2681, %v2668, %v2702
        %v2740 = vadd.s32 %v2540, 4294967288
        %v2741 = vlaneseq
        %v2742 = vshrl.u32 %v2741, 7
        %v2743 = vsub.s32 %v2740, %v2742
        %v2744 = vrot.slane %v1800, %v2743
        %v2745 = vlaneseq
        %v2746 = vshrl.u32 %v2745, 7
        %v2747 = vsub.s32 %v2740, %v2746
        %v2748 = vrot.slane %v1802, %v2747
        %v2749 = vlaneseq
        %v2750 = vshrl.u32 %v2749, 7
        %v2751 = vsub.s32 %v2740, %v2750
        %v2752 = vrot.slane %v1804, %v2751
        %v2753 = vlaneseq
        %v2754 = vshrl.u32 %v2753, 7
        %v2755 = vsub.s32 %v2740, %v2754
        %v2756 = vrot.slane %v1806, %v2755
        %v2757 = vlaneseq
        %v2758 = vshrl.u32 %v2757, 7
        %v2759 = vsub.s32 %v2740, %v2758
        %v2760 = vrot.slane %v1808, %v2759
        %v2761 = vlaneseq
        %v2762 = vshrl.u32 %v2761, 7
        %v2763 = vsub.s32 %v2740, %v2762
        %v2764 = vrot.slane %v1810, %v2763
        %v2765 = vlaneseq
        %v2766 = vshrl.u32 %v2765, 7
        %v2767 = vsub.s32 %v2740, %v2766
        %v2768 = vrot.slane %v1812, %v2767
        %v2769 = vlaneseq
        %v2770 = vshrl.u32 %v2769, 7
        %v2771 = vsub.s32 %v2740, %v2770
        %v2772 = vrot.slane %v1814, %v2771
        %v2773 = vlaneseq
        %v2774 = vshrl.u32 %v2773, 7
        %v2775 = vsub.s32 %v2740, %v2774
        %v2776 = vrot.slane %v1816, %v2775
        %v2777 = vlaneseq
        %v2778 = vshrl.u32 %v2777, 7
        %v2779 = vsub.s32 %v2740, %v2778
        %v2780 = vrot.slane %v1818, %v2779
        %v2781 = vlaneseq
        %v2782 = vshrl.u32 %v2781, 7
        %v2783 = vsub.s32 %v2740, %v2782
        %v2784 = vrot.slane %v1820, %v2783
        %v2785 = vlaneseq
        %v2786 = vshrl.u32 %v2785, 7
        %v2787 = vsub.s32 %v2740, %v2786
        %v2788 = vrot.slane %v1822, %v2787
        %v2789 = vlaneseq
        %v2790 = vshrl.u32 %v2789, 7
        %v2791 = vsub.s32 %v2740, %v2790
        %v2792 = vrot.slane %v1824, %v2791
        %v2793 = vlaneseq
        %v2794 = vshrl.u32 %v2793, 7
        %v2795 = vsub.s32 %v2740, %v2794
        %v2796 = vrot.slane %v1826, %v2795
        %v2797 = vlaneseq
        %v2798 = vshrl.u32 %v2797, 7
        %v2799 = vsub.s32 %v2740, %v2798
        %v2800 = vrot.slane %v1828, %v2799
        %v2801 = vlaneseq
        %v2802 = vshrl.u32 %v2801, 7
        %v2803 = vsub.s32 %v2740, %v2802
        %v2804 = vrot.slane %v1830, %v2803
        %v2805 = vlaneseq
        %v2806 = vshrl.u32 %v2805, 7
        %v2807 = vsub.s32 %v2740, %v2806
        %v2808 = vrot.slane %v1832, %v2807
        %v2809 = vlaneseq
        %v2810 = vshrl.u32 %v2809, 7
        %v2811 = vsub.s32 %v2740, %v2810
        %v2812 = vrot.slane %v1834, %v2811
        %v2813 = vlaneseq
        %v2814 = vshrl.u32 %v2813, 7
        %v2815 = vsub.s32 %v2740, %v2814
        %v2816 = vrot.slane %v1836, %v2815
        %v2817 = vlaneseq
        %v2818 = vshrl.u32 %v2817, 7
        %v2819 = vsub.s32 %v2740, %v2818
        %v2820 = vrot.slane %v1838, %v2819
        %v2821 = vlaneseq
        %v2822 = vshrl.u32 %v2821, 7
        %v2823 = vsub.s32 %v2740, %v2822
        %v2824 = vrot.slane %v1840, %v2823
        %v2825 = vlaneseq
        %v2826 = vshrl.u32 %v2825, 7
        %v2827 = vsub.s32 %v2740, %v2826
        %v2828 = vrot.slane %v1842, %v2827
        %v2829 = vlaneseq
        %v2830 = vshrl.u32 %v2829, 7
        %v2831 = vsub.s32 %v2740, %v2830
        %v2832 = vrot.slane %v1844, %v2831
        %v2833 = vlaneseq
        %v2834 = vshrl.u32 %v2833, 7
        %v2835 = vsub.s32 %v2740, %v2834
        %v2836 = vrot.slane %v1846, %v2835
        %v2837 = vlaneseq
        %v2838 = vshrl.u32 %v2837, 7
        %v2839 = vsub.s32 %v2740, %v2838
        %v2840 = vrot.slane %v1848, %v2839
        %v2841 = vlaneseq
        %v2842 = vshrl.u32 %v2841, 7
        %v2843 = vsub.s32 %v2740, %v2842
        %v2844 = vrot.slane %v1850, %v2843
        %v2845 = vlaneseq
        %v2846 = vshrl.u32 %v2845, 7
        %v2847 = vsub.s32 %v2740, %v2846
        %v2848 = vrot.slane %v1852, %v2847
        %v2849 = vlaneseq
        %v2850 = vshrl.u32 %v2849, 7
        %v2851 = vsub.s32 %v2740, %v2850
        %v2852 = vrot.slane %v1854, %v2851
        %v2853 = vlaneseq
        %v2854 = vshrl.u32 %v2853, 7
        %v2855 = vsub.s32 %v2740, %v2854
        %v2856 = vrot.slane %v1856, %v2855
        %v2857 = vlaneseq
        %v2858 = vshrl.u32 %v2857, 7
        %v2859 = vsub.s32 %v2740, %v2858
        %v2860 = vrot.slane %v1858, %v2859
        %v2861 = vlaneseq
        %v2862 = vshrl.u32 %v2861, 7
        %v2863 = vsub.s32 %v2740, %v2862
        %v2864 = vrot.slane %v1860, %v2863
        %v2865 = vlaneseq
        %v2866 = vshrl.u32 %v2865, 7
        %v2867 = vsub.s32 %v2740, %v2866
        %v2868 = vrot.slane %v1862, %v2867
        %v2869 = vsel %vm2669, %v2748, %v2744
        %v2870 = vsel %vm2671, %v2752, %v2869
        %v2871 = vsel %vm2673, %v2756, %v2870
        %v2872 = vsel %vm2675, %v2760, %v2871
        %v2873 = vsel %vm2677, %v2764, %v2872
        %v2874 = vsel %vm2679, %v2768, %v2873
        %v2875 = vsel %vm2681, %v2772, %v2874
        %v2876 = vsel %vm2669, %v2780, %v2776
        %v2877 = vsel %vm2671, %v2784, %v2876
        %v2878 = vsel %vm2673, %v2788, %v2877
        %v2879 = vsel %vm2675, %v2792, %v2878
        %v2880 = vsel %vm2677, %v2796, %v2879
        %v2881 = vsel %vm2679, %v2800, %v2880
        %v2882 = vsel %vm2681, %v2804, %v2881
        %v2883 = vsel %vm2669, %v2812, %v2808
        %v2884 = vsel %vm2671, %v2816, %v2883
        %v2885 = vsel %vm2673, %v2820, %v2884
        %v2886 = vsel %vm2675, %v2824, %v2885
        %v2887 = vsel %vm2677, %v2828, %v2886
        %v2888 = vsel %vm2679, %v2832, %v2887
        %v2889 = vsel %vm2681, %v2836, %v2888
        %v2890 = vsel %vm2669, %v2844, %v2840
        %v2891 = vsel %vm2671, %v2848, %v2890
        %v2892 = vsel %vm2673, %v2852, %v2891
        %v2893 = vsel %vm2675, %v2856, %v2892
        %v2894 = vsel %vm2677, %v2860, %v2893
        %v2895 = vsel %vm2679, %v2864, %v2894
        %v2896 = vsel %vm2681, %v2868, %v2895
        %v2933 = vadd.s32 %v2540, 4294967280
        %v2934 = vlaneseq
        %v2935 = vshrl.u32 %v2934, 7
        %v2936 = vsub.s32 %v2933, %v2935
        %v2937 = vrot.slane %v2072, %v2936
        %v2938 = vlaneseq
        %v2939 = vshrl.u32 %v2938, 7
        %v2940 = vsub.s32 %v2933, %v2939
        %v2941 = vrot.slane %v2074, %v2940
        %v2942 = vlaneseq
        %v2943 = vshrl.u32 %v2942, 7
        %v2944 = vsub.s32 %v2933, %v2943
        %v2945 = vrot.slane %v2076, %v2944
        %v2946 = vlaneseq
        %v2947 = vshrl.u32 %v2946, 7
        %v2948 = vsub.s32 %v2933, %v2947
        %v2949 = vrot.slane %v2078, %v2948
        %v2950 = vlaneseq
        %v2951 = vshrl.u32 %v2950, 7
        %v2952 = vsub.s32 %v2933, %v2951
        %v2953 = vrot.slane %v2080, %v2952
        %v2954 = vlaneseq
        %v2955 = vshrl.u32 %v2954, 7
        %v2956 = vsub.s32 %v2933, %v2955
        %v2957 = vrot.slane %v2082, %v2956
        %v2958 = vlaneseq
        %v2959 = vshrl.u32 %v2958, 7
        %v2960 = vsub.s32 %v2933, %v2959
        %v2961 = vrot.slane %v2084, %v2960
        %v2962 = vlaneseq
        %v2963 = vshrl.u32 %v2962, 7
        %v2964 = vsub.s32 %v2933, %v2963
        %v2965 = vrot.slane %v2086, %v2964
        %v2966 = vlaneseq
        %v2967 = vshrl.u32 %v2966, 7
        %v2968 = vsub.s32 %v2933, %v2967
        %v2969 = vrot.slane %v2088, %v2968
        %v2970 = vlaneseq
        %v2971 = vshrl.u32 %v2970, 7
        %v2972 = vsub.s32 %v2933, %v2971
        %v2973 = vrot.slane %v2090, %v2972
        %v2974 = vlaneseq
        %v2975 = vshrl.u32 %v2974, 7
        %v2976 = vsub.s32 %v2933, %v2975
        %v2977 = vrot.slane %v2092, %v2976
        %v2978 = vlaneseq
        %v2979 = vshrl.u32 %v2978, 7
        %v2980 = vsub.s32 %v2933, %v2979
        %v2981 = vrot.slane %v2094, %v2980
        %v2982 = vlaneseq
        %v2983 = vshrl.u32 %v2982, 7
        %v2984 = vsub.s32 %v2933, %v2983
        %v2985 = vrot.slane %v2096, %v2984
        %v2986 = vlaneseq
        %v2987 = vshrl.u32 %v2986, 7
        %v2988 = vsub.s32 %v2933, %v2987
        %v2989 = vrot.slane %v2098, %v2988
        %v2990 = vlaneseq
        %v2991 = vshrl.u32 %v2990, 7
        %v2992 = vsub.s32 %v2933, %v2991
        %v2993 = vrot.slane %v2100, %v2992
        %v2994 = vlaneseq
        %v2995 = vshrl.u32 %v2994, 7
        %v2996 = vsub.s32 %v2933, %v2995
        %v2997 = vrot.slane %v2102, %v2996
        %v2998 = vlaneseq
        %v2999 = vshrl.u32 %v2998, 7
        %v3000 = vsub.s32 %v2933, %v2999
        %v3001 = vrot.slane %v2104, %v3000
        %v3002 = vlaneseq
        %v3003 = vshrl.u32 %v3002, 7
        %v3004 = vsub.s32 %v2933, %v3003
        %v3005 = vrot.slane %v2106, %v3004
        %v3006 = vlaneseq
        %v3007 = vshrl.u32 %v3006, 7
        %v3008 = vsub.s32 %v2933, %v3007
        %v3009 = vrot.slane %v2108, %v3008
        %v3010 = vlaneseq
        %v3011 = vshrl.u32 %v3010, 7
        %v3012 = vsub.s32 %v2933, %v3011
        %v3013 = vrot.slane %v2110, %v3012
        %v3014 = vlaneseq
        %v3015 = vshrl.u32 %v3014, 7
        %v3016 = vsub.s32 %v2933, %v3015
        %v3017 = vrot.slane %v2112, %v3016
        %v3018 = vlaneseq
        %v3019 = vshrl.u32 %v3018, 7
        %v3020 = vsub.s32 %v2933, %v3019
        %v3021 = vrot.slane %v2114, %v3020
        %v3022 = vlaneseq
        %v3023 = vshrl.u32 %v3022, 7
        %v3024 = vsub.s32 %v2933, %v3023
        %v3025 = vrot.slane %v2116, %v3024
        %v3026 = vlaneseq
        %v3027 = vshrl.u32 %v3026, 7
        %v3028 = vsub.s32 %v2933, %v3027
        %v3029 = vrot.slane %v2118, %v3028
        %v3030 = vlaneseq
        %v3031 = vshrl.u32 %v3030, 7
        %v3032 = vsub.s32 %v2933, %v3031
        %v3033 = vrot.slane %v2120, %v3032
        %v3034 = vlaneseq
        %v3035 = vshrl.u32 %v3034, 7
        %v3036 = vsub.s32 %v2933, %v3035
        %v3037 = vrot.slane %v2122, %v3036
        %v3038 = vlaneseq
        %v3039 = vshrl.u32 %v3038, 7
        %v3040 = vsub.s32 %v2933, %v3039
        %v3041 = vrot.slane %v2124, %v3040
        %v3042 = vlaneseq
        %v3043 = vshrl.u32 %v3042, 7
        %v3044 = vsub.s32 %v2933, %v3043
        %v3045 = vrot.slane %v2126, %v3044
        %v3046 = vlaneseq
        %v3047 = vshrl.u32 %v3046, 7
        %v3048 = vsub.s32 %v2933, %v3047
        %v3049 = vrot.slane %v2128, %v3048
        %v3050 = vlaneseq
        %v3051 = vshrl.u32 %v3050, 7
        %v3052 = vsub.s32 %v2933, %v3051
        %v3053 = vrot.slane %v2130, %v3052
        %v3054 = vlaneseq
        %v3055 = vshrl.u32 %v3054, 7
        %v3056 = vsub.s32 %v2933, %v3055
        %v3057 = vrot.slane %v2132, %v3056
        %v3058 = vlaneseq
        %v3059 = vshrl.u32 %v3058, 7
        %v3060 = vsub.s32 %v2933, %v3059
        %v3061 = vrot.slane %v2134, %v3060
        %v3062 = vsel %vm2669, %v2941, %v2937
        %v3063 = vsel %vm2671, %v2945, %v3062
        %v3064 = vsel %vm2673, %v2949, %v3063
        %v3065 = vsel %vm2675, %v2953, %v3064
        %v3066 = vsel %vm2677, %v2957, %v3065
        %v3067 = vsel %vm2679, %v2961, %v3066
        %v3068 = vsel %vm2681, %v2965, %v3067
        %v3069 = vsel %vm2669, %v2973, %v2969
        %v3070 = vsel %vm2671, %v2977, %v3069
        %v3071 = vsel %vm2673, %v2981, %v3070
        %v3072 = vsel %vm2675, %v2985, %v3071
        %v3073 = vsel %vm2677, %v2989, %v3072
        %v3074 = vsel %vm2679, %v2993, %v3073
        %v3075 = vsel %vm2681, %v2997, %v3074
        %v3076 = vsel %vm2669, %v3005, %v3001
        %v3077 = vsel %vm2671, %v3009, %v3076
        %v3078 = vsel %vm2673, %v3013, %v3077
        %v3079 = vsel %vm2675, %v3017, %v3078
        %v3080 = vsel %vm2677, %v3021, %v3079
        %v3081 = vsel %vm2679, %v3025, %v3080
        %v3082 = vsel %vm2681, %v3029, %v3081
        %v3083 = vsel %vm2669, %v3037, %v3033
        %v3084 = vsel %vm2671, %v3041, %v3083
        %v3085 = vsel %vm2673, %v3045, %v3084
        %v3086 = vsel %vm2675, %v3049, %v3085
        %v3087 = vsel %vm2677, %v3053, %v3086
        %v3088 = vsel %vm2679, %v3057, %v3087
        %v3089 = vsel %vm2681, %v3061, %v3088
        %v3126 = vadd.s32 %v2540, 4294967272
        %v3127 = vlaneseq
        %v3128 = vshrl.u32 %v3127, 7
        %v3129 = vsub.s32 %v3126, %v3128
        %v3130 = vrot.slane %v2344, %v3129
        %v3131 = vlaneseq
        %v3132 = vshrl.u32 %v3131, 7
        %v3133 = vsub.s32 %v3126, %v3132
        %v3134 = vrot.slane %v2346, %v3133
        %v3135 = vlaneseq
        %v3136 = vshrl.u32 %v3135, 7
        %v3137 = vsub.s32 %v3126, %v3136
        %v3138 = vrot.slane %v2348, %v3137
        %v3139 = vlaneseq
        %v3140 = vshrl.u32 %v3139, 7
        %v3141 = vsub.s32 %v3126, %v3140
        %v3142 = vrot.slane %v2350, %v3141
        %v3143 = vlaneseq
        %v3144 = vshrl.u32 %v3143, 7
        %v3145 = vsub.s32 %v3126, %v3144
        %v3146 = vrot.slane %v2352, %v3145
        %v3147 = vlaneseq
        %v3148 = vshrl.u32 %v3147, 7
        %v3149 = vsub.s32 %v3126, %v3148
        %v3150 = vrot.slane %v2354, %v3149
        %v3151 = vlaneseq
        %v3152 = vshrl.u32 %v3151, 7
        %v3153 = vsub.s32 %v3126, %v3152
        %v3154 = vrot.slane %v2356, %v3153
        %v3155 = vlaneseq
        %v3156 = vshrl.u32 %v3155, 7
        %v3157 = vsub.s32 %v3126, %v3156
        %v3158 = vrot.slane %v2358, %v3157
        %v3159 = vlaneseq
        %v3160 = vshrl.u32 %v3159, 7
        %v3161 = vsub.s32 %v3126, %v3160
        %v3162 = vrot.slane %v2360, %v3161
        %v3163 = vlaneseq
        %v3164 = vshrl.u32 %v3163, 7
        %v3165 = vsub.s32 %v3126, %v3164
        %v3166 = vrot.slane %v2362, %v3165
        %v3167 = vlaneseq
        %v3168 = vshrl.u32 %v3167, 7
        %v3169 = vsub.s32 %v3126, %v3168
        %v3170 = vrot.slane %v2364, %v3169
        %v3171 = vlaneseq
        %v3172 = vshrl.u32 %v3171, 7
        %v3173 = vsub.s32 %v3126, %v3172
        %v3174 = vrot.slane %v2366, %v3173
        %v3175 = vlaneseq
        %v3176 = vshrl.u32 %v3175, 7
        %v3177 = vsub.s32 %v3126, %v3176
        %v3178 = vrot.slane %v2368, %v3177
        %v3179 = vlaneseq
        %v3180 = vshrl.u32 %v3179, 7
        %v3181 = vsub.s32 %v3126, %v3180
        %v3182 = vrot.slane %v2370, %v3181
        %v3183 = vlaneseq
        %v3184 = vshrl.u32 %v3183, 7
        %v3185 = vsub.s32 %v3126, %v3184
        %v3186 = vrot.slane %v2372, %v3185
        %v3187 = vlaneseq
        %v3188 = vshrl.u32 %v3187, 7
        %v3189 = vsub.s32 %v3126, %v3188
        %v3190 = vrot.slane %v2374, %v3189
        %v3191 = vlaneseq
        %v3192 = vshrl.u32 %v3191, 7
        %v3193 = vsub.s32 %v3126, %v3192
        %v3194 = vrot.slane %v2376, %v3193
        %v3195 = vlaneseq
        %v3196 = vshrl.u32 %v3195, 7
        %v3197 = vsub.s32 %v3126, %v3196
        %v3198 = vrot.slane %v2378, %v3197
        %v3199 = vlaneseq
        %v3200 = vshrl.u32 %v3199, 7
        %v3201 = vsub.s32 %v3126, %v3200
        %v3202 = vrot.slane %v2380, %v3201
        %v3203 = vlaneseq
        %v3204 = vshrl.u32 %v3203, 7
        %v3205 = vsub.s32 %v3126, %v3204
        %v3206 = vrot.slane %v2382, %v3205
        %v3207 = vlaneseq
        %v3208 = vshrl.u32 %v3207, 7
        %v3209 = vsub.s32 %v3126, %v3208
        %v3210 = vrot.slane %v2384, %v3209
        %v3211 = vlaneseq
        %v3212 = vshrl.u32 %v3211, 7
        %v3213 = vsub.s32 %v3126, %v3212
        %v3214 = vrot.slane %v2386, %v3213
        %v3215 = vlaneseq
        %v3216 = vshrl.u32 %v3215, 7
        %v3217 = vsub.s32 %v3126, %v3216
        %v3218 = vrot.slane %v2388, %v3217
        %v3219 = vlaneseq
        %v3220 = vshrl.u32 %v3219, 7
        %v3221 = vsub.s32 %v3126, %v3220
        %v3222 = vrot.slane %v2390, %v3221
        %v3223 = vlaneseq
        %v3224 = vshrl.u32 %v3223, 7
        %v3225 = vsub.s32 %v3126, %v3224
        %v3226 = vrot.slane %v2392, %v3225
        %v3227 = vlaneseq
        %v3228 = vshrl.u32 %v3227, 7
        %v3229 = vsub.s32 %v3126, %v3228
        %v3230 = vrot.slane %v2394, %v3229
        %v3231 = vlaneseq
        %v3232 = vshrl.u32 %v3231, 7
        %v3233 = vsub.s32 %v3126, %v3232
        %v3234 = vrot.slane %v2396, %v3233
        %v3235 = vlaneseq
        %v3236 = vshrl.u32 %v3235, 7
        %v3237 = vsub.s32 %v3126, %v3236
        %v3238 = vrot.slane %v2398, %v3237
        %v3239 = vlaneseq
        %v3240 = vshrl.u32 %v3239, 7
        %v3241 = vsub.s32 %v3126, %v3240
        %v3242 = vrot.slane %v2400, %v3241
        %v3243 = vlaneseq
        %v3244 = vshrl.u32 %v3243, 7
        %v3245 = vsub.s32 %v3126, %v3244
        %v3246 = vrot.slane %v2402, %v3245
        %v3247 = vlaneseq
        %v3248 = vshrl.u32 %v3247, 7
        %v3249 = vsub.s32 %v3126, %v3248
        %v3250 = vrot.slane %v2404, %v3249
        %v3251 = vlaneseq
        %v3252 = vshrl.u32 %v3251, 7
        %v3253 = vsub.s32 %v3126, %v3252
        %v3254 = vrot.slane %v2406, %v3253
        %v3255 = vsel %vm2669, %v3134, %v3130
        %v3256 = vsel %vm2671, %v3138, %v3255
        %v3257 = vsel %vm2673, %v3142, %v3256
        %v3258 = vsel %vm2675, %v3146, %v3257
        %v3259 = vsel %vm2677, %v3150, %v3258
        %v3260 = vsel %vm2679, %v3154, %v3259
        %v3261 = vsel %vm2681, %v3158, %v3260
        %v3262 = vsel %vm2669, %v3166, %v3162
        %v3263 = vsel %vm2671, %v3170, %v3262
        %v3264 = vsel %vm2673, %v3174, %v3263
        %v3265 = vsel %vm2675, %v3178, %v3264
        %v3266 = vsel %vm2677, %v3182, %v3265
        %v3267 = vsel %vm2679, %v3186, %v3266
        %v3268 = vsel %vm2681, %v3190, %v3267
        %v3269 = vsel %vm2669, %v3198, %v3194
        %v3270 = vsel %vm2671, %v3202, %v3269
        %v3271 = vsel %vm2673, %v3206, %v3270
        %v3272 = vsel %vm2675, %v3210, %v3271
        %v3273 = vsel %vm2677, %v3214, %v3272
        %v3274 = vsel %vm2679, %v3218, %v3273
        %v3275 = vsel %vm2681, %v3222, %v3274
        %v3276 = vsel %vm2669, %v3230, %v3226
        %v3277 = vsel %vm2671, %v3234, %v3276
        %v3278 = vsel %vm2673, %v3238, %v3277
        %v3279 = vsel %vm2675, %v3242, %v3278
        %v3280 = vsel %vm2677, %v3246, %v3279
        %v3281 = vsel %vm2679, %v3250, %v3280
        %v3282 = vsel %vm2681, %v3254, %v3281
        %vm3287 = vcmask 64512
        %v3288 = vsel %vm3287, %v2682, %v2875
        %v3289 = vsel %vm3287, %v2689, %v2882
        %v3290 = vsel %vm3287, %v2696, %v2889
        %v3291 = vsel %vm3287, %v2703, %v2896
        %vm3292 = vcmask 130048
        %v3293 = vsel %vm3292, %v3288, %v3068
        %v3294 = vsel %vm3292, %v3289, %v3075
        %v3295 = vsel %vm3292, %v3290, %v3082
        %v3296 = vsel %vm3292, %v3291, %v3089
        %vm3297 = vcmask 195584
        %v3298 = vsel %vm3297, %v3293, %v3261
        %v3299 = vsel %vm3297, %v3294, %v3268
        %v3300 = vsel %vm3297, %v3295, %v3275
        %v3301 = vsel %vm3297, %v3296, %v3282
        %v3302 = vmin.f32 %v2503, %v3298
        %v3303 = vmin.f32 %v2504, %v3299
        %v3304 = vmin.f32 %v2505, %v3300
        %v3305 = vmin.f32 %v2506, %v3301
        %3306 = vst.msk [vmem:[#allocation3] sm:$0xff] %vm895, %v3302
        %3307 = vst.msk [vmem:[#allocation3 + $0x8] sm:$0xff] %vm895, %v3303
        %3308 = vst.msk [vmem:[#allocation3 + $0x10] sm:$0xff] %vm895, %v3304
        %3309 = vst.msk [vmem:[#allocation3 + $0x18] sm:$0xff] %vm895, %v3305
        %v3310 = vld [vmem:[#allocation4] sm:$0xff]
        %v3311 = vld [vmem:[#allocation4 + $0x8] sm:$0xff]
        %v3312 = vld [vmem:[#allocation4 + $0x10] sm:$0xff]
        %v3313 = vld [vmem:[#allocation4 + $0x18] sm:$0xff]
        %v3346 = vlaneseq
        %v3347 = vshrl.u32 %v3346, 7
        %v3348 = vsub.s32 %v2540, %v3347
        %v3349 = vrot.slane %v1608, %v3348
        %v3350 = vlaneseq
        %v3351 = vshrl.u32 %v3350, 7
        %v3352 = vsub.s32 %v2540, %v3351
        %v3353 = vrot.slane %v1610, %v3352
        %v3354 = vlaneseq
        %v3355 = vshrl.u32 %v3354, 7
        %v3356 = vsub.s32 %v2540, %v3355
        %v3357 = vrot.slane %v1612, %v3356
        %v3358 = vlaneseq
        %v3359 = vshrl.u32 %v3358, 7
        %v3360 = vsub.s32 %v2540, %v3359
        %v3361 = vrot.slane %v1614, %v3360
        %v3362 = vlaneseq
        %v3363 = vshrl.u32 %v3362, 7
        %v3364 = vsub.s32 %v2540, %v3363
        %v3365 = vrot.slane %v1616, %v3364
        %v3366 = vlaneseq
        %v3367 = vshrl.u32 %v3366, 7
        %v3368 = vsub.s32 %v2540, %v3367
        %v3369 = vrot.slane %v1618, %v3368
        %v3370 = vlaneseq
        %v3371 = vshrl.u32 %v3370, 7
        %v3372 = vsub.s32 %v2540, %v3371
        %v3373 = vrot.slane %v1620, %v3372
        %v3374 = vlaneseq
        %v3375 = vshrl.u32 %v3374, 7
        %v3376 = vsub.s32 %v2540, %v3375
        %v3377 = vrot.slane %v1622, %v3376
        %v3378 = vlaneseq
        %v3379 = vshrl.u32 %v3378, 7
        %v3380 = vsub.s32 %v2540, %v3379
        %v3381 = vrot.slane %v1624, %v3380
        %v3382 = vlaneseq
        %v3383 = vshrl.u32 %v3382, 7
        %v3384 = vsub.s32 %v2540, %v3383
        %v3385 = vrot.slane %v1626, %v3384
        %v3386 = vlaneseq
        %v3387 = vshrl.u32 %v3386, 7
        %v3388 = vsub.s32 %v2540, %v3387
        %v3389 = vrot.slane %v1628, %v3388
        %v3390 = vlaneseq
        %v3391 = vshrl.u32 %v3390, 7
        %v3392 = vsub.s32 %v2540, %v3391
        %v3393 = vrot.slane %v1630, %v3392
        %v3394 = vlaneseq
        %v3395 = vshrl.u32 %v3394, 7
        %v3396 = vsub.s32 %v2540, %v3395
        %v3397 = vrot.slane %v1632, %v3396
        %v3398 = vlaneseq
        %v3399 = vshrl.u32 %v3398, 7
        %v3400 = vsub.s32 %v2540, %v3399
        %v3401 = vrot.slane %v1634, %v3400
        %v3402 = vlaneseq
        %v3403 = vshrl.u32 %v3402, 7
        %v3404 = vsub.s32 %v2540, %v3403
        %v3405 = vrot.slane %v1636, %v3404
        %v3406 = vlaneseq
        %v3407 = vshrl.u32 %v3406, 7
        %v3408 = vsub.s32 %v2540, %v3407
        %v3409 = vrot.slane %v1638, %v3408
        %v3410 = vlaneseq
        %v3411 = vshrl.u32 %v3410, 7
        %v3412 = vsub.s32 %v2540, %v3411
        %v3413 = vrot.slane %v1640, %v3412
        %v3414 = vlaneseq
        %v3415 = vshrl.u32 %v3414, 7
        %v3416 = vsub.s32 %v2540, %v3415
        %v3417 = vrot.slane %v1642, %v3416
        %v3418 = vlaneseq
        %v3419 = vshrl.u32 %v3418, 7
        %v3420 = vsub.s32 %v2540, %v3419
        %v3421 = vrot.slane %v1644, %v3420
        %v3422 = vlaneseq
        %v3423 = vshrl.u32 %v3422, 7
        %v3424 = vsub.s32 %v2540, %v3423
        %v3425 = vrot.slane %v1646, %v3424
        %v3426 = vlaneseq
        %v3427 = vshrl.u32 %v3426, 7
        %v3428 = vsub.s32 %v2540, %v3427
        %v3429 = vrot.slane %v1648, %v3428
        %v3430 = vlaneseq
        %v3431 = vshrl.u32 %v3430, 7
        %v3432 = vsub.s32 %v2540, %v3431
        %v3433 = vrot.slane %v1650, %v3432
        %v3434 = vlaneseq
        %v3435 = vshrl.u32 %v3434, 7
        %v3436 = vsub.s32 %v2540, %v3435
        %v3437 = vrot.slane %v1652, %v3436
        %v3438 = vlaneseq
        %v3439 = vshrl.u32 %v3438, 7
        %v3440 = vsub.s32 %v2540, %v3439
        %v3441 = vrot.slane %v1654, %v3440
        %v3442 = vlaneseq
        %v3443 = vshrl.u32 %v3442, 7
        %v3444 = vsub.s32 %v2540, %v3443
        %v3445 = vrot.slane %v1656, %v3444
        %v3446 = vlaneseq
        %v3447 = vshrl.u32 %v3446, 7
        %v3448 = vsub.s32 %v2540, %v3447
        %v3449 = vrot.slane %v1658, %v3448
        %v3450 = vlaneseq
        %v3451 = vshrl.u32 %v3450, 7
        %v3452 = vsub.s32 %v2540, %v3451
        %v3453 = vrot.slane %v1660, %v3452
        %v3454 = vlaneseq
        %v3455 = vshrl.u32 %v3454, 7
        %v3456 = vsub.s32 %v2540, %v3455
        %v3457 = vrot.slane %v1662, %v3456
        %v3458 = vlaneseq
        %v3459 = vshrl.u32 %v3458, 7
        %v3460 = vsub.s32 %v2540, %v3459
        %v3461 = vrot.slane %v1664, %v3460
        %v3462 = vlaneseq
        %v3463 = vshrl.u32 %v3462, 7
        %v3464 = vsub.s32 %v2540, %v3463
        %v3465 = vrot.slane %v1666, %v3464
        %v3466 = vlaneseq
        %v3467 = vshrl.u32 %v3466, 7
        %v3468 = vsub.s32 %v2540, %v3467
        %v3469 = vrot.slane %v1668, %v3468
        %v3470 = vlaneseq
        %v3471 = vshrl.u32 %v3470, 7
        %v3472 = vsub.s32 %v2540, %v3471
        %v3473 = vrot.slane %v1670, %v3472
        %v3474 = vsel %vm2669, %v3353, %v3349
        %v3475 = vsel %vm2671, %v3357, %v3474
        %v3476 = vsel %vm2673, %v3361, %v3475
        %v3477 = vsel %vm2675, %v3365, %v3476
        %v3478 = vsel %vm2677, %v3369, %v3477
        %v3479 = vsel %vm2679, %v3373, %v3478
        %v3480 = vsel %vm2681, %v3377, %v3479
        %v3481 = vsel %vm2669, %v3385, %v3381
        %v3482 = vsel %vm2671, %v3389, %v3481
        %v3483 = vsel %vm2673, %v3393, %v3482
        %v3484 = vsel %vm2675, %v3397, %v3483
        %v3485 = vsel %vm2677, %v3401, %v3484
        %v3486 = vsel %vm2679, %v3405, %v3485
        %v3487 = vsel %vm2681, %v3409, %v3486
        %v3488 = vsel %vm2669, %v3417, %v3413
        %v3489 = vsel %vm2671, %v3421, %v3488
        %v3490 = vsel %vm2673, %v3425, %v3489
        %v3491 = vsel %vm2675, %v3429, %v3490
        %v3492 = vsel %vm2677, %v3433, %v3491
        %v3493 = vsel %vm2679, %v3437, %v3492
        %v3494 = vsel %vm2681, %v3441, %v3493
        %v3495 = vsel %vm2669, %v3449, %v3445
        %v3496 = vsel %vm2671, %v3453, %v3495
        %v3497 = vsel %vm2673, %v3457, %v3496
        %v3498 = vsel %vm2675, %v3461, %v3497
        %v3499 = vsel %vm2677, %v3465, %v3498
        %v3500 = vsel %vm2679, %v3469, %v3499
        %v3501 = vsel %vm2681, %v3473, %v3500
        %v3538 = vlaneseq
        %v3539 = vshrl.u32 %v3538, 7
        %v3540 = vsub.s32 %v2740, %v3539
        %v3541 = vrot.slane %v1896, %v3540
        %v3542 = vlaneseq
        %v3543 = vshrl.u32 %v3542, 7
        %v3544 = vsub.s32 %v2740, %v3543
        %v3545 = vrot.slane %v1898, %v3544
        %v3546 = vlaneseq
        %v3547 = vshrl.u32 %v3546, 7
        %v3548 = vsub.s32 %v2740, %v3547
        %v3549 = vrot.slane %v1900, %v3548
        %v3550 = vlaneseq
        %v3551 = vshrl.u32 %v3550, 7
        %v3552 = vsub.s32 %v2740, %v3551
        %v3553 = vrot.slane %v1902, %v3552
        %v3554 = vlaneseq
        %v3555 = vshrl.u32 %v3554, 7
        %v3556 = vsub.s32 %v2740, %v3555
        %v3557 = vrot.slane %v1904, %v3556
        %v3558 = vlaneseq
        %v3559 = vshrl.u32 %v3558, 7
        %v3560 = vsub.s32 %v2740, %v3559
        %v3561 = vrot.slane %v1906, %v3560
        %v3562 = vlaneseq
        %v3563 = vshrl.u32 %v3562, 7
        %v3564 = vsub.s32 %v2740, %v3563
        %v3565 = vrot.slane %v1908, %v3564
        %v3566 = vlaneseq
        %v3567 = vshrl.u32 %v3566, 7
        %v3568 = vsub.s32 %v2740, %v3567
        %v3569 = vrot.slane %v1910, %v3568
        %v3570 = vlaneseq
        %v3571 = vshrl.u32 %v3570, 7
        %v3572 = vsub.s32 %v2740, %v3571
        %v3573 = vrot.slane %v1912, %v3572
        %v3574 = vlaneseq
        %v3575 = vshrl.u32 %v3574, 7
        %v3576 = vsub.s32 %v2740, %v3575
        %v3577 = vrot.slane %v1914, %v3576
        %v3578 = vlaneseq
        %v3579 = vshrl.u32 %v3578, 7
        %v3580 = vsub.s32 %v2740, %v3579
        %v3581 = vrot.slane %v1916, %v3580
        %v3582 = vlaneseq
        %v3583 = vshrl.u32 %v3582, 7
        %v3584 = vsub.s32 %v2740, %v3583
        %v3585 = vrot.slane %v1918, %v3584
        %v3586 = vlaneseq
        %v3587 = vshrl.u32 %v3586, 7
        %v3588 = vsub.s32 %v2740, %v3587
        %v3589 = vrot.slane %v1920, %v3588
        %v3590 = vlaneseq
        %v3591 = vshrl.u32 %v3590, 7
        %v3592 = vsub.s32 %v2740, %v3591
        %v3593 = vrot.slane %v1922, %v3592
        %v3594 = vlaneseq
        %v3595 = vshrl.u32 %v3594, 7
        %v3596 = vsub.s32 %v2740, %v3595
        %v3597 = vrot.slane %v1924, %v3596
        %v3598 = vlaneseq
        %v3599 = vshrl.u32 %v3598, 7
        %v3600 = vsub.s32 %v2740, %v3599
        %v3601 = vrot.slane %v1926, %v3600
        %v3602 = vlaneseq
        %v3603 = vshrl.u32 %v3602, 7
        %v3604 = vsub.s32 %v2740, %v3603
        %v3605 = vrot.slane %v1928, %v3604
        %v3606 = vlaneseq
        %v3607 = vshrl.u32 %v3606, 7
        %v3608 = vsub.s32 %v2740, %v3607
        %v3609 = vrot.slane %v1930, %v3608
        %v3610 = vlaneseq
        %v3611 = vshrl.u32 %v3610, 7
        %v3612 = vsub.s32 %v2740, %v3611
        %v3613 = vrot.slane %v1932, %v3612
        %v3614 = vlaneseq
        %v3615 = vshrl.u32 %v3614, 7
        %v3616 = vsub.s32 %v2740, %v3615
        %v3617 = vrot.slane %v1934, %v3616
        %v3618 = vlaneseq
        %v3619 = vshrl.u32 %v3618, 7
        %v3620 = vsub.s32 %v2740, %v3619
        %v3621 = vrot.slane %v1936, %v3620
        %v3622 = vlaneseq
        %v3623 = vshrl.u32 %v3622, 7
        %v3624 = vsub.s32 %v2740, %v3623
        %v3625 = vrot.slane %v1938, %v3624
        %v3626 = vlaneseq
        %v3627 = vshrl.u32 %v3626, 7
        %v3628 = vsub.s32 %v2740, %v3627
        %v3629 = vrot.slane %v1940, %v3628
        %v3630 = vlaneseq
        %v3631 = vshrl.u32 %v3630, 7
        %v3632 = vsub.s32 %v2740, %v3631
        %v3633 = vrot.slane %v1942, %v3632
        %v3634 = vlaneseq
        %v3635 = vshrl.u32 %v3634, 7
        %v3636 = vsub.s32 %v2740, %v3635
        %v3637 = vrot.slane %v1944, %v3636
        %v3638 = vlaneseq
        %v3639 = vshrl.u32 %v3638, 7
        %v3640 = vsub.s32 %v2740, %v3639
        %v3641 = vrot.slane %v1946, %v3640
        %v3642 = vlaneseq
        %v3643 = vshrl.u32 %v3642, 7
        %v3644 = vsub.s32 %v2740, %v3643
        %v3645 = vrot.slane %v1948, %v3644
        %v3646 = vlaneseq
        %v3647 = vshrl.u32 %v3646, 7
        %v3648 = vsub.s32 %v2740, %v3647
        %v3649 = vrot.slane %v1950, %v3648
        %v3650 = vlaneseq
        %v3651 = vshrl.u32 %v3650, 7
        %v3652 = vsub.s32 %v2740, %v3651
        %v3653 = vrot.slane %v1952, %v3652
        %v3654 = vlaneseq
        %v3655 = vshrl.u32 %v3654, 7
        %v3656 = vsub.s32 %v2740, %v3655
        %v3657 = vrot.slane %v1954, %v3656
        %v3658 = vlaneseq
        %v3659 = vshrl.u32 %v3658, 7
        %v3660 = vsub.s32 %v2740, %v3659
        %v3661 = vrot.slane %v1956, %v3660
        %v3662 = vlaneseq
        %v3663 = vshrl.u32 %v3662, 7
        %v3664 = vsub.s32 %v2740, %v3663
        %v3665 = vrot.slane %v1958, %v3664
        %v3666 = vsel %vm2669, %v3545, %v3541
        %v3667 = vsel %vm2671, %v3549, %v3666
        %v3668 = vsel %vm2673, %v3553, %v3667
        %v3669 = vsel %vm2675, %v3557, %v3668
        %v3670 = vsel %vm2677, %v3561, %v3669
        %v3671 = vsel %vm2679, %v3565, %v3670
        %v3672 = vsel %vm2681, %v3569, %v3671
        %v3673 = vsel %vm2669, %v3577, %v3573
        %v3674 = vsel %vm2671, %v3581, %v3673
        %v3675 = vsel %vm2673, %v3585, %v3674
        %v3676 = vsel %vm2675, %v3589, %v3675
        %v3677 = vsel %vm2677, %v3593, %v3676
        %v3678 = vsel %vm2679, %v3597, %v3677
        %v3679 = vsel %vm2681, %v3601, %v3678
        %v3680 = vsel %vm2669, %v3609, %v3605
        %v3681 = vsel %vm2671, %v3613, %v3680
        %v3682 = vsel %vm2673, %v3617, %v3681
        %v3683 = vsel %vm2675, %v3621, %v3682
        %v3684 = vsel %vm2677, %v3625, %v3683
        %v3685 = vsel %vm2679, %v3629, %v3684
        %v3686 = vsel %vm2681, %v3633, %v3685
        %v3687 = vsel %vm2669, %v3641, %v3637
        %v3688 = vsel %vm2671, %v3645, %v3687
        %v3689 = vsel %vm2673, %v3649, %v3688
        %v3690 = vsel %vm2675, %v3653, %v3689
        %v3691 = vsel %vm2677, %v3657, %v3690
        %v3692 = vsel %vm2679, %v3661, %v3691
        %v3693 = vsel %vm2681, %v3665, %v3692
        %v3730 = vlaneseq
        %v3731 = vshrl.u32 %v3730, 7
        %v3732 = vsub.s32 %v2933, %v3731
        %v3733 = vrot.slane %v2168, %v3732
        %v3734 = vlaneseq
        %v3735 = vshrl.u32 %v3734, 7
        %v3736 = vsub.s32 %v2933, %v3735
        %v3737 = vrot.slane %v2170, %v3736
        %v3738 = vlaneseq
        %v3739 = vshrl.u32 %v3738, 7
        %v3740 = vsub.s32 %v2933, %v3739
        %v3741 = vrot.slane %v2172, %v3740
        %v3742 = vlaneseq
        %v3743 = vshrl.u32 %v3742, 7
        %v3744 = vsub.s32 %v2933, %v3743
        %v3745 = vrot.slane %v2174, %v3744
        %v3746 = vlaneseq
        %v3747 = vshrl.u32 %v3746, 7
        %v3748 = vsub.s32 %v2933, %v3747
        %v3749 = vrot.slane %v2176, %v3748
        %v3750 = vlaneseq
        %v3751 = vshrl.u32 %v3750, 7
        %v3752 = vsub.s32 %v2933, %v3751
        %v3753 = vrot.slane %v2178, %v3752
        %v3754 = vlaneseq
        %v3755 = vshrl.u32 %v3754, 7
        %v3756 = vsub.s32 %v2933, %v3755
        %v3757 = vrot.slane %v2180, %v3756
        %v3758 = vlaneseq
        %v3759 = vshrl.u32 %v3758, 7
        %v3760 = vsub.s32 %v2933, %v3759
        %v3761 = vrot.slane %v2182, %v3760
        %v3762 = vlaneseq
        %v3763 = vshrl.u32 %v3762, 7
        %v3764 = vsub.s32 %v2933, %v3763
        %v3765 = vrot.slane %v2184, %v3764
        %v3766 = vlaneseq
        %v3767 = vshrl.u32 %v3766, 7
        %v3768 = vsub.s32 %v2933, %v3767
        %v3769 = vrot.slane %v2186, %v3768
        %v3770 = vlaneseq
        %v3771 = vshrl.u32 %v3770, 7
        %v3772 = vsub.s32 %v2933, %v3771
        %v3773 = vrot.slane %v2188, %v3772
        %v3774 = vlaneseq
        %v3775 = vshrl.u32 %v3774, 7
        %v3776 = vsub.s32 %v2933, %v3775
        %v3777 = vrot.slane %v2190, %v3776
        %v3778 = vlaneseq
        %v3779 = vshrl.u32 %v3778, 7
        %v3780 = vsub.s32 %v2933, %v3779
        %v3781 = vrot.slane %v2192, %v3780
        %v3782 = vlaneseq
        %v3783 = vshrl.u32 %v3782, 7
        %v3784 = vsub.s32 %v2933, %v3783
        %v3785 = vrot.slane %v2194, %v3784
        %v3786 = vlaneseq
        %v3787 = vshrl.u32 %v3786, 7
        %v3788 = vsub.s32 %v2933, %v3787
        %v3789 = vrot.slane %v2196, %v3788
        %v3790 = vlaneseq
        %v3791 = vshrl.u32 %v3790, 7
        %v3792 = vsub.s32 %v2933, %v3791
        %v3793 = vrot.slane %v2198, %v3792
        %v3794 = vlaneseq
        %v3795 = vshrl.u32 %v3794, 7
        %v3796 = vsub.s32 %v2933, %v3795
        %v3797 = vrot.slane %v2200, %v3796
        %v3798 = vlaneseq
        %v3799 = vshrl.u32 %v3798, 7
        %v3800 = vsub.s32 %v2933, %v3799
        %v3801 = vrot.slane %v2202, %v3800
        %v3802 = vlaneseq
        %v3803 = vshrl.u32 %v3802, 7
        %v3804 = vsub.s32 %v2933, %v3803
        %v3805 = vrot.slane %v2204, %v3804
        %v3806 = vlaneseq
        %v3807 = vshrl.u32 %v3806, 7
        %v3808 = vsub.s32 %v2933, %v3807
        %v3809 = vrot.slane %v2206, %v3808
        %v3810 = vlaneseq
        %v3811 = vshrl.u32 %v3810, 7
        %v3812 = vsub.s32 %v2933, %v3811
        %v3813 = vrot.slane %v2208, %v3812
        %v3814 = vlaneseq
        %v3815 = vshrl.u32 %v3814, 7
        %v3816 = vsub.s32 %v2933, %v3815
        %v3817 = vrot.slane %v2210, %v3816
        %v3818 = vlaneseq
        %v3819 = vshrl.u32 %v3818, 7
        %v3820 = vsub.s32 %v2933, %v3819
        %v3821 = vrot.slane %v2212, %v3820
        %v3822 = vlaneseq
        %v3823 = vshrl.u32 %v3822, 7
        %v3824 = vsub.s32 %v2933, %v3823
        %v3825 = vrot.slane %v2214, %v3824
        %v3826 = vlaneseq
        %v3827 = vshrl.u32 %v3826, 7
        %v3828 = vsub.s32 %v2933, %v3827
        %v3829 = vrot.slane %v2216, %v3828
        %v3830 = vlaneseq
        %v3831 = vshrl.u32 %v3830, 7
        %v3832 = vsub.s32 %v2933, %v3831
        %v3833 = vrot.slane %v2218, %v3832
        %v3834 = vlaneseq
        %v3835 = vshrl.u32 %v3834, 7
        %v3836 = vsub.s32 %v2933, %v3835
        %v3837 = vrot.slane %v2220, %v3836
        %v3838 = vlaneseq
        %v3839 = vshrl.u32 %v3838, 7
        %v3840 = vsub.s32 %v2933, %v3839
        %v3841 = vrot.slane %v2222, %v3840
        %v3842 = vlaneseq
        %v3843 = vshrl.u32 %v3842, 7
        %v3844 = vsub.s32 %v2933, %v3843
        %v3845 = vrot.slane %v2224, %v3844
        %v3846 = vlaneseq
        %v3847 = vshrl.u32 %v3846, 7
        %v3848 = vsub.s32 %v2933, %v3847
        %v3849 = vrot.slane %v2226, %v3848
        %v3850 = vlaneseq
        %v3851 = vshrl.u32 %v3850, 7
        %v3852 = vsub.s32 %v2933, %v3851
        %v3853 = vrot.slane %v2228, %v3852
        %v3854 = vlaneseq
        %v3855 = vshrl.u32 %v3854, 7
        %v3856 = vsub.s32 %v2933, %v3855
        %v3857 = vrot.slane %v2230, %v3856
        %v3858 = vsel %vm2669, %v3737, %v3733
        %v3859 = vsel %vm2671, %v3741, %v3858
        %v3860 = vsel %vm2673, %v3745, %v3859
        %v3861 = vsel %vm2675, %v3749, %v3860
        %v3862 = vsel %vm2677, %v3753, %v3861
        %v3863 = vsel %vm2679, %v3757, %v3862
        %v3864 = vsel %vm2681, %v3761, %v3863
        %v3865 = vsel %vm2669, %v3769, %v3765
        %v3866 = vsel %vm2671, %v3773, %v3865
        %v3867 = vsel %vm2673, %v3777, %v3866
        %v3868 = vsel %vm2675, %v3781, %v3867
        %v3869 = vsel %vm2677, %v3785, %v3868
        %v3870 = vsel %vm2679, %v3789, %v3869
        %v3871 = vsel %vm2681, %v3793, %v3870
        %v3872 = vsel %vm2669, %v3801, %v3797
        %v3873 = vsel %vm2671, %v3805, %v3872
        %v3874 = vsel %vm2673, %v3809, %v3873
        %v3875 = vsel %vm2675, %v3813, %v3874
        %v3876 = vsel %vm2677, %v3817, %v3875
        %v3877 = vsel %vm2679, %v3821, %v3876
        %v3878 = vsel %vm2681, %v3825, %v3877
        %v3879 = vsel %vm2669, %v3833, %v3829
        %v3880 = vsel %vm2671, %v3837, %v3879
        %v3881 = vsel %vm2673, %v3841, %v3880
        %v3882 = vsel %vm2675, %v3845, %v3881
        %v3883 = vsel %vm2677, %v3849, %v3882
        %v3884 = vsel %vm2679, %v3853, %v3883
        %v3885 = vsel %vm2681, %v3857, %v3884
        %v3922 = vlaneseq
        %v3923 = vshrl.u32 %v3922, 7
        %v3924 = vsub.s32 %v3126, %v3923
        %v3925 = vrot.slane %v2440, %v3924
        %v3926 = vlaneseq
        %v3927 = vshrl.u32 %v3926, 7
        %v3928 = vsub.s32 %v3126, %v3927
        %v3929 = vrot.slane %v2442, %v3928
        %v3930 = vlaneseq
        %v3931 = vshrl.u32 %v3930, 7
        %v3932 = vsub.s32 %v3126, %v3931
        %v3933 = vrot.slane %v2444, %v3932
        %v3934 = vlaneseq
        %v3935 = vshrl.u32 %v3934, 7
        %v3936 = vsub.s32 %v3126, %v3935
        %v3937 = vrot.slane %v2446, %v3936
        %v3938 = vlaneseq
        %v3939 = vshrl.u32 %v3938, 7
        %v3940 = vsub.s32 %v3126, %v3939
        %v3941 = vrot.slane %v2448, %v3940
        %v3942 = vlaneseq
        %v3943 = vshrl.u32 %v3942, 7
        %v3944 = vsub.s32 %v3126, %v3943
        %v3945 = vrot.slane %v2450, %v3944
        %v3946 = vlaneseq
        %v3947 = vshrl.u32 %v3946, 7
        %v3948 = vsub.s32 %v3126, %v3947
        %v3949 = vrot.slane %v2452, %v3948
        %v3950 = vlaneseq
        %v3951 = vshrl.u32 %v3950, 7
        %v3952 = vsub.s32 %v3126, %v3951
        %v3953 = vrot.slane %v2454, %v3952
        %v3954 = vlaneseq
        %v3955 = vshrl.u32 %v3954, 7
        %v3956 = vsub.s32 %v3126, %v3955
        %v3957 = vrot.slane %v2456, %v3956
        %v3958 = vlaneseq
        %v3959 = vshrl.u32 %v3958, 7
        %v3960 = vsub.s32 %v3126, %v3959
        %v3961 = vrot.slane %v2458, %v3960
        %v3962 = vlaneseq
        %v3963 = vshrl.u32 %v3962, 7
        %v3964 = vsub.s32 %v3126, %v3963
        %v3965 = vrot.slane %v2460, %v3964
        %v3966 = vlaneseq
        %v3967 = vshrl.u32 %v3966, 7
        %v3968 = vsub.s32 %v3126, %v3967
        %v3969 = vrot.slane %v2462, %v3968
        %v3970 = vlaneseq
        %v3971 = vshrl.u32 %v3970, 7
        %v3972 = vsub.s32 %v3126, %v3971
        %v3973 = vrot.slane %v2464, %v3972
        %v3974 = vlaneseq
        %v3975 = vshrl.u32 %v3974, 7
        %v3976 = vsub.s32 %v3126, %v3975
        %v3977 = vrot.slane %v2466, %v3976
        %v3978 = vlaneseq
        %v3979 = vshrl.u32 %v3978, 7
        %v3980 = vsub.s32 %v3126, %v3979
        %v3981 = vrot.slane %v2468, %v3980
        %v3982 = vlaneseq
        %v3983 = vshrl.u32 %v3982, 7
        %v3984 = vsub.s32 %v3126, %v3983
        %v3985 = vrot.slane %v2470, %v3984
        %v3986 = vlaneseq
        %v3987 = vshrl.u32 %v3986, 7
        %v3988 = vsub.s32 %v3126, %v3987
        %v3989 = vrot.slane %v2472, %v3988
        %v3990 = vlaneseq
        %v3991 = vshrl.u32 %v3990, 7
        %v3992 = vsub.s32 %v3126, %v3991
        %v3993 = vrot.slane %v2474, %v3992
        %v3994 = vlaneseq
        %v3995 = vshrl.u32 %v3994, 7
        %v3996 = vsub.s32 %v3126, %v3995
        %v3997 = vrot.slane %v2476, %v3996
        %v3998 = vlaneseq
        %v3999 = vshrl.u32 %v3998, 7
        %v4000 = vsub.s32 %v3126, %v3999
        %v4001 = vrot.slane %v2478, %v4000
        %v4002 = vlaneseq
        %v4003 = vshrl.u32 %v4002, 7
        %v4004 = vsub.s32 %v3126, %v4003
        %v4005 = vrot.slane %v2480, %v4004
        %v4006 = vlaneseq
        %v4007 = vshrl.u32 %v4006, 7
        %v4008 = vsub.s32 %v3126, %v4007
        %v4009 = vrot.slane %v2482, %v4008
        %v4010 = vlaneseq
        %v4011 = vshrl.u32 %v4010, 7
        %v4012 = vsub.s32 %v3126, %v4011
        %v4013 = vrot.slane %v2484, %v4012
        %v4014 = vlaneseq
        %v4015 = vshrl.u32 %v4014, 7
        %v4016 = vsub.s32 %v3126, %v4015
        %v4017 = vrot.slane %v2486, %v4016
        %v4018 = vlaneseq
        %v4019 = vshrl.u32 %v4018, 7
        %v4020 = vsub.s32 %v3126, %v4019
        %v4021 = vrot.slane %v2488, %v4020
        %v4022 = vlaneseq
        %v4023 = vshrl.u32 %v4022, 7
        %v4024 = vsub.s32 %v3126, %v4023
        %v4025 = vrot.slane %v2490, %v4024
        %v4026 = vlaneseq
        %v4027 = vshrl.u32 %v4026, 7
        %v4028 = vsub.s32 %v3126, %v4027
        %v4029 = vrot.slane %v2492, %v4028
        %v4030 = vlaneseq
        %v4031 = vshrl.u32 %v4030, 7
        %v4032 = vsub.s32 %v3126, %v4031
        %v4033 = vrot.slane %v2494, %v4032
        %v4034 = vlaneseq
        %v4035 = vshrl.u32 %v4034, 7
        %v4036 = vsub.s32 %v3126, %v4035
        %v4037 = vrot.slane %v2496, %v4036
        %v4038 = vlaneseq
        %v4039 = vshrl.u32 %v4038, 7
        %v4040 = vsub.s32 %v3126, %v4039
        %v4041 = vrot.slane %v2498, %v4040
        %v4042 = vlaneseq
        %v4043 = vshrl.u32 %v4042, 7
        %v4044 = vsub.s32 %v3126, %v4043
        %v4045 = vrot.slane %v2500, %v4044
        %v4046 = vlaneseq
        %v4047 = vshrl.u32 %v4046, 7
        %v4048 = vsub.s32 %v3126, %v4047
        %v4049 = vrot.slane %v2502, %v4048
        %v4050 = vsel %vm2669, %v3929, %v3925
        %v4051 = vsel %vm2671, %v3933, %v4050
        %v4052 = vsel %vm2673, %v3937, %v4051
        %v4053 = vsel %vm2675, %v3941, %v4052
        %v4054 = vsel %vm2677, %v3945, %v4053
        %v4055 = vsel %vm2679, %v3949, %v4054
        %v4056 = vsel %vm2681, %v3953, %v4055
        %v4057 = vsel %vm2669, %v3961, %v3957
        %v4058 = vsel %vm2671, %v3965, %v4057
        %v4059 = vsel %vm2673, %v3969, %v4058
        %v4060 = vsel %vm2675, %v3973, %v4059
        %v4061 = vsel %vm2677, %v3977, %v4060
        %v4062 = vsel %vm2679, %v3981, %v4061
        %v4063 = vsel %vm2681, %v3985, %v4062
        %v4064 = vsel %vm2669, %v3993, %v3989
        %v4065 = vsel %vm2671, %v3997, %v4064
        %v4066 = vsel %vm2673, %v4001, %v4065
        %v4067 = vsel %vm2675, %v4005, %v4066
        %v4068 = vsel %vm2677, %v4009, %v4067
        %v4069 = vsel %vm2679, %v4013, %v4068
        %v4070 = vsel %vm2681, %v4017, %v4069
        %v4071 = vsel %vm2669, %v4025, %v4021
        %v4072 = vsel %vm2671, %v4029, %v4071
        %v4073 = vsel %vm2673, %v4033, %v4072
        %v4074 = vsel %vm2675, %v4037, %v4073
        %v4075 = vsel %vm2677, %v4041, %v4074
        %v4076 = vsel %vm2679, %v4045, %v4075
        %v4077 = vsel %vm2681, %v4049, %v4076
        %v4082 = vsel %vm3287, %v3480, %v3672
        %v4083 = vsel %vm3287, %v3487, %v3679
        %v4084 = vsel %vm3287, %v3494, %v3686
        %v4085 = vsel %vm3287, %v3501, %v3693
        %v4086 = vsel %vm3292, %v4082, %v3864
        %v4087 = vsel %vm3292, %v4083, %v3871
        %v4088 = vsel %vm3292, %v4084, %v3878
        %v4089 = vsel %vm3292, %v4085, %v3885
        %v4090 = vsel %vm3297, %v4086, %v4056
        %v4091 = vsel %vm3297, %v4087, %v4063
        %v4092 = vsel %vm3297, %v4088, %v4070
        %v4093 = vsel %vm3297, %v4089, %v4077
        %v4094 = vmax.f32 %v3310, %v4090
        %v4095 = vmax.f32 %v3311, %v4091
        %v4096 = vmax.f32 %v3312, %v4092
        %v4097 = vmax.f32 %v3313, %v4093
        %4098 = vst.msk [vmem:[#allocation4] sm:$0xff] %vm895, %v4094
        %4099 = vst.msk [vmem:[#allocation4 + $0x8] sm:$0xff] %vm895, %v4095
        %4100 = vst.msk [vmem:[#allocation4 + $0x10] sm:$0xff] %vm895, %v4096
        %4101 = vst.msk [vmem:[#allocation4 + $0x18] sm:$0xff] %vm895, %v4097
      $region72: #{net_forward.3} parent=63 // pred_fallthru
        _
      %p4102 = scmp.eq.s32.totalorder %s39, 1
      // Predicated region
      $region73: #{net_forward.3} parent=63 // pred_check
        %p4103 = pneg %p4102
      $region74: #{net_forward.3} parent=63 // pred_check_branch
        %4105 = sbr.rel (%p4103) target = $region76
      $region75: #{net_forward.3} parent=63 // pred_region
        %v4106 = vld [vmem:[#allocation2] sm:$0xff]
        %v4107 = vld [vmem:[#allocation2 + $0x8] sm:$0xff]
        %v4108 = vld [vmem:[#allocation2 + $0x10] sm:$0xff]
        %v4109 = vld [vmem:[#allocation2 + $0x18] sm:$0xff]
        %v4110 = vmax.f32 %v4106, 1.0
        %v4111 = vmax.f32 %v4107, 1.0
        %v4112 = vmax.f32 %v4108, 1.0
        %v4113 = vmax.f32 %v4109, 1.0
        %v4114 = vrcp.pop %v4110
        %v4115 = vrcp.pop %v4111
        %v4116 = vrcp.pop %v4112
        %v4117 = vrcp.pop %v4113
        %4119 = vset.pattern.permute.xlu0 64
        %4120 = vperm.xlu0 %4119, %v4114
        %v4121 = vpop.permute.xlu0 %4120
        %4124 = vset.pattern.permute.xlu0 64
        %4125 = vperm.xlu0 %4124, %v4115
        %v4126 = vpop.permute.xlu0 %4125
        %4129 = vset.pattern.permute.xlu0 64
        %4130 = vperm.xlu0 %4129, %v4116
        %v4131 = vpop.permute.xlu0 %4130
        %4134 = vset.pattern.permute.xlu0 64
        %4135 = vperm.xlu0 %4134, %v4117
        %v4136 = vpop.permute.xlu0 %4135
        %v4138 = vmul.f32 %v4106, %v4121
        %v4139 = vmul.f32 %v4107, %v4126
        %v4140 = vmul.f32 %v4108, %v4131
        %v4141 = vmul.f32 %v4109, %v4136
        %v4142 = vmul.f32 %v4138, %v4138
        %v4143 = vmul.f32 %v4139, %v4139
        %v4144 = vmul.f32 %v4140, %v4140
        %v4145 = vmul.f32 %v4141, %v4141
        %4150 = vrot.lane.b32.xlu0 %v4142, 32
        %v4151 = vpop.permute.xlu0 %4150
        %4152 = vrot.lane.b32.xlu0 %v4143, 32
        %v4153 = vpop.permute.xlu0 %4152
        %4154 = vrot.lane.b32.xlu0 %v4144, 32
        %v4155 = vpop.permute.xlu0 %4154
        %4156 = vrot.lane.b32.xlu0 %v4145, 32
        %v4157 = vpop.permute.xlu0 %4156
        %v4162 = vsub.f32 %v4138, %v4151
        %v4163 = vsub.f32 %v4139, %v4153
        %v4164 = vsub.f32 %v4140, %v4155
        %v4165 = vsub.f32 %v4141, %v4157
        %v4166 = vmax.f32 %v4162, 0.0
        %v4167 = vmax.f32 %v4163, 0.0
        %v4168 = vmax.f32 %v4164, 0.0
        %v4169 = vmax.f32 %v4165, 0.0
        %v4170 = vadd.f32 %v4166, 1e-05
        %v4171 = vadd.f32 %v4167, 1e-05
        %v4172 = vadd.f32 %v4168, 1e-05
        %v4173 = vadd.f32 %v4169, 1e-05
        %v4174 = vrsqrt.pop %v4170
        %v4175 = vmul.f32 %v4170, %v4174
        %vm4176 = vcmp.eq.f32.partialorder %v4170, inf
        %v4177 = vsel %vm4176, %v4170, %v4175
        %vm4178 = vcmp.eq.f32.partialorder %v4170, 0.0
        %v4179 = vand.u32 %v4170, 2147483648
        %v4180 = vsel %vm4178, %v4179, %v4177
        %v4181 = vrsqrt.pop %v4171
        %v4182 = vmul.f32 %v4171, %v4181
        %vm4183 = vcmp.eq.f32.partialorder %v4171, inf
        %v4184 = vsel %vm4183, %v4171, %v4182
        %vm4185 = vcmp.eq.f32.partialorder %v4171, 0.0
        %v4186 = vand.u32 %v4171, 2147483648
        %v4187 = vsel %vm4185, %v4186, %v4184
        %v4188 = vrsqrt.pop %v4172
        %v4189 = vmul.f32 %v4172, %v4188
        %vm4190 = vcmp.eq.f32.partialorder %v4172, inf
        %v4191 = vsel %vm4190, %v4172, %v4189
        %vm4192 = vcmp.eq.f32.partialorder %v4172, 0.0
        %v4193 = vand.u32 %v4172, 2147483648
        %v4194 = vsel %vm4192, %v4193, %v4191
        %v4195 = vrsqrt.pop %v4173
        %v4196 = vmul.f32 %v4173, %v4195
        %vm4197 = vcmp.eq.f32.partialorder %v4173, inf
        %v4198 = vsel %vm4197, %v4173, %v4196
        %vm4199 = vcmp.eq.f32.partialorder %v4173, 0.0
        %v4200 = vand.u32 %v4173, 2147483648
        %v4201 = vsel %vm4199, %v4200, %v4198
        %vm4202 = vcmp.gt.f32.partialorder %v4106, 0.5
        %vm4203 = vcmp.gt.f32.partialorder %v4107, 0.5
        %vm4204 = vcmp.gt.f32.partialorder %v4108, 0.5
        %vm4205 = vcmp.gt.f32.partialorder %v4109, 0.5
        %v4206 = vld [vmem:[#allocation3] sm:$0xff]
        %v4207 = vld [vmem:[#allocation3 + $0x8] sm:$0xff]
        %v4208 = vld [vmem:[#allocation3 + $0x10] sm:$0xff]
        %v4209 = vld [vmem:[#allocation3 + $0x18] sm:$0xff]
        %v4210 = vsel %vm4202, 1, 0
        %v4211 = vsel %vm4203, 1, 0
        %v4212 = vsel %vm4204, 1, 0
        %v4213 = vsel %vm4205, 1, 0
        %4214 = vset.pattern.permute.xlu0 64
        %4215 = vperm.xlu0 %4214, %v4210
        %v4216 = vpop.permute.xlu0 %4215
        %4217 = vset.pattern.permute.xlu0 64
        %4218 = vperm.xlu0 %4217, %v4211
        %v4219 = vpop.permute.xlu0 %4218
        %4220 = vset.pattern.permute.xlu0 64
        %4221 = vperm.xlu0 %4220, %v4212
        %v4222 = vpop.permute.xlu0 %4221
        %4223 = vset.pattern.permute.xlu0 64
        %4224 = vperm.xlu0 %4223, %v4213
        %v4225 = vpop.permute.xlu0 %4224
        %vm4226 = vcmp.eq.s32.totalorder %v4216, 1
        %vm4227 = vcmp.eq.s32.totalorder %v4219, 1
        %vm4228 = vcmp.eq.s32.totalorder %v4222, 1
        %vm4229 = vcmp.eq.s32.totalorder %v4225, 1
        %v4230 = vsel %vm4226, %v4206, 0.0
        %v4231 = vsel %vm4227, %v4207, 0.0
        %v4232 = vsel %vm4228, %v4208, 0.0
        %v4233 = vsel %vm4229, %v4209, 0.0
        %v4234 = vld [vmem:[#allocation4] sm:$0xff]
        %v4235 = vld [vmem:[#allocation4 + $0x8] sm:$0xff]
        %v4236 = vld [vmem:[#allocation4 + $0x10] sm:$0xff]
        %v4237 = vld [vmem:[#allocation4 + $0x18] sm:$0xff]
        %v4238 = vsel %vm4226, %v4234, 0.0
        %v4239 = vsel %vm4227, %v4235, 0.0
        %v4240 = vsel %vm4228, %v4236, 0.0
        %v4241 = vsel %vm4229, %v4237, 0.0
        %4246 = vrot.lane.b32.xlu0 %v4230, 32
        %v4247 = vpop.permute.xlu0 %4246
        %4248 = vrot.lane.b32.xlu0 %v4231, 32
        %v4249 = vpop.permute.xlu0 %4248
        %4250 = vrot.lane.b32.xlu0 %v4232, 32
        %v4251 = vpop.permute.xlu0 %4250
        %4252 = vrot.lane.b32.xlu0 %v4233, 32
        %v4253 = vpop.permute.xlu0 %4252
        %4262 = vrot.lane.b32.xlu0 %v4238, 64
        %v4263 = vpop.permute.xlu0 %4262
        %4264 = vrot.lane.b32.xlu0 %v4239, 64
        %v4265 = vpop.permute.xlu0 %4264
        %4266 = vrot.lane.b32.xlu0 %v4240, 64
        %v4267 = vpop.permute.xlu0 %4266
        %4268 = vrot.lane.b32.xlu0 %v4241, 64
        %v4269 = vpop.permute.xlu0 %4268
        %4278 = vrot.lane.b32.xlu0 %v4180, 64
        %v4279 = vpop.permute.xlu0 %4278
        %4280 = vrot.lane.b32.xlu0 %v4187, 64
        %v4281 = vpop.permute.xlu0 %4280
        %4282 = vrot.lane.b32.xlu0 %v4194, 64
        %v4283 = vpop.permute.xlu0 %4282
        %4284 = vrot.lane.b32.xlu0 %v4201, 64
        %v4285 = vpop.permute.xlu0 %4284
        %vm4290 = vcmask 261120
        %v4291 = vsel %vm4290, %v4138, %v4247
        %v4292 = vsel %vm4290, %v4139, %v4249
        %v4293 = vsel %vm4290, %v4140, %v4251
        %v4294 = vsel %vm4290, %v4141, %v4253
        %vm4295 = vcmask 523264
        %v4296 = vsel %vm4295, %v4291, %v4263
        %v4297 = vsel %vm4295, %v4292, %v4265
        %v4298 = vsel %vm4295, %v4293, %v4267
        %v4299 = vsel %vm4295, %v4294, %v4269
        %vm4300 = vcmask 785408
        %v4301 = vsel %vm4300, %v4296, %v4279
        %v4302 = vsel %vm4300, %v4297, %v4281
        %v4303 = vsel %vm4300, %v4298, %v4283
        %v4304 = vsel %vm4300, %v4299, %v4285
        %v4305 = vadd.f32 %v4110, 1.0
        %v4306 = vadd.f32 %v4111, 1.0
        %v4307 = vadd.f32 %v4112, 1.0
        %v4308 = vadd.f32 %v4113, 1.0
        %v4309 = vlog2.pop %v4305
        %v4310 = vmul.f32 %v4309, 0.6931472
        %v4311 = vlog2.pop %v4306
        %v4312 = vmul.f32 %v4311, 0.6931472
        %v4313 = vlog2.pop %v4307
        %v4314 = vmul.f32 %v4313, 0.6931472
        %v4315 = vlog2.pop %v4308
        %v4316 = vmul.f32 %v4315, 0.6931472
        %v4317 = vmul.f32 %v4310, 0.66028255
        %v4318 = vmul.f32 %v4312, 0.66028255
        %v4319 = vmul.f32 %v4314, 0.66028255
        %v4320 = vmul.f32 %v4316, 0.66028255
        %v4321 = vrcp.pop %v4310
        %v4322 = vrcp.pop %v4312
        %v4323 = vrcp.pop %v4314
        %v4324 = vrcp.pop %v4316
        %v4325 = vmul.f32 %v4321, 1.5145031
        %v4326 = vmul.f32 %v4322, 1.5145031
        %v4327 = vmul.f32 %v4323, 1.5145031
        %v4328 = vmul.f32 %v4324, 1.5145031
        %4330 = vset.pattern.permute.xlu0 64
        %4331 = vperm.xlu0 %4330, %v4317
        %v4332 = vpop.permute.xlu0 %4331
        %4335 = vset.pattern.permute.xlu0 64
        %4336 = vperm.xlu0 %4335, %v4318
        %v4337 = vpop.permute.xlu0 %4336
        %4340 = vset.pattern.permute.xlu0 64
        %4341 = vperm.xlu0 %4340, %v4319
        %v4342 = vpop.permute.xlu0 %4341
        %4345 = vset.pattern.permute.xlu0 64
        %4346 = vperm.xlu0 %4345, %v4320
        %v4347 = vpop.permute.xlu0 %4346
        %v4349 = vmul.f32 %v4301, %v4332
        %v4350 = vmul.f32 %v4302, %v4337
        %v4351 = vmul.f32 %v4303, %v4342
        %v4352 = vmul.f32 %v4304, %v4347
        %4354 = vset.pattern.permute.xlu0 64
        %4355 = vperm.xlu0 %4354, %v4325
        %v4356 = vpop.permute.xlu0 %4355
        %4359 = vset.pattern.permute.xlu0 64
        %4360 = vperm.xlu0 %4359, %v4326
        %v4361 = vpop.permute.xlu0 %4360
        %4364 = vset.pattern.permute.xlu0 64
        %4365 = vperm.xlu0 %4364, %v4327
        %v4366 = vpop.permute.xlu0 %4365
        %4369 = vset.pattern.permute.xlu0 64
        %4370 = vperm.xlu0 %4369, %v4328
        %v4371 = vpop.permute.xlu0 %4370
        %v4373 = vmul.f32 %v4301, %v4356
        %v4374 = vmul.f32 %v4302, %v4361
        %v4375 = vmul.f32 %v4303, %v4366
        %v4376 = vmul.f32 %v4304, %v4371
        %v4377 = vld [vmem:[%s526] sm:$0xff]
        %v4378 = vld [vmem:[%s526 + $0x8] sm:$0xff]
        %v4379 = vld [vmem:[%s526 + $0x10] sm:$0xff]
        %v4380 = vld [vmem:[%s526 + $0x18] sm:$0xff]
        %4393 = vrot.lane.b32.xlu0 %v4301, 32
        %v4394 = vpop.permute.xlu0 %4393
        %4395 = vrot.lane.b32.xlu0 %v4349, 32
        %v4396 = vpop.permute.xlu0 %4395
        %4397 = vrot.lane.b32.xlu0 %v4373, 32
        %v4398 = vpop.permute.xlu0 %4397
        %4399 = vrot.lane.b32.xlu0 %v4302, 32
        %v4400 = vpop.permute.xlu0 %4399
        %4401 = vrot.lane.b32.xlu0 %v4350, 32
        %v4402 = vpop.permute.xlu0 %4401
        %4403 = vrot.lane.b32.xlu0 %v4374, 32
        %v4404 = vpop.permute.xlu0 %4403
        %4405 = vrot.lane.b32.xlu0 %v4303, 32
        %v4406 = vpop.permute.xlu0 %4405
        %4407 = vrot.lane.b32.xlu0 %v4351, 32
        %v4408 = vpop.permute.xlu0 %4407
        %4409 = vrot.lane.b32.xlu0 %v4375, 32
        %v4410 = vpop.permute.xlu0 %4409
        %4411 = vrot.lane.b32.xlu0 %v4304, 32
        %v4412 = vpop.permute.xlu0 %4411
        %4413 = vrot.lane.b32.xlu0 %v4352, 32
        %v4414 = vpop.permute.xlu0 %4413
        %4415 = vrot.lane.b32.xlu0 %v4376, 32
        %v4416 = vpop.permute.xlu0 %4415
        %v4417 = vsel %vm4290, %v4394, %v4396
        %v4418 = vsel %vm4290, %v4396, %v4398
        %v4419 = vsel %vm4290, %v4400, %v4402
        %v4420 = vsel %vm4290, %v4402, %v4404
        %v4421 = vsel %vm4290, %v4406, %v4408
        %v4422 = vsel %vm4290, %v4408, %v4410
        %v4423 = vsel %vm4290, %v4412, %v4414
        %v4424 = vsel %vm4290, %v4414, %v4416
        %v4437 = vsel %vm4290, %v4377, %v4394
        %v4438 = vsel %vm4290, %v4378, %v4400
        %v4439 = vsel %vm4290, %v4379, %v4406
        %v4440 = vsel %vm4290, %v4380, %v4412
        %v4441 = vld [vmem:[%s7] sm:$0xff]
        %v4442 = vld [vmem:[%s7 + $0x8] sm:$0xff]
        %v4443 = vld [vmem:[%s7 + $0x10] sm:$0xff]
        %v4444 = vld [vmem:[%s7 + $0x18] sm:$0xff]
        %v4445 = vld [vmem:[%s7 + $0x20] sm:$0xff]
        %v4446 = vld [vmem:[%s7 + $0x28] sm:$0xff]
        %v4447 = vld [vmem:[%s7 + $0x30] sm:$0xff]
        %v4448 = vld [vmem:[%s7 + $0x38] sm:$0xff]
        %v4449 = vld [vmem:[%s7 + $0x40] sm:$0xff]
        %v4450 = vld [vmem:[%s7 + $0x48] sm:$0xff]
        %v4451 = vld [vmem:[%s7 + $0x50] sm:$0xff]
        %v4452 = vld [vmem:[%s7 + $0x58] sm:$0xff]
        %v4453 = vld [vmem:[%s7 + $0x60] sm:$0xff]
        %v4454 = vld [vmem:[%s7 + $0x68] sm:$0xff]
        %v4455 = vld [vmem:[%s7 + $0x70] sm:$0xff]
        %v4456 = vld [vmem:[%s7 + $0x78] sm:$0xff]
        %v4457 = vld [vmem:[%s7 + $0x80] sm:$0xff]
        %v4458 = vld [vmem:[%s7 + $0x88] sm:$0xff]
        %v4459 = vld [vmem:[%s7 + $0x90] sm:$0xff]
        %v4460 = vld [vmem:[%s7 + $0x98] sm:$0xff]
        %v4461 = vld [vmem:[%s7 + $0xa0] sm:$0xff]
        %v4462 = vld [vmem:[%s7 + $0xa8] sm:$0xff]
        %v4463 = vld [vmem:[%s7 + $0xb0] sm:$0xff]
        %v4464 = vld [vmem:[%s7 + $0xb8] sm:$0xff]
        %v4465 = vld [vmem:[%s7 + $0xc0] sm:$0xff]
        %v4466 = vld [vmem:[%s7 + $0xc8] sm:$0xff]
        %v4467 = vld [vmem:[%s7 + $0xd0] sm:$0xff]
        %v4468 = vld [vmem:[%s7 + $0xd8] sm:$0xff]
        %v4469 = vld [vmem:[%s7 + $0xe0] sm:$0xff]
        %v4470 = vld [vmem:[%s7 + $0xe8] sm:$0xff]
        %v4471 = vld [vmem:[%s7 + $0xf0] sm:$0xff]
        %v4472 = vld [vmem:[%s7 + $0xf8] sm:$0xff]
        %v4473 = vld [vmem:[%s7 + $0x100] sm:$0xff]
        %v4474 = vld [vmem:[%s7 + $0x108] sm:$0xff]
        %v4475 = vld [vmem:[%s7 + $0x110] sm:$0xff]
        %v4476 = vld [vmem:[%s7 + $0x118] sm:$0xff]
        %v4477 = vld [vmem:[%s7 + $0x120] sm:$0xff]
        %v4478 = vld [vmem:[%s7 + $0x128] sm:$0xff]
        %v4479 = vld [vmem:[%s7 + $0x130] sm:$0xff]
        %v4480 = vld [vmem:[%s7 + $0x138] sm:$0xff]
        %v4481 = vld [vmem:[%s7 + $0x140] sm:$0xff]
        %v4482 = vld [vmem:[%s7 + $0x148] sm:$0xff]
        %v4483 = vld [vmem:[%s7 + $0x150] sm:$0xff]
        %v4484 = vld [vmem:[%s7 + $0x158] sm:$0xff]
        %v4485 = vld [vmem:[%s7 + $0x160] sm:$0xff]
        %v4486 = vld [vmem:[%s7 + $0x168] sm:$0xff]
        %v4487 = vld [vmem:[%s7 + $0x170] sm:$0xff]
        %v4488 = vld [vmem:[%s7 + $0x178] sm:$0xff]
        %v4489 = vld [vmem:[%s7 + $0x180] sm:$0xff]
        %v4490 = vld [vmem:[%s7 + $0x188] sm:$0xff]
        %v4491 = vld [vmem:[%s7 + $0x190] sm:$0xff]
        %v4492 = vld [vmem:[%s7 + $0x198] sm:$0xff]
        %v4493 = vld [vmem:[%s8] sm:$0x1]
        %v4495 = vlaneseq
        %v4496 = vshrl.u32 %v4495, 7
        %v4497 = vsub.s32 0, %v4496
        %v4498 = vrot.slane %v4493, %v4497
        %v4500 = vsel %vm4290, %v4398, 0
        %v4502 = vsel %vm4290, %v4404, 0
        %v4504 = vsel %vm4290, %v4410, 0
        %v4506 = vsel %vm4290, %v4416, 0
        %4508 = vmatprep.subr.mxu0 0.0
        %4509 = vmatpush1.msra.mxu0 %v4441
        %4510 = vmatprep.subr.mxu0 0.0
        %4511 = vmatpush1.msra.mxu0 %v4442
        %4512 = vmatprep.subr.mxu0 0.0
        %4513 = vmatpush1.msra.mxu0 %v4443
        %4514 = vmatprep.subr.mxu0 0.0
        %4515 = vmatpush1.msra.mxu0 %v4444
        %4516 = vmatprep.subr.mxu0 0.0
        %4517 = vmatpush1.msra.mxu0 %v4445
        %4518 = vmatprep.subr.mxu0 0.0
        %4519 = vmatpush1.msra.mxu0 %v4446
        %4520 = vmatprep.subr.mxu0 0.0
        %4521 = vmatpush1.msra.mxu0 %v4447
        %4522 = vmatprep.subr.mxu0 0.0
        %4523 = vmatpush1.msra.mxu0 %v4448
        %4524 = vmatprep.subr.mxu0 0.0
        %4525 = vmatpush1.msra.mxu0 %v4449
        %4526 = vmatprep.subr.mxu0 0.0
        %4527 = vmatpush1.msra.mxu0 %v4450
        %4528 = vmatprep.subr.mxu0 0.0
        %4529 = vmatpush1.msra.mxu0 %v4451
        %4530 = vmatprep.subr.mxu0 0.0
        %4531 = vmatpush1.msra.mxu0 %v4452
        %4532 = vmatprep.subr.mxu0 0.0
        %4533 = vmatpush1.msra.mxu0 %v4453
        %4534 = vmatprep.subr.mxu0 0.0
        %4535 = vmatpush1.msra.mxu0 %v4454
        %4536 = vmatprep.subr.mxu0 0.0
        %4537 = vmatpush1.msra.mxu0 %v4455
        %4538 = vmatprep.subr.mxu0 0.0
        %4539 = vmatpush1.msra.mxu0 %v4456
        %4540 = vmatprep.subr.mxu0 0.0
        %4541 = vmatpush1.msra.mxu0 %v4457
        %4542 = vmatprep.subr.mxu0 0.0
        %4543 = vmatpush1.msra.mxu0 %v4458
        %4544 = vmatprep.subr.mxu0 0.0
        %4545 = vmatpush1.msra.mxu0 %v4459
        %4546 = vmatprep.subr.mxu0 0.0
        %4547 = vmatpush1.msra.mxu0 %v4460
        %4548 = vmatprep.subr.mxu0 0.0
        %4549 = vmatpush1.msra.mxu0 %v4461
        %4550 = vmatprep.subr.mxu0 0.0
        %4551 = vmatpush1.msra.mxu0 %v4462
        %4552 = vmatprep.subr.mxu0 0.0
        %4553 = vmatpush1.msra.mxu0 %v4463
        %4554 = vmatprep.subr.mxu0 0.0
        %4555 = vmatpush1.msra.mxu0 %v4464
        %4556 = vmatprep.subr.mxu0 0.0
        %4557 = vmatpush1.msra.mxu0 %v4465
        %4558 = vmatprep.subr.mxu0 0.0
        %4559 = vmatpush1.msra.mxu0 %v4466
        %4560 = vmatprep.subr.mxu0 0.0
        %4561 = vmatpush1.msra.mxu0 %v4467
        %4562 = vmatprep.subr.mxu0 0.0
        %4563 = vmatpush1.msra.mxu0 %v4468
        %4564 = vmatprep.subr.mxu0 0.0
        %4565 = vmatpush1.msra.mxu0 %v4469
        %4566 = vmatprep.subr.mxu0 0.0
        %4567 = vmatpush1.msra.mxu0 %v4470
        %4568 = vmatprep.subr.mxu0 0.0
        %4569 = vmatpush1.msra.mxu0 %v4471
        %4570 = vmatprep.subr.mxu0 0.0
        %4571 = vmatpush1.msra.mxu0 %v4472
        %4572 = vmatprep.mubr.f32.mxu0 %v4417
        %4573 = vmatmul.mubr.f32.gmra.mrb[0].mxu0 %v4437
        %v4574 = vpop.f32.mrb[0].mxu0
        %v4575 = vadd.f32 %v4498, %v4574
        %v4576 = vpop.f32.mrb[0].mxu0
        %4577 = vmatprep.mubr.f32.mxu0 %v4419
        %4578 = vmatmul.mubr.f32.gmra.mrb[0].mxu0 %v4438
        %v4579 = vpop.f32.mrb[0].mxu0
        %v4580 = vadd.f32 %v4498, %v4579
        %v4581 = vpop.f32.mrb[0].mxu0
        %4582 = vmatprep.mubr.f32.mxu0 %v4421
        %4583 = vmatmul.mubr.f32.gmra.mrb[0].mxu0 %v4439
        %v4584 = vpop.f32.mrb[0].mxu0
        %v4585 = vadd.f32 %v4498, %v4584
        %v4586 = vpop.f32.mrb[0].mxu0
        %4587 = vmatprep.mubr.f32.mxu0 %v4423
        %4588 = vmatmul.mubr.f32.gmra.mrb[0].mxu0 %v4440
        %v4589 = vpop.f32.mrb[0].mxu0
        %v4590 = vadd.f32 %v4498, %v4589
        %v4591 = vpop.f32.mrb[0].mxu0
        %4592 = vdwg.mxu0
        %4593 = vmatprep.subr.mxu0 0.0
        %4594 = vmatpush1.msra.mxu0 %v4473
        %4595 = vmatprep.subr.mxu0 0.0
        %4596 = vmatpush1.msra.mxu0 %v4474
        %4597 = vmatprep.subr.mxu0 0.0
        %4598 = vmatpush1.msra.mxu0 %v4475
        %4599 = vmatprep.subr.mxu0 0.0
        %4600 = vmatpush1.msra.mxu0 %v4476
        %4601 = vmatprep.subr.mxu0 0.0
        %4602 = vmatpush1.msra.mxu0 %v4477
        %4603 = vmatprep.subr.mxu0 0.0
        %4604 = vmatpush1.msra.mxu0 %v4478
        %4605 = vmatprep.subr.mxu0 0.0
        %4606 = vmatpush1.msra.mxu0 %v4479
        %4607 = vmatprep.subr.mxu0 0.0
        %4608 = vmatpush1.msra.mxu0 %v4480
        %4609 = vmatprep.subr.mxu0 0.0
        %4610 = vmatpush1.msra.mxu0 %v4481
        %4611 = vmatprep.subr.mxu0 0.0
        %4612 = vmatpush1.msra.mxu0 %v4482
        %4613 = vmatprep.subr.mxu0 0.0
        %4614 = vmatpush1.msra.mxu0 %v4483
        %4615 = vmatprep.subr.mxu0 0.0
        %4616 = vmatpush1.msra.mxu0 %v4484
        %4617 = vmatprep.subr.mxu0 0.0
        %4618 = vmatpush1.msra.mxu0 %v4485
        %4619 = vmatprep.subr.mxu0 0.0
        %4620 = vmatpush1.msra.mxu0 %v4486
        %4621 = vmatprep.subr.mxu0 0.0
        %4622 = vmatpush1.msra.mxu0 %v4487
        %4623 = vmatprep.subr.mxu0 0.0
        %4624 = vmatpush1.msra.mxu0 %v4488
        %4625 = vmatprep.subr.mxu0 0.0
        %4626 = vmatpush1.msra.mxu0 %v4489
        %4627 = vmatprep.subr.mxu0 0.0
        %4628 = vmatpush1.msra.mxu0 %v4490
        %4629 = vmatprep.subr.mxu0 0.0
        %4630 = vmatpush1.msra.mxu0 %v4491
        %4631 = vmatprep.subr.mxu0 0.0
        %4632 = vmatpush1.msra.mxu0 %v4492
        %4633 = vmatprep.subr.mxu0 0.0
        %4634 = vmatpush1.msra.mxu0 0.0
        %4635 = vmatprep.subr.mxu0 0.0
        %4636 = vmatpush1.msra.mxu0 0.0
        %4637 = vmatprep.subr.mxu0 0.0
        %4638 = vmatpush1.msra.mxu0 0.0
        %4639 = vmatprep.subr.mxu0 0.0
        %4640 = vmatpush1.msra.mxu0 0.0
        %4641 = vmatprep.subr.mxu0 0.0
        %4642 = vmatpush1.msra.mxu0 0.0
        %4643 = vmatprep.subr.mxu0 0.0
        %4644 = vmatpush1.msra.mxu0 0.0
        %4645 = vmatprep.subr.mxu0 0.0
        %4646 = vmatpush1.msra.mxu0 0.0
        %4647 = vmatprep.subr.mxu0 0.0
        %4648 = vmatpush1.msra.mxu0 0.0
        %4649 = vmatprep.subr.mxu0 0.0
        %4650 = vmatpush1.msra.mxu0 0.0
        %4651 = vmatprep.subr.mxu0 0.0
        %4652 = vmatpush1.msra.mxu0 0.0
        %4653 = vmatprep.subr.mxu0 0.0
        %4654 = vmatpush1.msra.mxu0 0.0
        %4655 = vmatprep.subr.mxu0 0.0
        %4656 = vmatpush1.msra.mxu0 0.0
        %4657 = vmatprep.mubr.f32.mxu0 %v4500
        %4658 = vmatmul.mubr.f32.gmra.mrb[0].mxu0 %v4418
        %v4659 = vpop.f32.mrb[0].mxu0
        %v4660 = vadd.f32 %v4575, %v4659
        %v4661 = vpop.f32.mrb[0].mxu0
        %4662 = vmatprep.mubr.f32.mxu0 %v4502
        %4663 = vmatmul.mubr.f32.gmra.mrb[0].mxu0 %v4420
        %v4664 = vpop.f32.mrb[0].mxu0
        %v4665 = vadd.f32 %v4580, %v4664
        %v4666 = vpop.f32.mrb[0].mxu0
        %4667 = vmatprep.mubr.f32.mxu0 %v4504
        %4668 = vmatmul.mubr.f32.gmra.mrb[0].mxu0 %v4422
        %v4669 = vpop.f32.mrb[0].mxu0
        %v4670 = vadd.f32 %v4585, %v4669
        %v4671 = vpop.f32.mrb[0].mxu0
        %4672 = vmatprep.mubr.f32.mxu0 %v4506
        %4673 = vmatmul.mubr.f32.gmra.mrb[0].mxu0 %v4424
        %v4674 = vpop.f32.mrb[0].mxu0
        %v4675 = vadd.f32 %v4590, %v4674
        %v4676 = vpop.f32.mrb[0].mxu0
        %4677 = vdwg.mxu0
        %v4678 = vmax.f32 %v4660, 0.0
        %v4679 = vmax.f32 %v4665, 0.0
        %v4680 = vmax.f32 %v4670, 0.0
        %v4681 = vmax.f32 %v4675, 0.0
        %v4682 = vld [vmem:[%s9] sm:$0xff]
        %v4683 = vld [vmem:[%s9 + $0x8] sm:$0xff]
        %v4684 = vld [vmem:[%s9 + $0x10] sm:$0xff]
        %v4685 = vld [vmem:[%s9 + $0x18] sm:$0xff]
        %v4686 = vld [vmem:[%s10] sm:$0x1]
        %v4688 = vlaneseq
        %v4689 = vshrl.u32 %v4688, 7
        %v4690 = vsub.s32 0, %v4689
        %v4691 = vrot.slane %v4686, %v4690
        %v4694 = vsel %vm4290, %v4678, 0
        %v4697 = vsel %vm4290, %v4679, 0
        %v4700 = vsel %vm4290, %v4680, 0
        %v4703 = vsel %vm4290, %v4681, 0
        %4705 = vmatprep.subr.mxu0 0.0
        %4706 = vmatpush1.msra.mxu0 %v4682
        %4707 = vmatprep.subr.mxu0 0.0
        %4708 = vmatpush1.msra.mxu0 %v4683
        %4709 = vmatprep.subr.mxu0 0.0
        %4710 = vmatpush1.msra.mxu0 %v4684
        %4711 = vmatprep.subr.mxu0 0.0
        %4712 = vmatpush1.msra.mxu0 %v4685
        %4713 = vmatprep.subr.mxu0 0.0
        %4714 = vmatpush1.msra.mxu0 0.0
        %4715 = vmatprep.subr.mxu0 0.0
        %4716 = vmatpush1.msra.mxu0 0.0
        %4717 = vmatprep.subr.mxu0 0.0
        %4718 = vmatpush1.msra.mxu0 0.0
        %4719 = vmatprep.subr.mxu0 0.0
        %4720 = vmatpush1.msra.mxu0 0.0
        %4721 = vmatprep.subr.mxu0 0.0
        %4722 = vmatpush1.msra.mxu0 0.0
        %4723 = vmatprep.subr.mxu0 0.0
        %4724 = vmatpush1.msra.mxu0 0.0
        %4725 = vmatprep.subr.mxu0 0.0
        %4726 = vmatpush1.msra.mxu0 0.0
        %4727 = vmatprep.subr.mxu0 0.0
        %4728 = vmatpush1.msra.mxu0 0.0
        %4729 = vmatprep.subr.mxu0 0.0
        %4730 = vmatpush1.msra.mxu0 0.0
        %4731 = vmatprep.subr.mxu0 0.0
        %4732 = vmatpush1.msra.mxu0 0.0
        %4733 = vmatprep.subr.mxu0 0.0
        %4734 = vmatpush1.msra.mxu0 0.0
        %4735 = vmatprep.subr.mxu0 0.0
        %4736 = vmatpush1.msra.mxu0 0.0
        %4737 = vmatprep.subr.mxu0 0.0
        %4738 = vmatpush1.msra.mxu0 0.0
        %4739 = vmatprep.subr.mxu0 0.0
        %4740 = vmatpush1.msra.mxu0 0.0
        %4741 = vmatprep.subr.mxu0 0.0
        %4742 = vmatpush1.msra.mxu0 0.0
        %4743 = vmatprep.subr.mxu0 0.0
        %4744 = vmatpush1.msra.mxu0 0.0
        %4745 = vmatprep.subr.mxu0 0.0
        %4746 = vmatpush1.msra.mxu0 0.0
        %4747 = vmatprep.subr.mxu0 0.0
        %4748 = vmatpush1.msra.mxu0 0.0
        %4749 = vmatprep.subr.mxu0 0.0
        %4750 = vmatpush1.msra.mxu0 0.0
        %4751 = vmatprep.subr.mxu0 0.0
        %4752 = vmatpush1.msra.mxu0 0.0
        %4753 = vmatprep.subr.mxu0 0.0
        %4754 = vmatpush1.msra.mxu0 0.0
        %4755 = vmatprep.subr.mxu0 0.0
        %4756 = vmatpush1.msra.mxu0 0.0
        %4757 = vmatprep.subr.mxu0 0.0
        %4758 = vmatpush1.msra.mxu0 0.0
        %4759 = vmatprep.subr.mxu0 0.0
        %4760 = vmatpush1.msra.mxu0 0.0
        %4761 = vmatprep.subr.mxu0 0.0
        %4762 = vmatpush1.msra.mxu0 0.0
        %4763 = vmatprep.subr.mxu0 0.0
        %4764 = vmatpush1.msra.mxu0 0.0
        %4765 = vmatprep.subr.mxu0 0.0
        %4766 = vmatpush1.msra.mxu0 0.0
        %4767 = vmatprep.subr.mxu0 0.0
        %4768 = vmatpush1.msra.mxu0 0.0
        %4769 = vmatprep.mubr.f32.mxu0 0.0
        %4770 = vmatmul.mubr.f32.gmra.mrb[0].mxu0 %v4694
        %v4771 = vpop.f32.mrb[0].mxu0
        %v4772 = vadd.f32 %v4691, %v4771
        %v4773 = vpop.f32.mrb[0].mxu0
        %4774 = vmatprep.mubr.f32.mxu0 0.0
        %4775 = vmatmul.mubr.f32.gmra.mrb[0].mxu0 %v4697
        %v4776 = vpop.f32.mrb[0].mxu0
        %v4777 = vadd.f32 %v4691, %v4776
        %v4778 = vpop.f32.mrb[0].mxu0
        %4779 = vmatprep.mubr.f32.mxu0 0.0
        %4780 = vmatmul.mubr.f32.gmra.mrb[0].mxu0 %v4700
        %v4781 = vpop.f32.mrb[0].mxu0
        %v4782 = vadd.f32 %v4691, %v4781
        %v4783 = vpop.f32.mrb[0].mxu0
        %4784 = vmatprep.mubr.f32.mxu0 0.0
        %4785 = vmatmul.mubr.f32.gmra.mrb[0].mxu0 %v4703
        %v4786 = vpop.f32.mrb[0].mxu0
        %v4787 = vadd.f32 %v4691, %v4786
        %v4788 = vpop.f32.mrb[0].mxu0
        %4789 = vdwg.mxu0
        %v4790 = vmax.f32 %v4772, 0.0
        %v4791 = vmax.f32 %v4777, 0.0
        %v4792 = vmax.f32 %v4782, 0.0
        %v4793 = vmax.f32 %v4787, 0.0
        %v4794 = vld [vmem:[%s11] sm:$0xff]
        %v4795 = vld [vmem:[%s11 + $0x8] sm:$0xff]
        %v4796 = vld [vmem:[%s12] sm:$0x1]
        %v4798 = vlaneseq
        %v4799 = vshrl.u32 %v4798, 7
        %v4800 = vsub.s32 0, %v4799
        %v4801 = vrot.slane %v4796, %v4800
        %vm4803 = vcmask 130048
        %v4805 = vsel %vm4803, %v4790, 0
        %v4808 = vsel %vm4803, %v4791, 0
        %v4811 = vsel %vm4803, %v4792, 0
        %v4814 = vsel %vm4803, %v4793, 0
        %4816 = vmatprep.subr.mxu0 0.0
        %4817 = vmatpush1.msra.mxu0 %v4794
        %4818 = vmatprep.subr.mxu0 0.0
        %4819 = vmatpush1.msra.mxu0 %v4795
        %4820 = vmatprep.subr.mxu0 0.0
        %4821 = vmatpush1.msra.mxu0 0.0
        %4822 = vmatprep.subr.mxu0 0.0
        %4823 = vmatpush1.msra.mxu0 0.0
        %4824 = vmatprep.subr.mxu0 0.0
        %4825 = vmatpush1.msra.mxu0 0.0
        %4826 = vmatprep.subr.mxu0 0.0
        %4827 = vmatpush1.msra.mxu0 0.0
        %4828 = vmatprep.subr.mxu0 0.0
        %4829 = vmatpush1.msra.mxu0 0.0
        %4830 = vmatprep.subr.mxu0 0.0
        %4831 = vmatpush1.msra.mxu0 0.0
        %4832 = vmatprep.subr.mxu0 0.0
        %4833 = vmatpush1.msra.mxu0 0.0
        %4834 = vmatprep.subr.mxu0 0.0
        %4835 = vmatpush1.msra.mxu0 0.0
        %4836 = vmatprep.subr.mxu0 0.0
        %4837 = vmatpush1.msra.mxu0 0.0
        %4838 = vmatprep.subr.mxu0 0.0
        %4839 = vmatpush1.msra.mxu0 0.0
        %4840 = vmatprep.subr.mxu0 0.0
        %4841 = vmatpush1.msra.mxu0 0.0
        %4842 = vmatprep.subr.mxu0 0.0
        %4843 = vmatpush1.msra.mxu0 0.0
        %4844 = vmatprep.subr.mxu0 0.0
        %4845 = vmatpush1.msra.mxu0 0.0
        %4846 = vmatprep.subr.mxu0 0.0
        %4847 = vmatpush1.msra.mxu0 0.0
        %4848 = vmatprep.subr.mxu0 0.0
        %4849 = vmatpush1.msra.mxu0 0.0
        %4850 = vmatprep.subr.mxu0 0.0
        %4851 = vmatpush1.msra.mxu0 0.0
        %4852 = vmatprep.subr.mxu0 0.0
        %4853 = vmatpush1.msra.mxu0 0.0
        %4854 = vmatprep.subr.mxu0 0.0
        %4855 = vmatpush1.msra.mxu0 0.0
        %4856 = vmatprep.subr.mxu0 0.0
        %4857 = vmatpush1.msra.mxu0 0.0
        %4858 = vmatprep.subr.mxu0 0.0
        %4859 = vmatpush1.msra.mxu0 0.0
        %4860 = vmatprep.subr.mxu0 0.0
        %4861 = vmatpush1.msra.mxu0 0.0
        %4862 = vmatprep.subr.mxu0 0.0
        %4863 = vmatpush1.msra.mxu0 0.0
        %4864 = vmatprep.subr.mxu0 0.0
        %4865 = vmatpush1.msra.mxu0 0.0
        %4866 = vmatprep.subr.mxu0 0.0
        %4867 = vmatpush1.msra.mxu0 0.0
        %4868 = vmatprep.subr.mxu0 0.0
        %4869 = vmatpush1.msra.mxu0 0.0
        %4870 = vmatprep.subr.mxu0 0.0
        %4871 = vmatpush1.msra.mxu0 0.0
        %4872 = vmatprep.subr.mxu0 0.0
        %4873 = vmatpush1.msra.mxu0 0.0
        %4874 = vmatprep.subr.mxu0 0.0
        %4875 = vmatpush1.msra.mxu0 0.0
        %4876 = vmatprep.subr.mxu0 0.0
        %4877 = vmatpush1.msra.mxu0 0.0
        %4878 = vmatprep.subr.mxu0 0.0
        %4879 = vmatpush1.msra.mxu0 0.0
        %4880 = vmatprep.mubr.f32.mxu0 0.0
        %4881 = vmatmul.mubr.f32.gmra.mrb[0].mxu0 %v4805
        %v4882 = vpop.f32.mrb[0].mxu0
        %v4883 = vadd.f32 %v4801, %v4882
        %v4884 = vpop.f32.mrb[0].mxu0
        %4885 = vmatprep.mubr.f32.mxu0 0.0
        %4886 = vmatmul.mubr.f32.gmra.mrb[0].mxu0 %v4808
        %v4887 = vpop.f32.mrb[0].mxu0
        %v4888 = vadd.f32 %v4801, %v4887
        %v4889 = vpop.f32.mrb[0].mxu0
        %4890 = vmatprep.mubr.f32.mxu0 0.0
        %4891 = vmatmul.mubr.f32.gmra.mrb[0].mxu0 %v4811
        %v4892 = vpop.f32.mrb[0].mxu0
        %v4893 = vadd.f32 %v4801, %v4892
        %v4894 = vpop.f32.mrb[0].mxu0
        %4895 = vmatprep.mubr.f32.mxu0 0.0
        %4896 = vmatmul.mubr.f32.gmra.mrb[0].mxu0 %v4814
        %v4897 = vpop.f32.mrb[0].mxu0
        %v4898 = vadd.f32 %v4801, %v4897
        %v4899 = vpop.f32.mrb[0].mxu0
        %4900 = vdwg.mxu0
        %vm4901 = vcmask 64512
        %v4902 = vsel %vm4901, %v4883, -inf
        %4903 = vmax.xlane.f32.xlu0 %v4902
        %v4904 = vpop.xlane.xlu0 %4903
        %v4905 = vsel %vm4901, %v4888, -inf
        %4906 = vmax.xlane.f32.xlu0 %v4905
        %v4907 = vpop.xlane.xlu0 %4906
        %v4908 = vsel %vm4901, %v4893, -inf
        %4909 = vmax.xlane.f32.xlu0 %v4908
        %v4910 = vpop.xlane.xlu0 %4909
        %v4911 = vsel %vm4901, %v4898, -inf
        %4912 = vmax.xlane.f32.xlu0 %v4911
        %v4913 = vpop.xlane.xlu0 %4912
        %v4914 = vsub.f32 %v4883, %v4904
        %v4915 = vsub.f32 %v4888, %v4907
        %v4916 = vsub.f32 %v4893, %v4910
        %v4917 = vsub.f32 %v4898, %v4913
        %v4918 = vmul.f32 %v4914, 1.442695
        %v4919 = vpow.pop %v4918
        %v4920 = vmul.f32 %v4915, 1.442695
        %v4921 = vpow.pop %v4920
        %v4922 = vmul.f32 %v4916, 1.442695
        %v4923 = vpow.pop %v4922
        %v4924 = vmul.f32 %v4917, 1.442695
        %v4925 = vpow.pop %v4924
        %v4926 = vsel %vm4901, %v4919, 0.0
        %4927 = vadd.xlane.f32.xlu0 %v4926
        %v4928 = vpop.xlane.xlu0 %4927
        %v4929 = vsel %vm4901, %v4921, 0.0
        %4930 = vadd.xlane.f32.xlu0 %v4929
        %v4931 = vpop.xlane.xlu0 %4930
        %v4932 = vsel %vm4901, %v4923, 0.0
        %4933 = vadd.xlane.f32.xlu0 %v4932
        %v4934 = vpop.xlane.xlu0 %4933
        %v4935 = vsel %vm4901, %v4925, 0.0
        %4936 = vadd.xlane.f32.xlu0 %v4935
        %v4937 = vpop.xlane.xlu0 %4936
        %v4938 = vlog2.pop %v4928
        %v4939 = vmul.f32 %v4938, 0.6931472
        %v4940 = vlog2.pop %v4931
        %v4941 = vmul.f32 %v4940, 0.6931472
        %v4942 = vlog2.pop %v4934
        %v4943 = vmul.f32 %v4942, 0.6931472
        %v4944 = vlog2.pop %v4937
        %v4945 = vmul.f32 %v4944, 0.6931472
        %v4946 = vsub.f32 %v4914, %v4939
        %v4947 = vsub.f32 %v4915, %v4941
        %v4948 = vsub.f32 %v4916, %v4943
        %v4949 = vsub.f32 %v4917, %v4945
        %4950 = vst.msk [vmem:[%s532] sm:$0xff] %vm4901, %v4946
        %4951 = vst.msk [vmem:[%s532 + $0x8] sm:$0xff] %vm4901, %v4947
        %4952 = vst.msk [vmem:[%s532 + $0x10] sm:$0xff] %vm4901, %v4948
        %4953 = vst.msk [vmem:[%s532 + $0x18] sm:$0xff] %vm4901, %v4949
      $region76: #{net_forward.3} parent=63 // pred_fallthru
        _
      %s4954 = smul.u32 4, %s38
      %p4955 = scmp.lt.s32.totalorder %s4954, 7
      %s4956 = scalar_select %p4955, %s4954, 7
      %s4957 = smul.addr %s4956, 8
      %s4958 = scalar_lea.vmem %s13, %s4957
      // Predicated region
      $region77: #{net_forward.3} parent=63 // pred_check
        %p4959 = pneg %p334
      $region78: #{net_forward.3} parent=63 // pred_check_branch
        %4961 = sbr.rel (%p4959) target = $region80
      $region79: #{net_forward.3} parent=63 // pred_region
        %s4962 = smul.u32 4, %s38
      $region80: #{net_forward.3} parent=63 // pred_fallthru
        _
    $region64: #{net_forward.3} parent=5 // pred_fallthru
      _
    %p4963 = scmp.le.s32.totalorder 2, %s29
    // Predicated region
    $region81: #{net_forward.3} parent=5 // pred_check
      %p4964 = pneg %p4963
    $region82: #{net_forward.3} parent=5 // pred_check_branch
      %4966 = sbr.rel (%p4964) target = $region84
    $region83: #{net_forward.3} parent=5 // pred_region
      %s4967 = ssub.s32 %s29, 2
      // Predicated region
      $region85: #{net_forward.3} parent=83 // pred_check
        %p4968 = pneg %p340
      $region86: #{net_forward.3} parent=83 // pred_check_branch
        %4970 = sbr.rel (%p4968) target = $region88
      $region87: #{net_forward.3} parent=83 // pred_region
        %s4971 = smul.u32 4, %s40
        %p4972 = scmp.lt.s32.totalorder %s4971, 7
        %s4973 = scalar_select %p4972, %s4971, 7
        %s4974 = smul.addr %s4973, 8
        %s4975 = scalar_lea.vmem %s13, %s4974
      $region88: #{net_forward.3} parent=83 // pred_fallthru
        _
    $region84: #{net_forward.3} parent=5 // pred_fallthru
      _
  $region6: #{net_forward.3} parent=0 // loop_footer
    %s33 = sadd.s32 1, %s29
  $region7: #{net_forward.3} parent=0 // loop_footer_branch
    %28 = sbr.rel target = $region3
  $region8: #{net_forward.3} parent=0 // loop_exit
    _

</llo_original>
